<compile_context>
chip_gen: v7x
topology: tpu7x:2x2x1
jax: 0.10.0
libtpu: 0.0.40
codegen_flags: <defaults>
</compile_context>

<pallas_src>
import functools
import math

import jax
import jax.numpy as jnp
from jax.experimental import pallas as pl
from jax.experimental.pallas import tpu as pltpu


_VMEM_LIMIT = 32 * 1024 * 1024  # safe on v5e/v6e (128 MiB) and v7x (64 MiB)


def _pick_tile(dim, target):
    """Largest divisor of `dim` that is <= target (prefer 128/8 aligned)."""
    if dim <= target:
        return dim
    for align in (128, 8, 1):
        t = (target // align) * align
        while t >= align:
            if dim % t == 0:
                return t
            t -= align
    return dim


# --------------------- tiled GEMM with fused epilogues ----------------------

def _mm_bias_kernel(*refs, activation, has_add):
    if has_add:
        x_ref, w_ref, b_ref, a_ref, o_ref, acc_ref = refs
    else:
        x_ref, w_ref, b_ref, o_ref, acc_ref = refs
        a_ref = None
    k = pl.program_id(2)

    @pl.when(k == 0)
    def _():
        acc_ref[...] = jnp.zeros_like(acc_ref)

    acc_ref[...] += jnp.dot(
        x_ref[...].astype(jnp.bfloat16),
        w_ref[...].astype(jnp.bfloat16),
        preferred_element_type=jnp.float32)

    @pl.when(k == pl.num_programs(2) - 1)
    def _():
        out = acc_ref[...] + b_ref[...]
        if activation == "relu":
            out = jnp.maximum(out, 0.0)
        if has_add:
            out = out + a_ref[...]        # e.g. fused positional encoding
        o_ref[...] = out.astype(o_ref.dtype)


def matmul_bias(x, w, b, activation=None, add=None,
                tm_target=128, tn_target=256, tk_target=512):
    """y = act(x @ w + b) (+ add).  x:(M,K) w:(K,N) b:(N,) add:(M,N)."""
    M, K = x.shape
    K2, N = w.shape
    assert K == K2
    tm = _pick_tile(M, tm_target)
    tn = _pick_tile(N, tn_target)
    tk = _pick_tile(K, tk_target)
    grid = (M // tm, N // tn, K // tk)
    has_add = add is not None

    in_specs = [
        pl.BlockSpec((tm, tk), lambda i, j, k: (i, k)),
        pl.BlockSpec((tk, tn), lambda i, j, k: (k, j)),
        pl.BlockSpec((1, tn), lambda i, j, k: (0, j)),
    ]
    inputs = [x, w, b.reshape(1, N)]
    if has_add:
        in_specs.append(pl.BlockSpec((tm, tn), lambda i, j, k: (i, j)))
        inputs.append(add)

    kernel = functools.partial(_mm_bias_kernel, activation=activation,
                               has_add=has_add)
    return pl.pallas_call(
        kernel,
        out_shape=jax.ShapeDtypeStruct((M, N), jnp.float32),
        grid=grid,
        in_specs=in_specs,
        out_specs=pl.BlockSpec((tm, tn), lambda i, j, k: (i, j)),
        scratch_shapes=[pltpu.VMEM((tm, tn), jnp.float32)],
        compiler_params=pltpu.CompilerParams(
            dimension_semantics=("parallel", "parallel", "arbitrary"),
            vmem_limit_bytes=_VMEM_LIMIT),
    )(*inputs)


def _mm_res_ln_kernel(x_ref, w_ref, b_ref, r_ref, g_ref, bb_ref,
                      o_ref, acc_ref, *, eps):
    k = pl.program_id(1)

    @pl.when(k == 0)
    def _():
        acc_ref[...] = jnp.zeros_like(acc_ref)

    acc_ref[...] += jnp.dot(
        x_ref[...].astype(jnp.bfloat16),
        w_ref[...].astype(jnp.bfloat16),
        preferred_element_type=jnp.float32)

    @pl.when(k == pl.num_programs(1) - 1)
    def _():
        v = acc_ref[...] + b_ref[...] + r_ref[...]      # matmul + bias + residual
        mean = jnp.mean(v, axis=-1, keepdims=True)
        c = v - mean
        var = jnp.mean(c * c, axis=-1, keepdims=True)   # biased var (PyTorch LN)
        inv = jax.lax.rsqrt(var + eps)
        o_ref[...] = (c * inv * g_ref[...] + bb_ref[...]).astype(o_ref.dtype)


def matmul_bias_residual_layernorm(x, w, b, res, gamma, beta, eps=1e-5,
                                   tm_target=128, tk_target=512):
    """LayerNorm(res + (x @ w + b)).  Full N per tile (row-wise stats)."""
    M, K = x.shape
    _, N = w.shape
    tm = _pick_tile(M, tm_target)
    tk = _pick_tile(K, tk_target)
    grid = (M // tm, K // tk)
    kernel = functools.partial(_mm_res_ln_kernel, eps=eps)
    return pl.pallas_call(
        kernel,
        out_shape=jax.ShapeDtypeStruct((M, N), jnp.float32),
        grid=grid,
        in_specs=[
            pl.BlockSpec((tm, tk), lambda i, k: (i, k)),
            pl.BlockSpec((tk, N), lambda i, k: (k, 0)),
            pl.BlockSpec((1, N), lambda i, k: (0, 0)),
            pl.BlockSpec((tm, N), lambda i, k: (i, 0)),
            pl.BlockSpec((1, N), lambda i, k: (0, 0)),
            pl.BlockSpec((1, N), lambda i, k: (0, 0)),
        ],
        out_specs=pl.BlockSpec((tm, N), lambda i, k: (i, 0)),
        scratch_shapes=[pltpu.VMEM((tm, N), jnp.float32)],
        compiler_params=pltpu.CompilerParams(
            dimension_semantics=("parallel", "arbitrary"),
            vmem_limit_bytes=_VMEM_LIMIT),
    )(x, w, b.reshape(1, N), res, gamma.reshape(1, N), beta.reshape(1, N))


# ------------------------------- attention ---------------------------------

def _attn_kernel(qkv_ref, o_ref, *, nhead, scale):
    x = qkv_ref[0]                                  # (S, 3E) f32
    S, E3 = x.shape
    E = E3 // 3
    hd = E // nhead
    outs = []
    # TODO(synk): for large S switch to a flash-style online-softmax loop over
    # KV tiles (m/l/acc scratch) so VMEM is O(S*hd) instead of O(S^2).
    for h in range(nhead):
        q = x[:, h * hd:(h + 1) * hd].astype(jnp.bfloat16)           # (S, hd)
        kh = x[:, E + h * hd:E + (h + 1) * hd].astype(jnp.bfloat16)
        vh = x[:, 2 * E + h * hd:2 * E + (h + 1) * hd].astype(jnp.bfloat16)
        # q @ k^T via dot_general (contract head dim) -> lane-dense (S, S)
        s = jax.lax.dot_general(q, kh, (((1,), (1,)), ((), ())),
                                preferred_element_type=jnp.float32) * scale
        m = jnp.max(s, axis=-1, keepdims=True)
        e = jnp.exp(s - m)
        p = e * pl.reciprocal(jnp.sum(e, axis=-1, keepdims=True), approx=True)
        outs.append(jax.lax.dot_general(p.astype(jnp.bfloat16), vh,
                                        (((1,), (0,)), ((), ())),
                                        preferred_element_type=jnp.float32))
    o_ref[0] = jnp.concatenate(outs, axis=-1).astype(o_ref.dtype)


def multihead_attention(qkv, nhead, scale):
    """qkv: (B, S, 3E) fused projection -> (B, S, E) attention output."""
    B, S, E3 = qkv.shape
    E = E3 // 3
    kernel = functools.partial(_attn_kernel, nhead=nhead, scale=scale)
    return pl.pallas_call(
        kernel,
        out_shape=jax.ShapeDtypeStruct((B, S, E), jnp.float32),
        grid=(B,),
        in_specs=[pl.BlockSpec((1, S, E3), lambda b: (b, 0, 0))],
        out_specs=pl.BlockSpec((1, S, E), lambda b: (b, 0, 0)),
        compiler_params=pltpu.CompilerParams(
            dimension_semantics=("parallel",),
            vmem_limit_bytes=_VMEM_LIMIT),
    )(qkv)


# ----------------------------- model pieces -------------------------------

def _im2col_3d(x_pad, D, H, W):
    # x_pad: (N, D+2, H+2, W+2, C) -> (N, D, H, W, 27*C); pure layout glue.
    cols = []
    for kd in range(3):
        for kh in range(3):
            for kw in range(3):
                cols.append(x_pad[:, kd:kd + D, kh:kh + H, kw:kw + W, :])
    return jnp.concatenate(cols, axis=-1)


def conv3d_relu(x, w2, b, add=None):
    """3x3x3 conv, padding=1, + ReLU (+ optional fused add, e.g. pos-enc).
    x:(N,D,H,W,Cin); w2:(27*Cin,Cout) already in (kd,kh,kw,Cin)->Cout order."""
    N, D, H, W, Cin = x.shape
    Cout = w2.shape[1]
    xp = jnp.pad(x, ((0, 0), (1, 1), (1, 1), (1, 1), (0, 0)))
    # TODO(synk): fuse im2col into the GEMM kernel (27 shifted-window matmuls
    # over a VMEM-resident padded tile) so the 27x patches tensor never
    # round-trips HBM; kept as XLA-side layout glue here for lowering safety.
    patches = _im2col_3d(xp, D, H, W).reshape(N * D * H * W, 27 * Cin)
    y = matmul_bias(patches, w2, b, activation="relu", add=add)
    return y.reshape(N, D, H, W, Cout)


def positional_encoding(seq_len, d_model):
    position = jnp.arange(seq_len, dtype=jnp.float32)[:, None]
    div_term = jnp.exp(jnp.arange(0, d_model, 2, dtype=jnp.float32)
                       * (-math.log(10000.0) / d_model))
    pe = jnp.zeros((seq_len, d_model), jnp.float32)
    pe = pe.at[:, 0::2].set(jnp.sin(position * div_term))
    pe = pe.at[:, 1::2].set(jnp.cos(position * div_term))
    return pe


def transformer_layer(x_flat, p, B, S, E, nhead, eps=1e-5):
    """Post-norm nn.TransformerEncoderLayer (batch_first, relu, no dropout).
    x_flat: (B*S, E) -> (B*S, E)."""
    hd = E // nhead
    qkv = matmul_bias(x_flat, p["in_w"], p["in_b"])              # (B*S, 3E)
    attn = multihead_attention(qkv.reshape(B, S, 3 * E), nhead,
                               scale=1.0 / math.sqrt(hd))        # (B, S, E)
    # out-projection + residual + LayerNorm fused in one kernel
    x1 = matmul_bias_residual_layernorm(attn.reshape(B * S, E),
                                        p["out_w"], p["out_b"],
                                        x_flat, p["ln1_g"], p["ln1_b"], eps)
    ff = matmul_bias(x1, p["ff1_w"], p["ff1_b"], activation="relu")
    # FFN-2 + residual + LayerNorm fused in one kernel
    x2 = matmul_bias_residual_layernorm(ff, p["ff2_w"], p["ff2_b"],
                                        x1, p["ln2_g"], p["ln2_b"], eps)
    return x2


def conv3d_transformer2_forward(x, params, *, embed_dim, nhead):
    B, T, V, D, H, W = x.shape
    num_tokens = D * H * W
    S = T * num_tokens

    # (B,T,V,D,H,W) -> (B*T, D, H, W, V)  (channels-last for the conv GEMMs)
    xc = x.reshape(B * T, V, D, H, W).transpose(0, 2, 3, 4, 1)
    h1 = conv3d_relu(xc, params["conv1_w"], params["conv1_b"])

    # Fuse the positional-encoding add into conv2's epilogue: GEMM row r of
    # conv2 is token (b, t, d, h, w) == sequence position r % S of batch r//S.
    pe_rows = jnp.tile(positional_encoding(S, embed_dim), (B, 1))    # (B*S, E)
    h2 = conv3d_relu(h1, params["conv2_w"], params["conv2_b"], add=pe_rows)

    seq = h2.reshape(B * S, embed_dim)                               # (B*S, E)
    for layer_params in params["layers"]:
        seq = transformer_layer(seq, layer_params, B, S, embed_dim, nhead)

    last = seq.reshape(B, S, embed_dim)[:, -num_tokens:, :]
    last = last.reshape(B * num_tokens, embed_dim)
    out = matmul_bias(last, params["final_w"], params["final_b"])    # (B*DHW, V)
    out = out.reshape(B, D, H, W, V).transpose(0, 4, 1, 2, 3)        # (B,V,D,H,W)
    return out


# --------------------------- deterministic init ----------------------------
# Weights are stored pre-transposed / pre-reshaped so the jitted forward never
# transposes a weight:
#   linears: (in_features, out_features)   (== PyTorch weight.T)
#   convs:   (27*Cin, Cout) with row order (kd, kh, kw, Cin) matching im2col.

def init_params(key, V, E, num_layers, FF):
    n_rand = 4 + num_layers * 8 + 2
    keys = iter(jax.random.split(key, n_rand))

    def norm(shape, scale=0.05):
        return scale * jax.random.normal(next(keys), shape, dtype=jnp.float32)

    params = {
        "conv1_w": norm((27 * V, E // 2)),
        "conv1_b": norm((E // 2,)),
        "conv2_w": norm((27 * (E // 2), E)),
        "conv2_b": norm((E,)),
        "layers": [],
    }
    for _ in range(num_layers):
        params["layers"].append({
            "in_w": norm((E, 3 * E)),      # fused q,k,v projection
            "in_b": norm((3 * E,)),
            "out_w": norm((E, E)),
            "out_b": norm((E,)),
            "ff1_w": norm((E, FF)),
            "ff1_b": norm((FF,)),
            "ff2_w": norm((FF, E)),
            "ff2_b": norm((E,)),
            "ln1_g": jnp.ones((E,), jnp.float32),
            "ln1_b": jnp.zeros((E,), jnp.float32),
            "ln2_g": jnp.ones((E,), jnp.float32),
            "ln2_b": jnp.zeros((E,), jnp.float32),
        })
    params["final_w"] = norm((E, V))
    params["final_b"] = norm((V,))
    return params


# --------------------------------- main ------------------------------------

if __name__ == "__main__":
    B, T, V, D, H, W = 2, 2, 3, 4, 4, 4
    EMBED_DIM, NHEAD, NUM_LAYERS, DIM_FF = 32, 4, 2, 64

    key = jax.random.PRNGKey(0)
    kx, kp = jax.random.split(key)
    x = jax.random.normal(kx, (B, T, V, D, H, W), dtype=jnp.float32)
    params = init_params(kp, V, EMBED_DIM, NUM_LAYERS, DIM_FF)

    fwd = jax.jit(functools.partial(conv3d_transformer2_forward,
                                    embed_dim=EMBED_DIM, nhead=NHEAD))
    out = fwd(x, params)
    jax.block_until_ready(out)
    assert out.shape == (B, V, D, H, W), out.shape
    assert bool(jnp.all(jnp.isfinite(out)))
    print("KERNEL_OK")
</pallas_src>

<mosaic_0001>
module attributes {stable_mosaic.version = 11 : i64} {
  func.func @_mm_bias_kernel(%arg0: i32, %arg1: i32, %arg2: i32, %arg3: memref<128x81xf32, #tpu.memory_space<vmem>>, %arg4: memref<81x16xf32, #tpu.memory_space<vmem>>, %arg5: memref<1x16xf32, #tpu.memory_space<vmem>>, %arg6: memref<128x16xf32, #tpu.memory_space<vmem>>, %arg7: memref<128x16xf32, #tpu.memory_space<vmem>>) attributes {dimension_semantics = [#tpu.dimension_semantics<parallel>, #tpu.dimension_semantics<parallel>, #tpu.dimension_semantics<arbitrary>], iteration_bounds = array<i64: 2, 1, 1>, scalar_prefetch = 0 : i64, scratch_operands = 1 : i64, tpu.core_type = #tpu.core_type<tc>, window_params = [{transform_indices = @transform_0, window_bounds = array<i64: 128, 81>}, {transform_indices = @transform_1, window_bounds = array<i64: 81, 16>}, {transform_indices = @transform_2, window_bounds = array<i64: 1, 16>}, {transform_indices = @transform_3, window_bounds = array<i64: 128, 16>}]} {
    %c0_i32 = arith.constant 0 : i32
    %0 = arith.cmpi eq, %arg2, %c0_i32 : i32
    %1 = arith.extui %0 : i1 to i32
    %c0_i32_0 = arith.constant 0 : i32
    %2 = arith.cmpi ne, %1, %c0_i32_0 : i32
    scf.if %2 {
      %cst_10 = arith.constant 0.000000e+00 : f32
      %14 = vector.broadcast %cst_10 : f32 to vector<128x16xf32>
      %c0_11 = arith.constant 0 : index
      %c0_12 = arith.constant 0 : index
      %15 = vector.load %arg7[%c0_11, %c0_12] : memref<128x16xf32, #tpu.memory_space<vmem>>, vector<128x16xf32>
      tpu.vector_store %arg7[%c0_11, %c0_12], %14 {strides = array<i32>} : memref<128x16xf32, #tpu.memory_space<vmem>>, vector<128x16xf32>,
    } else {
    }
    %c0 = arith.constant 0 : index
    %c0_1 = arith.constant 0 : index
    %3 = vector.load %arg7[%c0, %c0_1] : memref<128x16xf32, #tpu.memory_space<vmem>>, vector<128x16xf32>
    %c0_2 = arith.constant 0 : index
    %c0_3 = arith.constant 0 : index
    %4 = vector.load %arg3[%c0_2, %c0_3] : memref<128x81xf32, #tpu.memory_space<vmem>>, vector<128x81xf32>
    %5 = arith.truncf %4 : vector<128x81xf32> to vector<128x81xbf16>
    %c0_4 = arith.constant 0 : index
    %c0_5 = arith.constant 0 : index
    %6 = vector.load %arg4[%c0_4, %c0_5] : memref<81x16xf32, #tpu.memory_space<vmem>>, vector<81x16xf32>
    %7 = arith.truncf %6 : vector<81x16xf32> to vector<81x16xbf16>
    %cst = arith.constant dense<0.000000e+00> : vector<128x16xf32>
    %8 = tpu.matmul %5, %7, %cst {dimension_numbers = #tpu.dot_dimension_numbers<[1], [0], [0], [1], [0, 0, 1, 1], [], []>} : vector<128x81xbf16>, vector<81x16xbf16>, vector<128x16xf32> -> vector<128x16xf32>
    %9 = arith.addf %3, %8 : vector<128x16xf32>
    %c0_6 = arith.constant 0 : index
    %c0_7 = arith.constant 0 : index
    %10 = vector.load %arg7[%c0_6, %c0_7] : memref<128x16xf32, #tpu.memory_space<vmem>>, vector<128x16xf32>
    tpu.vector_store %arg7[%c0_6, %c0_7], %9 {strides = array<i32>} : memref<128x16xf32, #tpu.memory_space<vmem>>, vector<128x16xf32>,
    %c0_i32_8 = arith.constant 0 : i32
    %11 = arith.cmpi eq, %arg2, %c0_i32_8 : i32
    %12 = arith.extui %11 : i1 to i32
    %c0_i32_9 = arith.constant 0 : i32
    %13 = arith.cmpi ne, %12, %c0_i32_9 : i32
    scf.if %13 {
      %c0_10 = arith.constant 0 : index
      %c0_11 = arith.constant 0 : index
      %14 = vector.load %arg7[%c0_10, %c0_11] : memref<128x16xf32, #tpu.memory_space<vmem>>, vector<128x16xf32>
      %c0_12 = arith.constant 0 : index
      %c0_13 = arith.constant 0 : index
      %15 = vector.load %arg5[%c0_12, %c0_13] : memref<1x16xf32, #tpu.memory_space<vmem>>, vector<1x16xf32>
      %16 = vector.broadcast %15 : vector<1x16xf32> to vector<128x16xf32>
      %17 = arith.addf %14, %16 : vector<128x16xf32>
      %cst_14 = arith.constant 0.000000e+00 : f32
      %18 = vector.broadcast %cst_14 : f32 to vector<128x16xf32>
      %19 = arith.maximumf %17, %18 : vector<128x16xf32>
      %c0_15 = arith.constant 0 : index
      %c0_16 = arith.constant 0 : index
      %20 = vector.load %arg6[%c0_15, %c0_16] : memref<128x16xf32, #tpu.memory_space<vmem>>, vector<128x16xf32>
      tpu.vector_store %arg6[%c0_15, %c0_16], %19 {strides = array<i32>} : memref<128x16xf32, #tpu.memory_space<vmem>>, vector<128x16xf32>,
    } else {
    }
    return
  }
  func.func @transform_0(%arg0: i32, %arg1: i32, %arg2: i32) -> (i32, i32) {
    %c0_i32 = arith.constant 0 : i32
    return %arg0, %arg2 : i32, i32
  }
  func.func @transform_1(%arg0: i32, %arg1: i32, %arg2: i32) -> (i32, i32) {
    %c0_i32 = arith.constant 0 : i32
    return %arg2, %arg1 : i32, i32
  }
  func.func @transform_2(%arg0: i32, %arg1: i32, %arg2: i32) -> (i32, i32) {
    %c0_i32 = arith.constant 0 : i32
    %c0_i32_0 = arith.constant 0 : i32
    return %c0_i32, %arg1 : i32, i32
  }
  func.func @transform_3(%arg0: i32, %arg1: i32, %arg2: i32) -> (i32, i32) {
    %c0_i32 = arith.constant 0 : i32
    return %arg0, %arg1 : i32, i32
  }
}

module attributes {stable_mosaic.version = 11 : i64} {
  func.func @_mm_bias_kernel(%arg0: i32, %arg1: i32, %arg2: i32, %arg3: memref<128x432xf32, #tpu.memory_space<vmem>>, %arg4: memref<432x32xf32, #tpu.memory_space<vmem>>, %arg5: memref<1x32xf32, #tpu.memory_space<vmem>>, %arg6: memref<128x32xf32, #tpu.memory_space<vmem>>, %arg7: memref<128x32xf32, #tpu.memory_space<vmem>>, %arg8: memref<128x32xf32, #tpu.memory_space<vmem>>) attributes {dimension_semantics = [#tpu.dimension_semantics<parallel>, #tpu.dimension_semantics<parallel>, #tpu.dimension_semantics<arbitrary>], iteration_bounds = array<i64: 2, 1, 1>, scalar_prefetch = 0 : i64, scratch_operands = 1 : i64, tpu.core_type = #tpu.core_type<tc>, window_params = [{transform_indices = @transform_0, window_bounds = array<i64: 128, 432>}, {transform_indices = @transform_1, window_bounds = array<i64: 432, 32>}, {transform_indices = @transform_2, window_bounds = array<i64: 1, 32>}, {transform_indices = @transform_3, window_bounds = array<i64: 128, 32>}, {transform_indices = @transform_4, window_bounds = array<i64: 128, 32>}]} {
    %c0_i32 = arith.constant 0 : i32
    %0 = arith.cmpi eq, %arg2, %c0_i32 : i32
    %1 = arith.extui %0 : i1 to i32
    %c0_i32_0 = arith.constant 0 : i32
    %2 = arith.cmpi ne, %1, %c0_i32_0 : i32
    scf.if %2 {
      %cst_10 = arith.constant 0.000000e+00 : f32
      %14 = vector.broadcast %cst_10 : f32 to vector<128x32xf32>
      %c0_11 = arith.constant 0 : index
      %c0_12 = arith.constant 0 : index
      %15 = vector.load %arg8[%c0_11, %c0_12] : memref<128x32xf32, #tpu.memory_space<vmem>>, vector<128x32xf32>
      tpu.vector_store %arg8[%c0_11, %c0_12], %14 {strides = array<i32>} : memref<128x32xf32, #tpu.memory_space<vmem>>, vector<128x32xf32>,
    } else {
    }
    %c0 = arith.constant 0 : index
    %c0_1 = arith.constant 0 : index
    %3 = vector.load %arg8[%c0, %c0_1] : memref<128x32xf32, #tpu.memory_space<vmem>>, vector<128x32xf32>
    %c0_2 = arith.constant 0 : index
    %c0_3 = arith.constant 0 : index
    %4 = vector.load %arg3[%c0_2, %c0_3] : memref<128x432xf32, #tpu.memory_space<vmem>>, vector<128x432xf32>
    %5 = arith.truncf %4 : vector<128x432xf32> to vector<128x432xbf16>
    %c0_4 = arith.constant 0 : index
    %c0_5 = arith.constant 0 : index
    %6 = vector.load %arg4[%c0_4, %c0_5] : memref<432x32xf32, #tpu.memory_space<vmem>>, vector<432x32xf32>
    %7 = arith.truncf %6 : vector<432x32xf32> to vector<432x32xbf16>
    %cst = arith.constant dense<0.000000e+00> : vector<128x32xf32>
    %8 = tpu.matmul %5, %7, %cst {dimension_numbers = #tpu.dot_dimension_numbers<[1], [0], [0], [1], [0, 0, 1, 1], [], []>} : vector<128x432xbf16>, vector<432x32xbf16>, vector<128x32xf32> -> vector<128x32xf32>
    %9 = arith.addf %3, %8 : vector<128x32xf32>
    %c0_6 = arith.constant 0 : index
    %c0_7 = arith.constant 0 : index
    %10 = vector.load %arg8[%c0_6, %c0_7] : memref<128x32xf32, #tpu.memory_space<vmem>>, vector<128x32xf32>
    tpu.vector_store %arg8[%c0_6, %c0_7], %9 {strides = array<i32>} : memref<128x32xf32, #tpu.memory_space<vmem>>, vector<128x32xf32>,
    %c0_i32_8 = arith.constant 0 : i32
    %11 = arith.cmpi eq, %arg2, %c0_i32_8 : i32
    %12 = arith.extui %11 : i1 to i32
    %c0_i32_9 = arith.constant 0 : i32
    %13 = arith.cmpi ne, %12, %c0_i32_9 : i32
    scf.if %13 {
      %c0_10 = arith.constant 0 : index
      %c0_11 = arith.constant 0 : index
      %14 = vector.load %arg8[%c0_10, %c0_11] : memref<128x32xf32, #tpu.memory_space<vmem>>, vector<128x32xf32>
      %c0_12 = arith.constant 0 : index
      %c0_13 = arith.constant 0 : index
      %15 = vector.load %arg5[%c0_12, %c0_13] : memref<1x32xf32, #tpu.memory_space<vmem>>, vector<1x32xf32>
      %16 = vector.broadcast %15 : vector<1x32xf32> to vector<128x32xf32>
      %17 = arith.addf %14, %16 : vector<128x32xf32>
      %cst_14 = arith.constant 0.000000e+00 : f32
      %18 = vector.broadcast %cst_14 : f32 to vector<128x32xf32>
      %19 = arith.maximumf %17, %18 : vector<128x32xf32>
      %c0_15 = arith.constant 0 : index
      %c0_16 = arith.constant 0 : index
      %20 = vector.load %arg6[%c0_15, %c0_16] : memref<128x32xf32, #tpu.memory_space<vmem>>, vector<128x32xf32>
      %21 = arith.addf %19, %20 : vector<128x32xf32>
      %c0_17 = arith.constant 0 : index
      %c0_18 = arith.constant 0 : index
      %22 = vector.load %arg7[%c0_17, %c0_18] : memref<128x32xf32, #tpu.memory_space<vmem>>, vector<128x32xf32>
      tpu.vector_store %arg7[%c0_17, %c0_18], %21 {strides = array<i32>} : memref<128x32xf32, #tpu.memory_space<vmem>>, vector<128x32xf32>,
    } else {
    }
    return
  }
  func.func @transform_0(%arg0: i32, %arg1: i32, %arg2: i32) -> (i32, i32) {
    %c0_i32 = arith.constant 0 : i32
    return %arg0, %arg2 : i32, i32
  }
  func.func @transform_1(%arg0: i32, %arg1: i32, %arg2: i32) -> (i32, i32) {
    %c0_i32 = arith.constant 0 : i32
    return %arg2, %arg1 : i32, i32
  }
  func.func @transform_2(%arg0: i32, %arg1: i32, %arg2: i32) -> (i32, i32) {
    %c0_i32 = arith.constant 0 : i32
    %c0_i32_0 = arith.constant 0 : i32
    return %c0_i32, %arg1 : i32, i32
  }
  func.func @transform_3(%arg0: i32, %arg1: i32, %arg2: i32) -> (i32, i32) {
    %c0_i32 = arith.constant 0 : i32
    return %arg0, %arg1 : i32, i32
  }
  func.func @transform_4(%arg0: i32, %arg1: i32, %arg2: i32) -> (i32, i32) {
    %c0_i32 = arith.constant 0 : i32
    return %arg0, %arg1 : i32, i32
  }
}

module attributes {stable_mosaic.version = 11 : i64} {
  func.func @_attn_kernel(%arg0: i32, %arg1: memref<1x128x96xf32, #tpu.memory_space<vmem>>, %arg2: memref<1x128x32xf32, #tpu.memory_space<vmem>>) attributes {dimension_semantics = [#tpu.dimension_semantics<parallel>], iteration_bounds = array<i64: 2>, scalar_prefetch = 0 : i64, scratch_operands = 0 : i64, tpu.core_type = #tpu.core_type<tc>, window_params = [{transform_indices = @transform_0, window_bounds = array<i64: 1, 128, 96>}, {transform_indices = @transform_1, window_bounds = array<i64: 1, 128, 32>}]} {
    %c0 = arith.constant 0 : index
    %c0_0 = arith.constant 0 : index
    %c0_1 = arith.constant 0 : index
    %0 = vector.load %arg1[%c0, %c0_0, %c0_1] : memref<1x128x96xf32, #tpu.memory_space<vmem>>, vector<1x128x96xf32>
    %1 = vector.shape_cast %0 : vector<1x128x96xf32> to vector<128x96xf32>
    %2 = vector.extract_strided_slice %1 {offsets = [0, 0], sizes = [128, 8], strides = [1, 1]} : vector<128x96xf32> to vector<128x8xf32>
    %3 = arith.truncf %2 : vector<128x8xf32> to vector<128x8xbf16>
    %4 = vector.extract_strided_slice %1 {offsets = [0, 32], sizes = [128, 8], strides = [1, 1]} : vector<128x96xf32> to vector<128x8xf32>
    %5 = arith.truncf %4 : vector<128x8xf32> to vector<128x8xbf16>
    %6 = vector.extract_strided_slice %1 {offsets = [0, 64], sizes = [128, 8], strides = [1, 1]} : vector<128x96xf32> to vector<128x8xf32>
    %7 = arith.truncf %6 : vector<128x8xf32> to vector<128x8xbf16>
    %cst = arith.constant dense<0.000000e+00> : vector<128x128xf32>
    %8 = tpu.matmul %3, %5, %cst {dimension_numbers = #tpu.dot_dimension_numbers<[1], [1], [0], [0], [0, 0, 1, 0], [], []>} : vector<128x8xbf16>, vector<128x8xbf16>, vector<128x128xf32> -> vector<128x128xf32>
    %cst_2 = arith.constant 0.353553385 : f32
    %9 = vector.broadcast %cst_2 : f32 to vector<128x128xf32>
    %10 = arith.mulf %8, %9 : vector<128x128xf32>
    %cst_3 = arith.constant dense<0xFF800000> : vector<128xf32>
    %11 = vector.multi_reduction <maximumf>, %10, %cst_3 [1] : vector<128x128xf32> to vector<128xf32>
    %12 = vector.shape_cast %11 : vector<128xf32> to vector<128x1xf32>
    %13 = vector.broadcast %12 : vector<128x1xf32> to vector<128x128xf32>
    %14 = arith.subf %10, %13 : vector<128x128xf32>
    %15 = math.exp %14 : vector<128x128xf32>
    %cst_4 = arith.constant dense<0.000000e+00> : vector<128xf32>
    %16 = vector.multi_reduction <add>, %15, %cst_4 [1] : vector<128x128xf32> to vector<128xf32>
    %17 = vector.shape_cast %16 : vector<128xf32> to vector<128x1xf32>
    %18 = tpu.reciprocal %17 {approx = true} : vector<128x1xf32> -> vector<128x1xf32>
    %19 = vector.broadcast %18 : vector<128x1xf32> to vector<128x128xf32>
    %20 = arith.mulf %15, %19 : vector<128x128xf32>
    %21 = arith.truncf %20 : vector<128x128xf32> to vector<128x128xbf16>
    %cst_5 = arith.constant dense<0.000000e+00> : vector<128x8xf32>
    %22 = tpu.matmul %21, %7, %cst_5 {dimension_numbers = #tpu.dot_dimension_numbers<[1], [0], [0], [1], [0, 0, 1, 1], [], []>} : vector<128x128xbf16>, vector<128x8xbf16>, vector<128x8xf32> -> vector<128x8xf32>
    %23 = vector.extract_strided_slice %1 {offsets = [0, 8], sizes = [128, 8], strides = [1, 1]} : vector<128x96xf32> to vector<128x8xf32>
    %24 = arith.truncf %23 : vector<128x8xf32> to vector<128x8xbf16>
    %25 = vector.extract_strided_slice %1 {offsets = [0, 40], sizes = [128, 8], strides = [1, 1]} : vector<128x96xf32> to vector<128x8xf32>
    %26 = arith.truncf %25 : vector<128x8xf32> to vector<128x8xbf16>
    %27 = vector.extract_strided_slice %1 {offsets = [0, 72], sizes = [128, 8], strides = [1, 1]} : vector<128x96xf32> to vector<128x8xf32>
    %28 = arith.truncf %27 : vector<128x8xf32> to vector<128x8xbf16>
    %cst_6 = arith.constant dense<0.000000e+00> : vector<128x128xf32>
    %29 = tpu.matmul %24, %26, %cst_6 {dimension_numbers = #tpu.dot_dimension_numbers<[1], [1], [0], [0], [0, 0, 1, 0], [], []>} : vector<128x8xbf16>, vector<128x8xbf16>, vector<128x128xf32> -> vector<128x128xf32>
    %cst_7 = arith.constant 0.353553385 : f32
    %30 = vector.broadcast %cst_7 : f32 to vector<128x128xf32>
    %31 = arith.mulf %29, %30 : vector<128x128xf32>
    %cst_8 = arith.constant dense<0xFF800000> : vector<128xf32>
    %32 = vector.multi_reduction <maximumf>, %31, %cst_8 [1] : vector<128x128xf32> to vector<128xf32>
    %33 = vector.shape_cast %32 : vector<128xf32> to vector<128x1xf32>
    %34 = vector.broadcast %33 : vector<128x1xf32> to vector<128x128xf32>
    %35 = arith.subf %31, %34 : vector<128x128xf32>
    %36 = math.exp %35 : vector<128x128xf32>
    %cst_9 = arith.constant dense<0.000000e+00> : vector<128xf32>
    %37 = vector.multi_reduction <add>, %36, %cst_9 [1] : vector<128x128xf32> to vector<128xf32>
    %38 = vector.shape_cast %37 : vector<128xf32> to vector<128x1xf32>
    %39 = tpu.reciprocal %38 {approx = true} : vector<128x1xf32> -> vector<128x1xf32>
    %40 = vector.broadcast %39 : vector<128x1xf32> to vector<128x128xf32>
    %41 = arith.mulf %36, %40 : vector<128x128xf32>
    %42 = arith.truncf %41 : vector<128x128xf32> to vector<128x128xbf16>
    %cst_10 = arith.constant dense<0.000000e+00> : vector<128x8xf32>
    %43 = tpu.matmul %42, %28, %cst_10 {dimension_numbers = #tpu.dot_dimension_numbers<[1], [0], [0], [1], [0, 0, 1, 1], [], []>} : vector<128x128xbf16>, vector<128x8xbf16>, vector<128x8xf32> -> vector<128x8xf32>
    %44 = vector.extract_strided_slice %1 {offsets = [0, 16], sizes = [128, 8], strides = [1, 1]} : vector<128x96xf32> to vector<128x8xf32>
    %45 = arith.truncf %44 : vector<128x8xf32> to vector<128x8xbf16>
    %46 = vector.extract_strided_slice %1 {offsets = [0, 48], sizes = [128, 8], strides = [1, 1]} : vector<128x96xf32> to vector<128x8xf32>
    %47 = arith.truncf %46 : vector<128x8xf32> to vector<128x8xbf16>
    %48 = vector.extract_strided_slice %1 {offsets = [0, 80], sizes = [128, 8], strides = [1, 1]} : vector<128x96xf32> to vector<128x8xf32>
    %49 = arith.truncf %48 : vector<128x8xf32> to vector<128x8xbf16>
    %cst_11 = arith.constant dense<0.000000e+00> : vector<128x128xf32>
    %50 = tpu.matmul %45, %47, %cst_11 {dimension_numbers = #tpu.dot_dimension_numbers<[1], [1], [0], [0], [0, 0, 1, 0], [], []>} : vector<128x8xbf16>, vector<128x8xbf16>, vector<128x128xf32> -> vector<128x128xf32>
    %cst_12 = arith.constant 0.353553385 : f32
    %51 = vector.broadcast %cst_12 : f32 to vector<128x128xf32>
    %52 = arith.mulf %50, %51 : vector<128x128xf32>
    %cst_13 = arith.constant dense<0xFF800000> : vector<128xf32>
    %53 = vector.multi_reduction <maximumf>, %52, %cst_13 [1] : vector<128x128xf32> to vector<128xf32>
    %54 = vector.shape_cast %53 : vector<128xf32> to vector<128x1xf32>
    %55 = vector.broadcast %54 : vector<128x1xf32> to vector<128x128xf32>
    %56 = arith.subf %52, %55 : vector<128x128xf32>
    %57 = math.exp %56 : vector<128x128xf32>
    %cst_14 = arith.constant dense<0.000000e+00> : vector<128xf32>
    %58 = vector.multi_reduction <add>, %57, %cst_14 [1] : vector<128x128xf32> to vector<128xf32>
    %59 = vector.shape_cast %58 : vector<128xf32> to vector<128x1xf32>
    %60 = tpu.reciprocal %59 {approx = true} : vector<128x1xf32> -> vector<128x1xf32>
    %61 = vector.broadcast %60 : vector<128x1xf32> to vector<128x128xf32>
    %62 = arith.mulf %57, %61 : vector<128x128xf32>
    %63 = arith.truncf %62 : vector<128x128xf32> to vector<128x128xbf16>
    %cst_15 = arith.constant dense<0.000000e+00> : vector<128x8xf32>
    %64 = tpu.matmul %63, %49, %cst_15 {dimension_numbers = #tpu.dot_dimension_numbers<[1], [0], [0], [1], [0, 0, 1, 1], [], []>} : vector<128x128xbf16>, vector<128x8xbf16>, vector<128x8xf32> -> vector<128x8xf32>
    %65 = vector.extract_strided_slice %1 {offsets = [0, 24], sizes = [128, 8], strides = [1, 1]} : vector<128x96xf32> to vector<128x8xf32>
    %66 = arith.truncf %65 : vector<128x8xf32> to vector<128x8xbf16>
    %67 = vector.extract_strided_slice %1 {offsets = [0, 56], sizes = [128, 8], strides = [1, 1]} : vector<128x96xf32> to vector<128x8xf32>
    %68 = arith.truncf %67 : vector<128x8xf32> to vector<128x8xbf16>
    %69 = vector.extract_strided_slice %1 {offsets = [0, 88], sizes = [128, 8], strides = [1, 1]} : vector<128x96xf32> to vector<128x8xf32>
    %70 = arith.truncf %69 : vector<128x8xf32> to vector<128x8xbf16>
    %cst_16 = arith.constant dense<0.000000e+00> : vector<128x128xf32>
    %71 = tpu.matmul %66, %68, %cst_16 {dimension_numbers = #tpu.dot_dimension_numbers<[1], [1], [0], [0], [0, 0, 1, 0], [], []>} : vector<128x8xbf16>, vector<128x8xbf16>, vector<128x128xf32> -> vector<128x128xf32>
    %cst_17 = arith.constant 0.353553385 : f32
    %72 = vector.broadcast %cst_17 : f32 to vector<128x128xf32>
    %73 = arith.mulf %71, %72 : vector<128x128xf32>
    %cst_18 = arith.constant dense<0xFF800000> : vector<128xf32>
    %74 = vector.multi_reduction <maximumf>, %73, %cst_18 [1] : vector<128x128xf32> to vector<128xf32>
    %75 = vector.shape_cast %74 : vector<128xf32> to vector<128x1xf32>
    %76 = vector.broadcast %75 : vector<128x1xf32> to vector<128x128xf32>
    %77 = arith.subf %73, %76 : vector<128x128xf32>
    %78 = math.exp %77 : vector<128x128xf32>
    %cst_19 = arith.constant dense<0.000000e+00> : vector<128xf32>
    %79 = vector.multi_reduction <add>, %78, %cst_19 [1] : vector<128x128xf32> to vector<128xf32>
    %80 = vector.shape_cast %79 : vector<128xf32> to vector<128x1xf32>
    %81 = tpu.reciprocal %80 {approx = true} : vector<128x1xf32> -> vector<128x1xf32>
    %82 = vector.broadcast %81 : vector<128x1xf32> to vector<128x128xf32>
    %83 = arith.mulf %78, %82 : vector<128x128xf32>
    %84 = arith.truncf %83 : vector<128x128xf32> to vector<128x128xbf16>
    %cst_20 = arith.constant dense<0.000000e+00> : vector<128x8xf32>
    %85 = tpu.matmul %84, %70, %cst_20 {dimension_numbers = #tpu.dot_dimension_numbers<[1], [0], [0], [1], [0, 0, 1, 1], [], []>} : vector<128x128xbf16>, vector<128x8xbf16>, vector<128x8xf32> -> vector<128x8xf32>
    %86 = tpu.concatenate %22, %43, %64, %85 in 1 : vector<128x8xf32>, vector<128x8xf32>, vector<128x8xf32>, vector<128x8xf32> -> vector<128x32xf32>
    %c0_21 = arith.constant 0 : index
    %c0_22 = arith.constant 0 : index
    %c0_23 = arith.constant 0 : index
    %87 = vector.load %arg2[%c0_21, %c0_22, %c0_23] : memref<1x128x32xf32, #tpu.memory_space<vmem>>, vector<1x128x32xf32>
    %88 = vector.shape_cast %87 : vector<1x128x32xf32> to vector<128x32xf32>
    %89 = vector.shape_cast %86 : vector<128x32xf32> to vector<1x128x32xf32>
    tpu.vector_store %arg2[%c0_21, %c0_22, %c0_23], %89 {strides = array<i32>} : memref<1x128x32xf32, #tpu.memory_space<vmem>>, vector<1x128x32xf32>,
    return
  }
  func.func @transform_0(%arg0: i32) -> (i32, i32, i32) {
    %c0_i32 = arith.constant 0 : i32
    %c0_i32_0 = arith.constant 0 : i32
    %c0_i32_1 = arith.constant 0 : i32
    return %arg0, %c0_i32, %c0_i32_0 : i32, i32, i32
  }
  func.func @transform_1(%arg0: i32) -> (i32, i32, i32) {
    %c0_i32 = arith.constant 0 : i32
    %c0_i32_0 = arith.constant 0 : i32
    %c0_i32_1 = arith.constant 0 : i32
    return %arg0, %c0_i32, %c0_i32_0 : i32, i32, i32
  }
}

module attributes {stable_mosaic.version = 11 : i64} {
  func.func @_mm_bias_kernel(%arg0: i32, %arg1: i32, %arg2: i32, %arg3: memref<128x32xf32, #tpu.memory_space<vmem>>, %arg4: memref<32x96xf32, #tpu.memory_space<vmem>>, %arg5: memref<1x96xf32, #tpu.memory_space<vmem>>, %arg6: memref<128x96xf32, #tpu.memory_space<vmem>>, %arg7: memref<128x96xf32, #tpu.memory_space<vmem>>) attributes {dimension_semantics = [#tpu.dimension_semantics<parallel>, #tpu.dimension_semantics<parallel>, #tpu.dimension_semantics<arbitrary>], iteration_bounds = array<i64: 2, 1, 1>, scalar_prefetch = 0 : i64, scratch_operands = 1 : i64, tpu.core_type = #tpu.core_type<tc>, window_params = [{transform_indices = @transform_0, window_bounds = array<i64: 128, 32>}, {transform_indices = @transform_1, window_bounds = array<i64: 32, 96>}, {transform_indices = @transform_2, window_bounds = array<i64: 1, 96>}, {transform_indices = @transform_3, window_bounds = array<i64: 128, 96>}]} {
    %c0_i32 = arith.constant 0 : i32
    %0 = arith.cmpi eq, %arg2, %c0_i32 : i32
    %1 = arith.extui %0 : i1 to i32
    %c0_i32_0 = arith.constant 0 : i32
    %2 = arith.cmpi ne, %1, %c0_i32_0 : i32
    scf.if %2 {
      %cst_10 = arith.constant 0.000000e+00 : f32
      %14 = vector.broadcast %cst_10 : f32 to vector<128x96xf32>
      %c0_11 = arith.constant 0 : index
      %c0_12 = arith.constant 0 : index
      %15 = vector.load %arg7[%c0_11, %c0_12] : memref<128x96xf32, #tpu.memory_space<vmem>>, vector<128x96xf32>
      tpu.vector_store %arg7[%c0_11, %c0_12], %14 {strides = array<i32>} : memref<128x96xf32, #tpu.memory_space<vmem>>, vector<128x96xf32>,
    } else {
    }
    %c0 = arith.constant 0 : index
    %c0_1 = arith.constant 0 : index
    %3 = vector.load %arg7[%c0, %c0_1] : memref<128x96xf32, #tpu.memory_space<vmem>>, vector<128x96xf32>
    %c0_2 = arith.constant 0 : index
    %c0_3 = arith.constant 0 : index
    %4 = vector.load %arg3[%c0_2, %c0_3] : memref<128x32xf32, #tpu.memory_space<vmem>>, vector<128x32xf32>
    %5 = arith.truncf %4 : vector<128x32xf32> to vector<128x32xbf16>
    %c0_4 = arith.constant 0 : index
    %c0_5 = arith.constant 0 : index
    %6 = vector.load %arg4[%c0_4, %c0_5] : memref<32x96xf32, #tpu.memory_space<vmem>>, vector<32x96xf32>
    %7 = arith.truncf %6 : vector<32x96xf32> to vector<32x96xbf16>
    %cst = arith.constant dense<0.000000e+00> : vector<128x96xf32>
    %8 = tpu.matmul %5, %7, %cst {dimension_numbers = #tpu.dot_dimension_numbers<[1], [0], [0], [1], [0, 0, 1, 1], [], []>} : vector<128x32xbf16>, vector<32x96xbf16>, vector<128x96xf32> -> vector<128x96xf32>
    %9 = arith.addf %3, %8 : vector<128x96xf32>
    %c0_6 = arith.constant 0 : index
    %c0_7 = arith.constant 0 : index
    %10 = vector.load %arg7[%c0_6, %c0_7] : memref<128x96xf32, #tpu.memory_space<vmem>>, vector<128x96xf32>
    tpu.vector_store %arg7[%c0_6, %c0_7], %9 {strides = array<i32>} : memref<128x96xf32, #tpu.memory_space<vmem>>, vector<128x96xf32>,
    %c0_i32_8 = arith.constant 0 : i32
    %11 = arith.cmpi eq, %arg2, %c0_i32_8 : i32
    %12 = arith.extui %11 : i1 to i32
    %c0_i32_9 = arith.constant 0 : i32
    %13 = arith.cmpi ne, %12, %c0_i32_9 : i32
    scf.if %13 {
      %c0_10 = arith.constant 0 : index
      %c0_11 = arith.constant 0 : index
      %14 = vector.load %arg7[%c0_10, %c0_11] : memref<128x96xf32, #tpu.memory_space<vmem>>, vector<128x96xf32>
      %c0_12 = arith.constant 0 : index
      %c0_13 = arith.constant 0 : index
      %15 = vector.load %arg5[%c0_12, %c0_13] : memref<1x96xf32, #tpu.memory_space<vmem>>, vector<1x96xf32>
      %16 = vector.broadcast %15 : vector<1x96xf32> to vector<128x96xf32>
      %17 = arith.addf %14, %16 : vector<128x96xf32>
      %c0_14 = arith.constant 0 : index
      %c0_15 = arith.constant 0 : index
      %18 = vector.load %arg6[%c0_14, %c0_15] : memref<128x96xf32, #tpu.memory_space<vmem>>, vector<128x96xf32>
      tpu.vector_store %arg6[%c0_14, %c0_15], %17 {strides = array<i32>} : memref<128x96xf32, #tpu.memory_space<vmem>>, vector<128x96xf32>,
    } else {
    }
    return
  }
  func.func @transform_0(%arg0: i32, %arg1: i32, %arg2: i32) -> (i32, i32) {
    %c0_i32 = arith.constant 0 : i32
    return %arg0, %arg2 : i32, i32
  }
  func.func @transform_1(%arg0: i32, %arg1: i32, %arg2: i32) -> (i32, i32) {
    %c0_i32 = arith.constant 0 : i32
    return %arg2, %arg1 : i32, i32
  }
  func.func @transform_2(%arg0: i32, %arg1: i32, %arg2: i32) -> (i32, i32) {
    %c0_i32 = arith.constant 0 : i32
    %c0_i32_0 = arith.constant 0 : i32
    return %c0_i32, %arg1 : i32, i32
  }
  func.func @transform_3(%arg0: i32, %arg1: i32, %arg2: i32) -> (i32, i32) {
    %c0_i32 = arith.constant 0 : i32
    return %arg0, %arg1 : i32, i32
  }
}

module attributes {stable_mosaic.version = 11 : i64} {
  func.func @_mm_res_ln_kernel(%arg0: i32, %arg1: i32, %arg2: memref<128x32xf32, #tpu.memory_space<vmem>>, %arg3: memref<32x32xf32, #tpu.memory_space<vmem>>, %arg4: memref<1x32xf32, #tpu.memory_space<vmem>>, %arg5: memref<128x32xf32, #tpu.memory_space<vmem>>, %arg6: memref<1x32xf32, #tpu.memory_space<vmem>>, %arg7: memref<1x32xf32, #tpu.memory_space<vmem>>, %arg8: memref<128x32xf32, #tpu.memory_space<vmem>>, %arg9: memref<128x32xf32, #tpu.memory_space<vmem>>) attributes {dimension_semantics = [#tpu.dimension_semantics<parallel>, #tpu.dimension_semantics<arbitrary>], iteration_bounds = array<i64: 2, 1>, scalar_prefetch = 0 : i64, scratch_operands = 1 : i64, tpu.core_type = #tpu.core_type<tc>, window_params = [{transform_indices = @transform_0, window_bounds = array<i64: 128, 32>}, {transform_indices = @transform_1, window_bounds = array<i64: 32, 32>}, {pipeline_mode = #tpu.pipeline_mode<synchronous>, transform_indices = @transform_2, window_bounds = array<i64: 1, 32>}, {transform_indices = @transform_3, window_bounds = array<i64: 128, 32>}, {pipeline_mode = #tpu.pipeline_mode<synchronous>, transform_indices = @transform_4, window_bounds = array<i64: 1, 32>}, {pipeline_mode = #tpu.pipeline_mode<synchronous>, transform_indices = @transform_5, window_bounds = array<i64: 1, 32>}, {transform_indices = @transform_6, window_bounds = array<i64: 128, 32>}]} {
    %c0_i32 = arith.constant 0 : i32
    %0 = arith.cmpi eq, %arg1, %c0_i32 : i32
    %1 = arith.extui %0 : i1 to i32
    %c0_i32_0 = arith.constant 0 : i32
    %2 = arith.cmpi ne, %1, %c0_i32_0 : i32
    scf.if %2 {
      %cst_10 = arith.constant 0.000000e+00 : f32
      %14 = vector.broadcast %cst_10 : f32 to vector<128x32xf32>
      %c0_11 = arith.constant 0 : index
      %c0_12 = arith.constant 0 : index
      %15 = vector.load %arg9[%c0_11, %c0_12] : memref<128x32xf32, #tpu.memory_space<vmem>>, vector<128x32xf32>
      tpu.vector_store %arg9[%c0_11, %c0_12], %14 {strides = array<i32>} : memref<128x32xf32, #tpu.memory_space<vmem>>, vector<128x32xf32>,
    } else {
    }
    %c0 = arith.constant 0 : index
    %c0_1 = arith.constant 0 : index
    %3 = vector.load %arg9[%c0, %c0_1] : memref<128x32xf32, #tpu.memory_space<vmem>>, vector<128x32xf32>
    %c0_2 = arith.constant 0 : index
    %c0_3 = arith.constant 0 : index
    %4 = vector.load %arg2[%c0_2, %c0_3] : memref<128x32xf32, #tpu.memory_space<vmem>>, vector<128x32xf32>
    %5 = arith.truncf %4 : vector<128x32xf32> to vector<128x32xbf16>
    %c0_4 = arith.constant 0 : index
    %c0_5 = arith.constant 0 : index
    %6 = vector.load %arg3[%c0_4, %c0_5] : memref<32x32xf32, #tpu.memory_space<vmem>>, vector<32x32xf32>
    %7 = arith.truncf %6 : vector<32x32xf32> to vector<32x32xbf16>
    %cst = arith.constant dense<0.000000e+00> : vector<128x32xf32>
    %8 = tpu.matmul %5, %7, %cst {dimension_numbers = #tpu.dot_dimension_numbers<[1], [0], [0], [1], [0, 0, 1, 1], [], []>} : vector<128x32xbf16>, vector<32x32xbf16>, vector<128x32xf32> -> vector<128x32xf32>
    %9 = arith.addf %3, %8 : vector<128x32xf32>
    %c0_6 = arith.constant 0 : index
    %c0_7 = arith.constant 0 : index
    %10 = vector.load %arg9[%c0_6, %c0_7] : memref<128x32xf32, #tpu.memory_space<vmem>>, vector<128x32xf32>
    tpu.vector_store %arg9[%c0_6, %c0_7], %9 {strides = array<i32>} : memref<128x32xf32, #tpu.memory_space<vmem>>, vector<128x32xf32>,
    %c0_i32_8 = arith.constant 0 : i32
    %11 = arith.cmpi eq, %arg1, %c0_i32_8 : i32
    %12 = arith.extui %11 : i1 to i32
    %c0_i32_9 = arith.constant 0 : i32
    %13 = arith.cmpi ne, %12, %c0_i32_9 : i32
    scf.if %13 {
      %c0_10 = arith.constant 0 : index
      %c0_11 = arith.constant 0 : index
      %14 = vector.load %arg9[%c0_10, %c0_11] : memref<128x32xf32, #tpu.memory_space<vmem>>, vector<128x32xf32>
      %c0_12 = arith.constant 0 : index
      %c0_13 = arith.constant 0 : index
      %15 = vector.load %arg4[%c0_12, %c0_13] : memref<1x32xf32, #tpu.memory_space<vmem>>, vector<1x32xf32>
      %16 = vector.broadcast %15 : vector<1x32xf32> to vector<128x32xf32>
      %17 = arith.addf %14, %16 : vector<128x32xf32>
      %c0_14 = arith.constant 0 : index
      %c0_15 = arith.constant 0 : index
      %18 = vector.load %arg5[%c0_14, %c0_15] : memref<128x32xf32, #tpu.memory_space<vmem>>, vector<128x32xf32>
      %19 = arith.addf %17, %18 : vector<128x32xf32>
      %cst_16 = arith.constant dense<0.000000e+00> : vector<128xf32>
      %20 = vector.multi_reduction <add>, %19, %cst_16 [1] : vector<128x32xf32> to vector<128xf32>
      %21 = vector.shape_cast %20 : vector<128xf32> to vector<128x1xf32>
      %cst_17 = arith.constant 3.200000e+01 : f32
      %22 = vector.broadcast %cst_17 : f32 to vector<128x1xf32>
      %23 = arith.divf %21, %22 : vector<128x1xf32>
      %24 = vector.broadcast %23 : vector<128x1xf32> to vector<128x32xf32>
      %25 = arith.subf %19, %24 : vector<128x32xf32>
      %26 = arith.mulf %25, %25 : vector<128x32xf32>
      %cst_18 = arith.constant dense<0.000000e+00> : vector<128xf32>
      %27 = vector.multi_reduction <add>, %26, %cst_18 [1] : vector<128x32xf32> to vector<128xf32>
      %28 = vector.shape_cast %27 : vector<128xf32> to vector<128x1xf32>
      %cst_19 = arith.constant 3.200000e+01 : f32
      %29 = vector.broadcast %cst_19 : f32 to vector<128x1xf32>
      %30 = arith.divf %28, %29 : vector<128x1xf32>
      %cst_20 = arith.constant 9.99999974E-6 : f32
      %31 = vector.broadcast %cst_20 : f32 to vector<128x1xf32>
      %32 = arith.addf %30, %31 : vector<128x1xf32>
      %33 = math.rsqrt %32 : vector<128x1xf32>
      %34 = vector.broadcast %33 : vector<128x1xf32> to vector<128x32xf32>
      %35 = arith.mulf %25, %34 : vector<128x32xf32>
      %c0_21 = arith.constant 0 : index
      %c0_22 = arith.constant 0 : index
      %36 = vector.load %arg6[%c0_21, %c0_22] : memref<1x32xf32, #tpu.memory_space<vmem>>, vector<1x32xf32>
      %37 = vector.broadcast %36 : vector<1x32xf32> to vector<128x32xf32>
      %38 = arith.mulf %35, %37 : vector<128x32xf32>
      %c0_23 = arith.constant 0 : index
      %c0_24 = arith.constant 0 : index
      %39 = vector.load %arg7[%c0_23, %c0_24] : memref<1x32xf32, #tpu.memory_space<vmem>>, vector<1x32xf32>
      %40 = vector.broadcast %39 : vector<1x32xf32> to vector<128x32xf32>
      %41 = arith.addf %38, %40 : vector<128x32xf32>
      %c0_25 = arith.constant 0 : index
      %c0_26 = arith.constant 0 : index
      %42 = vector.load %arg8[%c0_25, %c0_26] : memref<128x32xf32, #tpu.memory_space<vmem>>, vector<128x32xf32>
      tpu.vector_store %arg8[%c0_25, %c0_26], %41 {strides = array<i32>} : memref<128x32xf32, #tpu.memory_space<vmem>>, vector<128x32xf32>,
    } else {
    }
    return
  }
  func.func @transform_0(%arg0: i32, %arg1: i32) -> (i32, i32) {
    %c0_i32 = arith.constant 0 : i32
    return %arg0, %arg1 : i32, i32
  }
  func.func @transform_1(%arg0: i32, %arg1: i32) -> (i32, i32) {
    %c0_i32 = arith.constant 0 : i32
    %c0_i32_0 = arith.constant 0 : i32
    return %arg1, %c0_i32 : i32, i32
  }
  func.func @transform_2(%arg0: i32, %arg1: i32) -> (i32, i32) {
    %c0_i32 = arith.constant 0 : i32
    %c0_i32_0 = arith.constant 0 : i32
    %c0_i32_1 = arith.constant 0 : i32
    return %c0_i32, %c0_i32_0 : i32, i32
  }
  func.func @transform_3(%arg0: i32, %arg1: i32) -> (i32, i32) {
    %c0_i32 = arith.constant 0 : i32
    %c0_i32_0 = arith.constant 0 : i32
    return %arg0, %c0_i32 : i32, i32
  }
  func.func @transform_4(%arg0: i32, %arg1: i32) -> (i32, i32) {
    %c0_i32 = arith.constant 0 : i32
    %c0_i32_0 = arith.constant 0 : i32
    %c0_i32_1 = arith.constant 0 : i32
    return %c0_i32, %c0_i32_0 : i32, i32
  }
  func.func @transform_5(%arg0: i32, %arg1: i32) -> (i32, i32) {
    %c0_i32 = arith.constant 0 : i32
    %c0_i32_0 = arith.constant 0 : i32
    %c0_i32_1 = arith.constant 0 : i32
    return %c0_i32, %c0_i32_0 : i32, i32
  }
  func.func @transform_6(%arg0: i32, %arg1: i32) -> (i32, i32) {
    %c0_i32 = arith.constant 0 : i32
    %c0_i32_0 = arith.constant 0 : i32
    return %arg0, %c0_i32 : i32, i32
  }
}

module attributes {stable_mosaic.version = 11 : i64} {
  func.func @_mm_bias_kernel(%arg0: i32, %arg1: i32, %arg2: i32, %arg3: memref<128x32xf32, #tpu.memory_space<vmem>>, %arg4: memref<32x64xf32, #tpu.memory_space<vmem>>, %arg5: memref<1x64xf32, #tpu.memory_space<vmem>>, %arg6: memref<128x64xf32, #tpu.memory_space<vmem>>, %arg7: memref<128x64xf32, #tpu.memory_space<vmem>>) attributes {dimension_semantics = [#tpu.dimension_semantics<parallel>, #tpu.dimension_semantics<parallel>, #tpu.dimension_semantics<arbitrary>], iteration_bounds = array<i64: 2, 1, 1>, scalar_prefetch = 0 : i64, scratch_operands = 1 : i64, tpu.core_type = #tpu.core_type<tc>, window_params = [{transform_indices = @transform_0, window_bounds = array<i64: 128, 32>}, {transform_indices = @transform_1, window_bounds = array<i64: 32, 64>}, {transform_indices = @transform_2, window_bounds = array<i64: 1, 64>}, {transform_indices = @transform_3, window_bounds = array<i64: 128, 64>}]} {
    %c0_i32 = arith.constant 0 : i32
    %0 = arith.cmpi eq, %arg2, %c0_i32 : i32
    %1 = arith.extui %0 : i1 to i32
    %c0_i32_0 = arith.constant 0 : i32
    %2 = arith.cmpi ne, %1, %c0_i32_0 : i32
    scf.if %2 {
      %cst_10 = arith.constant 0.000000e+00 : f32
      %14 = vector.broadcast %cst_10 : f32 to vector<128x64xf32>
      %c0_11 = arith.constant 0 : index
      %c0_12 = arith.constant 0 : index
      %15 = vector.load %arg7[%c0_11, %c0_12] : memref<128x64xf32, #tpu.memory_space<vmem>>, vector<128x64xf32>
      tpu.vector_store %arg7[%c0_11, %c0_12], %14 {strides = array<i32>} : memref<128x64xf32, #tpu.memory_space<vmem>>, vector<128x64xf32>,
    } else {
    }
    %c0 = arith.constant 0 : index
    %c0_1 = arith.constant 0 : index
    %3 = vector.load %arg7[%c0, %c0_1] : memref<128x64xf32, #tpu.memory_space<vmem>>, vector<128x64xf32>
    %c0_2 = arith.constant 0 : index
    %c0_3 = arith.constant 0 : index
    %4 = vector.load %arg3[%c0_2, %c0_3] : memref<128x32xf32, #tpu.memory_space<vmem>>, vector<128x32xf32>
    %5 = arith.truncf %4 : vector<128x32xf32> to vector<128x32xbf16>
    %c0_4 = arith.constant 0 : index
    %c0_5 = arith.constant 0 : index
    %6 = vector.load %arg4[%c0_4, %c0_5] : memref<32x64xf32, #tpu.memory_space<vmem>>, vector<32x64xf32>
    %7 = arith.truncf %6 : vector<32x64xf32> to vector<32x64xbf16>
    %cst = arith.constant dense<0.000000e+00> : vector<128x64xf32>
    %8 = tpu.matmul %5, %7, %cst {dimension_numbers = #tpu.dot_dimension_numbers<[1], [0], [0], [1], [0, 0, 1, 1], [], []>} : vector<128x32xbf16>, vector<32x64xbf16>, vector<128x64xf32> -> vector<128x64xf32>
    %9 = arith.addf %3, %8 : vector<128x64xf32>
    %c0_6 = arith.constant 0 : index
    %c0_7 = arith.constant 0 : index
    %10 = vector.load %arg7[%c0_6, %c0_7] : memref<128x64xf32, #tpu.memory_space<vmem>>, vector<128x64xf32>
    tpu.vector_store %arg7[%c0_6, %c0_7], %9 {strides = array<i32>} : memref<128x64xf32, #tpu.memory_space<vmem>>, vector<128x64xf32>,
    %c0_i32_8 = arith.constant 0 : i32
    %11 = arith.cmpi eq, %arg2, %c0_i32_8 : i32
    %12 = arith.extui %11 : i1 to i32
    %c0_i32_9 = arith.constant 0 : i32
    %13 = arith.cmpi ne, %12, %c0_i32_9 : i32
    scf.if %13 {
      %c0_10 = arith.constant 0 : index
      %c0_11 = arith.constant 0 : index
      %14 = vector.load %arg7[%c0_10, %c0_11] : memref<128x64xf32, #tpu.memory_space<vmem>>, vector<128x64xf32>
      %c0_12 = arith.constant 0 : index
      %c0_13 = arith.constant 0 : index
      %15 = vector.load %arg5[%c0_12, %c0_13] : memref<1x64xf32, #tpu.memory_space<vmem>>, vector<1x64xf32>
      %16 = vector.broadcast %15 : vector<1x64xf32> to vector<128x64xf32>
      %17 = arith.addf %14, %16 : vector<128x64xf32>
      %cst_14 = arith.constant 0.000000e+00 : f32
      %18 = vector.broadcast %cst_14 : f32 to vector<128x64xf32>
      %19 = arith.maximumf %17, %18 : vector<128x64xf32>
      %c0_15 = arith.constant 0 : index
      %c0_16 = arith.constant 0 : index
      %20 = vector.load %arg6[%c0_15, %c0_16] : memref<128x64xf32, #tpu.memory_space<vmem>>, vector<128x64xf32>
      tpu.vector_store %arg6[%c0_15, %c0_16], %19 {strides = array<i32>} : memref<128x64xf32, #tpu.memory_space<vmem>>, vector<128x64xf32>,
    } else {
    }
    return
  }
  func.func @transform_0(%arg0: i32, %arg1: i32, %arg2: i32) -> (i32, i32) {
    %c0_i32 = arith.constant 0 : i32
    return %arg0, %arg2 : i32, i32
  }
  func.func @transform_1(%arg0: i32, %arg1: i32, %arg2: i32) -> (i32, i32) {
    %c0_i32 = arith.constant 0 : i32
    return %arg2, %arg1 : i32, i32
  }
  func.func @transform_2(%arg0: i32, %arg1: i32, %arg2: i32) -> (i32, i32) {
    %c0_i32 = arith.constant 0 : i32
    %c0_i32_0 = arith.constant 0 : i32
    return %c0_i32, %arg1 : i32, i32
  }
  func.func @transform_3(%arg0: i32, %arg1: i32, %arg2: i32) -> (i32, i32) {
    %c0_i32 = arith.constant 0 : i32
    return %arg0, %arg1 : i32, i32
  }
}

module attributes {stable_mosaic.version = 11 : i64} {
  func.func @_mm_res_ln_kernel(%arg0: i32, %arg1: i32, %arg2: memref<128x64xf32, #tpu.memory_space<vmem>>, %arg3: memref<64x32xf32, #tpu.memory_space<vmem>>, %arg4: memref<1x32xf32, #tpu.memory_space<vmem>>, %arg5: memref<128x32xf32, #tpu.memory_space<vmem>>, %arg6: memref<1x32xf32, #tpu.memory_space<vmem>>, %arg7: memref<1x32xf32, #tpu.memory_space<vmem>>, %arg8: memref<128x32xf32, #tpu.memory_space<vmem>>, %arg9: memref<128x32xf32, #tpu.memory_space<vmem>>) attributes {dimension_semantics = [#tpu.dimension_semantics<parallel>, #tpu.dimension_semantics<arbitrary>], iteration_bounds = array<i64: 2, 1>, scalar_prefetch = 0 : i64, scratch_operands = 1 : i64, tpu.core_type = #tpu.core_type<tc>, window_params = [{transform_indices = @transform_0, window_bounds = array<i64: 128, 64>}, {transform_indices = @transform_1, window_bounds = array<i64: 64, 32>}, {pipeline_mode = #tpu.pipeline_mode<synchronous>, transform_indices = @transform_2, window_bounds = array<i64: 1, 32>}, {transform_indices = @transform_3, window_bounds = array<i64: 128, 32>}, {pipeline_mode = #tpu.pipeline_mode<synchronous>, transform_indices = @transform_4, window_bounds = array<i64: 1, 32>}, {pipeline_mode = #tpu.pipeline_mode<synchronous>, transform_indices = @transform_5, window_bounds = array<i64: 1, 32>}, {transform_indices = @transform_6, window_bounds = array<i64: 128, 32>}]} {
    %c0_i32 = arith.constant 0 : i32
    %0 = arith.cmpi eq, %arg1, %c0_i32 : i32
    %1 = arith.extui %0 : i1 to i32
    %c0_i32_0 = arith.constant 0 : i32
    %2 = arith.cmpi ne, %1, %c0_i32_0 : i32
    scf.if %2 {
      %cst_10 = arith.constant 0.000000e+00 : f32
      %14 = vector.broadcast %cst_10 : f32 to vector<128x32xf32>
      %c0_11 = arith.constant 0 : index
      %c0_12 = arith.constant 0 : index
      %15 = vector.load %arg9[%c0_11, %c0_12] : memref<128x32xf32, #tpu.memory_space<vmem>>, vector<128x32xf32>
      tpu.vector_store %arg9[%c0_11, %c0_12], %14 {strides = array<i32>} : memref<128x32xf32, #tpu.memory_space<vmem>>, vector<128x32xf32>,
    } else {
    }
    %c0 = arith.constant 0 : index
    %c0_1 = arith.constant 0 : index
    %3 = vector.load %arg9[%c0, %c0_1] : memref<128x32xf32, #tpu.memory_space<vmem>>, vector<128x32xf32>
    %c0_2 = arith.constant 0 : index
    %c0_3 = arith.constant 0 : index
    %4 = vector.load %arg2[%c0_2, %c0_3] : memref<128x64xf32, #tpu.memory_space<vmem>>, vector<128x64xf32>
    %5 = arith.truncf %4 : vector<128x64xf32> to vector<128x64xbf16>
    %c0_4 = arith.constant 0 : index
    %c0_5 = arith.constant 0 : index
    %6 = vector.load %arg3[%c0_4, %c0_5] : memref<64x32xf32, #tpu.memory_space<vmem>>, vector<64x32xf32>
    %7 = arith.truncf %6 : vector<64x32xf32> to vector<64x32xbf16>
    %cst = arith.constant dense<0.000000e+00> : vector<128x32xf32>
    %8 = tpu.matmul %5, %7, %cst {dimension_numbers = #tpu.dot_dimension_numbers<[1], [0], [0], [1], [0, 0, 1, 1], [], []>} : vector<128x64xbf16>, vector<64x32xbf16>, vector<128x32xf32> -> vector<128x32xf32>
    %9 = arith.addf %3, %8 : vector<128x32xf32>
    %c0_6 = arith.constant 0 : index
    %c0_7 = arith.constant 0 : index
    %10 = vector.load %arg9[%c0_6, %c0_7] : memref<128x32xf32, #tpu.memory_space<vmem>>, vector<128x32xf32>
    tpu.vector_store %arg9[%c0_6, %c0_7], %9 {strides = array<i32>} : memref<128x32xf32, #tpu.memory_space<vmem>>, vector<128x32xf32>,
    %c0_i32_8 = arith.constant 0 : i32
    %11 = arith.cmpi eq, %arg1, %c0_i32_8 : i32
    %12 = arith.extui %11 : i1 to i32
    %c0_i32_9 = arith.constant 0 : i32
    %13 = arith.cmpi ne, %12, %c0_i32_9 : i32
    scf.if %13 {
      %c0_10 = arith.constant 0 : index
      %c0_11 = arith.constant 0 : index
      %14 = vector.load %arg9[%c0_10, %c0_11] : memref<128x32xf32, #tpu.memory_space<vmem>>, vector<128x32xf32>
      %c0_12 = arith.constant 0 : index
      %c0_13 = arith.constant 0 : index
      %15 = vector.load %arg4[%c0_12, %c0_13] : memref<1x32xf32, #tpu.memory_space<vmem>>, vector<1x32xf32>
      %16 = vector.broadcast %15 : vector<1x32xf32> to vector<128x32xf32>
      %17 = arith.addf %14, %16 : vector<128x32xf32>
      %c0_14 = arith.constant 0 : index
      %c0_15 = arith.constant 0 : index
      %18 = vector.load %arg5[%c0_14, %c0_15] : memref<128x32xf32, #tpu.memory_space<vmem>>, vector<128x32xf32>
      %19 = arith.addf %17, %18 : vector<128x32xf32>
      %cst_16 = arith.constant dense<0.000000e+00> : vector<128xf32>
      %20 = vector.multi_reduction <add>, %19, %cst_16 [1] : vector<128x32xf32> to vector<128xf32>
      %21 = vector.shape_cast %20 : vector<128xf32> to vector<128x1xf32>
      %cst_17 = arith.constant 3.200000e+01 : f32
      %22 = vector.broadcast %cst_17 : f32 to vector<128x1xf32>
      %23 = arith.divf %21, %22 : vector<128x1xf32>
      %24 = vector.broadcast %23 : vector<128x1xf32> to vector<128x32xf32>
      %25 = arith.subf %19, %24 : vector<128x32xf32>
      %26 = arith.mulf %25, %25 : vector<128x32xf32>
      %cst_18 = arith.constant dense<0.000000e+00> : vector<128xf32>
      %27 = vector.multi_reduction <add>, %26, %cst_18 [1] : vector<128x32xf32> to vector<128xf32>
      %28 = vector.shape_cast %27 : vector<128xf32> to vector<128x1xf32>
      %cst_19 = arith.constant 3.200000e+01 : f32
      %29 = vector.broadcast %cst_19 : f32 to vector<128x1xf32>
      %30 = arith.divf %28, %29 : vector<128x1xf32>
      %cst_20 = arith.constant 9.99999974E-6 : f32
      %31 = vector.broadcast %cst_20 : f32 to vector<128x1xf32>
      %32 = arith.addf %30, %31 : vector<128x1xf32>
      %33 = math.rsqrt %32 : vector<128x1xf32>
      %34 = vector.broadcast %33 : vector<128x1xf32> to vector<128x32xf32>
      %35 = arith.mulf %25, %34 : vector<128x32xf32>
      %c0_21 = arith.constant 0 : index
      %c0_22 = arith.constant 0 : index
      %36 = vector.load %arg6[%c0_21, %c0_22] : memref<1x32xf32, #tpu.memory_space<vmem>>, vector<1x32xf32>
      %37 = vector.broadcast %36 : vector<1x32xf32> to vector<128x32xf32>
      %38 = arith.mulf %35, %37 : vector<128x32xf32>
      %c0_23 = arith.constant 0 : index
      %c0_24 = arith.constant 0 : index
      %39 = vector.load %arg7[%c0_23, %c0_24] : memref<1x32xf32, #tpu.memory_space<vmem>>, vector<1x32xf32>
      %40 = vector.broadcast %39 : vector<1x32xf32> to vector<128x32xf32>
      %41 = arith.addf %38, %40 : vector<128x32xf32>
      %c0_25 = arith.constant 0 : index
      %c0_26 = arith.constant 0 : index
      %42 = vector.load %arg8[%c0_25, %c0_26] : memref<128x32xf32, #tpu.memory_space<vmem>>, vector<128x32xf32>
      tpu.vector_store %arg8[%c0_25, %c0_26], %41 {strides = array<i32>} : memref<128x32xf32, #tpu.memory_space<vmem>>, vector<128x32xf32>,
    } else {
    }
    return
  }
  func.func @transform_0(%arg0: i32, %arg1: i32) -> (i32, i32) {
    %c0_i32 = arith.constant 0 : i32
    return %arg0, %arg1 : i32, i32
  }
  func.func @transform_1(%arg0: i32, %arg1: i32) -> (i32, i32) {
    %c0_i32 = arith.constant 0 : i32
    %c0_i32_0 = arith.constant 0 : i32
    return %arg1, %c0_i32 : i32, i32
  }
  func.func @transform_2(%arg0: i32, %arg1: i32) -> (i32, i32) {
    %c0_i32 = arith.constant 0 : i32
    %c0_i32_0 = arith.constant 0 : i32
    %c0_i32_1 = arith.constant 0 : i32
    return %c0_i32, %c0_i32_0 : i32, i32
  }
  func.func @transform_3(%arg0: i32, %arg1: i32) -> (i32, i32) {
    %c0_i32 = arith.constant 0 : i32
    %c0_i32_0 = arith.constant 0 : i32
    return %arg0, %c0_i32 : i32, i32
  }
  func.func @transform_4(%arg0: i32, %arg1: i32) -> (i32, i32) {
    %c0_i32 = arith.constant 0 : i32
    %c0_i32_0 = arith.constant 0 : i32
    %c0_i32_1 = arith.constant 0 : i32
    return %c0_i32, %c0_i32_0 : i32, i32
  }
  func.func @transform_5(%arg0: i32, %arg1: i32) -> (i32, i32) {
    %c0_i32 = arith.constant 0 : i32
    %c0_i32_0 = arith.constant 0 : i32
    %c0_i32_1 = arith.constant 0 : i32
    return %c0_i32, %c0_i32_0 : i32, i32
  }
  func.func @transform_6(%arg0: i32, %arg1: i32) -> (i32, i32) {
    %c0_i32 = arith.constant 0 : i32
    %c0_i32_0 = arith.constant 0 : i32
    return %arg0, %c0_i32 : i32, i32
  }
}

module attributes {stable_mosaic.version = 11 : i64} {
  func.func @_mm_bias_kernel(%arg0: i32, %arg1: i32, %arg2: i32, %arg3: memref<128x32xf32, #tpu.memory_space<vmem>>, %arg4: memref<32x3xf32, #tpu.memory_space<vmem>>, %arg5: memref<1x3xf32, #tpu.memory_space<vmem>>, %arg6: memref<128x3xf32, #tpu.memory_space<vmem>>, %arg7: memref<128x3xf32, #tpu.memory_space<vmem>>) attributes {dimension_semantics = [#tpu.dimension_semantics<parallel>, #tpu.dimension_semantics<parallel>, #tpu.dimension_semantics<arbitrary>], iteration_bounds = array<i64: 1, 1, 1>, scalar_prefetch = 0 : i64, scratch_operands = 1 : i64, tpu.core_type = #tpu.core_type<tc>, window_params = [{transform_indices = @transform_0, window_bounds = array<i64: 128, 32>}, {transform_indices = @transform_1, window_bounds = array<i64: 32, 3>}, {transform_indices = @transform_2, window_bounds = array<i64: 1, 3>}, {transform_indices = @transform_3, window_bounds = array<i64: 128, 3>}]} {
    %c0_i32 = arith.constant 0 : i32
    %0 = arith.cmpi eq, %arg2, %c0_i32 : i32
    %1 = arith.extui %0 : i1 to i32
    %c0_i32_0 = arith.constant 0 : i32
    %2 = arith.cmpi ne, %1, %c0_i32_0 : i32
    scf.if %2 {
      %cst_10 = arith.constant 0.000000e+00 : f32
      %14 = vector.broadcast %cst_10 : f32 to vector<128x3xf32>
      %c0_11 = arith.constant 0 : index
      %c0_12 = arith.constant 0 : index
      %15 = vector.load %arg7[%c0_11, %c0_12] : memref<128x3xf32, #tpu.memory_space<vmem>>, vector<128x3xf32>
      tpu.vector_store %arg7[%c0_11, %c0_12], %14 {strides = array<i32>} : memref<128x3xf32, #tpu.memory_space<vmem>>, vector<128x3xf32>,
    } else {
    }
    %c0 = arith.constant 0 : index
    %c0_1 = arith.constant 0 : index
    %3 = vector.load %arg7[%c0, %c0_1] : memref<128x3xf32, #tpu.memory_space<vmem>>, vector<128x3xf32>
    %c0_2 = arith.constant 0 : index
    %c0_3 = arith.constant 0 : index
    %4 = vector.load %arg3[%c0_2, %c0_3] : memref<128x32xf32, #tpu.memory_space<vmem>>, vector<128x32xf32>
    %5 = arith.truncf %4 : vector<128x32xf32> to vector<128x32xbf16>
    %c0_4 = arith.constant 0 : index
    %c0_5 = arith.constant 0 : index
    %6 = vector.load %arg4[%c0_4, %c0_5] : memref<32x3xf32, #tpu.memory_space<vmem>>, vector<32x3xf32>
    %7 = arith.truncf %6 : vector<32x3xf32> to vector<32x3xbf16>
    %cst = arith.constant dense<0.000000e+00> : vector<128x3xf32>
    %8 = tpu.matmul %5, %7, %cst {dimension_numbers = #tpu.dot_dimension_numbers<[1], [0], [0], [1], [0, 0, 1, 1], [], []>} : vector<128x32xbf16>, vector<32x3xbf16>, vector<128x3xf32> -> vector<128x3xf32>
    %9 = arith.addf %3, %8 : vector<128x3xf32>
    %c0_6 = arith.constant 0 : index
    %c0_7 = arith.constant 0 : index
    %10 = vector.load %arg7[%c0_6, %c0_7] : memref<128x3xf32, #tpu.memory_space<vmem>>, vector<128x3xf32>
    tpu.vector_store %arg7[%c0_6, %c0_7], %9 {strides = array<i32>} : memref<128x3xf32, #tpu.memory_space<vmem>>, vector<128x3xf32>,
    %c0_i32_8 = arith.constant 0 : i32
    %11 = arith.cmpi eq, %arg2, %c0_i32_8 : i32
    %12 = arith.extui %11 : i1 to i32
    %c0_i32_9 = arith.constant 0 : i32
    %13 = arith.cmpi ne, %12, %c0_i32_9 : i32
    scf.if %13 {
      %c0_10 = arith.constant 0 : index
      %c0_11 = arith.constant 0 : index
      %14 = vector.load %arg7[%c0_10, %c0_11] : memref<128x3xf32, #tpu.memory_space<vmem>>, vector<128x3xf32>
      %c0_12 = arith.constant 0 : index
      %c0_13 = arith.constant 0 : index
      %15 = vector.load %arg5[%c0_12, %c0_13] : memref<1x3xf32, #tpu.memory_space<vmem>>, vector<1x3xf32>
      %16 = vector.broadcast %15 : vector<1x3xf32> to vector<128x3xf32>
      %17 = arith.addf %14, %16 : vector<128x3xf32>
      %c0_14 = arith.constant 0 : index
      %c0_15 = arith.constant 0 : index
      %18 = vector.load %arg6[%c0_14, %c0_15] : memref<128x3xf32, #tpu.memory_space<vmem>>, vector<128x3xf32>
      tpu.vector_store %arg6[%c0_14, %c0_15], %17 {strides = array<i32>} : memref<128x3xf32, #tpu.memory_space<vmem>>, vector<128x3xf32>,
    } else {
    }
    return
  }
  func.func @transform_0(%arg0: i32, %arg1: i32, %arg2: i32) -> (i32, i32) {
    %c0_i32 = arith.constant 0 : i32
    return %arg0, %arg2 : i32, i32
  }
  func.func @transform_1(%arg0: i32, %arg1: i32, %arg2: i32) -> (i32, i32) {
    %c0_i32 = arith.constant 0 : i32
    return %arg2, %arg1 : i32, i32
  }
  func.func @transform_2(%arg0: i32, %arg1: i32, %arg2: i32) -> (i32, i32) {
    %c0_i32 = arith.constant 0 : i32
    %c0_i32_0 = arith.constant 0 : i32
    return %c0_i32, %arg1 : i32, i32
  }
  func.func @transform_3(%arg0: i32, %arg1: i32, %arg2: i32) -> (i32, i32) {
    %c0_i32 = arith.constant 0 : i32
    return %arg0, %arg1 : i32, i32
  }
}

</mosaic_0001>

<llo_original>
// kernel: conv3d_transformer2_forward.13
$region0: #{conv3d_transformer2_forward.13}
  #allocation0 [shape = 'u32[]', space=smem, size = 0x4, offset = 0x4, fixed_abs, tag = 'smem constant byte address 0x4 - core index']
  #allocation1 [shape = 'u32[144,128]{1,0:T(1,128)}', space=vmem, size = 0x12000, scoped, tag = 'internal scratch']
  #allocation2 [shape = 'f32[128,16]{1,0:T(8,128)}', space=vmem, size = 0x10000, scoped, tag = 'scratch operand']
  %s0 = inlined_call_operand.vmem [shape: f32[256,81], index: 0, kind: input, shape index: {}]
  %s1 = inlined_call_operand.vmem [shape: f32[81,16], index: 1, kind: input, shape index: {}]
  %s2 = inlined_call_operand.vmem [shape: f32[1,16], index: 2, kind: input, shape index: {}]
  %s3 = inlined_call_operand.vmem [shape: f32[256,16], index: 3, kind: output, shape index: {}]
  %s4 = sld [smem:[#allocation0]]
  $region53: #{conv3d_transformer2_forward.13} parent=0
    _
  %s6 = ssub.s32 1, %s4
  %s7 = scalar_select 0, %s6, %s4
  loop: start=0, step=1, limit=4
  $region2: #{conv3d_transformer2_forward.13} parent=0 // loop_pre_header
    _
  $region3: #{conv3d_transformer2_forward.13} parent=0 // loop_header
    %s9 = sphi 0, %s13
    %p10 = scmp.ge.s32.totalorder %s9, 4
    %s16 = sphi 0, %s35
    %s17 = sphi 0, %s31
    %s18 = sphi 0, %s27
    %s19 = sphi 0, %s16
    %s20 = sphi 0, %s17
    %s21 = sphi 0, %s18
    %s22 = sphi 0, %s19
    %s23 = sphi 0, %s20
    %s24 = sphi 0, %s21
    %s40 = sphi 0, %s42
    %s43 = sphi 0, %s40
    %s44 = sphi 0, %s43
    %s60 = sphi 0, %s44
    %s68 = sphi 0, %s70
    %s71 = sphi 0, %s68
    %s72 = sphi 0, %s71
    %s88 = sphi 0, %s72
    %s94 = sphi 0, %s96
    %s97 = sphi 0, %s94
    %s98 = sphi 0, %s97
    %s114 = sphi 0, %s98
    %s122 = sphi 0, %s124
    %s125 = sphi 0, %s122
    %s126 = sphi 0, %s125
    %s142 = sphi 0, %s126
  $region4: #{conv3d_transformer2_forward.13} parent=0 // loop_header_branch
    %12 = sbr.rel (%p10) target = $region8
  $region5: #{conv3d_transformer2_forward.13} parent=0 // loop_body
    %s14 = ssub.s32 %s9, 1
    %s15 = ssub.s32 %s9, 2
    %s25 = sadd.s32 1, %s18
    %p26 = scmp.ge.s32.totalorder %s25, 1
    %s27 = scalar_select %p26, 0, %s25
    %s28 = sadd.s32 1, %s17
    %s29 = scalar_select %p26, %s28, %s17
    %p30 = scmp.ge.s32.totalorder %s29, 1
    %s31 = scalar_select %p30, 0, %s29
    %s32 = sadd.s32 1, %s16
    %s33 = scalar_select %p30, %s32, %s16
    %p34 = scmp.ge.s32.totalorder %s33, 2
    %s35 = scalar_select %p34, 0, %s33
    %s36 = ssub.s32 %s16, %s35
    %s37 = ssub.s32 %s18, %s27
    %s38 = sor.u32 %s36, %s37
    %p39 = scmp.eq.s32.totalorder %s38, 0
    %s41 = sadd.s32 %s40, 1
    %s42 = scalar_select %p39, %s40, %s41
    %p45 = pneg %p39
    %p46 = scmp.eq.s32.totalorder %s9, 1
    %p47 = por %p45, %p46
    %p48 = scmp.ne.s32.totalorder %s40, %s43
    %p49 = scmp.eq.s32.totalorder %s9, 0
    %p50 = por %p48, %p49
    %p51 = scmp.ne.s32.totalorder %s40, %s43
    %p52 = scmp.eq.s32.totalorder %s14, 1
    %p53 = por %p51, %p52
    %p54 = scmp.ne.s32.totalorder %s43, %s44
    %p55 = scmp.eq.s32.totalorder %s14, 0
    %p56 = por %p54, %p55
    %p57 = scmp.ne.s32.totalorder %s43, %s44
    %p58 = scmp.eq.s32.totalorder %s15, 1
    %p59 = por %p57, %p58
    %p61 = scmp.ne.s32.totalorder %s44, %s60
    %p62 = scmp.eq.s32.totalorder %s15, 0
    %p63 = por %p61, %p62
    %s64 = ssub.s32 %s18, %s27
    %s65 = ssub.s32 %s17, %s31
    %s66 = sor.u32 %s64, %s65
    %p67 = scmp.eq.s32.totalorder %s66, 0
    %s69 = sadd.s32 %s68, 1
    %s70 = scalar_select %p67, %s68, %s69
    %p73 = pneg %p67
    %p74 = scmp.eq.s32.totalorder %s9, 1
    %p75 = por %p73, %p74
    %p76 = scmp.ne.s32.totalorder %s68, %s71
    %p77 = scmp.eq.s32.totalorder %s9, 0
    %p78 = por %p76, %p77
    %p79 = scmp.ne.s32.totalorder %s68, %s71
    %p80 = scmp.eq.s32.totalorder %s14, 1
    %p81 = por %p79, %p80
    %p82 = scmp.ne.s32.totalorder %s71, %s72
    %p83 = scmp.eq.s32.totalorder %s14, 0
    %p84 = por %p82, %p83
    %p85 = scmp.ne.s32.totalorder %s71, %s72
    %p86 = scmp.eq.s32.totalorder %s15, 1
    %p87 = por %p85, %p86
    %p89 = scmp.ne.s32.totalorder %s72, %s88
    %p90 = scmp.eq.s32.totalorder %s15, 0
    %p91 = por %p89, %p90
    %s92 = ssub.s32 %s17, %s31
    %p93 = scmp.eq.s32.totalorder %s92, 0
    %s95 = sadd.s32 %s94, 1
    %s96 = scalar_select %p93, %s94, %s95
    %p99 = pneg %p93
    %p100 = scmp.eq.s32.totalorder %s9, 1
    %p101 = por %p99, %p100
    %p102 = scmp.ne.s32.totalorder %s94, %s97
    %p103 = scmp.eq.s32.totalorder %s9, 0
    %p104 = por %p102, %p103
    %p105 = scmp.ne.s32.totalorder %s94, %s97
    %p106 = scmp.eq.s32.totalorder %s14, 1
    %p107 = por %p105, %p106
    %p108 = scmp.ne.s32.totalorder %s97, %s98
    %p109 = scmp.eq.s32.totalorder %s14, 0
    %p110 = por %p108, %p109
    %p111 = scmp.ne.s32.totalorder %s97, %s98
    %p112 = scmp.eq.s32.totalorder %s15, 1
    %p113 = por %p111, %p112
    %p115 = scmp.ne.s32.totalorder %s98, %s114
    %p116 = scmp.eq.s32.totalorder %s15, 0
    %p117 = por %p115, %p116
    %s118 = ssub.s32 %s16, %s35
    %s119 = ssub.s32 %s17, %s31
    %s120 = sor.u32 %s118, %s119
    %p121 = scmp.eq.s32.totalorder %s120, 0
    %s123 = sadd.s32 %s122, 1
    %s124 = scalar_select %p121, %s122, %s123
    %p127 = pneg %p121
    %p128 = scmp.eq.s32.totalorder %s9, 1
    %p129 = por %p127, %p128
    %p130 = scmp.ne.s32.totalorder %s122, %s125
    %p131 = scmp.eq.s32.totalorder %s9, 0
    %p132 = por %p130, %p131
    %p133 = scmp.ne.s32.totalorder %s122, %s125
    %p134 = scmp.eq.s32.totalorder %s14, 1
    %p135 = por %p133, %p134
    %p136 = scmp.ne.s32.totalorder %s125, %s126
    %p137 = scmp.eq.s32.totalorder %s14, 0
    %p138 = por %p136, %p137
    %p139 = scmp.ne.s32.totalorder %s125, %s126
    %p140 = scmp.eq.s32.totalorder %s15, 1
    %p141 = por %p139, %p140
    %p143 = scmp.ne.s32.totalorder %s126, %s142
    %p144 = scmp.eq.s32.totalorder %s15, 0
    %p145 = por %p143, %p144
    %p146 = scmp.le.s32.totalorder 1, %s9
    %p147 = scmp.lt.s32.totalorder %s9, 3
    %p148 = pnand %p146, %p147
    %p149 = pneg %p148
    // Predicated region
    $region9: #{conv3d_transformer2_forward.13} parent=5 // pred_check
      _
    $region10: #{conv3d_transformer2_forward.13} parent=5 // pred_check_branch
      %151 = sbr.rel (%p148) target = $region12
    $region11: #{conv3d_transformer2_forward.13} parent=5 // pred_region
      %s152 = ssub.s32 %s9, 1
      // Predicated region
      $region13: #{conv3d_transformer2_forward.13} parent=11 // pred_check
        %p153 = pneg %p84
      $region14: #{conv3d_transformer2_forward.13} parent=11 // pred_check_branch
        %155 = sbr.rel (%p153) target = $region16
      $region15: #{conv3d_transformer2_forward.13} parent=11 // pred_region
        %s156 = smul.u32 11, %s21
        %p157 = scmp.lt.s32.totalorder %s156, 10
        %s158 = scalar_select %p157, %s156, 10
        %p159 = scmp.lt.s32.totalorder %s20, 0
        %s160 = scalar_select %p159, %s20, 0
        %s161 = sadd.s32 %s160, %s158
        %s162 = smul.addr %s161, 8
        %s163 = scalar_lea.vmem %s1, %s162
        %s164 = smul.u32 11, %s21
      $region16: #{conv3d_transformer2_forward.13} parent=11 // pred_fallthru
        _
      // Predicated region
      $region17: #{conv3d_transformer2_forward.13} parent=11 // pred_check
        %p165 = pneg %p110
      $region18: #{conv3d_transformer2_forward.13} parent=11 // pred_check_branch
        %167 = sbr.rel (%p165) target = $region20
      $region19: #{conv3d_transformer2_forward.13} parent=11 // pred_region
        %p168 = scmp.lt.s32.totalorder %s20, 0
        %s169 = scalar_select %p168, %s20, 0
        %s170 = scalar_lea.vmem %s2, %s169
      $region20: #{conv3d_transformer2_forward.13} parent=11 // pred_fallthru
        _
    $region12: #{conv3d_transformer2_forward.13} parent=5 // pred_fallthru
      _
    %p171 = scmp.lt.s32.totalorder %s9, 2
    // Predicated region
    $region21: #{conv3d_transformer2_forward.13} parent=5 // pred_check
      %p172 = pneg %p171
    $region22: #{conv3d_transformer2_forward.13} parent=5 // pred_check_branch
      %174 = sbr.rel (%p172) target = $region24
    $region23: #{conv3d_transformer2_forward.13} parent=5 // pred_region
      // Predicated region
      $region25: #{conv3d_transformer2_forward.13} parent=23 // pred_check
        %p175 = pneg %p50
      $region26: #{conv3d_transformer2_forward.13} parent=23 // pred_check_branch
        %177 = sbr.rel (%p175) target = $region28
      $region27: #{conv3d_transformer2_forward.13} parent=23 // pred_region
        %s178 = smul.u32 16, %s16
        %p179 = scmp.lt.s32.totalorder %s178, 31
        %s180 = scalar_select %p179, %s178, 31
        %p181 = scmp.lt.s32.totalorder %s18, 0
        %s182 = scalar_select %p181, %s18, 0
        %s183 = sadd.s32 %s182, %s180
        %s184 = smul.addr %s183, 8
        %s185 = scalar_lea.vmem %s0, %s184
        %s186 = smul.u32 16, %s16
      $region28: #{conv3d_transformer2_forward.13} parent=23 // pred_fallthru
        _
    $region24: #{conv3d_transformer2_forward.13} parent=5 // pred_fallthru
      _
    %p187 = scmp.le.s32.totalorder 1, %s9
    %p188 = scmp.lt.s32.totalorder %s9, 3
    %p189 = pnand %p187, %p188
    %p190 = pneg %p189
    // Predicated region
    $region29: #{conv3d_transformer2_forward.13} parent=5 // pred_check
      _
    $region30: #{conv3d_transformer2_forward.13} parent=5 // pred_check_branch
      %192 = sbr.rel (%p189) target = $region32
    $region31: #{conv3d_transformer2_forward.13} parent=5 // pred_region
      %s193 = ssub.s32 %s9, 1
      %s194 = smul.u32 16, %s19
      %p195 = scmp.lt.s32.totalorder %s194, 31
      %s196 = scalar_select %p195, %s194, 31
      %p197 = scmp.lt.s32.totalorder %s21, 0
      %s198 = scalar_select %p197, %s21, 0
      %s199 = sadd.s32 %s198, %s196
      %s200 = smul.addr %s199, 8
      %s201 = scalar_lea.vmem %s0, %s200
      %p202 = pneg %p56
      %p203 = pneg %p53
      %s204 = smul.u32 11, %s21
      %p205 = scmp.lt.s32.totalorder %s204, 10
      %s206 = scalar_select %p205, %s204, 10
      %p207 = scmp.lt.s32.totalorder %s20, 0
      %s208 = scalar_select %p207, %s20, 0
      %s209 = sadd.s32 %s208, %s206
      %s210 = smul.addr %s209, 8
      %s211 = scalar_lea.vmem %s1, %s210
      %p212 = pneg %p84
      %p213 = pneg %p81
      %p214 = scmp.lt.s32.totalorder %s20, 0
      %s215 = scalar_select %p214, %s20, 0
      %s216 = scalar_lea.vmem %s2, %s215
      %p217 = pneg %p110
      %p218 = pneg %p107
      %p219 = pneg %p138
      %p220 = pneg %p135
      %s221 = smul.u32 16, %s19
      %p222 = scmp.lt.s32.totalorder %s221, 31
      %s223 = scalar_select %p222, %s221, 31
      %p224 = scmp.lt.s32.totalorder %s20, 0
      %s225 = scalar_select %p224, %s20, 0
      %s226 = sadd.s32 %s225, %s223
      %s227 = smul.addr %s226, 8
      %s228 = scalar_lea.vmem %s3, %s227
      %s229 = smul.u32 16, %s19
      %p230 = scmp.lt.s32.totalorder %s229, 31
      %s231 = scalar_select %p230, %s229, 31
      %p232 = scmp.lt.s32.totalorder %s21, 0
      %s233 = scalar_select %p232, %s21, 0
      %s234 = sadd.s32 %s233, %s231
      %s235 = smul.addr %s234, 8
      %s236 = scalar_lea.vmem %s0, %s235
      %s237 = smul.u32 16, %s19
      %s238 = smul.u32 11, %s21
      %p239 = scmp.lt.s32.totalorder %s238, 10
      %s240 = scalar_select %p239, %s238, 10
      %p241 = scmp.lt.s32.totalorder %s20, 0
      %s242 = scalar_select %p241, %s20, 0
      %s243 = sadd.s32 %s242, %s240
      %s244 = smul.addr %s243, 8
      %s245 = scalar_lea.vmem %s1, %s244
      %s246 = smul.u32 11, %s21
      %p247 = scmp.lt.s32.totalorder %s20, 0
      %s248 = scalar_select %p247, %s20, 0
      %s249 = scalar_lea.vmem %s2, %s248
      %s250 = smul.u32 16, %s19
      %p251 = scmp.lt.s32.totalorder %s250, 31
      %s252 = scalar_select %p251, %s250, 31
      %p253 = scmp.lt.s32.totalorder %s20, 0
      %s254 = scalar_select %p253, %s20, 0
      %s255 = sadd.s32 %s254, %s252
      %s256 = smul.addr %s255, 8
      %s257 = scalar_lea.vmem %s3, %s256
      %s258 = smul.u32 16, %s19
      %p260 = scmp.eq.s32.totalorder %s21, 0
      // Predicated region
      $region33: #{conv3d_transformer2_forward.13} parent=31 // pred_check
        %p261 = pneg %p260
      $region34: #{conv3d_transformer2_forward.13} parent=31 // pred_check_branch
        %263 = sbr.rel (%p261) target = $region36
      $region35: #{conv3d_transformer2_forward.13} parent=31 // pred_region
        %vm264 = vcmask 130048
        %265 = vst.msk [vmem:[#allocation2] sm:$0xff] %vm264, 0.0
        %266 = vst.msk [vmem:[#allocation2 + $0x8] sm:$0xff] %vm264, 0.0
        %267 = vst.msk [vmem:[#allocation2 + $0x10] sm:$0xff] %vm264, 0.0
        %268 = vst.msk [vmem:[#allocation2 + $0x18] sm:$0xff] %vm264, 0.0
        %269 = vst.msk [vmem:[#allocation2 + $0x20] sm:$0xff] %vm264, 0.0
        %270 = vst.msk [vmem:[#allocation2 + $0x28] sm:$0xff] %vm264, 0.0
        %271 = vst.msk [vmem:[#allocation2 + $0x30] sm:$0xff] %vm264, 0.0
        %272 = vst.msk [vmem:[#allocation2 + $0x38] sm:$0xff] %vm264, 0.0
        %273 = vst.msk [vmem:[#allocation2 + $0x40] sm:$0xff] %vm264, 0.0
        %274 = vst.msk [vmem:[#allocation2 + $0x48] sm:$0xff] %vm264, 0.0
        %275 = vst.msk [vmem:[#allocation2 + $0x50] sm:$0xff] %vm264, 0.0
        %276 = vst.msk [vmem:[#allocation2 + $0x58] sm:$0xff] %vm264, 0.0
        %277 = vst.msk [vmem:[#allocation2 + $0x60] sm:$0xff] %vm264, 0.0
        %278 = vst.msk [vmem:[#allocation2 + $0x68] sm:$0xff] %vm264, 0.0
        %279 = vst.msk [vmem:[#allocation2 + $0x70] sm:$0xff] %vm264, 0.0
        %280 = vst.msk [vmem:[#allocation2 + $0x78] sm:$0xff] %vm264, 0.0
      $region36: #{conv3d_transformer2_forward.13} parent=31 // pred_fallthru
        _
      %v281 = vld [vmem:[#allocation2] sm:$0xff]
      %v282 = vld [vmem:[#allocation2 + $0x8] sm:$0xff]
      %v283 = vld [vmem:[#allocation2 + $0x10] sm:$0xff]
      %v284 = vld [vmem:[#allocation2 + $0x18] sm:$0xff]
      %v285 = vld [vmem:[#allocation2 + $0x20] sm:$0xff]
      %v286 = vld [vmem:[#allocation2 + $0x28] sm:$0xff]
      %v287 = vld [vmem:[#allocation2 + $0x30] sm:$0xff]
      %v288 = vld [vmem:[#allocation2 + $0x38] sm:$0xff]
      %v289 = vld [vmem:[#allocation2 + $0x40] sm:$0xff]
      %v290 = vld [vmem:[#allocation2 + $0x48] sm:$0xff]
      %v291 = vld [vmem:[#allocation2 + $0x50] sm:$0xff]
      %v292 = vld [vmem:[#allocation2 + $0x58] sm:$0xff]
      %v293 = vld [vmem:[#allocation2 + $0x60] sm:$0xff]
      %v294 = vld [vmem:[#allocation2 + $0x68] sm:$0xff]
      %v295 = vld [vmem:[#allocation2 + $0x70] sm:$0xff]
      %v296 = vld [vmem:[#allocation2 + $0x78] sm:$0xff]
      %v297 = vld [vmem:[%s236] sm:$0xff]
      %v298 = vld [vmem:[%s236 + $0x8] sm:$0xff]
      %v299 = vld [vmem:[%s236 + $0x10] sm:$0xff]
      %v300 = vld [vmem:[%s236 + $0x18] sm:$0xff]
      %v301 = vld [vmem:[%s236 + $0x20] sm:$0xff]
      %v302 = vld [vmem:[%s236 + $0x28] sm:$0xff]
      %v303 = vld [vmem:[%s236 + $0x30] sm:$0xff]
      %v304 = vld [vmem:[%s236 + $0x38] sm:$0xff]
      %v305 = vld [vmem:[%s236 + $0x40] sm:$0xff]
      %v306 = vld [vmem:[%s236 + $0x48] sm:$0xff]
      %v307 = vld [vmem:[%s236 + $0x50] sm:$0xff]
      %v308 = vld [vmem:[%s236 + $0x58] sm:$0xff]
      %v309 = vld [vmem:[%s236 + $0x60] sm:$0xff]
      %v310 = vld [vmem:[%s236 + $0x68] sm:$0xff]
      %v311 = vld [vmem:[%s236 + $0x70] sm:$0xff]
      %v312 = vld [vmem:[%s236 + $0x78] sm:$0xff]
      %v313 = vpack.c.bf16 %v298, %v297
      %v314 = vpack.c.bf16 %v300, %v299
      %v315 = vpack.c.bf16 %v302, %v301
      %v316 = vpack.c.bf16 %v304, %v303
      %v317 = vpack.c.bf16 %v306, %v305
      %v318 = vpack.c.bf16 %v308, %v307
      %v319 = vpack.c.bf16 %v310, %v309
      %v320 = vpack.c.bf16 %v312, %v311
      %v321 = vld [vmem:[%s245] sm:$0xff]
      %v322 = vld [vmem:[%s245 + $0x8] sm:$0xff]
      %v323 = vld [vmem:[%s245 + $0x10] sm:$0xff]
      %v324 = vld [vmem:[%s245 + $0x18] sm:$0xff]
      %v325 = vld [vmem:[%s245 + $0x20] sm:$0xff]
      %v326 = vld [vmem:[%s245 + $0x28] sm:$0xff]
      %v327 = vld [vmem:[%s245 + $0x30] sm:$0xff]
      %v328 = vld [vmem:[%s245 + $0x38] sm:$0xff]
      %v329 = vld [vmem:[%s245 + $0x40] sm:$0xff]
      %v330 = vld [vmem:[%s245 + $0x48] sm:$0xff]
      %v331 = vld [vmem:[%s245 + $0x50] sm:$0x1]
      %v332 = vpack.c.bf16 %v322, %v321
      %v333 = vpack.c.bf16 %v324, %v323
      %v334 = vpack.c.bf16 %v326, %v325
      %v335 = vpack.c.bf16 %v328, %v327
      %v336 = vpack.c.bf16 %v330, %v329
      %v337 = vpack.c.bf16 %v331, %v331
      %vm338 = vcmask 662528
      %v340 = vsel %vm338, %v313, 0
      %v343 = vsel %vm338, %v314, 0
      %v346 = vsel %vm338, %v315, 0
      %v349 = vsel %vm338, %v316, 0
      %v352 = vsel %vm338, %v317, 0
      %v355 = vsel %vm338, %v318, 0
      %v358 = vsel %vm338, %v319, 0
      %v361 = vsel %vm338, %v320, 0
      %vm363 = vcmask 1040384
      %v364 = vsel 0, 4294967295, 65535
      %v365 = vsel %vm363, %v364, 0
      %v367 = vand.u32 %v337, %v365
      %369 = vmatprep.subr.bf16.mxu0 0
      %370 = vmatpush1.bf16.msra.mxu0 %v332
      %371 = vmatprep.subr.bf16.mxu0 0
      %372 = vmatpush1.bf16.msra.mxu0 %v333
      %373 = vmatprep.subr.bf16.mxu0 0
      %374 = vmatpush1.bf16.msra.mxu0 %v334
      %375 = vmatprep.subr.bf16.mxu0 0
      %376 = vmatpush1.bf16.msra.mxu0 %v335
      %377 = vmatprep.subr.bf16.mxu0 0
      %378 = vmatpush1.bf16.msra.mxu0 %v336
      %379 = vmatprep.subr.bf16.mxu0 0
      %380 = vmatpush1.bf16.msra.mxu0 %v367
      %381 = vmatprep.subr.bf16.mxu0 0
      %382 = vmatpush1.bf16.msra.mxu0 0
      %383 = vmatprep.subr.bf16.mxu0 0
      %384 = vmatpush1.bf16.msra.mxu0 0
      %385 = vmatprep.subr.bf16.mxu0 0
      %386 = vmatpush1.bf16.msra.mxu0 0
      %387 = vmatprep.subr.bf16.mxu0 0
      %388 = vmatpush1.bf16.msra.mxu0 0
      %389 = vmatprep.subr.bf16.mxu0 0
      %390 = vmatpush1.bf16.msra.mxu0 0
      %391 = vmatprep.subr.bf16.mxu0 0
      %392 = vmatpush1.bf16.msra.mxu0 0
      %393 = vmatprep.subr.bf16.mxu0 0
      %394 = vmatpush1.bf16.msra.mxu0 0
      %395 = vmatprep.subr.bf16.mxu0 0
      %396 = vmatpush1.bf16.msra.mxu0 0
      %397 = vmatprep.subr.bf16.mxu0 0
      %398 = vmatpush1.bf16.msra.mxu0 0
      %399 = vmatprep.subr.bf16.mxu0 0
      %400 = vmatpush1.bf16.msra.mxu0 0
      %401 = vmatprep.mubr.bf16.mxu0 0
      %402 = vmatmul.mubr.bf16.gmra.mrb[0].mxu0 %v340
      %v403 = vpop.f32.mrb[0].mxu0
      %v404 = vadd.f32 0.0, %v403
      %v405 = vpop.f32.mrb[0].mxu0
      %v406 = vpop.f32.mrb[0].mxu0
      %v407 = vadd.f32 0.0, %v406
      %v408 = vpop.f32.mrb[0].mxu0
      %409 = vmatprep.mubr.bf16.mxu0 0
      %410 = vmatmul.mubr.bf16.gmra.mrb[0].mxu0 %v343
      %v411 = vpop.f32.mrb[0].mxu0
      %v412 = vadd.f32 0.0, %v411
      %v413 = vpop.f32.mrb[0].mxu0
      %v414 = vpop.f32.mrb[0].mxu0
      %v415 = vadd.f32 0.0, %v414
      %v416 = vpop.f32.mrb[0].mxu0
      %417 = vmatprep.mubr.bf16.mxu0 0
      %418 = vmatmul.mubr.bf16.gmra.mrb[0].mxu0 %v346
      %v419 = vpop.f32.mrb[0].mxu0
      %v420 = vadd.f32 0.0, %v419
      %v421 = vpop.f32.mrb[0].mxu0
      %v422 = vpop.f32.mrb[0].mxu0
      %v423 = vadd.f32 0.0, %v422
      %v424 = vpop.f32.mrb[0].mxu0
      %425 = vmatprep.mubr.bf16.mxu0 0
      %426 = vmatmul.mubr.bf16.gmra.mrb[0].mxu0 %v349
      %v427 = vpop.f32.mrb[0].mxu0
      %v428 = vadd.f32 0.0, %v427
      %v429 = vpop.f32.mrb[0].mxu0
      %v430 = vpop.f32.mrb[0].mxu0
      %v431 = vadd.f32 0.0, %v430
      %v432 = vpop.f32.mrb[0].mxu0
      %433 = vmatprep.mubr.bf16.mxu0 0
      %434 = vmatmul.mubr.bf16.gmra.mrb[0].mxu0 %v352
      %v435 = vpop.f32.mrb[0].mxu0
      %v436 = vadd.f32 0.0, %v435
      %v437 = vpop.f32.mrb[0].mxu0
      %v438 = vpop.f32.mrb[0].mxu0
      %v439 = vadd.f32 0.0, %v438
      %v440 = vpop.f32.mrb[0].mxu0
      %441 = vmatprep.mubr.bf16.mxu0 0
      %442 = vmatmul.mubr.bf16.gmra.mrb[0].mxu0 %v355
      %v443 = vpop.f32.mrb[0].mxu0
      %v444 = vadd.f32 0.0, %v443
      %v445 = vpop.f32.mrb[0].mxu0
      %v446 = vpop.f32.mrb[0].mxu0
      %v447 = vadd.f32 0.0, %v446
      %v448 = vpop.f32.mrb[0].mxu0
      %449 = vmatprep.mubr.bf16.mxu0 0
      %450 = vmatmul.mubr.bf16.gmra.mrb[0].mxu0 %v358
      %v451 = vpop.f32.mrb[0].mxu0
      %v452 = vadd.f32 0.0, %v451
      %v453 = vpop.f32.mrb[0].mxu0
      %v454 = vpop.f32.mrb[0].mxu0
      %v455 = vadd.f32 0.0, %v454
      %v456 = vpop.f32.mrb[0].mxu0
      %457 = vmatprep.mubr.bf16.mxu0 0
      %458 = vmatmul.mubr.bf16.gmra.mrb[0].mxu0 %v361
      %v459 = vpop.f32.mrb[0].mxu0
      %v460 = vadd.f32 0.0, %v459
      %v461 = vpop.f32.mrb[0].mxu0
      %v462 = vpop.f32.mrb[0].mxu0
      %v463 = vadd.f32 0.0, %v462
      %v464 = vpop.f32.mrb[0].mxu0
      %465 = vdwg.mxu0
      %v466 = vadd.f32 %v281, %v404
      %v467 = vadd.f32 %v282, %v407
      %v468 = vadd.f32 %v283, %v412
      %v469 = vadd.f32 %v284, %v415
      %v470 = vadd.f32 %v285, %v420
      %v471 = vadd.f32 %v286, %v423
      %v472 = vadd.f32 %v287, %v428
      %v473 = vadd.f32 %v288, %v431
      %v474 = vadd.f32 %v289, %v436
      %v475 = vadd.f32 %v290, %v439
      %v476 = vadd.f32 %v291, %v444
      %v477 = vadd.f32 %v292, %v447
      %v478 = vadd.f32 %v293, %v452
      %v479 = vadd.f32 %v294, %v455
      %v480 = vadd.f32 %v295, %v460
      %v481 = vadd.f32 %v296, %v463
      %vm482 = vcmask 130048
      %483 = vst.msk [vmem:[#allocation2] sm:$0xff] %vm482, %v466
      %484 = vst.msk [vmem:[#allocation2 + $0x8] sm:$0xff] %vm482, %v467
      %485 = vst.msk [vmem:[#allocation2 + $0x10] sm:$0xff] %vm482, %v468
      %486 = vst.msk [vmem:[#allocation2 + $0x18] sm:$0xff] %vm482, %v469
      %487 = vst.msk [vmem:[#allocation2 + $0x20] sm:$0xff] %vm482, %v470
      %488 = vst.msk [vmem:[#allocation2 + $0x28] sm:$0xff] %vm482, %v471
      %489 = vst.msk [vmem:[#allocation2 + $0x30] sm:$0xff] %vm482, %v472
      %490 = vst.msk [vmem:[#allocation2 + $0x38] sm:$0xff] %vm482, %v473
      %491 = vst.msk [vmem:[#allocation2 + $0x40] sm:$0xff] %vm482, %v474
      %492 = vst.msk [vmem:[#allocation2 + $0x48] sm:$0xff] %vm482, %v475
      %493 = vst.msk [vmem:[#allocation2 + $0x50] sm:$0xff] %vm482, %v476
      %494 = vst.msk [vmem:[#allocation2 + $0x58] sm:$0xff] %vm482, %v477
      %495 = vst.msk [vmem:[#allocation2 + $0x60] sm:$0xff] %vm482, %v478
      %496 = vst.msk [vmem:[#allocation2 + $0x68] sm:$0xff] %vm482, %v479
      %497 = vst.msk [vmem:[#allocation2 + $0x70] sm:$0xff] %vm482, %v480
      %498 = vst.msk [vmem:[#allocation2 + $0x78] sm:$0xff] %vm482, %v481
      // Predicated region
      $region37: #{conv3d_transformer2_forward.13} parent=31 // pred_check
        %p499 = pneg %p260
      $region38: #{conv3d_transformer2_forward.13} parent=31 // pred_check_branch
        %501 = sbr.rel (%p499) target = $region40
      $region39: #{conv3d_transformer2_forward.13} parent=31 // pred_region
        %v502 = vld [vmem:[#allocation2] sm:$0xff]
        %v503 = vld [vmem:[#allocation2 + $0x8] sm:$0xff]
        %v504 = vld [vmem:[#allocation2 + $0x10] sm:$0xff]
        %v505 = vld [vmem:[#allocation2 + $0x18] sm:$0xff]
        %v506 = vld [vmem:[#allocation2 + $0x20] sm:$0xff]
        %v507 = vld [vmem:[#allocation2 + $0x28] sm:$0xff]
        %v508 = vld [vmem:[#allocation2 + $0x30] sm:$0xff]
        %v509 = vld [vmem:[#allocation2 + $0x38] sm:$0xff]
        %v510 = vld [vmem:[#allocation2 + $0x40] sm:$0xff]
        %v511 = vld [vmem:[#allocation2 + $0x48] sm:$0xff]
        %v512 = vld [vmem:[#allocation2 + $0x50] sm:$0xff]
        %v513 = vld [vmem:[#allocation2 + $0x58] sm:$0xff]
        %v514 = vld [vmem:[#allocation2 + $0x60] sm:$0xff]
        %v515 = vld [vmem:[#allocation2 + $0x68] sm:$0xff]
        %v516 = vld [vmem:[#allocation2 + $0x70] sm:$0xff]
        %v517 = vld [vmem:[#allocation2 + $0x78] sm:$0xff]
        %v518 = vld [vmem:[%s249] sm:$0x1]
        %v520 = vlaneseq
        %v521 = vshrl.u32 %v520, 7
        %v522 = vsub.s32 0, %v521
        %v523 = vrot.slane %v518, %v522
        %v525 = vadd.f32 %v502, %v523
        %v526 = vadd.f32 %v503, %v523
        %v527 = vadd.f32 %v504, %v523
        %v528 = vadd.f32 %v505, %v523
        %v529 = vadd.f32 %v506, %v523
        %v530 = vadd.f32 %v507, %v523
        %v531 = vadd.f32 %v508, %v523
        %v532 = vadd.f32 %v509, %v523
        %v533 = vadd.f32 %v510, %v523
        %v534 = vadd.f32 %v511, %v523
        %v535 = vadd.f32 %v512, %v523
        %v536 = vadd.f32 %v513, %v523
        %v537 = vadd.f32 %v514, %v523
        %v538 = vadd.f32 %v515, %v523
        %v539 = vadd.f32 %v516, %v523
        %v540 = vadd.f32 %v517, %v523
        %v541 = vmax.f32 %v525, 0.0
        %v542 = vmax.f32 %v526, 0.0
        %v543 = vmax.f32 %v527, 0.0
        %v544 = vmax.f32 %v528, 0.0
        %v545 = vmax.f32 %v529, 0.0
        %v546 = vmax.f32 %v530, 0.0
        %v547 = vmax.f32 %v531, 0.0
        %v548 = vmax.f32 %v532, 0.0
        %v549 = vmax.f32 %v533, 0.0
        %v550 = vmax.f32 %v534, 0.0
        %v551 = vmax.f32 %v535, 0.0
        %v552 = vmax.f32 %v536, 0.0
        %v553 = vmax.f32 %v537, 0.0
        %v554 = vmax.f32 %v538, 0.0
        %v555 = vmax.f32 %v539, 0.0
        %v556 = vmax.f32 %v540, 0.0
        %557 = vst.msk [vmem:[%s257] sm:$0xff] %vm482, %v541
        %558 = vst.msk [vmem:[%s257 + $0x8] sm:$0xff] %vm482, %v542
        %559 = vst.msk [vmem:[%s257 + $0x10] sm:$0xff] %vm482, %v543
        %560 = vst.msk [vmem:[%s257 + $0x18] sm:$0xff] %vm482, %v544
        %561 = vst.msk [vmem:[%s257 + $0x20] sm:$0xff] %vm482, %v545
        %562 = vst.msk [vmem:[%s257 + $0x28] sm:$0xff] %vm482, %v546
        %563 = vst.msk [vmem:[%s257 + $0x30] sm:$0xff] %vm482, %v547
        %564 = vst.msk [vmem:[%s257 + $0x38] sm:$0xff] %vm482, %v548
        %565 = vst.msk [vmem:[%s257 + $0x40] sm:$0xff] %vm482, %v549
        %566 = vst.msk [vmem:[%s257 + $0x48] sm:$0xff] %vm482, %v550
        %567 = vst.msk [vmem:[%s257 + $0x50] sm:$0xff] %vm482, %v551
        %568 = vst.msk [vmem:[%s257 + $0x58] sm:$0xff] %vm482, %v552
        %569 = vst.msk [vmem:[%s257 + $0x60] sm:$0xff] %vm482, %v553
        %570 = vst.msk [vmem:[%s257 + $0x68] sm:$0xff] %vm482, %v554
        %571 = vst.msk [vmem:[%s257 + $0x70] sm:$0xff] %vm482, %v555
        %572 = vst.msk [vmem:[%s257 + $0x78] sm:$0xff] %vm482, %v556
      $region40: #{conv3d_transformer2_forward.13} parent=31 // pred_fallthru
        _
      %s573 = smul.u32 16, %s19
      %p574 = scmp.lt.s32.totalorder %s573, 31
      %s575 = scalar_select %p574, %s573, 31
      %p576 = scmp.lt.s32.totalorder %s20, 0
      %s577 = scalar_select %p576, %s20, 0
      %s578 = sadd.s32 %s577, %s575
      %s579 = smul.addr %s578, 8
      %s580 = scalar_lea.vmem %s3, %s579
      // Predicated region
      $region41: #{conv3d_transformer2_forward.13} parent=31 // pred_check
        %p581 = pneg %p135
      $region42: #{conv3d_transformer2_forward.13} parent=31 // pred_check_branch
        %583 = sbr.rel (%p581) target = $region44
      $region43: #{conv3d_transformer2_forward.13} parent=31 // pred_region
        %s584 = smul.u32 16, %s19
      $region44: #{conv3d_transformer2_forward.13} parent=31 // pred_fallthru
        _
    $region32: #{conv3d_transformer2_forward.13} parent=5 // pred_fallthru
      _
    %p585 = scmp.le.s32.totalorder 2, %s9
    // Predicated region
    $region45: #{conv3d_transformer2_forward.13} parent=5 // pred_check
      %p586 = pneg %p585
    $region46: #{conv3d_transformer2_forward.13} parent=5 // pred_check_branch
      %588 = sbr.rel (%p586) target = $region48
    $region47: #{conv3d_transformer2_forward.13} parent=5 // pred_region
      %s589 = ssub.s32 %s9, 2
      // Predicated region
      $region49: #{conv3d_transformer2_forward.13} parent=47 // pred_check
        %p590 = pneg %p141
      $region50: #{conv3d_transformer2_forward.13} parent=47 // pred_check_branch
        %592 = sbr.rel (%p590) target = $region52
      $region51: #{conv3d_transformer2_forward.13} parent=47 // pred_region
        %s593 = smul.u32 16, %s22
        %p594 = scmp.lt.s32.totalorder %s593, 31
        %s595 = scalar_select %p594, %s593, 31
        %p596 = scmp.lt.s32.totalorder %s23, 0
        %s597 = scalar_select %p596, %s23, 0
        %s598 = sadd.s32 %s597, %s595
        %s599 = smul.addr %s598, 8
        %s600 = scalar_lea.vmem %s3, %s599
      $region52: #{conv3d_transformer2_forward.13} parent=47 // pred_fallthru
        _
    $region48: #{conv3d_transformer2_forward.13} parent=5 // pred_fallthru
      _
  $region6: #{conv3d_transformer2_forward.13} parent=0 // loop_footer
    %s13 = sadd.s32 1, %s9
  $region7: #{conv3d_transformer2_forward.13} parent=0 // loop_footer_branch
    %8 = sbr.rel target = $region3
  $region8: #{conv3d_transformer2_forward.13} parent=0 // loop_exit
    _

// kernel: conv3d_transformer2_forward.14
$region0: #{conv3d_transformer2_forward.14}
  #allocation0 [shape = 'u32[]', space=smem, size = 0x4, offset = 0x4, fixed_abs, tag = 'smem constant byte address 0x4 - core index']
  #allocation1 [shape = 'u32[144,128]{1,0:T(1,128)}', space=vmem, size = 0x12000, scoped, tag = 'internal scratch']
  #allocation2 [shape = 'f32[128,32]{1,0:T(8,128)}', space=vmem, size = 0x10000, scoped, tag = 'scratch operand']
  %s0 = inlined_call_operand.vmem [shape: f32[256,432], index: 0, kind: input, shape index: {}]
  %s1 = inlined_call_operand.vmem [shape: f32[432,32], index: 1, kind: input, shape index: {}]
  %s2 = inlined_call_operand.vmem [shape: f32[1,32], index: 2, kind: input, shape index: {}]
  %s3 = inlined_call_operand.vmem [shape: f32[256,32], index: 3, kind: input, shape index: {}]
  %s4 = inlined_call_operand.vmem [shape: f32[256,32], index: 4, kind: output, shape index: {}]
  %s5 = sld [smem:[#allocation0]]
  $region57: #{conv3d_transformer2_forward.14} parent=0
    _
  %s7 = ssub.s32 1, %s5
  %s8 = scalar_select 0, %s7, %s5
  loop: start=0, step=1, limit=4
  $region2: #{conv3d_transformer2_forward.14} parent=0 // loop_pre_header
    _
  $region3: #{conv3d_transformer2_forward.14} parent=0 // loop_header
    %s10 = sphi 0, %s14
    %p11 = scmp.ge.s32.totalorder %s10, 4
    %s17 = sphi 0, %s36
    %s18 = sphi 0, %s32
    %s19 = sphi 0, %s28
    %s20 = sphi 0, %s17
    %s21 = sphi 0, %s18
    %s22 = sphi 0, %s19
    %s23 = sphi 0, %s20
    %s24 = sphi 0, %s21
    %s25 = sphi 0, %s22
    %s41 = sphi 0, %s43
    %s44 = sphi 0, %s41
    %s45 = sphi 0, %s44
    %s61 = sphi 0, %s45
    %s69 = sphi 0, %s71
    %s72 = sphi 0, %s69
    %s73 = sphi 0, %s72
    %s89 = sphi 0, %s73
    %s95 = sphi 0, %s97
    %s98 = sphi 0, %s95
    %s99 = sphi 0, %s98
    %s115 = sphi 0, %s99
    %s123 = sphi 0, %s125
    %s126 = sphi 0, %s123
    %s127 = sphi 0, %s126
    %s143 = sphi 0, %s127
    %s151 = sphi 0, %s153
    %s154 = sphi 0, %s151
    %s155 = sphi 0, %s154
    %s171 = sphi 0, %s155
  $region4: #{conv3d_transformer2_forward.14} parent=0 // loop_header_branch
    %13 = sbr.rel (%p11) target = $region8
  $region5: #{conv3d_transformer2_forward.14} parent=0 // loop_body
    %s15 = ssub.s32 %s10, 1
    %s16 = ssub.s32 %s10, 2
    %s26 = sadd.s32 1, %s19
    %p27 = scmp.ge.s32.totalorder %s26, 1
    %s28 = scalar_select %p27, 0, %s26
    %s29 = sadd.s32 1, %s18
    %s30 = scalar_select %p27, %s29, %s18
    %p31 = scmp.ge.s32.totalorder %s30, 1
    %s32 = scalar_select %p31, 0, %s30
    %s33 = sadd.s32 1, %s17
    %s34 = scalar_select %p31, %s33, %s17
    %p35 = scmp.ge.s32.totalorder %s34, 2
    %s36 = scalar_select %p35, 0, %s34
    %s37 = ssub.s32 %s17, %s36
    %s38 = ssub.s32 %s19, %s28
    %s39 = sor.u32 %s37, %s38
    %p40 = scmp.eq.s32.totalorder %s39, 0
    %s42 = sadd.s32 %s41, 1
    %s43 = scalar_select %p40, %s41, %s42
    %p46 = pneg %p40
    %p47 = scmp.eq.s32.totalorder %s10, 1
    %p48 = por %p46, %p47
    %p49 = scmp.ne.s32.totalorder %s41, %s44
    %p50 = scmp.eq.s32.totalorder %s10, 0
    %p51 = por %p49, %p50
    %p52 = scmp.ne.s32.totalorder %s41, %s44
    %p53 = scmp.eq.s32.totalorder %s15, 1
    %p54 = por %p52, %p53
    %p55 = scmp.ne.s32.totalorder %s44, %s45
    %p56 = scmp.eq.s32.totalorder %s15, 0
    %p57 = por %p55, %p56
    %p58 = scmp.ne.s32.totalorder %s44, %s45
    %p59 = scmp.eq.s32.totalorder %s16, 1
    %p60 = por %p58, %p59
    %p62 = scmp.ne.s32.totalorder %s45, %s61
    %p63 = scmp.eq.s32.totalorder %s16, 0
    %p64 = por %p62, %p63
    %s65 = ssub.s32 %s19, %s28
    %s66 = ssub.s32 %s18, %s32
    %s67 = sor.u32 %s65, %s66
    %p68 = scmp.eq.s32.totalorder %s67, 0
    %s70 = sadd.s32 %s69, 1
    %s71 = scalar_select %p68, %s69, %s70
    %p74 = pneg %p68
    %p75 = scmp.eq.s32.totalorder %s10, 1
    %p76 = por %p74, %p75
    %p77 = scmp.ne.s32.totalorder %s69, %s72
    %p78 = scmp.eq.s32.totalorder %s10, 0
    %p79 = por %p77, %p78
    %p80 = scmp.ne.s32.totalorder %s69, %s72
    %p81 = scmp.eq.s32.totalorder %s15, 1
    %p82 = por %p80, %p81
    %p83 = scmp.ne.s32.totalorder %s72, %s73
    %p84 = scmp.eq.s32.totalorder %s15, 0
    %p85 = por %p83, %p84
    %p86 = scmp.ne.s32.totalorder %s72, %s73
    %p87 = scmp.eq.s32.totalorder %s16, 1
    %p88 = por %p86, %p87
    %p90 = scmp.ne.s32.totalorder %s73, %s89
    %p91 = scmp.eq.s32.totalorder %s16, 0
    %p92 = por %p90, %p91
    %s93 = ssub.s32 %s18, %s32
    %p94 = scmp.eq.s32.totalorder %s93, 0
    %s96 = sadd.s32 %s95, 1
    %s97 = scalar_select %p94, %s95, %s96
    %p100 = pneg %p94
    %p101 = scmp.eq.s32.totalorder %s10, 1
    %p102 = por %p100, %p101
    %p103 = scmp.ne.s32.totalorder %s95, %s98
    %p104 = scmp.eq.s32.totalorder %s10, 0
    %p105 = por %p103, %p104
    %p106 = scmp.ne.s32.totalorder %s95, %s98
    %p107 = scmp.eq.s32.totalorder %s15, 1
    %p108 = por %p106, %p107
    %p109 = scmp.ne.s32.totalorder %s98, %s99
    %p110 = scmp.eq.s32.totalorder %s15, 0
    %p111 = por %p109, %p110
    %p112 = scmp.ne.s32.totalorder %s98, %s99
    %p113 = scmp.eq.s32.totalorder %s16, 1
    %p114 = por %p112, %p113
    %p116 = scmp.ne.s32.totalorder %s99, %s115
    %p117 = scmp.eq.s32.totalorder %s16, 0
    %p118 = por %p116, %p117
    %s119 = ssub.s32 %s17, %s36
    %s120 = ssub.s32 %s18, %s32
    %s121 = sor.u32 %s119, %s120
    %p122 = scmp.eq.s32.totalorder %s121, 0
    %s124 = sadd.s32 %s123, 1
    %s125 = scalar_select %p122, %s123, %s124
    %p128 = pneg %p122
    %p129 = scmp.eq.s32.totalorder %s10, 1
    %p130 = por %p128, %p129
    %p131 = scmp.ne.s32.totalorder %s123, %s126
    %p132 = scmp.eq.s32.totalorder %s10, 0
    %p133 = por %p131, %p132
    %p134 = scmp.ne.s32.totalorder %s123, %s126
    %p135 = scmp.eq.s32.totalorder %s15, 1
    %p136 = por %p134, %p135
    %p137 = scmp.ne.s32.totalorder %s126, %s127
    %p138 = scmp.eq.s32.totalorder %s15, 0
    %p139 = por %p137, %p138
    %p140 = scmp.ne.s32.totalorder %s126, %s127
    %p141 = scmp.eq.s32.totalorder %s16, 1
    %p142 = por %p140, %p141
    %p144 = scmp.ne.s32.totalorder %s127, %s143
    %p145 = scmp.eq.s32.totalorder %s16, 0
    %p146 = por %p144, %p145
    %s147 = ssub.s32 %s17, %s36
    %s148 = ssub.s32 %s18, %s32
    %s149 = sor.u32 %s147, %s148
    %p150 = scmp.eq.s32.totalorder %s149, 0
    %s152 = sadd.s32 %s151, 1
    %s153 = scalar_select %p150, %s151, %s152
    %p156 = pneg %p150
    %p157 = scmp.eq.s32.totalorder %s10, 1
    %p158 = por %p156, %p157
    %p159 = scmp.ne.s32.totalorder %s151, %s154
    %p160 = scmp.eq.s32.totalorder %s10, 0
    %p161 = por %p159, %p160
    %p162 = scmp.ne.s32.totalorder %s151, %s154
    %p163 = scmp.eq.s32.totalorder %s15, 1
    %p164 = por %p162, %p163
    %p165 = scmp.ne.s32.totalorder %s154, %s155
    %p166 = scmp.eq.s32.totalorder %s15, 0
    %p167 = por %p165, %p166
    %p168 = scmp.ne.s32.totalorder %s154, %s155
    %p169 = scmp.eq.s32.totalorder %s16, 1
    %p170 = por %p168, %p169
    %p172 = scmp.ne.s32.totalorder %s155, %s171
    %p173 = scmp.eq.s32.totalorder %s16, 0
    %p174 = por %p172, %p173
    %p175 = scmp.le.s32.totalorder 1, %s10
    %p176 = scmp.lt.s32.totalorder %s10, 3
    %p177 = pnand %p175, %p176
    %p178 = pneg %p177
    // Predicated region
    $region9: #{conv3d_transformer2_forward.14} parent=5 // pred_check
      _
    $region10: #{conv3d_transformer2_forward.14} parent=5 // pred_check_branch
      %180 = sbr.rel (%p177) target = $region12
    $region11: #{conv3d_transformer2_forward.14} parent=5 // pred_region
      %s181 = ssub.s32 %s10, 1
      // Predicated region
      $region13: #{conv3d_transformer2_forward.14} parent=11 // pred_check
        %p182 = pneg %p85
      $region14: #{conv3d_transformer2_forward.14} parent=11 // pred_check_branch
        %184 = sbr.rel (%p182) target = $region16
      $region15: #{conv3d_transformer2_forward.14} parent=11 // pred_region
        %s185 = smul.u32 54, %s22
        %p186 = scmp.lt.s32.totalorder %s185, 53
        %s187 = scalar_select %p186, %s185, 53
        %p188 = scmp.lt.s32.totalorder %s21, 0
        %s189 = scalar_select %p188, %s21, 0
        %s190 = sadd.s32 %s189, %s187
        %s191 = smul.addr %s190, 8
        %s192 = scalar_lea.vmem %s1, %s191
        %s193 = smul.u32 54, %s22
      $region16: #{conv3d_transformer2_forward.14} parent=11 // pred_fallthru
        _
      // Predicated region
      $region17: #{conv3d_transformer2_forward.14} parent=11 // pred_check
        %p194 = pneg %p111
      $region18: #{conv3d_transformer2_forward.14} parent=11 // pred_check_branch
        %196 = sbr.rel (%p194) target = $region20
      $region19: #{conv3d_transformer2_forward.14} parent=11 // pred_region
        %p197 = scmp.lt.s32.totalorder %s21, 0
        %s198 = scalar_select %p197, %s21, 0
        %s199 = scalar_lea.vmem %s2, %s198
      $region20: #{conv3d_transformer2_forward.14} parent=11 // pred_fallthru
        _
    $region12: #{conv3d_transformer2_forward.14} parent=5 // pred_fallthru
      _
    %p200 = scmp.lt.s32.totalorder %s10, 2
    // Predicated region
    $region21: #{conv3d_transformer2_forward.14} parent=5 // pred_check
      %p201 = pneg %p200
    $region22: #{conv3d_transformer2_forward.14} parent=5 // pred_check_branch
      %203 = sbr.rel (%p201) target = $region24
    $region23: #{conv3d_transformer2_forward.14} parent=5 // pred_region
      // Predicated region
      $region25: #{conv3d_transformer2_forward.14} parent=23 // pred_check
        %p204 = pneg %p51
      $region26: #{conv3d_transformer2_forward.14} parent=23 // pred_check_branch
        %206 = sbr.rel (%p204) target = $region28
      $region27: #{conv3d_transformer2_forward.14} parent=23 // pred_region
        %s207 = smul.u32 16, %s17
        %s208 = smul.u32 4, %s19
        %p209 = scmp.lt.s32.totalorder %s207, 31
        %s210 = scalar_select %p209, %s207, 31
        %p211 = scmp.lt.s32.totalorder %s208, 3
        %s212 = scalar_select %p211, %s208, 3
        %s213 = smul.addr %s210, 4
        %s214 = sadd.s32 %s212, %s213
        %s215 = smul.addr %s214, 8
        %s216 = scalar_lea.vmem %s0, %s215
        %s217 = smul.u32 16, %s17
        %s218 = smul.u32 4, %s19
      $region28: #{conv3d_transformer2_forward.14} parent=23 // pred_fallthru
        _
      // Predicated region
      $region29: #{conv3d_transformer2_forward.14} parent=23 // pred_check
        %p219 = pneg %p133
      $region30: #{conv3d_transformer2_forward.14} parent=23 // pred_check_branch
        %221 = sbr.rel (%p219) target = $region32
      $region31: #{conv3d_transformer2_forward.14} parent=23 // pred_region
        %s222 = smul.u32 16, %s17
        %p223 = scmp.lt.s32.totalorder %s222, 31
        %s224 = scalar_select %p223, %s222, 31
        %p225 = scmp.lt.s32.totalorder %s18, 0
        %s226 = scalar_select %p225, %s18, 0
        %s227 = sadd.s32 %s226, %s224
        %s228 = smul.addr %s227, 8
        %s229 = scalar_lea.vmem %s3, %s228
        %s230 = smul.u32 16, %s17
      $region32: #{conv3d_transformer2_forward.14} parent=23 // pred_fallthru
        _
    $region24: #{conv3d_transformer2_forward.14} parent=5 // pred_fallthru
      _
    %p231 = scmp.le.s32.totalorder 1, %s10
    %p232 = scmp.lt.s32.totalorder %s10, 3
    %p233 = pnand %p231, %p232
    %p234 = pneg %p233
    // Predicated region
    $region33: #{conv3d_transformer2_forward.14} parent=5 // pred_check
      _
    $region34: #{conv3d_transformer2_forward.14} parent=5 // pred_check_branch
      %236 = sbr.rel (%p233) target = $region36
    $region35: #{conv3d_transformer2_forward.14} parent=5 // pred_region
      %s237 = ssub.s32 %s10, 1
      %s238 = smul.u32 16, %s20
      %s239 = smul.u32 4, %s22
      %p240 = scmp.lt.s32.totalorder %s238, 31
      %s241 = scalar_select %p240, %s238, 31
      %p242 = scmp.lt.s32.totalorder %s239, 3
      %s243 = scalar_select %p242, %s239, 3
      %s244 = smul.addr %s241, 4
      %s245 = sadd.s32 %s243, %s244
      %s246 = smul.addr %s245, 8
      %s247 = scalar_lea.vmem %s0, %s246
      %p248 = pneg %p57
      %p249 = pneg %p54
      %s250 = smul.u32 54, %s22
      %p251 = scmp.lt.s32.totalorder %s250, 53
      %s252 = scalar_select %p251, %s250, 53
      %p253 = scmp.lt.s32.totalorder %s21, 0
      %s254 = scalar_select %p253, %s21, 0
      %s255 = sadd.s32 %s254, %s252
      %s256 = smul.addr %s255, 8
      %s257 = scalar_lea.vmem %s1, %s256
      %p258 = pneg %p85
      %p259 = pneg %p82
      %p260 = scmp.lt.s32.totalorder %s21, 0
      %s261 = scalar_select %p260, %s21, 0
      %s262 = scalar_lea.vmem %s2, %s261
      %p263 = pneg %p111
      %p264 = pneg %p108
      %s265 = smul.u32 16, %s20
      %p266 = scmp.lt.s32.totalorder %s265, 31
      %s267 = scalar_select %p266, %s265, 31
      %p268 = scmp.lt.s32.totalorder %s21, 0
      %s269 = scalar_select %p268, %s21, 0
      %s270 = sadd.s32 %s269, %s267
      %s271 = smul.addr %s270, 8
      %s272 = scalar_lea.vmem %s3, %s271
      %p273 = pneg %p139
      %p274 = pneg %p136
      %p275 = pneg %p167
      %p276 = pneg %p164
      %s277 = smul.u32 16, %s20
      %p278 = scmp.lt.s32.totalorder %s277, 31
      %s279 = scalar_select %p278, %s277, 31
      %p280 = scmp.lt.s32.totalorder %s21, 0
      %s281 = scalar_select %p280, %s21, 0
      %s282 = sadd.s32 %s281, %s279
      %s283 = smul.addr %s282, 8
      %s284 = scalar_lea.vmem %s4, %s283
      %s285 = smul.u32 16, %s20
      %s286 = smul.u32 4, %s22
      %p287 = scmp.lt.s32.totalorder %s285, 31
      %s288 = scalar_select %p287, %s285, 31
      %p289 = scmp.lt.s32.totalorder %s286, 3
      %s290 = scalar_select %p289, %s286, 3
      %s291 = smul.addr %s288, 4
      %s292 = sadd.s32 %s290, %s291
      %s293 = smul.addr %s292, 8
      %s294 = scalar_lea.vmem %s0, %s293
      %s295 = smul.u32 16, %s20
      %s296 = smul.u32 4, %s22
      %s297 = smul.u32 54, %s22
      %p298 = scmp.lt.s32.totalorder %s297, 53
      %s299 = scalar_select %p298, %s297, 53
      %p300 = scmp.lt.s32.totalorder %s21, 0
      %s301 = scalar_select %p300, %s21, 0
      %s302 = sadd.s32 %s301, %s299
      %s303 = smul.addr %s302, 8
      %s304 = scalar_lea.vmem %s1, %s303
      %s305 = smul.u32 54, %s22
      %p306 = scmp.lt.s32.totalorder %s21, 0
      %s307 = scalar_select %p306, %s21, 0
      %s308 = scalar_lea.vmem %s2, %s307
      %s309 = smul.u32 16, %s20
      %p310 = scmp.lt.s32.totalorder %s309, 31
      %s311 = scalar_select %p310, %s309, 31
      %p312 = scmp.lt.s32.totalorder %s21, 0
      %s313 = scalar_select %p312, %s21, 0
      %s314 = sadd.s32 %s313, %s311
      %s315 = smul.addr %s314, 8
      %s316 = scalar_lea.vmem %s3, %s315
      %s317 = smul.u32 16, %s20
      %s318 = smul.u32 16, %s20
      %p319 = scmp.lt.s32.totalorder %s318, 31
      %s320 = scalar_select %p319, %s318, 31
      %p321 = scmp.lt.s32.totalorder %s21, 0
      %s322 = scalar_select %p321, %s21, 0
      %s323 = sadd.s32 %s322, %s320
      %s324 = smul.addr %s323, 8
      %s325 = scalar_lea.vmem %s4, %s324
      %s326 = smul.u32 16, %s20
      %p328 = scmp.eq.s32.totalorder %s22, 0
      // Predicated region
      $region37: #{conv3d_transformer2_forward.14} parent=35 // pred_check
        %p329 = pneg %p328
      $region38: #{conv3d_transformer2_forward.14} parent=35 // pred_check_branch
        %331 = sbr.rel (%p329) target = $region40
      $region39: #{conv3d_transformer2_forward.14} parent=35 // pred_region
        %vm332 = vcmask 261120
        %333 = vst.msk [vmem:[#allocation2] sm:$0xff] %vm332, 0.0
        %334 = vst.msk [vmem:[#allocation2 + $0x8] sm:$0xff] %vm332, 0.0
        %335 = vst.msk [vmem:[#allocation2 + $0x10] sm:$0xff] %vm332, 0.0
        %336 = vst.msk [vmem:[#allocation2 + $0x18] sm:$0xff] %vm332, 0.0
        %337 = vst.msk [vmem:[#allocation2 + $0x20] sm:$0xff] %vm332, 0.0
        %338 = vst.msk [vmem:[#allocation2 + $0x28] sm:$0xff] %vm332, 0.0
        %339 = vst.msk [vmem:[#allocation2 + $0x30] sm:$0xff] %vm332, 0.0
        %340 = vst.msk [vmem:[#allocation2 + $0x38] sm:$0xff] %vm332, 0.0
        %341 = vst.msk [vmem:[#allocation2 + $0x40] sm:$0xff] %vm332, 0.0
        %342 = vst.msk [vmem:[#allocation2 + $0x48] sm:$0xff] %vm332, 0.0
        %343 = vst.msk [vmem:[#allocation2 + $0x50] sm:$0xff] %vm332, 0.0
        %344 = vst.msk [vmem:[#allocation2 + $0x58] sm:$0xff] %vm332, 0.0
        %345 = vst.msk [vmem:[#allocation2 + $0x60] sm:$0xff] %vm332, 0.0
        %346 = vst.msk [vmem:[#allocation2 + $0x68] sm:$0xff] %vm332, 0.0
        %347 = vst.msk [vmem:[#allocation2 + $0x70] sm:$0xff] %vm332, 0.0
        %348 = vst.msk [vmem:[#allocation2 + $0x78] sm:$0xff] %vm332, 0.0
      $region40: #{conv3d_transformer2_forward.14} parent=35 // pred_fallthru
        _
      %v349 = vld [vmem:[#allocation2] sm:$0xff]
      %v350 = vld [vmem:[#allocation2 + $0x8] sm:$0xff]
      %v351 = vld [vmem:[#allocation2 + $0x10] sm:$0xff]
      %v352 = vld [vmem:[#allocation2 + $0x18] sm:$0xff]
      %v353 = vld [vmem:[#allocation2 + $0x20] sm:$0xff]
      %v354 = vld [vmem:[#allocation2 + $0x28] sm:$0xff]
      %v355 = vld [vmem:[#allocation2 + $0x30] sm:$0xff]
      %v356 = vld [vmem:[#allocation2 + $0x38] sm:$0xff]
      %v357 = vld [vmem:[#allocation2 + $0x40] sm:$0xff]
      %v358 = vld [vmem:[#allocation2 + $0x48] sm:$0xff]
      %v359 = vld [vmem:[#allocation2 + $0x50] sm:$0xff]
      %v360 = vld [vmem:[#allocation2 + $0x58] sm:$0xff]
      %v361 = vld [vmem:[#allocation2 + $0x60] sm:$0xff]
      %v362 = vld [vmem:[#allocation2 + $0x68] sm:$0xff]
      %v363 = vld [vmem:[#allocation2 + $0x70] sm:$0xff]
      %v364 = vld [vmem:[#allocation2 + $0x78] sm:$0xff]
      %v365 = vld [vmem:[%s294] sm:$0xff]
      %v366 = vld [vmem:[%s294 + $0x8] sm:$0xff]
      %v367 = vld [vmem:[%s294 + $0x10] sm:$0xff]
      %v368 = vld [vmem:[%s294 + $0x18] sm:$0xff]
      %v369 = vld [vmem:[%s294 + $0x20] sm:$0xff]
      %v370 = vld [vmem:[%s294 + $0x28] sm:$0xff]
      %v371 = vld [vmem:[%s294 + $0x30] sm:$0xff]
      %v372 = vld [vmem:[%s294 + $0x38] sm:$0xff]
      %v373 = vld [vmem:[%s294 + $0x40] sm:$0xff]
      %v374 = vld [vmem:[%s294 + $0x48] sm:$0xff]
      %v375 = vld [vmem:[%s294 + $0x50] sm:$0xff]
      %v376 = vld [vmem:[%s294 + $0x58] sm:$0xff]
      %v377 = vld [vmem:[%s294 + $0x60] sm:$0xff]
      %v378 = vld [vmem:[%s294 + $0x68] sm:$0xff]
      %v379 = vld [vmem:[%s294 + $0x70] sm:$0xff]
      %v380 = vld [vmem:[%s294 + $0x78] sm:$0xff]
      %v381 = vld [vmem:[%s294 + $0x80] sm:$0xff]
      %v382 = vld [vmem:[%s294 + $0x88] sm:$0xff]
      %v383 = vld [vmem:[%s294 + $0x90] sm:$0xff]
      %v384 = vld [vmem:[%s294 + $0x98] sm:$0xff]
      %v385 = vld [vmem:[%s294 + $0xa0] sm:$0xff]
      %v386 = vld [vmem:[%s294 + $0xa8] sm:$0xff]
      %v387 = vld [vmem:[%s294 + $0xb0] sm:$0xff]
      %v388 = vld [vmem:[%s294 + $0xb8] sm:$0xff]
      %v389 = vld [vmem:[%s294 + $0xc0] sm:$0xff]
      %v390 = vld [vmem:[%s294 + $0xc8] sm:$0xff]
      %v391 = vld [vmem:[%s294 + $0xd0] sm:$0xff]
      %v392 = vld [vmem:[%s294 + $0xd8] sm:$0xff]
      %v393 = vld [vmem:[%s294 + $0xe0] sm:$0xff]
      %v394 = vld [vmem:[%s294 + $0xe8] sm:$0xff]
      %v395 = vld [vmem:[%s294 + $0xf0] sm:$0xff]
      %v396 = vld [vmem:[%s294 + $0xf8] sm:$0xff]
      %v397 = vld [vmem:[%s294 + $0x100] sm:$0xff]
      %v398 = vld [vmem:[%s294 + $0x108] sm:$0xff]
      %v399 = vld [vmem:[%s294 + $0x110] sm:$0xff]
      %v400 = vld [vmem:[%s294 + $0x118] sm:$0xff]
      %v401 = vld [vmem:[%s294 + $0x120] sm:$0xff]
      %v402 = vld [vmem:[%s294 + $0x128] sm:$0xff]
      %v403 = vld [vmem:[%s294 + $0x130] sm:$0xff]
      %v404 = vld [vmem:[%s294 + $0x138] sm:$0xff]
      %v405 = vld [vmem:[%s294 + $0x140] sm:$0xff]
      %v406 = vld [vmem:[%s294 + $0x148] sm:$0xff]
      %v407 = vld [vmem:[%s294 + $0x150] sm:$0xff]
      %v408 = vld [vmem:[%s294 + $0x158] sm:$0xff]
      %v409 = vld [vmem:[%s294 + $0x160] sm:$0xff]
      %v410 = vld [vmem:[%s294 + $0x168] sm:$0xff]
      %v411 = vld [vmem:[%s294 + $0x170] sm:$0xff]
      %v412 = vld [vmem:[%s294 + $0x178] sm:$0xff]
      %v413 = vld [vmem:[%s294 + $0x180] sm:$0xff]
      %v414 = vld [vmem:[%s294 + $0x188] sm:$0xff]
      %v415 = vld [vmem:[%s294 + $0x190] sm:$0xff]
      %v416 = vld [vmem:[%s294 + $0x198] sm:$0xff]
      %v417 = vld [vmem:[%s294 + $0x1a0] sm:$0xff]
      %v418 = vld [vmem:[%s294 + $0x1a8] sm:$0xff]
      %v419 = vld [vmem:[%s294 + $0x1b0] sm:$0xff]
      %v420 = vld [vmem:[%s294 + $0x1b8] sm:$0xff]
      %v421 = vld [vmem:[%s294 + $0x1c0] sm:$0xff]
      %v422 = vld [vmem:[%s294 + $0x1c8] sm:$0xff]
      %v423 = vld [vmem:[%s294 + $0x1d0] sm:$0xff]
      %v424 = vld [vmem:[%s294 + $0x1d8] sm:$0xff]
      %v425 = vld [vmem:[%s294 + $0x1e0] sm:$0xff]
      %v426 = vld [vmem:[%s294 + $0x1e8] sm:$0xff]
      %v427 = vld [vmem:[%s294 + $0x1f0] sm:$0xff]
      %v428 = vld [vmem:[%s294 + $0x1f8] sm:$0xff]
      %v429 = vpack.c.bf16 %v369, %v365
      %v430 = vpack.c.bf16 %v370, %v366
      %v431 = vpack.c.bf16 %v371, %v367
      %v432 = vpack.c.bf16 %v372, %v368
      %v433 = vpack.c.bf16 %v377, %v373
      %v434 = vpack.c.bf16 %v378, %v374
      %v435 = vpack.c.bf16 %v379, %v375
      %v436 = vpack.c.bf16 %v380, %v376
      %v437 = vpack.c.bf16 %v385, %v381
      %v438 = vpack.c.bf16 %v386, %v382
      %v439 = vpack.c.bf16 %v387, %v383
      %v440 = vpack.c.bf16 %v388, %v384
      %v441 = vpack.c.bf16 %v393, %v389
      %v442 = vpack.c.bf16 %v394, %v390
      %v443 = vpack.c.bf16 %v395, %v391
      %v444 = vpack.c.bf16 %v396, %v392
      %v445 = vpack.c.bf16 %v401, %v397
      %v446 = vpack.c.bf16 %v402, %v398
      %v447 = vpack.c.bf16 %v403, %v399
      %v448 = vpack.c.bf16 %v404, %v400
      %v449 = vpack.c.bf16 %v409, %v405
      %v450 = vpack.c.bf16 %v410, %v406
      %v451 = vpack.c.bf16 %v411, %v407
      %v452 = vpack.c.bf16 %v412, %v408
      %v453 = vpack.c.bf16 %v417, %v413
      %v454 = vpack.c.bf16 %v418, %v414
      %v455 = vpack.c.bf16 %v419, %v415
      %v456 = vpack.c.bf16 %v420, %v416
      %v457 = vpack.c.bf16 %v425, %v421
      %v458 = vpack.c.bf16 %v426, %v422
      %v459 = vpack.c.bf16 %v427, %v423
      %v460 = vpack.c.bf16 %v428, %v424
      %v461 = vld [vmem:[%s304] sm:$0xff]
      %v462 = vld [vmem:[%s304 + $0x8] sm:$0xff]
      %v463 = vld [vmem:[%s304 + $0x10] sm:$0xff]
      %v464 = vld [vmem:[%s304 + $0x18] sm:$0xff]
      %v465 = vld [vmem:[%s304 + $0x20] sm:$0xff]
      %v466 = vld [vmem:[%s304 + $0x28] sm:$0xff]
      %v467 = vld [vmem:[%s304 + $0x30] sm:$0xff]
      %v468 = vld [vmem:[%s304 + $0x38] sm:$0xff]
      %v469 = vld [vmem:[%s304 + $0x40] sm:$0xff]
      %v470 = vld [vmem:[%s304 + $0x48] sm:$0xff]
      %v471 = vld [vmem:[%s304 + $0x50] sm:$0xff]
      %v472 = vld [vmem:[%s304 + $0x58] sm:$0xff]
      %v473 = vld [vmem:[%s304 + $0x60] sm:$0xff]
      %v474 = vld [vmem:[%s304 + $0x68] sm:$0xff]
      %v475 = vld [vmem:[%s304 + $0x70] sm:$0xff]
      %v476 = vld [vmem:[%s304 + $0x78] sm:$0xff]
      %v477 = vld [vmem:[%s304 + $0x80] sm:$0xff]
      %v478 = vld [vmem:[%s304 + $0x88] sm:$0xff]
      %v479 = vld [vmem:[%s304 + $0x90] sm:$0xff]
      %v480 = vld [vmem:[%s304 + $0x98] sm:$0xff]
      %v481 = vld [vmem:[%s304 + $0xa0] sm:$0xff]
      %v482 = vld [vmem:[%s304 + $0xa8] sm:$0xff]
      %v483 = vld [vmem:[%s304 + $0xb0] sm:$0xff]
      %v484 = vld [vmem:[%s304 + $0xb8] sm:$0xff]
      %v485 = vld [vmem:[%s304 + $0xc0] sm:$0xff]
      %v486 = vld [vmem:[%s304 + $0xc8] sm:$0xff]
      %v487 = vld [vmem:[%s304 + $0xd0] sm:$0xff]
      %v488 = vld [vmem:[%s304 + $0xd8] sm:$0xff]
      %v489 = vld [vmem:[%s304 + $0xe0] sm:$0xff]
      %v490 = vld [vmem:[%s304 + $0xe8] sm:$0xff]
      %v491 = vld [vmem:[%s304 + $0xf0] sm:$0xff]
      %v492 = vld [vmem:[%s304 + $0xf8] sm:$0xff]
      %v493 = vld [vmem:[%s304 + $0x100] sm:$0xff]
      %v494 = vld [vmem:[%s304 + $0x108] sm:$0xff]
      %v495 = vld [vmem:[%s304 + $0x110] sm:$0xff]
      %v496 = vld [vmem:[%s304 + $0x118] sm:$0xff]
      %v497 = vld [vmem:[%s304 + $0x120] sm:$0xff]
      %v498 = vld [vmem:[%s304 + $0x128] sm:$0xff]
      %v499 = vld [vmem:[%s304 + $0x130] sm:$0xff]
      %v500 = vld [vmem:[%s304 + $0x138] sm:$0xff]
      %v501 = vld [vmem:[%s304 + $0x140] sm:$0xff]
      %v502 = vld [vmem:[%s304 + $0x148] sm:$0xff]
      %v503 = vld [vmem:[%s304 + $0x150] sm:$0xff]
      %v504 = vld [vmem:[%s304 + $0x158] sm:$0xff]
      %v505 = vld [vmem:[%s304 + $0x160] sm:$0xff]
      %v506 = vld [vmem:[%s304 + $0x168] sm:$0xff]
      %v507 = vld [vmem:[%s304 + $0x170] sm:$0xff]
      %v508 = vld [vmem:[%s304 + $0x178] sm:$0xff]
      %v509 = vld [vmem:[%s304 + $0x180] sm:$0xff]
      %v510 = vld [vmem:[%s304 + $0x188] sm:$0xff]
      %v511 = vld [vmem:[%s304 + $0x190] sm:$0xff]
      %v512 = vld [vmem:[%s304 + $0x198] sm:$0xff]
      %v513 = vld [vmem:[%s304 + $0x1a0] sm:$0xff]
      %v514 = vld [vmem:[%s304 + $0x1a8] sm:$0xff]
      %v515 = vpack.c.bf16 %v462, %v461
      %v516 = vpack.c.bf16 %v464, %v463
      %v517 = vpack.c.bf16 %v466, %v465
      %v518 = vpack.c.bf16 %v468, %v467
      %v519 = vpack.c.bf16 %v470, %v469
      %v520 = vpack.c.bf16 %v472, %v471
      %v521 = vpack.c.bf16 %v474, %v473
      %v522 = vpack.c.bf16 %v476, %v475
      %v523 = vpack.c.bf16 %v478, %v477
      %v524 = vpack.c.bf16 %v480, %v479
      %v525 = vpack.c.bf16 %v482, %v481
      %v526 = vpack.c.bf16 %v484, %v483
      %v527 = vpack.c.bf16 %v486, %v485
      %v528 = vpack.c.bf16 %v488, %v487
      %v529 = vpack.c.bf16 %v490, %v489
      %v530 = vpack.c.bf16 %v492, %v491
      %v531 = vpack.c.bf16 %v494, %v493
      %v532 = vpack.c.bf16 %v496, %v495
      %v533 = vpack.c.bf16 %v498, %v497
      %v534 = vpack.c.bf16 %v500, %v499
      %v535 = vpack.c.bf16 %v502, %v501
      %v536 = vpack.c.bf16 %v504, %v503
      %v537 = vpack.c.bf16 %v506, %v505
      %v538 = vpack.c.bf16 %v508, %v507
      %v539 = vpack.c.bf16 %v510, %v509
      %v540 = vpack.c.bf16 %v512, %v511
      %v541 = vpack.c.bf16 %v514, %v513
      %vm542 = vcmask 392192
      %v544 = vsel %vm542, %v432, 0
      %v547 = vsel %vm542, %v436, 0
      %v550 = vsel %vm542, %v440, 0
      %v553 = vsel %vm542, %v444, 0
      %v556 = vsel %vm542, %v448, 0
      %v559 = vsel %vm542, %v452, 0
      %v562 = vsel %vm542, %v456, 0
      %v565 = vsel %vm542, %v460, 0
      %567 = vmatprep.subr.bf16.mxu0 0
      %568 = vmatpush1.bf16.msra.mxu0 %v515
      %569 = vmatprep.subr.bf16.mxu0 0
      %570 = vmatpush1.bf16.msra.mxu0 %v516
      %571 = vmatprep.subr.bf16.mxu0 0
      %572 = vmatpush1.bf16.msra.mxu0 %v517
      %573 = vmatprep.subr.bf16.mxu0 0
      %574 = vmatpush1.bf16.msra.mxu0 %v518
      %575 = vmatprep.subr.bf16.mxu0 0
      %576 = vmatpush1.bf16.msra.mxu0 %v519
      %577 = vmatprep.subr.bf16.mxu0 0
      %578 = vmatpush1.bf16.msra.mxu0 %v520
      %579 = vmatprep.subr.bf16.mxu0 0
      %580 = vmatpush1.bf16.msra.mxu0 %v521
      %581 = vmatprep.subr.bf16.mxu0 0
      %582 = vmatpush1.bf16.msra.mxu0 %v522
      %583 = vmatprep.subr.bf16.mxu0 0
      %584 = vmatpush1.bf16.msra.mxu0 %v523
      %585 = vmatprep.subr.bf16.mxu0 0
      %586 = vmatpush1.bf16.msra.mxu0 %v524
      %587 = vmatprep.subr.bf16.mxu0 0
      %588 = vmatpush1.bf16.msra.mxu0 %v525
      %589 = vmatprep.subr.bf16.mxu0 0
      %590 = vmatpush1.bf16.msra.mxu0 %v526
      %591 = vmatprep.subr.bf16.mxu0 0
      %592 = vmatpush1.bf16.msra.mxu0 %v527
      %593 = vmatprep.subr.bf16.mxu0 0
      %594 = vmatpush1.bf16.msra.mxu0 %v528
      %595 = vmatprep.subr.bf16.mxu0 0
      %596 = vmatpush1.bf16.msra.mxu0 %v529
      %597 = vmatprep.subr.bf16.mxu0 0
      %598 = vmatpush1.bf16.msra.mxu0 %v530
      %599 = vmatprep.mubr.bf16.mxu0 %v430
      %600 = vmatmul.mubr.bf16.gmra.mrb[0].mxu0 %v429
      %v601 = vpop.f32.mrb[0].mxu0
      %v602 = vadd.f32 0.0, %v601
      %v603 = vpop.f32.mrb[0].mxu0
      %v604 = vpop.f32.mrb[0].mxu0
      %v605 = vadd.f32 0.0, %v604
      %v606 = vpop.f32.mrb[0].mxu0
      %607 = vmatprep.mubr.bf16.mxu0 %v434
      %608 = vmatmul.mubr.bf16.gmra.mrb[0].mxu0 %v433
      %v609 = vpop.f32.mrb[0].mxu0
      %v610 = vadd.f32 0.0, %v609
      %v611 = vpop.f32.mrb[0].mxu0
      %v612 = vpop.f32.mrb[0].mxu0
      %v613 = vadd.f32 0.0, %v612
      %v614 = vpop.f32.mrb[0].mxu0
      %615 = vmatprep.mubr.bf16.mxu0 %v438
      %616 = vmatmul.mubr.bf16.gmra.mrb[0].mxu0 %v437
      %v617 = vpop.f32.mrb[0].mxu0
      %v618 = vadd.f32 0.0, %v617
      %v619 = vpop.f32.mrb[0].mxu0
      %v620 = vpop.f32.mrb[0].mxu0
      %v621 = vadd.f32 0.0, %v620
      %v622 = vpop.f32.mrb[0].mxu0
      %623 = vmatprep.mubr.bf16.mxu0 %v442
      %624 = vmatmul.mubr.bf16.gmra.mrb[0].mxu0 %v441
      %v625 = vpop.f32.mrb[0].mxu0
      %v626 = vadd.f32 0.0, %v625
      %v627 = vpop.f32.mrb[0].mxu0
      %v628 = vpop.f32.mrb[0].mxu0
      %v629 = vadd.f32 0.0, %v628
      %v630 = vpop.f32.mrb[0].mxu0
      %631 = vmatprep.mubr.bf16.mxu0 %v446
      %632 = vmatmul.mubr.bf16.gmra.mrb[0].mxu0 %v445
      %v633 = vpop.f32.mrb[0].mxu0
      %v634 = vadd.f32 0.0, %v633
      %v635 = vpop.f32.mrb[0].mxu0
      %v636 = vpop.f32.mrb[0].mxu0
      %v637 = vadd.f32 0.0, %v636
      %v638 = vpop.f32.mrb[0].mxu0
      %639 = vmatprep.mubr.bf16.mxu0 %v450
      %640 = vmatmul.mubr.bf16.gmra.mrb[0].mxu0 %v449
      %v641 = vpop.f32.mrb[0].mxu0
      %v642 = vadd.f32 0.0, %v641
      %v643 = vpop.f32.mrb[0].mxu0
      %v644 = vpop.f32.mrb[0].mxu0
      %v645 = vadd.f32 0.0, %v644
      %v646 = vpop.f32.mrb[0].mxu0
      %647 = vmatprep.mubr.bf16.mxu0 %v454
      %648 = vmatmul.mubr.bf16.gmra.mrb[0].mxu0 %v453
      %v649 = vpop.f32.mrb[0].mxu0
      %v650 = vadd.f32 0.0, %v649
      %v651 = vpop.f32.mrb[0].mxu0
      %v652 = vpop.f32.mrb[0].mxu0
      %v653 = vadd.f32 0.0, %v652
      %v654 = vpop.f32.mrb[0].mxu0
      %655 = vmatprep.mubr.bf16.mxu0 %v458
      %656 = vmatmul.mubr.bf16.gmra.mrb[0].mxu0 %v457
      %v657 = vpop.f32.mrb[0].mxu0
      %v658 = vadd.f32 0.0, %v657
      %v659 = vpop.f32.mrb[0].mxu0
      %v660 = vpop.f32.mrb[0].mxu0
      %v661 = vadd.f32 0.0, %v660
      %v662 = vpop.f32.mrb[0].mxu0
      %663 = vdwg.mxu0
      %664 = vmatprep.subr.bf16.mxu0 0
      %665 = vmatpush1.bf16.msra.mxu0 %v531
      %666 = vmatprep.subr.bf16.mxu0 0
      %667 = vmatpush1.bf16.msra.mxu0 %v532
      %668 = vmatprep.subr.bf16.mxu0 0
      %669 = vmatpush1.bf16.msra.mxu0 %v533
      %670 = vmatprep.subr.bf16.mxu0 0
      %671 = vmatpush1.bf16.msra.mxu0 %v534
      %672 = vmatprep.subr.bf16.mxu0 0
      %673 = vmatpush1.bf16.msra.mxu0 %v535
      %674 = vmatprep.subr.bf16.mxu0 0
      %675 = vmatpush1.bf16.msra.mxu0 %v536
      %676 = vmatprep.subr.bf16.mxu0 0
      %677 = vmatpush1.bf16.msra.mxu0 %v537
      %678 = vmatprep.subr.bf16.mxu0 0
      %679 = vmatpush1.bf16.msra.mxu0 %v538
      %680 = vmatprep.subr.bf16.mxu0 0
      %681 = vmatpush1.bf16.msra.mxu0 %v539
      %682 = vmatprep.subr.bf16.mxu0 0
      %683 = vmatpush1.bf16.msra.mxu0 %v540
      %684 = vmatprep.subr.bf16.mxu0 0
      %685 = vmatpush1.bf16.msra.mxu0 %v541
      %686 = vmatprep.subr.bf16.mxu0 0
      %687 = vmatpush1.bf16.msra.mxu0 0
      %688 = vmatprep.subr.bf16.mxu0 0
      %689 = vmatpush1.bf16.msra.mxu0 0
      %690 = vmatprep.subr.bf16.mxu0 0
      %691 = vmatpush1.bf16.msra.mxu0 0
      %692 = vmatprep.subr.bf16.mxu0 0
      %693 = vmatpush1.bf16.msra.mxu0 0
      %694 = vmatprep.subr.bf16.mxu0 0
      %695 = vmatpush1.bf16.msra.mxu0 0
      %696 = vmatprep.mubr.bf16.mxu0 %v544
      %697 = vmatmul.mubr.bf16.gmra.mrb[0].mxu0 %v431
      %v698 = vpop.f32.mrb[0].mxu0
      %v699 = vadd.f32 %v602, %v698
      %v700 = vpop.f32.mrb[0].mxu0
      %v701 = vpop.f32.mrb[0].mxu0
      %v702 = vadd.f32 %v605, %v701
      %v703 = vpop.f32.mrb[0].mxu0
      %704 = vmatprep.mubr.bf16.mxu0 %v547
      %705 = vmatmul.mubr.bf16.gmra.mrb[0].mxu0 %v435
      %v706 = vpop.f32.mrb[0].mxu0
      %v707 = vadd.f32 %v610, %v706
      %v708 = vpop.f32.mrb[0].mxu0
      %v709 = vpop.f32.mrb[0].mxu0
      %v710 = vadd.f32 %v613, %v709
      %v711 = vpop.f32.mrb[0].mxu0
      %712 = vmatprep.mubr.bf16.mxu0 %v550
      %713 = vmatmul.mubr.bf16.gmra.mrb[0].mxu0 %v439
      %v714 = vpop.f32.mrb[0].mxu0
      %v715 = vadd.f32 %v618, %v714
      %v716 = vpop.f32.mrb[0].mxu0
      %v717 = vpop.f32.mrb[0].mxu0
      %v718 = vadd.f32 %v621, %v717
      %v719 = vpop.f32.mrb[0].mxu0
      %720 = vmatprep.mubr.bf16.mxu0 %v553
      %721 = vmatmul.mubr.bf16.gmra.mrb[0].mxu0 %v443
      %v722 = vpop.f32.mrb[0].mxu0
      %v723 = vadd.f32 %v626, %v722
      %v724 = vpop.f32.mrb[0].mxu0
      %v725 = vpop.f32.mrb[0].mxu0
      %v726 = vadd.f32 %v629, %v725
      %v727 = vpop.f32.mrb[0].mxu0
      %728 = vmatprep.mubr.bf16.mxu0 %v556
      %729 = vmatmul.mubr.bf16.gmra.mrb[0].mxu0 %v447
      %v730 = vpop.f32.mrb[0].mxu0
      %v731 = vadd.f32 %v634, %v730
      %v732 = vpop.f32.mrb[0].mxu0
      %v733 = vpop.f32.mrb[0].mxu0
      %v734 = vadd.f32 %v637, %v733
      %v735 = vpop.f32.mrb[0].mxu0
      %736 = vmatprep.mubr.bf16.mxu0 %v559
      %737 = vmatmul.mubr.bf16.gmra.mrb[0].mxu0 %v451
      %v738 = vpop.f32.mrb[0].mxu0
      %v739 = vadd.f32 %v642, %v738
      %v740 = vpop.f32.mrb[0].mxu0
      %v741 = vpop.f32.mrb[0].mxu0
      %v742 = vadd.f32 %v645, %v741
      %v743 = vpop.f32.mrb[0].mxu0
      %744 = vmatprep.mubr.bf16.mxu0 %v562
      %745 = vmatmul.mubr.bf16.gmra.mrb[0].mxu0 %v455
      %v746 = vpop.f32.mrb[0].mxu0
      %v747 = vadd.f32 %v650, %v746
      %v748 = vpop.f32.mrb[0].mxu0
      %v749 = vpop.f32.mrb[0].mxu0
      %v750 = vadd.f32 %v653, %v749
      %v751 = vpop.f32.mrb[0].mxu0
      %752 = vmatprep.mubr.bf16.mxu0 %v565
      %753 = vmatmul.mubr.bf16.gmra.mrb[0].mxu0 %v459
      %v754 = vpop.f32.mrb[0].mxu0
      %v755 = vadd.f32 %v658, %v754
      %v756 = vpop.f32.mrb[0].mxu0
      %v757 = vpop.f32.mrb[0].mxu0
      %v758 = vadd.f32 %v661, %v757
      %v759 = vpop.f32.mrb[0].mxu0
      %760 = vdwg.mxu0
      %v761 = vadd.f32 %v349, %v699
      %v762 = vadd.f32 %v350, %v702
      %v763 = vadd.f32 %v351, %v707
      %v764 = vadd.f32 %v352, %v710
      %v765 = vadd.f32 %v353, %v715
      %v766 = vadd.f32 %v354, %v718
      %v767 = vadd.f32 %v355, %v723
      %v768 = vadd.f32 %v356, %v726
      %v769 = vadd.f32 %v357, %v731
      %v770 = vadd.f32 %v358, %v734
      %v771 = vadd.f32 %v359, %v739
      %v772 = vadd.f32 %v360, %v742
      %v773 = vadd.f32 %v361, %v747
      %v774 = vadd.f32 %v362, %v750
      %v775 = vadd.f32 %v363, %v755
      %v776 = vadd.f32 %v364, %v758
      %vm777 = vcmask 261120
      %778 = vst.msk [vmem:[#allocation2] sm:$0xff] %vm777, %v761
      %779 = vst.msk [vmem:[#allocation2 + $0x8] sm:$0xff] %vm777, %v762
      %780 = vst.msk [vmem:[#allocation2 + $0x10] sm:$0xff] %vm777, %v763
      %781 = vst.msk [vmem:[#allocation2 + $0x18] sm:$0xff] %vm777, %v764
      %782 = vst.msk [vmem:[#allocation2 + $0x20] sm:$0xff] %vm777, %v765
      %783 = vst.msk [vmem:[#allocation2 + $0x28] sm:$0xff] %vm777, %v766
      %784 = vst.msk [vmem:[#allocation2 + $0x30] sm:$0xff] %vm777, %v767
      %785 = vst.msk [vmem:[#allocation2 + $0x38] sm:$0xff] %vm777, %v768
      %786 = vst.msk [vmem:[#allocation2 + $0x40] sm:$0xff] %vm777, %v769
      %787 = vst.msk [vmem:[#allocation2 + $0x48] sm:$0xff] %vm777, %v770
      %788 = vst.msk [vmem:[#allocation2 + $0x50] sm:$0xff] %vm777, %v771
      %789 = vst.msk [vmem:[#allocation2 + $0x58] sm:$0xff] %vm777, %v772
      %790 = vst.msk [vmem:[#allocation2 + $0x60] sm:$0xff] %vm777, %v773
      %791 = vst.msk [vmem:[#allocation2 + $0x68] sm:$0xff] %vm777, %v774
      %792 = vst.msk [vmem:[#allocation2 + $0x70] sm:$0xff] %vm777, %v775
      %793 = vst.msk [vmem:[#allocation2 + $0x78] sm:$0xff] %vm777, %v776
      // Predicated region
      $region41: #{conv3d_transformer2_forward.14} parent=35 // pred_check
        %p794 = pneg %p328
      $region42: #{conv3d_transformer2_forward.14} parent=35 // pred_check_branch
        %796 = sbr.rel (%p794) target = $region44
      $region43: #{conv3d_transformer2_forward.14} parent=35 // pred_region
        %v797 = vld [vmem:[#allocation2] sm:$0xff]
        %v798 = vld [vmem:[#allocation2 + $0x8] sm:$0xff]
        %v799 = vld [vmem:[#allocation2 + $0x10] sm:$0xff]
        %v800 = vld [vmem:[#allocation2 + $0x18] sm:$0xff]
        %v801 = vld [vmem:[#allocation2 + $0x20] sm:$0xff]
        %v802 = vld [vmem:[#allocation2 + $0x28] sm:$0xff]
        %v803 = vld [vmem:[#allocation2 + $0x30] sm:$0xff]
        %v804 = vld [vmem:[#allocation2 + $0x38] sm:$0xff]
        %v805 = vld [vmem:[#allocation2 + $0x40] sm:$0xff]
        %v806 = vld [vmem:[#allocation2 + $0x48] sm:$0xff]
        %v807 = vld [vmem:[#allocation2 + $0x50] sm:$0xff]
        %v808 = vld [vmem:[#allocation2 + $0x58] sm:$0xff]
        %v809 = vld [vmem:[#allocation2 + $0x60] sm:$0xff]
        %v810 = vld [vmem:[#allocation2 + $0x68] sm:$0xff]
        %v811 = vld [vmem:[#allocation2 + $0x70] sm:$0xff]
        %v812 = vld [vmem:[#allocation2 + $0x78] sm:$0xff]
        %v813 = vld [vmem:[%s308] sm:$0x1]
        %v815 = vlaneseq
        %v816 = vshrl.u32 %v815, 7
        %v817 = vsub.s32 0, %v816
        %v818 = vrot.slane %v813, %v817
        %v820 = vadd.f32 %v797, %v818
        %v821 = vadd.f32 %v798, %v818
        %v822 = vadd.f32 %v799, %v818
        %v823 = vadd.f32 %v800, %v818
        %v824 = vadd.f32 %v801, %v818
        %v825 = vadd.f32 %v802, %v818
        %v826 = vadd.f32 %v803, %v818
        %v827 = vadd.f32 %v804, %v818
        %v828 = vadd.f32 %v805, %v818
        %v829 = vadd.f32 %v806, %v818
        %v830 = vadd.f32 %v807, %v818
        %v831 = vadd.f32 %v808, %v818
        %v832 = vadd.f32 %v809, %v818
        %v833 = vadd.f32 %v810, %v818
        %v834 = vadd.f32 %v811, %v818
        %v835 = vadd.f32 %v812, %v818
        %v836 = vmax.f32 %v820, 0.0
        %v837 = vmax.f32 %v821, 0.0
        %v838 = vmax.f32 %v822, 0.0
        %v839 = vmax.f32 %v823, 0.0
        %v840 = vmax.f32 %v824, 0.0
        %v841 = vmax.f32 %v825, 0.0
        %v842 = vmax.f32 %v826, 0.0
        %v843 = vmax.f32 %v827, 0.0
        %v844 = vmax.f32 %v828, 0.0
        %v845 = vmax.f32 %v829, 0.0
        %v846 = vmax.f32 %v830, 0.0
        %v847 = vmax.f32 %v831, 0.0
        %v848 = vmax.f32 %v832, 0.0
        %v849 = vmax.f32 %v833, 0.0
        %v850 = vmax.f32 %v834, 0.0
        %v851 = vmax.f32 %v835, 0.0
        %v852 = vld [vmem:[%s316] sm:$0xff]
        %v853 = vld [vmem:[%s316 + $0x8] sm:$0xff]
        %v854 = vld [vmem:[%s316 + $0x10] sm:$0xff]
        %v855 = vld [vmem:[%s316 + $0x18] sm:$0xff]
        %v856 = vld [vmem:[%s316 + $0x20] sm:$0xff]
        %v857 = vld [vmem:[%s316 + $0x28] sm:$0xff]
        %v858 = vld [vmem:[%s316 + $0x30] sm:$0xff]
        %v859 = vld [vmem:[%s316 + $0x38] sm:$0xff]
        %v860 = vld [vmem:[%s316 + $0x40] sm:$0xff]
        %v861 = vld [vmem:[%s316 + $0x48] sm:$0xff]
        %v862 = vld [vmem:[%s316 + $0x50] sm:$0xff]
        %v863 = vld [vmem:[%s316 + $0x58] sm:$0xff]
        %v864 = vld [vmem:[%s316 + $0x60] sm:$0xff]
        %v865 = vld [vmem:[%s316 + $0x68] sm:$0xff]
        %v866 = vld [vmem:[%s316 + $0x70] sm:$0xff]
        %v867 = vld [vmem:[%s316 + $0x78] sm:$0xff]
        %v868 = vadd.f32 %v836, %v852
        %v869 = vadd.f32 %v837, %v853
        %v870 = vadd.f32 %v838, %v854
        %v871 = vadd.f32 %v839, %v855
        %v872 = vadd.f32 %v840, %v856
        %v873 = vadd.f32 %v841, %v857
        %v874 = vadd.f32 %v842, %v858
        %v875 = vadd.f32 %v843, %v859
        %v876 = vadd.f32 %v844, %v860
        %v877 = vadd.f32 %v845, %v861
        %v878 = vadd.f32 %v846, %v862
        %v879 = vadd.f32 %v847, %v863
        %v880 = vadd.f32 %v848, %v864
        %v881 = vadd.f32 %v849, %v865
        %v882 = vadd.f32 %v850, %v866
        %v883 = vadd.f32 %v851, %v867
        %884 = vst.msk [vmem:[%s325] sm:$0xff] %vm777, %v868
        %885 = vst.msk [vmem:[%s325 + $0x8] sm:$0xff] %vm777, %v869
        %886 = vst.msk [vmem:[%s325 + $0x10] sm:$0xff] %vm777, %v870
        %887 = vst.msk [vmem:[%s325 + $0x18] sm:$0xff] %vm777, %v871
        %888 = vst.msk [vmem:[%s325 + $0x20] sm:$0xff] %vm777, %v872
        %889 = vst.msk [vmem:[%s325 + $0x28] sm:$0xff] %vm777, %v873
        %890 = vst.msk [vmem:[%s325 + $0x30] sm:$0xff] %vm777, %v874
        %891 = vst.msk [vmem:[%s325 + $0x38] sm:$0xff] %vm777, %v875
        %892 = vst.msk [vmem:[%s325 + $0x40] sm:$0xff] %vm777, %v876
        %893 = vst.msk [vmem:[%s325 + $0x48] sm:$0xff] %vm777, %v877
        %894 = vst.msk [vmem:[%s325 + $0x50] sm:$0xff] %vm777, %v878
        %895 = vst.msk [vmem:[%s325 + $0x58] sm:$0xff] %vm777, %v879
        %896 = vst.msk [vmem:[%s325 + $0x60] sm:$0xff] %vm777, %v880
        %897 = vst.msk [vmem:[%s325 + $0x68] sm:$0xff] %vm777, %v881
        %898 = vst.msk [vmem:[%s325 + $0x70] sm:$0xff] %vm777, %v882
        %899 = vst.msk [vmem:[%s325 + $0x78] sm:$0xff] %vm777, %v883
      $region44: #{conv3d_transformer2_forward.14} parent=35 // pred_fallthru
        _
      %s900 = smul.u32 16, %s20
      %p901 = scmp.lt.s32.totalorder %s900, 31
      %s902 = scalar_select %p901, %s900, 31
      %p903 = scmp.lt.s32.totalorder %s21, 0
      %s904 = scalar_select %p903, %s21, 0
      %s905 = sadd.s32 %s904, %s902
      %s906 = smul.addr %s905, 8
      %s907 = scalar_lea.vmem %s4, %s906
      // Predicated region
      $region45: #{conv3d_transformer2_forward.14} parent=35 // pred_check
        %p908 = pneg %p164
      $region46: #{conv3d_transformer2_forward.14} parent=35 // pred_check_branch
        %910 = sbr.rel (%p908) target = $region48
      $region47: #{conv3d_transformer2_forward.14} parent=35 // pred_region
        %s911 = smul.u32 16, %s20
      $region48: #{conv3d_transformer2_forward.14} parent=35 // pred_fallthru
        _
    $region36: #{conv3d_transformer2_forward.14} parent=5 // pred_fallthru
      _
    %p912 = scmp.le.s32.totalorder 2, %s10
    // Predicated region
    $region49: #{conv3d_transformer2_forward.14} parent=5 // pred_check
      %p913 = pneg %p912
    $region50: #{conv3d_transformer2_forward.14} parent=5 // pred_check_branch
      %915 = sbr.rel (%p913) target = $region52
    $region51: #{conv3d_transformer2_forward.14} parent=5 // pred_region
      %s916 = ssub.s32 %s10, 2
      // Predicated region
      $region53: #{conv3d_transformer2_forward.14} parent=51 // pred_check
        %p917 = pneg %p170
      $region54: #{conv3d_transformer2_forward.14} parent=51 // pred_check_branch
        %919 = sbr.rel (%p917) target = $region56
      $region55: #{conv3d_transformer2_forward.14} parent=51 // pred_region
        %s920 = smul.u32 16, %s23
        %p921 = scmp.lt.s32.totalorder %s920, 31
        %s922 = scalar_select %p921, %s920, 31
        %p923 = scmp.lt.s32.totalorder %s24, 0
        %s924 = scalar_select %p923, %s24, 0
        %s925 = sadd.s32 %s924, %s922
        %s926 = smul.addr %s925, 8
        %s927 = scalar_lea.vmem %s4, %s926
      $region56: #{conv3d_transformer2_forward.14} parent=51 // pred_fallthru
        _
    $region52: #{conv3d_transformer2_forward.14} parent=5 // pred_fallthru
      _
  $region6: #{conv3d_transformer2_forward.14} parent=0 // loop_footer
    %s14 = sadd.s32 1, %s10
  $region7: #{conv3d_transformer2_forward.14} parent=0 // loop_footer_branch
    %9 = sbr.rel target = $region3
  $region8: #{conv3d_transformer2_forward.14} parent=0 // loop_exit
    _

// kernel: conv3d_transformer2_forward.15
$region0: #{conv3d_transformer2_forward.15}
  #allocation0 [shape = 'u32[]', space=smem, size = 0x4, offset = 0x4, fixed_abs, tag = 'smem constant byte address 0x4 - core index']
  #allocation1 [shape = 'u32[144,128]{1,0:T(1,128)}', space=vmem, size = 0x12000, scoped, tag = 'internal scratch']
  #allocation2 [shape = 'f32[128,96]{1,0:T(8,128)}', space=vmem, size = 0x10000, scoped, tag = 'scratch operand']
  %s0 = inlined_call_operand.vmem [shape: f32[256,32], index: 0, kind: input, shape index: {}]
  %s1 = inlined_call_operand.vmem [shape: f32[32,96], index: 1, kind: input, shape index: {}]
  %s2 = inlined_call_operand.vmem [shape: f32[1,96], index: 2, kind: input, shape index: {}]
  %s3 = inlined_call_operand.vmem [shape: f32[256,96], index: 3, kind: output, shape index: {}]
  %s4 = sld [smem:[#allocation0]]
  $region53: #{conv3d_transformer2_forward.15} parent=0
    _
  %s6 = ssub.s32 1, %s4
  %s7 = scalar_select 0, %s6, %s4
  loop: start=0, step=1, limit=4
  $region2: #{conv3d_transformer2_forward.15} parent=0 // loop_pre_header
    _
  $region3: #{conv3d_transformer2_forward.15} parent=0 // loop_header
    %s9 = sphi 0, %s13
    %p10 = scmp.ge.s32.totalorder %s9, 4
    %s16 = sphi 0, %s35
    %s17 = sphi 0, %s31
    %s18 = sphi 0, %s27
    %s19 = sphi 0, %s16
    %s20 = sphi 0, %s17
    %s21 = sphi 0, %s18
    %s22 = sphi 0, %s19
    %s23 = sphi 0, %s20
    %s24 = sphi 0, %s21
    %s40 = sphi 0, %s42
    %s43 = sphi 0, %s40
    %s44 = sphi 0, %s43
    %s60 = sphi 0, %s44
    %s68 = sphi 0, %s70
    %s71 = sphi 0, %s68
    %s72 = sphi 0, %s71
    %s88 = sphi 0, %s72
    %s94 = sphi 0, %s96
    %s97 = sphi 0, %s94
    %s98 = sphi 0, %s97
    %s114 = sphi 0, %s98
    %s122 = sphi 0, %s124
    %s125 = sphi 0, %s122
    %s126 = sphi 0, %s125
    %s142 = sphi 0, %s126
  $region4: #{conv3d_transformer2_forward.15} parent=0 // loop_header_branch
    %12 = sbr.rel (%p10) target = $region8
  $region5: #{conv3d_transformer2_forward.15} parent=0 // loop_body
    %s14 = ssub.s32 %s9, 1
    %s15 = ssub.s32 %s9, 2
    %s25 = sadd.s32 1, %s18
    %p26 = scmp.ge.s32.totalorder %s25, 1
    %s27 = scalar_select %p26, 0, %s25
    %s28 = sadd.s32 1, %s17
    %s29 = scalar_select %p26, %s28, %s17
    %p30 = scmp.ge.s32.totalorder %s29, 1
    %s31 = scalar_select %p30, 0, %s29
    %s32 = sadd.s32 1, %s16
    %s33 = scalar_select %p30, %s32, %s16
    %p34 = scmp.ge.s32.totalorder %s33, 2
    %s35 = scalar_select %p34, 0, %s33
    %s36 = ssub.s32 %s16, %s35
    %s37 = ssub.s32 %s18, %s27
    %s38 = sor.u32 %s36, %s37
    %p39 = scmp.eq.s32.totalorder %s38, 0
    %s41 = sadd.s32 %s40, 1
    %s42 = scalar_select %p39, %s40, %s41
    %p45 = pneg %p39
    %p46 = scmp.eq.s32.totalorder %s9, 1
    %p47 = por %p45, %p46
    %p48 = scmp.ne.s32.totalorder %s40, %s43
    %p49 = scmp.eq.s32.totalorder %s9, 0
    %p50 = por %p48, %p49
    %p51 = scmp.ne.s32.totalorder %s40, %s43
    %p52 = scmp.eq.s32.totalorder %s14, 1
    %p53 = por %p51, %p52
    %p54 = scmp.ne.s32.totalorder %s43, %s44
    %p55 = scmp.eq.s32.totalorder %s14, 0
    %p56 = por %p54, %p55
    %p57 = scmp.ne.s32.totalorder %s43, %s44
    %p58 = scmp.eq.s32.totalorder %s15, 1
    %p59 = por %p57, %p58
    %p61 = scmp.ne.s32.totalorder %s44, %s60
    %p62 = scmp.eq.s32.totalorder %s15, 0
    %p63 = por %p61, %p62
    %s64 = ssub.s32 %s18, %s27
    %s65 = ssub.s32 %s17, %s31
    %s66 = sor.u32 %s64, %s65
    %p67 = scmp.eq.s32.totalorder %s66, 0
    %s69 = sadd.s32 %s68, 1
    %s70 = scalar_select %p67, %s68, %s69
    %p73 = pneg %p67
    %p74 = scmp.eq.s32.totalorder %s9, 1
    %p75 = por %p73, %p74
    %p76 = scmp.ne.s32.totalorder %s68, %s71
    %p77 = scmp.eq.s32.totalorder %s9, 0
    %p78 = por %p76, %p77
    %p79 = scmp.ne.s32.totalorder %s68, %s71
    %p80 = scmp.eq.s32.totalorder %s14, 1
    %p81 = por %p79, %p80
    %p82 = scmp.ne.s32.totalorder %s71, %s72
    %p83 = scmp.eq.s32.totalorder %s14, 0
    %p84 = por %p82, %p83
    %p85 = scmp.ne.s32.totalorder %s71, %s72
    %p86 = scmp.eq.s32.totalorder %s15, 1
    %p87 = por %p85, %p86
    %p89 = scmp.ne.s32.totalorder %s72, %s88
    %p90 = scmp.eq.s32.totalorder %s15, 0
    %p91 = por %p89, %p90
    %s92 = ssub.s32 %s17, %s31
    %p93 = scmp.eq.s32.totalorder %s92, 0
    %s95 = sadd.s32 %s94, 1
    %s96 = scalar_select %p93, %s94, %s95
    %p99 = pneg %p93
    %p100 = scmp.eq.s32.totalorder %s9, 1
    %p101 = por %p99, %p100
    %p102 = scmp.ne.s32.totalorder %s94, %s97
    %p103 = scmp.eq.s32.totalorder %s9, 0
    %p104 = por %p102, %p103
    %p105 = scmp.ne.s32.totalorder %s94, %s97
    %p106 = scmp.eq.s32.totalorder %s14, 1
    %p107 = por %p105, %p106
    %p108 = scmp.ne.s32.totalorder %s97, %s98
    %p109 = scmp.eq.s32.totalorder %s14, 0
    %p110 = por %p108, %p109
    %p111 = scmp.ne.s32.totalorder %s97, %s98
    %p112 = scmp.eq.s32.totalorder %s15, 1
    %p113 = por %p111, %p112
    %p115 = scmp.ne.s32.totalorder %s98, %s114
    %p116 = scmp.eq.s32.totalorder %s15, 0
    %p117 = por %p115, %p116
    %s118 = ssub.s32 %s16, %s35
    %s119 = ssub.s32 %s17, %s31
    %s120 = sor.u32 %s118, %s119
    %p121 = scmp.eq.s32.totalorder %s120, 0
    %s123 = sadd.s32 %s122, 1
    %s124 = scalar_select %p121, %s122, %s123
    %p127 = pneg %p121
    %p128 = scmp.eq.s32.totalorder %s9, 1
    %p129 = por %p127, %p128
    %p130 = scmp.ne.s32.totalorder %s122, %s125
    %p131 = scmp.eq.s32.totalorder %s9, 0
    %p132 = por %p130, %p131
    %p133 = scmp.ne.s32.totalorder %s122, %s125
    %p134 = scmp.eq.s32.totalorder %s14, 1
    %p135 = por %p133, %p134
    %p136 = scmp.ne.s32.totalorder %s125, %s126
    %p137 = scmp.eq.s32.totalorder %s14, 0
    %p138 = por %p136, %p137
    %p139 = scmp.ne.s32.totalorder %s125, %s126
    %p140 = scmp.eq.s32.totalorder %s15, 1
    %p141 = por %p139, %p140
    %p143 = scmp.ne.s32.totalorder %s126, %s142
    %p144 = scmp.eq.s32.totalorder %s15, 0
    %p145 = por %p143, %p144
    %p146 = scmp.le.s32.totalorder 1, %s9
    %p147 = scmp.lt.s32.totalorder %s9, 3
    %p148 = pnand %p146, %p147
    %p149 = pneg %p148
    // Predicated region
    $region9: #{conv3d_transformer2_forward.15} parent=5 // pred_check
      _
    $region10: #{conv3d_transformer2_forward.15} parent=5 // pred_check_branch
      %151 = sbr.rel (%p148) target = $region12
    $region11: #{conv3d_transformer2_forward.15} parent=5 // pred_region
      %s152 = ssub.s32 %s9, 1
      // Predicated region
      $region13: #{conv3d_transformer2_forward.15} parent=11 // pred_check
        %p153 = pneg %p84
      $region14: #{conv3d_transformer2_forward.15} parent=11 // pred_check_branch
        %155 = sbr.rel (%p153) target = $region16
      $region15: #{conv3d_transformer2_forward.15} parent=11 // pred_region
        %s156 = smul.u32 4, %s21
        %p157 = scmp.lt.s32.totalorder %s156, 3
        %s158 = scalar_select %p157, %s156, 3
        %p159 = scmp.lt.s32.totalorder %s20, 0
        %s160 = scalar_select %p159, %s20, 0
        %s161 = sadd.s32 %s160, %s158
        %s162 = smul.addr %s161, 8
        %s163 = scalar_lea.vmem %s1, %s162
        %s164 = smul.u32 4, %s21
      $region16: #{conv3d_transformer2_forward.15} parent=11 // pred_fallthru
        _
      // Predicated region
      $region17: #{conv3d_transformer2_forward.15} parent=11 // pred_check
        %p165 = pneg %p110
      $region18: #{conv3d_transformer2_forward.15} parent=11 // pred_check_branch
        %167 = sbr.rel (%p165) target = $region20
      $region19: #{conv3d_transformer2_forward.15} parent=11 // pred_region
        %p168 = scmp.lt.s32.totalorder %s20, 0
        %s169 = scalar_select %p168, %s20, 0
        %s170 = scalar_lea.vmem %s2, %s169
      $region20: #{conv3d_transformer2_forward.15} parent=11 // pred_fallthru
        _
    $region12: #{conv3d_transformer2_forward.15} parent=5 // pred_fallthru
      _
    %p171 = scmp.lt.s32.totalorder %s9, 2
    // Predicated region
    $region21: #{conv3d_transformer2_forward.15} parent=5 // pred_check
      %p172 = pneg %p171
    $region22: #{conv3d_transformer2_forward.15} parent=5 // pred_check_branch
      %174 = sbr.rel (%p172) target = $region24
    $region23: #{conv3d_transformer2_forward.15} parent=5 // pred_region
      // Predicated region
      $region25: #{conv3d_transformer2_forward.15} parent=23 // pred_check
        %p175 = pneg %p50
      $region26: #{conv3d_transformer2_forward.15} parent=23 // pred_check_branch
        %177 = sbr.rel (%p175) target = $region28
      $region27: #{conv3d_transformer2_forward.15} parent=23 // pred_region
        %s178 = smul.u32 16, %s16
        %p179 = scmp.lt.s32.totalorder %s178, 31
        %s180 = scalar_select %p179, %s178, 31
        %p181 = scmp.lt.s32.totalorder %s18, 0
        %s182 = scalar_select %p181, %s18, 0
        %s183 = sadd.s32 %s182, %s180
        %s184 = smul.addr %s183, 8
        %s185 = scalar_lea.vmem %s0, %s184
        %s186 = smul.u32 16, %s16
      $region28: #{conv3d_transformer2_forward.15} parent=23 // pred_fallthru
        _
    $region24: #{conv3d_transformer2_forward.15} parent=5 // pred_fallthru
      _
    %p187 = scmp.le.s32.totalorder 1, %s9
    %p188 = scmp.lt.s32.totalorder %s9, 3
    %p189 = pnand %p187, %p188
    %p190 = pneg %p189
    // Predicated region
    $region29: #{conv3d_transformer2_forward.15} parent=5 // pred_check
      _
    $region30: #{conv3d_transformer2_forward.15} parent=5 // pred_check_branch
      %192 = sbr.rel (%p189) target = $region32
    $region31: #{conv3d_transformer2_forward.15} parent=5 // pred_region
      %s193 = ssub.s32 %s9, 1
      %s194 = smul.u32 16, %s19
      %p195 = scmp.lt.s32.totalorder %s194, 31
      %s196 = scalar_select %p195, %s194, 31
      %p197 = scmp.lt.s32.totalorder %s21, 0
      %s198 = scalar_select %p197, %s21, 0
      %s199 = sadd.s32 %s198, %s196
      %s200 = smul.addr %s199, 8
      %s201 = scalar_lea.vmem %s0, %s200
      %p202 = pneg %p56
      %p203 = pneg %p53
      %s204 = smul.u32 4, %s21
      %p205 = scmp.lt.s32.totalorder %s204, 3
      %s206 = scalar_select %p205, %s204, 3
      %p207 = scmp.lt.s32.totalorder %s20, 0
      %s208 = scalar_select %p207, %s20, 0
      %s209 = sadd.s32 %s208, %s206
      %s210 = smul.addr %s209, 8
      %s211 = scalar_lea.vmem %s1, %s210
      %p212 = pneg %p84
      %p213 = pneg %p81
      %p214 = scmp.lt.s32.totalorder %s20, 0
      %s215 = scalar_select %p214, %s20, 0
      %s216 = scalar_lea.vmem %s2, %s215
      %p217 = pneg %p110
      %p218 = pneg %p107
      %p219 = pneg %p138
      %p220 = pneg %p135
      %s221 = smul.u32 16, %s19
      %p222 = scmp.lt.s32.totalorder %s221, 31
      %s223 = scalar_select %p222, %s221, 31
      %p224 = scmp.lt.s32.totalorder %s20, 0
      %s225 = scalar_select %p224, %s20, 0
      %s226 = sadd.s32 %s225, %s223
      %s227 = smul.addr %s226, 8
      %s228 = scalar_lea.vmem %s3, %s227
      %s229 = smul.u32 16, %s19
      %p230 = scmp.lt.s32.totalorder %s229, 31
      %s231 = scalar_select %p230, %s229, 31
      %p232 = scmp.lt.s32.totalorder %s21, 0
      %s233 = scalar_select %p232, %s21, 0
      %s234 = sadd.s32 %s233, %s231
      %s235 = smul.addr %s234, 8
      %s236 = scalar_lea.vmem %s0, %s235
      %s237 = smul.u32 16, %s19
      %s238 = smul.u32 4, %s21
      %p239 = scmp.lt.s32.totalorder %s238, 3
      %s240 = scalar_select %p239, %s238, 3
      %p241 = scmp.lt.s32.totalorder %s20, 0
      %s242 = scalar_select %p241, %s20, 0
      %s243 = sadd.s32 %s242, %s240
      %s244 = smul.addr %s243, 8
      %s245 = scalar_lea.vmem %s1, %s244
      %s246 = smul.u32 4, %s21
      %p247 = scmp.lt.s32.totalorder %s20, 0
      %s248 = scalar_select %p247, %s20, 0
      %s249 = scalar_lea.vmem %s2, %s248
      %s250 = smul.u32 16, %s19
      %p251 = scmp.lt.s32.totalorder %s250, 31
      %s252 = scalar_select %p251, %s250, 31
      %p253 = scmp.lt.s32.totalorder %s20, 0
      %s254 = scalar_select %p253, %s20, 0
      %s255 = sadd.s32 %s254, %s252
      %s256 = smul.addr %s255, 8
      %s257 = scalar_lea.vmem %s3, %s256
      %s258 = smul.u32 16, %s19
      %p260 = scmp.eq.s32.totalorder %s21, 0
      // Predicated region
      $region33: #{conv3d_transformer2_forward.15} parent=31 // pred_check
        %p261 = pneg %p260
      $region34: #{conv3d_transformer2_forward.15} parent=31 // pred_check_branch
        %263 = sbr.rel (%p261) target = $region36
      $region35: #{conv3d_transformer2_forward.15} parent=31 // pred_region
        %vm264 = vcmask 785408
        %265 = vst.msk [vmem:[#allocation2] sm:$0xff] %vm264, 0.0
        %266 = vst.msk [vmem:[#allocation2 + $0x8] sm:$0xff] %vm264, 0.0
        %267 = vst.msk [vmem:[#allocation2 + $0x10] sm:$0xff] %vm264, 0.0
        %268 = vst.msk [vmem:[#allocation2 + $0x18] sm:$0xff] %vm264, 0.0
        %269 = vst.msk [vmem:[#allocation2 + $0x20] sm:$0xff] %vm264, 0.0
        %270 = vst.msk [vmem:[#allocation2 + $0x28] sm:$0xff] %vm264, 0.0
        %271 = vst.msk [vmem:[#allocation2 + $0x30] sm:$0xff] %vm264, 0.0
        %272 = vst.msk [vmem:[#allocation2 + $0x38] sm:$0xff] %vm264, 0.0
        %273 = vst.msk [vmem:[#allocation2 + $0x40] sm:$0xff] %vm264, 0.0
        %274 = vst.msk [vmem:[#allocation2 + $0x48] sm:$0xff] %vm264, 0.0
        %275 = vst.msk [vmem:[#allocation2 + $0x50] sm:$0xff] %vm264, 0.0
        %276 = vst.msk [vmem:[#allocation2 + $0x58] sm:$0xff] %vm264, 0.0
        %277 = vst.msk [vmem:[#allocation2 + $0x60] sm:$0xff] %vm264, 0.0
        %278 = vst.msk [vmem:[#allocation2 + $0x68] sm:$0xff] %vm264, 0.0
        %279 = vst.msk [vmem:[#allocation2 + $0x70] sm:$0xff] %vm264, 0.0
        %280 = vst.msk [vmem:[#allocation2 + $0x78] sm:$0xff] %vm264, 0.0
      $region36: #{conv3d_transformer2_forward.15} parent=31 // pred_fallthru
        _
      %v281 = vld [vmem:[#allocation2] sm:$0xff]
      %v282 = vld [vmem:[#allocation2 + $0x8] sm:$0xff]
      %v283 = vld [vmem:[#allocation2 + $0x10] sm:$0xff]
      %v284 = vld [vmem:[#allocation2 + $0x18] sm:$0xff]
      %v285 = vld [vmem:[#allocation2 + $0x20] sm:$0xff]
      %v286 = vld [vmem:[#allocation2 + $0x28] sm:$0xff]
      %v287 = vld [vmem:[#allocation2 + $0x30] sm:$0xff]
      %v288 = vld [vmem:[#allocation2 + $0x38] sm:$0xff]
      %v289 = vld [vmem:[#allocation2 + $0x40] sm:$0xff]
      %v290 = vld [vmem:[#allocation2 + $0x48] sm:$0xff]
      %v291 = vld [vmem:[#allocation2 + $0x50] sm:$0xff]
      %v292 = vld [vmem:[#allocation2 + $0x58] sm:$0xff]
      %v293 = vld [vmem:[#allocation2 + $0x60] sm:$0xff]
      %v294 = vld [vmem:[#allocation2 + $0x68] sm:$0xff]
      %v295 = vld [vmem:[#allocation2 + $0x70] sm:$0xff]
      %v296 = vld [vmem:[#allocation2 + $0x78] sm:$0xff]
      %v297 = vld [vmem:[%s236] sm:$0xff]
      %v298 = vld [vmem:[%s236 + $0x8] sm:$0xff]
      %v299 = vld [vmem:[%s236 + $0x10] sm:$0xff]
      %v300 = vld [vmem:[%s236 + $0x18] sm:$0xff]
      %v301 = vld [vmem:[%s236 + $0x20] sm:$0xff]
      %v302 = vld [vmem:[%s236 + $0x28] sm:$0xff]
      %v303 = vld [vmem:[%s236 + $0x30] sm:$0xff]
      %v304 = vld [vmem:[%s236 + $0x38] sm:$0xff]
      %v305 = vld [vmem:[%s236 + $0x40] sm:$0xff]
      %v306 = vld [vmem:[%s236 + $0x48] sm:$0xff]
      %v307 = vld [vmem:[%s236 + $0x50] sm:$0xff]
      %v308 = vld [vmem:[%s236 + $0x58] sm:$0xff]
      %v309 = vld [vmem:[%s236 + $0x60] sm:$0xff]
      %v310 = vld [vmem:[%s236 + $0x68] sm:$0xff]
      %v311 = vld [vmem:[%s236 + $0x70] sm:$0xff]
      %v312 = vld [vmem:[%s236 + $0x78] sm:$0xff]
      %v313 = vpack.c.bf16 %v298, %v297
      %v314 = vpack.c.bf16 %v300, %v299
      %v315 = vpack.c.bf16 %v302, %v301
      %v316 = vpack.c.bf16 %v304, %v303
      %v317 = vpack.c.bf16 %v306, %v305
      %v318 = vpack.c.bf16 %v308, %v307
      %v319 = vpack.c.bf16 %v310, %v309
      %v320 = vpack.c.bf16 %v312, %v311
      %v321 = vld [vmem:[%s245] sm:$0xff]
      %v322 = vld [vmem:[%s245 + $0x8] sm:$0xff]
      %v323 = vld [vmem:[%s245 + $0x10] sm:$0xff]
      %v324 = vld [vmem:[%s245 + $0x18] sm:$0xff]
      %v325 = vpack.c.bf16 %v322, %v321
      %v326 = vpack.c.bf16 %v324, %v323
      %vm327 = vcmask 261120
      %v329 = vsel %vm327, %v313, 0
      %v332 = vsel %vm327, %v314, 0
      %v335 = vsel %vm327, %v315, 0
      %v338 = vsel %vm327, %v316, 0
      %v341 = vsel %vm327, %v317, 0
      %v344 = vsel %vm327, %v318, 0
      %v347 = vsel %vm327, %v319, 0
      %v350 = vsel %vm327, %v320, 0
      %352 = vmatprep.subr.bf16.mxu0 0
      %353 = vmatpush1.bf16.msra.mxu0 %v325
      %354 = vmatprep.subr.bf16.mxu0 0
      %355 = vmatpush1.bf16.msra.mxu0 %v326
      %356 = vmatprep.subr.bf16.mxu0 0
      %357 = vmatpush1.bf16.msra.mxu0 0
      %358 = vmatprep.subr.bf16.mxu0 0
      %359 = vmatpush1.bf16.msra.mxu0 0
      %360 = vmatprep.subr.bf16.mxu0 0
      %361 = vmatpush1.bf16.msra.mxu0 0
      %362 = vmatprep.subr.bf16.mxu0 0
      %363 = vmatpush1.bf16.msra.mxu0 0
      %364 = vmatprep.subr.bf16.mxu0 0
      %365 = vmatpush1.bf16.msra.mxu0 0
      %366 = vmatprep.subr.bf16.mxu0 0
      %367 = vmatpush1.bf16.msra.mxu0 0
      %368 = vmatprep.subr.bf16.mxu0 0
      %369 = vmatpush1.bf16.msra.mxu0 0
      %370 = vmatprep.subr.bf16.mxu0 0
      %371 = vmatpush1.bf16.msra.mxu0 0
      %372 = vmatprep.subr.bf16.mxu0 0
      %373 = vmatpush1.bf16.msra.mxu0 0
      %374 = vmatprep.subr.bf16.mxu0 0
      %375 = vmatpush1.bf16.msra.mxu0 0
      %376 = vmatprep.subr.bf16.mxu0 0
      %377 = vmatpush1.bf16.msra.mxu0 0
      %378 = vmatprep.subr.bf16.mxu0 0
      %379 = vmatpush1.bf16.msra.mxu0 0
      %380 = vmatprep.subr.bf16.mxu0 0
      %381 = vmatpush1.bf16.msra.mxu0 0
      %382 = vmatprep.subr.bf16.mxu0 0
      %383 = vmatpush1.bf16.msra.mxu0 0
      %384 = vmatprep.mubr.bf16.mxu0 0
      %385 = vmatmul.mubr.bf16.gmra.mrb[0].mxu0 %v329
      %v386 = vpop.f32.mrb[0].mxu0
      %v387 = vadd.f32 0.0, %v386
      %v388 = vpop.f32.mrb[0].mxu0
      %v389 = vpop.f32.mrb[0].mxu0
      %v390 = vadd.f32 0.0, %v389
      %v391 = vpop.f32.mrb[0].mxu0
      %392 = vmatprep.mubr.bf16.mxu0 0
      %393 = vmatmul.mubr.bf16.gmra.mrb[0].mxu0 %v332
      %v394 = vpop.f32.mrb[0].mxu0
      %v395 = vadd.f32 0.0, %v394
      %v396 = vpop.f32.mrb[0].mxu0
      %v397 = vpop.f32.mrb[0].mxu0
      %v398 = vadd.f32 0.0, %v397
      %v399 = vpop.f32.mrb[0].mxu0
      %400 = vmatprep.mubr.bf16.mxu0 0
      %401 = vmatmul.mubr.bf16.gmra.mrb[0].mxu0 %v335
      %v402 = vpop.f32.mrb[0].mxu0
      %v403 = vadd.f32 0.0, %v402
      %v404 = vpop.f32.mrb[0].mxu0
      %v405 = vpop.f32.mrb[0].mxu0
      %v406 = vadd.f32 0.0, %v405
      %v407 = vpop.f32.mrb[0].mxu0
      %408 = vmatprep.mubr.bf16.mxu0 0
      %409 = vmatmul.mubr.bf16.gmra.mrb[0].mxu0 %v338
      %v410 = vpop.f32.mrb[0].mxu0
      %v411 = vadd.f32 0.0, %v410
      %v412 = vpop.f32.mrb[0].mxu0
      %v413 = vpop.f32.mrb[0].mxu0
      %v414 = vadd.f32 0.0, %v413
      %v415 = vpop.f32.mrb[0].mxu0
      %416 = vmatprep.mubr.bf16.mxu0 0
      %417 = vmatmul.mubr.bf16.gmra.mrb[0].mxu0 %v341
      %v418 = vpop.f32.mrb[0].mxu0
      %v419 = vadd.f32 0.0, %v418
      %v420 = vpop.f32.mrb[0].mxu0
      %v421 = vpop.f32.mrb[0].mxu0
      %v422 = vadd.f32 0.0, %v421
      %v423 = vpop.f32.mrb[0].mxu0
      %424 = vmatprep.mubr.bf16.mxu0 0
      %425 = vmatmul.mubr.bf16.gmra.mrb[0].mxu0 %v344
      %v426 = vpop.f32.mrb[0].mxu0
      %v427 = vadd.f32 0.0, %v426
      %v428 = vpop.f32.mrb[0].mxu0
      %v429 = vpop.f32.mrb[0].mxu0
      %v430 = vadd.f32 0.0, %v429
      %v431 = vpop.f32.mrb[0].mxu0
      %432 = vmatprep.mubr.bf16.mxu0 0
      %433 = vmatmul.mubr.bf16.gmra.mrb[0].mxu0 %v347
      %v434 = vpop.f32.mrb[0].mxu0
      %v435 = vadd.f32 0.0, %v434
      %v436 = vpop.f32.mrb[0].mxu0
      %v437 = vpop.f32.mrb[0].mxu0
      %v438 = vadd.f32 0.0, %v437
      %v439 = vpop.f32.mrb[0].mxu0
      %440 = vmatprep.mubr.bf16.mxu0 0
      %441 = vmatmul.mubr.bf16.gmra.mrb[0].mxu0 %v350
      %v442 = vpop.f32.mrb[0].mxu0
      %v443 = vadd.f32 0.0, %v442
      %v444 = vpop.f32.mrb[0].mxu0
      %v445 = vpop.f32.mrb[0].mxu0
      %v446 = vadd.f32 0.0, %v445
      %v447 = vpop.f32.mrb[0].mxu0
      %448 = vdwg.mxu0
      %v449 = vadd.f32 %v281, %v387
      %v450 = vadd.f32 %v282, %v390
      %v451 = vadd.f32 %v283, %v395
      %v452 = vadd.f32 %v284, %v398
      %v453 = vadd.f32 %v285, %v403
      %v454 = vadd.f32 %v286, %v406
      %v455 = vadd.f32 %v287, %v411
      %v456 = vadd.f32 %v288, %v414
      %v457 = vadd.f32 %v289, %v419
      %v458 = vadd.f32 %v290, %v422
      %v459 = vadd.f32 %v291, %v427
      %v460 = vadd.f32 %v292, %v430
      %v461 = vadd.f32 %v293, %v435
      %v462 = vadd.f32 %v294, %v438
      %v463 = vadd.f32 %v295, %v443
      %v464 = vadd.f32 %v296, %v446
      %vm465 = vcmask 785408
      %466 = vst.msk [vmem:[#allocation2] sm:$0xff] %vm465, %v449
      %467 = vst.msk [vmem:[#allocation2 + $0x8] sm:$0xff] %vm465, %v450
      %468 = vst.msk [vmem:[#allocation2 + $0x10] sm:$0xff] %vm465, %v451
      %469 = vst.msk [vmem:[#allocation2 + $0x18] sm:$0xff] %vm465, %v452
      %470 = vst.msk [vmem:[#allocation2 + $0x20] sm:$0xff] %vm465, %v453
      %471 = vst.msk [vmem:[#allocation2 + $0x28] sm:$0xff] %vm465, %v454
      %472 = vst.msk [vmem:[#allocation2 + $0x30] sm:$0xff] %vm465, %v455
      %473 = vst.msk [vmem:[#allocation2 + $0x38] sm:$0xff] %vm465, %v456
      %474 = vst.msk [vmem:[#allocation2 + $0x40] sm:$0xff] %vm465, %v457
      %475 = vst.msk [vmem:[#allocation2 + $0x48] sm:$0xff] %vm465, %v458
      %476 = vst.msk [vmem:[#allocation2 + $0x50] sm:$0xff] %vm465, %v459
      %477 = vst.msk [vmem:[#allocation2 + $0x58] sm:$0xff] %vm465, %v460
      %478 = vst.msk [vmem:[#allocation2 + $0x60] sm:$0xff] %vm465, %v461
      %479 = vst.msk [vmem:[#allocation2 + $0x68] sm:$0xff] %vm465, %v462
      %480 = vst.msk [vmem:[#allocation2 + $0x70] sm:$0xff] %vm465, %v463
      %481 = vst.msk [vmem:[#allocation2 + $0x78] sm:$0xff] %vm465, %v464
      // Predicated region
      $region37: #{conv3d_transformer2_forward.15} parent=31 // pred_check
        %p482 = pneg %p260
      $region38: #{conv3d_transformer2_forward.15} parent=31 // pred_check_branch
        %484 = sbr.rel (%p482) target = $region40
      $region39: #{conv3d_transformer2_forward.15} parent=31 // pred_region
        %v485 = vld [vmem:[#allocation2] sm:$0xff]
        %v486 = vld [vmem:[#allocation2 + $0x8] sm:$0xff]
        %v487 = vld [vmem:[#allocation2 + $0x10] sm:$0xff]
        %v488 = vld [vmem:[#allocation2 + $0x18] sm:$0xff]
        %v489 = vld [vmem:[#allocation2 + $0x20] sm:$0xff]
        %v490 = vld [vmem:[#allocation2 + $0x28] sm:$0xff]
        %v491 = vld [vmem:[#allocation2 + $0x30] sm:$0xff]
        %v492 = vld [vmem:[#allocation2 + $0x38] sm:$0xff]
        %v493 = vld [vmem:[#allocation2 + $0x40] sm:$0xff]
        %v494 = vld [vmem:[#allocation2 + $0x48] sm:$0xff]
        %v495 = vld [vmem:[#allocation2 + $0x50] sm:$0xff]
        %v496 = vld [vmem:[#allocation2 + $0x58] sm:$0xff]
        %v497 = vld [vmem:[#allocation2 + $0x60] sm:$0xff]
        %v498 = vld [vmem:[#allocation2 + $0x68] sm:$0xff]
        %v499 = vld [vmem:[#allocation2 + $0x70] sm:$0xff]
        %v500 = vld [vmem:[#allocation2 + $0x78] sm:$0xff]
        %v501 = vld [vmem:[%s249] sm:$0x1]
        %v503 = vlaneseq
        %v504 = vshrl.u32 %v503, 7
        %v505 = vsub.s32 0, %v504
        %v506 = vrot.slane %v501, %v505
        %v508 = vadd.f32 %v485, %v506
        %v509 = vadd.f32 %v486, %v506
        %v510 = vadd.f32 %v487, %v506
        %v511 = vadd.f32 %v488, %v506
        %v512 = vadd.f32 %v489, %v506
        %v513 = vadd.f32 %v490, %v506
        %v514 = vadd.f32 %v491, %v506
        %v515 = vadd.f32 %v492, %v506
        %v516 = vadd.f32 %v493, %v506
        %v517 = vadd.f32 %v494, %v506
        %v518 = vadd.f32 %v495, %v506
        %v519 = vadd.f32 %v496, %v506
        %v520 = vadd.f32 %v497, %v506
        %v521 = vadd.f32 %v498, %v506
        %v522 = vadd.f32 %v499, %v506
        %v523 = vadd.f32 %v500, %v506
        %524 = vst.msk [vmem:[%s257] sm:$0xff] %vm465, %v508
        %525 = vst.msk [vmem:[%s257 + $0x8] sm:$0xff] %vm465, %v509
        %526 = vst.msk [vmem:[%s257 + $0x10] sm:$0xff] %vm465, %v510
        %527 = vst.msk [vmem:[%s257 + $0x18] sm:$0xff] %vm465, %v511
        %528 = vst.msk [vmem:[%s257 + $0x20] sm:$0xff] %vm465, %v512
        %529 = vst.msk [vmem:[%s257 + $0x28] sm:$0xff] %vm465, %v513
        %530 = vst.msk [vmem:[%s257 + $0x30] sm:$0xff] %vm465, %v514
        %531 = vst.msk [vmem:[%s257 + $0x38] sm:$0xff] %vm465, %v515
        %532 = vst.msk [vmem:[%s257 + $0x40] sm:$0xff] %vm465, %v516
        %533 = vst.msk [vmem:[%s257 + $0x48] sm:$0xff] %vm465, %v517
        %534 = vst.msk [vmem:[%s257 + $0x50] sm:$0xff] %vm465, %v518
        %535 = vst.msk [vmem:[%s257 + $0x58] sm:$0xff] %vm465, %v519
        %536 = vst.msk [vmem:[%s257 + $0x60] sm:$0xff] %vm465, %v520
        %537 = vst.msk [vmem:[%s257 + $0x68] sm:$0xff] %vm465, %v521
        %538 = vst.msk [vmem:[%s257 + $0x70] sm:$0xff] %vm465, %v522
        %539 = vst.msk [vmem:[%s257 + $0x78] sm:$0xff] %vm465, %v523
      $region40: #{conv3d_transformer2_forward.15} parent=31 // pred_fallthru
        _
      %s540 = smul.u32 16, %s19
      %p541 = scmp.lt.s32.totalorder %s540, 31
      %s542 = scalar_select %p541, %s540, 31
      %p543 = scmp.lt.s32.totalorder %s20, 0
      %s544 = scalar_select %p543, %s20, 0
      %s545 = sadd.s32 %s544, %s542
      %s546 = smul.addr %s545, 8
      %s547 = scalar_lea.vmem %s3, %s546
      // Predicated region
      $region41: #{conv3d_transformer2_forward.15} parent=31 // pred_check
        %p548 = pneg %p135
      $region42: #{conv3d_transformer2_forward.15} parent=31 // pred_check_branch
        %550 = sbr.rel (%p548) target = $region44
      $region43: #{conv3d_transformer2_forward.15} parent=31 // pred_region
        %s551 = smul.u32 16, %s19
      $region44: #{conv3d_transformer2_forward.15} parent=31 // pred_fallthru
        _
    $region32: #{conv3d_transformer2_forward.15} parent=5 // pred_fallthru
      _
    %p552 = scmp.le.s32.totalorder 2, %s9
    // Predicated region
    $region45: #{conv3d_transformer2_forward.15} parent=5 // pred_check
      %p553 = pneg %p552
    $region46: #{conv3d_transformer2_forward.15} parent=5 // pred_check_branch
      %555 = sbr.rel (%p553) target = $region48
    $region47: #{conv3d_transformer2_forward.15} parent=5 // pred_region
      %s556 = ssub.s32 %s9, 2
      // Predicated region
      $region49: #{conv3d_transformer2_forward.15} parent=47 // pred_check
        %p557 = pneg %p141
      $region50: #{conv3d_transformer2_forward.15} parent=47 // pred_check_branch
        %559 = sbr.rel (%p557) target = $region52
      $region51: #{conv3d_transformer2_forward.15} parent=47 // pred_region
        %s560 = smul.u32 16, %s22
        %p561 = scmp.lt.s32.totalorder %s560, 31
        %s562 = scalar_select %p561, %s560, 31
        %p563 = scmp.lt.s32.totalorder %s23, 0
        %s564 = scalar_select %p563, %s23, 0
        %s565 = sadd.s32 %s564, %s562
        %s566 = smul.addr %s565, 8
        %s567 = scalar_lea.vmem %s3, %s566
      $region52: #{conv3d_transformer2_forward.15} parent=47 // pred_fallthru
        _
    $region48: #{conv3d_transformer2_forward.15} parent=5 // pred_fallthru
      _
  $region6: #{conv3d_transformer2_forward.15} parent=0 // loop_footer
    %s13 = sadd.s32 1, %s9
  $region7: #{conv3d_transformer2_forward.15} parent=0 // loop_footer_branch
    %8 = sbr.rel target = $region3
  $region8: #{conv3d_transformer2_forward.15} parent=0 // loop_exit
    _

// kernel: conv3d_transformer2_forward.16
$region0: #{conv3d_transformer2_forward.16}
  #allocation0 [shape = 'u32[]', space=smem, size = 0x4, offset = 0x4, fixed_abs, tag = 'smem constant byte address 0x4 - core index']
  #allocation1 [shape = 'u32[144,128]{1,0:T(1,128)}', space=vmem, size = 0x12000, scoped, tag = 'internal scratch']
  %s0 = inlined_call_operand.vmem [shape: f32[2,128,96], index: 0, kind: input, shape index: {}]
  %s1 = inlined_call_operand.vmem [shape: f32[2,128,32], index: 1, kind: output, shape index: {}]
  %s2 = sld [smem:[#allocation0]]
  $region37: #{conv3d_transformer2_forward.16} parent=0
    _
  %s4 = ssub.s32 1, %s2
  %s5 = scalar_select 0, %s4, %s2
  loop: start=0, step=1, limit=4
  $region2: #{conv3d_transformer2_forward.16} parent=0 // loop_pre_header
    _
  $region3: #{conv3d_transformer2_forward.16} parent=0 // loop_header
    %s7 = sphi 0, %s11
    %p8 = scmp.ge.s32.totalorder %s7, 4
    %s17 = sphi 0, %s19
    %s20 = sphi 0, %s17
    %s21 = sphi 0, %s20
    %s37 = sphi 0, %s21
    %s43 = sphi 0, %s45
    %s46 = sphi 0, %s43
    %s47 = sphi 0, %s46
    %s63 = sphi 0, %s47
  $region4: #{conv3d_transformer2_forward.16} parent=0 // loop_header_branch
    %10 = sbr.rel (%p8) target = $region8
  $region5: #{conv3d_transformer2_forward.16} parent=0 // loop_body
    %s12 = ssub.s32 %s7, 1
    %s13 = ssub.s32 %s7, 2
    %s14 = sadd.s32 %s7, 1
    %s15 = ssub.s32 %s7, %s14
    %p16 = scmp.eq.s32.totalorder %s15, 0
    %s18 = sadd.s32 %s17, 1
    %s19 = scalar_select %p16, %s17, %s18
    %p22 = pneg %p16
    %p23 = scmp.eq.s32.totalorder %s7, 1
    %p24 = por %p22, %p23
    %p25 = scmp.ne.s32.totalorder %s17, %s20
    %p26 = scmp.eq.s32.totalorder %s7, 0
    %p27 = por %p25, %p26
    %p28 = scmp.ne.s32.totalorder %s17, %s20
    %p29 = scmp.eq.s32.totalorder %s12, 1
    %p30 = por %p28, %p29
    %p31 = scmp.ne.s32.totalorder %s20, %s21
    %p32 = scmp.eq.s32.totalorder %s12, 0
    %p33 = por %p31, %p32
    %p34 = scmp.ne.s32.totalorder %s20, %s21
    %p35 = scmp.eq.s32.totalorder %s13, 1
    %p36 = por %p34, %p35
    %p38 = scmp.ne.s32.totalorder %s21, %s37
    %p39 = scmp.eq.s32.totalorder %s13, 0
    %p40 = por %p38, %p39
    %s41 = ssub.s32 %s7, %s14
    %p42 = scmp.eq.s32.totalorder %s41, 0
    %s44 = sadd.s32 %s43, 1
    %s45 = scalar_select %p42, %s43, %s44
    %p48 = pneg %p42
    %p49 = scmp.eq.s32.totalorder %s7, 1
    %p50 = por %p48, %p49
    %p51 = scmp.ne.s32.totalorder %s43, %s46
    %p52 = scmp.eq.s32.totalorder %s7, 0
    %p53 = por %p51, %p52
    %p54 = scmp.ne.s32.totalorder %s43, %s46
    %p55 = scmp.eq.s32.totalorder %s12, 1
    %p56 = por %p54, %p55
    %p57 = scmp.ne.s32.totalorder %s46, %s47
    %p58 = scmp.eq.s32.totalorder %s12, 0
    %p59 = por %p57, %p58
    %p60 = scmp.ne.s32.totalorder %s46, %s47
    %p61 = scmp.eq.s32.totalorder %s13, 1
    %p62 = por %p60, %p61
    %p64 = scmp.ne.s32.totalorder %s47, %s63
    %p65 = scmp.eq.s32.totalorder %s13, 0
    %p66 = por %p64, %p65
    %p67 = scmp.le.s32.totalorder 1, %s7
    %p68 = scmp.lt.s32.totalorder %s7, 3
    %p69 = pnand %p67, %p68
    %p70 = pneg %p69
    // Predicated region
    $region9: #{conv3d_transformer2_forward.16} parent=5 // pred_check
      _
    $region10: #{conv3d_transformer2_forward.16} parent=5 // pred_check_branch
      %72 = sbr.rel (%p69) target = $region12
    $region11: #{conv3d_transformer2_forward.16} parent=5 // pred_region
      %s73 = ssub.s32 %s7, 1
    $region12: #{conv3d_transformer2_forward.16} parent=5 // pred_fallthru
      _
    %p74 = scmp.lt.s32.totalorder %s7, 2
    // Predicated region
    $region13: #{conv3d_transformer2_forward.16} parent=5 // pred_check
      %p75 = pneg %p74
    $region14: #{conv3d_transformer2_forward.16} parent=5 // pred_check_branch
      %77 = sbr.rel (%p75) target = $region16
    $region15: #{conv3d_transformer2_forward.16} parent=5 // pred_region
      // Predicated region
      $region17: #{conv3d_transformer2_forward.16} parent=15 // pred_check
        %p78 = pneg %p27
      $region18: #{conv3d_transformer2_forward.16} parent=15 // pred_check_branch
        %80 = sbr.rel (%p78) target = $region20
      $region19: #{conv3d_transformer2_forward.16} parent=15 // pred_region
        %p81 = scmp.lt.s32.totalorder %s7, 1
        %s82 = scalar_select %p81, %s7, 1
        %s83 = smul.addr %s82, 16
        %s84 = smul.addr %s83, 8
        %s85 = scalar_lea.vmem %s0, %s84
      $region20: #{conv3d_transformer2_forward.16} parent=15 // pred_fallthru
        _
    $region16: #{conv3d_transformer2_forward.16} parent=5 // pred_fallthru
      _
    %p86 = scmp.le.s32.totalorder 1, %s7
    %p87 = scmp.lt.s32.totalorder %s7, 3
    %p88 = pnand %p86, %p87
    %p89 = pneg %p88
    // Predicated region
    $region21: #{conv3d_transformer2_forward.16} parent=5 // pred_check
      _
    $region22: #{conv3d_transformer2_forward.16} parent=5 // pred_check_branch
      %91 = sbr.rel (%p88) target = $region24
    $region23: #{conv3d_transformer2_forward.16} parent=5 // pred_region
      %s92 = ssub.s32 %s7, 1
      %p93 = scmp.lt.s32.totalorder %s12, 1
      %s94 = scalar_select %p93, %s12, 1
      %s95 = smul.addr %s94, 16
      %s96 = smul.addr %s95, 8
      %s97 = scalar_lea.vmem %s0, %s96
      %p98 = pneg %p33
      %p99 = pneg %p30
      %p100 = pneg %p59
      %p101 = pneg %p56
      %p102 = scmp.lt.s32.totalorder %s12, 1
      %s103 = scalar_select %p102, %s12, 1
      %s104 = smul.addr %s103, 16
      %s105 = smul.addr %s104, 8
      %s106 = scalar_lea.vmem %s1, %s105
      %p107 = scmp.lt.s32.totalorder %s12, 1
      %s108 = scalar_select %p107, %s12, 1
      %s109 = smul.addr %s108, 16
      %s110 = smul.addr %s109, 8
      %s111 = scalar_lea.vmem %s0, %s110
      %p112 = scmp.lt.s32.totalorder %s12, 1
      %s113 = scalar_select %p112, %s12, 1
      %s114 = smul.addr %s113, 16
      %s115 = smul.addr %s114, 8
      %s116 = scalar_lea.vmem %s1, %s115
      %v118 = vld [vmem:[%s111] sm:$0xff]
      %v119 = vld [vmem:[%s111 + $0x8] sm:$0xff]
      %v120 = vld [vmem:[%s111 + $0x10] sm:$0xff]
      %v121 = vld [vmem:[%s111 + $0x18] sm:$0xff]
      %v122 = vld [vmem:[%s111 + $0x20] sm:$0xff]
      %v123 = vld [vmem:[%s111 + $0x28] sm:$0xff]
      %v124 = vld [vmem:[%s111 + $0x30] sm:$0xff]
      %v125 = vld [vmem:[%s111 + $0x38] sm:$0xff]
      %v126 = vld [vmem:[%s111 + $0x40] sm:$0xff]
      %v127 = vld [vmem:[%s111 + $0x48] sm:$0xff]
      %v128 = vld [vmem:[%s111 + $0x50] sm:$0xff]
      %v129 = vld [vmem:[%s111 + $0x58] sm:$0xff]
      %v130 = vld [vmem:[%s111 + $0x60] sm:$0xff]
      %v131 = vld [vmem:[%s111 + $0x68] sm:$0xff]
      %v132 = vld [vmem:[%s111 + $0x70] sm:$0xff]
      %v133 = vld [vmem:[%s111 + $0x78] sm:$0xff]
      %v134 = vpack.c.bf16 %v119, %v118
      %v135 = vpack.c.bf16 %v121, %v120
      %v136 = vpack.c.bf16 %v123, %v122
      %v137 = vpack.c.bf16 %v125, %v124
      %v138 = vpack.c.bf16 %v127, %v126
      %v139 = vpack.c.bf16 %v129, %v128
      %v140 = vpack.c.bf16 %v131, %v130
      %v141 = vpack.c.bf16 %v133, %v132
      %150 = vrot.lane.b32.xlu0 %v134, 96
      %v151 = vpop.permute.xlu0 %150
      %152 = vrot.lane.b32.xlu0 %v135, 96
      %v153 = vpop.permute.xlu0 %152
      %154 = vrot.lane.b32.xlu0 %v136, 96
      %v155 = vpop.permute.xlu0 %154
      %156 = vrot.lane.b32.xlu0 %v137, 96
      %v157 = vpop.permute.xlu0 %156
      %158 = vrot.lane.b32.xlu0 %v138, 96
      %v159 = vpop.permute.xlu0 %158
      %160 = vrot.lane.b32.xlu0 %v139, 96
      %v161 = vpop.permute.xlu0 %160
      %162 = vrot.lane.b32.xlu0 %v140, 96
      %v163 = vpop.permute.xlu0 %162
      %164 = vrot.lane.b32.xlu0 %v141, 96
      %v165 = vpop.permute.xlu0 %164
      %vm166 = vcmask 64512
      %v168 = vsel %vm166, %v134, 0
      %v171 = vsel %vm166, %v135, 0
      %v174 = vsel %vm166, %v136, 0
      %v177 = vsel %vm166, %v137, 0
      %v180 = vsel %vm166, %v138, 0
      %v183 = vsel %vm166, %v139, 0
      %v186 = vsel %vm166, %v140, 0
      %v189 = vsel %vm166, %v141, 0
      %v192 = vsel %vm166, %v151, 0
      %v195 = vsel %vm166, %v153, 0
      %v198 = vsel %vm166, %v155, 0
      %v201 = vsel %vm166, %v157, 0
      %v204 = vsel %vm166, %v159, 0
      %v207 = vsel %vm166, %v161, 0
      %v210 = vsel %vm166, %v163, 0
      %v213 = vsel %vm166, %v165, 0
      %215 = vmatprep.subr.bf16.mxu0 0
      %216 = vmatpush1.bf16.xpose.msra.mxu0 %v192
      %217 = vmatprep.subr.bf16.mxu0 0
      %218 = vmatpush1.bf16.xpose.msra.mxu0 %v195
      %219 = vmatprep.subr.bf16.mxu0 0
      %220 = vmatpush1.bf16.xpose.msra.mxu0 %v198
      %221 = vmatprep.subr.bf16.mxu0 0
      %222 = vmatpush1.bf16.xpose.msra.mxu0 %v201
      %223 = vmatprep.subr.bf16.mxu0 0
      %224 = vmatpush1.bf16.xpose.msra.mxu0 %v204
      %225 = vmatprep.subr.bf16.mxu0 0
      %226 = vmatpush1.bf16.xpose.msra.mxu0 %v207
      %227 = vmatprep.subr.bf16.mxu0 0
      %228 = vmatpush1.bf16.xpose.msra.mxu0 %v210
      %229 = vmatprep.subr.bf16.mxu0 0
      %230 = vmatpush1.bf16.xpose.msra.mxu0 %v213
      %231 = vmatprep.subr.bf16.mxu0 0
      %232 = vmatpush1.bf16.xpose.msra.mxu0 0
      %233 = vmatprep.subr.bf16.mxu0 0
      %234 = vmatpush1.bf16.xpose.msra.mxu0 0
      %235 = vmatprep.subr.bf16.mxu0 0
      %236 = vmatpush1.bf16.xpose.msra.mxu0 0
      %237 = vmatprep.subr.bf16.mxu0 0
      %238 = vmatpush1.bf16.xpose.msra.mxu0 0
      %239 = vmatprep.subr.bf16.mxu0 0
      %240 = vmatpush1.bf16.xpose.msra.mxu0 0
      %241 = vmatprep.subr.bf16.mxu0 0
      %242 = vmatpush1.bf16.xpose.msra.mxu0 0
      %243 = vmatprep.subr.bf16.mxu0 0
      %244 = vmatpush1.bf16.xpose.msra.mxu0 0
      %245 = vmatprep.subr.bf16.mxu0 0
      %246 = vmatpush1.bf16.xpose.msra.mxu0 0
      %247 = vmatprep.mubr.bf16.mxu0 0
      %248 = vmatmul.mubr.bf16.gmra.mrb[0].mxu0 %v168
      %v249 = vpop.f32.mrb[0].mxu0
      %v250 = vadd.f32 0.0, %v249
      %v251 = vpop.f32.mrb[0].mxu0
      %v252 = vpop.f32.mrb[0].mxu0
      %v253 = vadd.f32 0.0, %v252
      %v254 = vpop.f32.mrb[0].mxu0
      %255 = vmatprep.mubr.bf16.mxu0 0
      %256 = vmatmul.mubr.bf16.gmra.mrb[0].mxu0 %v171
      %v257 = vpop.f32.mrb[0].mxu0
      %v258 = vadd.f32 0.0, %v257
      %v259 = vpop.f32.mrb[0].mxu0
      %v260 = vpop.f32.mrb[0].mxu0
      %v261 = vadd.f32 0.0, %v260
      %v262 = vpop.f32.mrb[0].mxu0
      %263 = vmatprep.mubr.bf16.mxu0 0
      %264 = vmatmul.mubr.bf16.gmra.mrb[0].mxu0 %v174
      %v265 = vpop.f32.mrb[0].mxu0
      %v266 = vadd.f32 0.0, %v265
      %v267 = vpop.f32.mrb[0].mxu0
      %v268 = vpop.f32.mrb[0].mxu0
      %v269 = vadd.f32 0.0, %v268
      %v270 = vpop.f32.mrb[0].mxu0
      %271 = vmatprep.mubr.bf16.mxu0 0
      %272 = vmatmul.mubr.bf16.gmra.mrb[0].mxu0 %v177
      %v273 = vpop.f32.mrb[0].mxu0
      %v274 = vadd.f32 0.0, %v273
      %v275 = vpop.f32.mrb[0].mxu0
      %v276 = vpop.f32.mrb[0].mxu0
      %v277 = vadd.f32 0.0, %v276
      %v278 = vpop.f32.mrb[0].mxu0
      %279 = vmatprep.mubr.bf16.mxu0 0
      %280 = vmatmul.mubr.bf16.gmra.mrb[0].mxu0 %v180
      %v281 = vpop.f32.mrb[0].mxu0
      %v282 = vadd.f32 0.0, %v281
      %v283 = vpop.f32.mrb[0].mxu0
      %v284 = vpop.f32.mrb[0].mxu0
      %v285 = vadd.f32 0.0, %v284
      %v286 = vpop.f32.mrb[0].mxu0
      %287 = vmatprep.mubr.bf16.mxu0 0
      %288 = vmatmul.mubr.bf16.gmra.mrb[0].mxu0 %v183
      %v289 = vpop.f32.mrb[0].mxu0
      %v290 = vadd.f32 0.0, %v289
      %v291 = vpop.f32.mrb[0].mxu0
      %v292 = vpop.f32.mrb[0].mxu0
      %v293 = vadd.f32 0.0, %v292
      %v294 = vpop.f32.mrb[0].mxu0
      %295 = vmatprep.mubr.bf16.mxu0 0
      %296 = vmatmul.mubr.bf16.gmra.mrb[0].mxu0 %v186
      %v297 = vpop.f32.mrb[0].mxu0
      %v298 = vadd.f32 0.0, %v297
      %v299 = vpop.f32.mrb[0].mxu0
      %v300 = vpop.f32.mrb[0].mxu0
      %v301 = vadd.f32 0.0, %v300
      %v302 = vpop.f32.mrb[0].mxu0
      %303 = vmatprep.mubr.bf16.mxu0 0
      %304 = vmatmul.mubr.bf16.gmra.mrb[0].mxu0 %v189
      %v305 = vpop.f32.mrb[0].mxu0
      %v306 = vadd.f32 0.0, %v305
      %v307 = vpop.f32.mrb[0].mxu0
      %v308 = vpop.f32.mrb[0].mxu0
      %v309 = vadd.f32 0.0, %v308
      %v310 = vpop.f32.mrb[0].mxu0
      %311 = vdwg.mxu0
      %v312 = vmul.f32 %v250, 0.35355338
      %v313 = vmul.f32 %v253, 0.35355338
      %v314 = vmul.f32 %v258, 0.35355338
      %v315 = vmul.f32 %v261, 0.35355338
      %v316 = vmul.f32 %v266, 0.35355338
      %v317 = vmul.f32 %v269, 0.35355338
      %v318 = vmul.f32 %v274, 0.35355338
      %v319 = vmul.f32 %v277, 0.35355338
      %v320 = vmul.f32 %v282, 0.35355338
      %v321 = vmul.f32 %v285, 0.35355338
      %v322 = vmul.f32 %v290, 0.35355338
      %v323 = vmul.f32 %v293, 0.35355338
      %v324 = vmul.f32 %v298, 0.35355338
      %v325 = vmul.f32 %v301, 0.35355338
      %v326 = vmul.f32 %v306, 0.35355338
      %v327 = vmul.f32 %v309, 0.35355338
      %328 = vmax.xlane.f32.xlu0 %v312
      %v329 = vpop.xlane.xlu0 %328
      %330 = vmax.xlane.f32.xlu0 %v313
      %v331 = vpop.xlane.xlu0 %330
      %332 = vmax.xlane.f32.xlu0 %v314
      %v333 = vpop.xlane.xlu0 %332
      %334 = vmax.xlane.f32.xlu0 %v315
      %v335 = vpop.xlane.xlu0 %334
      %336 = vmax.xlane.f32.xlu0 %v316
      %v337 = vpop.xlane.xlu0 %336
      %338 = vmax.xlane.f32.xlu0 %v317
      %v339 = vpop.xlane.xlu0 %338
      %340 = vmax.xlane.f32.xlu0 %v318
      %v341 = vpop.xlane.xlu0 %340
      %342 = vmax.xlane.f32.xlu0 %v319
      %v343 = vpop.xlane.xlu0 %342
      %344 = vmax.xlane.f32.xlu0 %v320
      %v345 = vpop.xlane.xlu0 %344
      %346 = vmax.xlane.f32.xlu0 %v321
      %v347 = vpop.xlane.xlu0 %346
      %348 = vmax.xlane.f32.xlu0 %v322
      %v349 = vpop.xlane.xlu0 %348
      %350 = vmax.xlane.f32.xlu0 %v323
      %v351 = vpop.xlane.xlu0 %350
      %352 = vmax.xlane.f32.xlu0 %v324
      %v353 = vpop.xlane.xlu0 %352
      %354 = vmax.xlane.f32.xlu0 %v325
      %v355 = vpop.xlane.xlu0 %354
      %356 = vmax.xlane.f32.xlu0 %v326
      %v357 = vpop.xlane.xlu0 %356
      %358 = vmax.xlane.f32.xlu0 %v327
      %v359 = vpop.xlane.xlu0 %358
      %v360 = vsub.f32 %v312, %v329
      %v361 = vsub.f32 %v313, %v331
      %v362 = vsub.f32 %v314, %v333
      %v363 = vsub.f32 %v315, %v335
      %v364 = vsub.f32 %v316, %v337
      %v365 = vsub.f32 %v317, %v339
      %v366 = vsub.f32 %v318, %v341
      %v367 = vsub.f32 %v319, %v343
      %v368 = vsub.f32 %v320, %v345
      %v369 = vsub.f32 %v321, %v347
      %v370 = vsub.f32 %v322, %v349
      %v371 = vsub.f32 %v323, %v351
      %v372 = vsub.f32 %v324, %v353
      %v373 = vsub.f32 %v325, %v355
      %v374 = vsub.f32 %v326, %v357
      %v375 = vsub.f32 %v327, %v359
      %v376 = vmul.f32 %v360, 1.442695
      %v377 = vpow.pop %v376
      %v378 = vmul.f32 %v361, 1.442695
      %v379 = vpow.pop %v378
      %v380 = vmul.f32 %v362, 1.442695
      %v381 = vpow.pop %v380
      %v382 = vmul.f32 %v363, 1.442695
      %v383 = vpow.pop %v382
      %v384 = vmul.f32 %v364, 1.442695
      %v385 = vpow.pop %v384
      %v386 = vmul.f32 %v365, 1.442695
      %v387 = vpow.pop %v386
      %v388 = vmul.f32 %v366, 1.442695
      %v389 = vpow.pop %v388
      %v390 = vmul.f32 %v367, 1.442695
      %v391 = vpow.pop %v390
      %v392 = vmul.f32 %v368, 1.442695
      %v393 = vpow.pop %v392
      %v394 = vmul.f32 %v369, 1.442695
      %v395 = vpow.pop %v394
      %v396 = vmul.f32 %v370, 1.442695
      %v397 = vpow.pop %v396
      %v398 = vmul.f32 %v371, 1.442695
      %v399 = vpow.pop %v398
      %v400 = vmul.f32 %v372, 1.442695
      %v401 = vpow.pop %v400
      %v402 = vmul.f32 %v373, 1.442695
      %v403 = vpow.pop %v402
      %v404 = vmul.f32 %v374, 1.442695
      %v405 = vpow.pop %v404
      %v406 = vmul.f32 %v375, 1.442695
      %v407 = vpow.pop %v406
      %408 = vadd.xlane.f32.xlu0 %v377
      %v409 = vpop.xlane.xlu0 %408
      %410 = vadd.xlane.f32.xlu0 %v379
      %v411 = vpop.xlane.xlu0 %410
      %412 = vadd.xlane.f32.xlu0 %v381
      %v413 = vpop.xlane.xlu0 %412
      %414 = vadd.xlane.f32.xlu0 %v383
      %v415 = vpop.xlane.xlu0 %414
      %416 = vadd.xlane.f32.xlu0 %v385
      %v417 = vpop.xlane.xlu0 %416
      %418 = vadd.xlane.f32.xlu0 %v387
      %v419 = vpop.xlane.xlu0 %418
      %420 = vadd.xlane.f32.xlu0 %v389
      %v421 = vpop.xlane.xlu0 %420
      %422 = vadd.xlane.f32.xlu0 %v391
      %v423 = vpop.xlane.xlu0 %422
      %424 = vadd.xlane.f32.xlu0 %v393
      %v425 = vpop.xlane.xlu0 %424
      %426 = vadd.xlane.f32.xlu0 %v395
      %v427 = vpop.xlane.xlu0 %426
      %428 = vadd.xlane.f32.xlu0 %v397
      %v429 = vpop.xlane.xlu0 %428
      %430 = vadd.xlane.f32.xlu0 %v399
      %v431 = vpop.xlane.xlu0 %430
      %432 = vadd.xlane.f32.xlu0 %v401
      %v433 = vpop.xlane.xlu0 %432
      %434 = vadd.xlane.f32.xlu0 %v403
      %v435 = vpop.xlane.xlu0 %434
      %436 = vadd.xlane.f32.xlu0 %v405
      %v437 = vpop.xlane.xlu0 %436
      %438 = vadd.xlane.f32.xlu0 %v407
      %v439 = vpop.xlane.xlu0 %438
      %v440 = vrcp.pop %v409
      %v441 = vrcp.pop %v411
      %v442 = vrcp.pop %v413
      %v443 = vrcp.pop %v415
      %v444 = vrcp.pop %v417
      %v445 = vrcp.pop %v419
      %v446 = vrcp.pop %v421
      %v447 = vrcp.pop %v423
      %v448 = vrcp.pop %v425
      %v449 = vrcp.pop %v427
      %v450 = vrcp.pop %v429
      %v451 = vrcp.pop %v431
      %v452 = vrcp.pop %v433
      %v453 = vrcp.pop %v435
      %v454 = vrcp.pop %v437
      %v455 = vrcp.pop %v439
      %v456 = vmul.f32 %v377, %v440
      %v457 = vmul.f32 %v379, %v441
      %v458 = vmul.f32 %v381, %v442
      %v459 = vmul.f32 %v383, %v443
      %v460 = vmul.f32 %v385, %v444
      %v461 = vmul.f32 %v387, %v445
      %v462 = vmul.f32 %v389, %v446
      %v463 = vmul.f32 %v391, %v447
      %v464 = vmul.f32 %v393, %v448
      %v465 = vmul.f32 %v395, %v449
      %v466 = vmul.f32 %v397, %v450
      %v467 = vmul.f32 %v399, %v451
      %v468 = vmul.f32 %v401, %v452
      %v469 = vmul.f32 %v403, %v453
      %v470 = vmul.f32 %v405, %v454
      %v471 = vmul.f32 %v407, %v455
      %v472 = vpack.c.bf16 %v457, %v456
      %v473 = vpack.c.bf16 %v459, %v458
      %v474 = vpack.c.bf16 %v461, %v460
      %v475 = vpack.c.bf16 %v463, %v462
      %v476 = vpack.c.bf16 %v465, %v464
      %v477 = vpack.c.bf16 %v467, %v466
      %v478 = vpack.c.bf16 %v469, %v468
      %v479 = vpack.c.bf16 %v471, %v470
      %480 = vrot.lane.b32.xlu0 %v134, 64
      %v481 = vpop.permute.xlu0 %480
      %482 = vrot.lane.b32.xlu0 %v135, 64
      %v483 = vpop.permute.xlu0 %482
      %484 = vrot.lane.b32.xlu0 %v136, 64
      %v485 = vpop.permute.xlu0 %484
      %486 = vrot.lane.b32.xlu0 %v137, 64
      %v487 = vpop.permute.xlu0 %486
      %488 = vrot.lane.b32.xlu0 %v138, 64
      %v489 = vpop.permute.xlu0 %488
      %490 = vrot.lane.b32.xlu0 %v139, 64
      %v491 = vpop.permute.xlu0 %490
      %492 = vrot.lane.b32.xlu0 %v140, 64
      %v493 = vpop.permute.xlu0 %492
      %494 = vrot.lane.b32.xlu0 %v141, 64
      %v495 = vpop.permute.xlu0 %494
      %504 = vmatprep.subr.bf16.mxu0 0
      %505 = vmatpush1.bf16.msra.mxu0 %v481
      %506 = vmatprep.subr.bf16.mxu0 0
      %507 = vmatpush1.bf16.msra.mxu0 %v483
      %508 = vmatprep.subr.bf16.mxu0 0
      %509 = vmatpush1.bf16.msra.mxu0 %v485
      %510 = vmatprep.subr.bf16.mxu0 0
      %511 = vmatpush1.bf16.msra.mxu0 %v487
      %512 = vmatprep.subr.bf16.mxu0 0
      %513 = vmatpush1.bf16.msra.mxu0 %v489
      %514 = vmatprep.subr.bf16.mxu0 0
      %515 = vmatpush1.bf16.msra.mxu0 %v491
      %516 = vmatprep.subr.bf16.mxu0 0
      %517 = vmatpush1.bf16.msra.mxu0 %v493
      %518 = vmatprep.subr.bf16.mxu0 0
      %519 = vmatpush1.bf16.msra.mxu0 %v495
      %520 = vmatprep.subr.bf16.mxu0 0
      %521 = vmatpush1.bf16.msra.mxu0 0
      %522 = vmatprep.subr.bf16.mxu0 0
      %523 = vmatpush1.bf16.msra.mxu0 0
      %524 = vmatprep.subr.bf16.mxu0 0
      %525 = vmatpush1.bf16.msra.mxu0 0
      %526 = vmatprep.subr.bf16.mxu0 0
      %527 = vmatpush1.bf16.msra.mxu0 0
      %528 = vmatprep.subr.bf16.mxu0 0
      %529 = vmatpush1.bf16.msra.mxu0 0
      %530 = vmatprep.subr.bf16.mxu0 0
      %531 = vmatpush1.bf16.msra.mxu0 0
      %532 = vmatprep.subr.bf16.mxu0 0
      %533 = vmatpush1.bf16.msra.mxu0 0
      %534 = vmatprep.subr.bf16.mxu0 0
      %535 = vmatpush1.bf16.msra.mxu0 0
      %536 = vmatprep.mubr.bf16.mxu0 0
      %537 = vmatmul.mubr.bf16.gmra.mrb[0].mxu0 %v472
      %v538 = vpop.f32.mrb[0].mxu0
      %v539 = vadd.f32 0.0, %v538
      %v540 = vpop.f32.mrb[0].mxu0
      %v541 = vpop.f32.mrb[0].mxu0
      %v542 = vadd.f32 0.0, %v541
      %v543 = vpop.f32.mrb[0].mxu0
      %544 = vmatprep.mubr.bf16.mxu0 0
      %545 = vmatmul.mubr.bf16.gmra.mrb[0].mxu0 %v473
      %v546 = vpop.f32.mrb[0].mxu0
      %v547 = vadd.f32 0.0, %v546
      %v548 = vpop.f32.mrb[0].mxu0
      %v549 = vpop.f32.mrb[0].mxu0
      %v550 = vadd.f32 0.0, %v549
      %v551 = vpop.f32.mrb[0].mxu0
      %552 = vmatprep.mubr.bf16.mxu0 0
      %553 = vmatmul.mubr.bf16.gmra.mrb[0].mxu0 %v474
      %v554 = vpop.f32.mrb[0].mxu0
      %v555 = vadd.f32 0.0, %v554
      %v556 = vpop.f32.mrb[0].mxu0
      %v557 = vpop.f32.mrb[0].mxu0
      %v558 = vadd.f32 0.0, %v557
      %v559 = vpop.f32.mrb[0].mxu0
      %560 = vmatprep.mubr.bf16.mxu0 0
      %561 = vmatmul.mubr.bf16.gmra.mrb[0].mxu0 %v475
      %v562 = vpop.f32.mrb[0].mxu0
      %v563 = vadd.f32 0.0, %v562
      %v564 = vpop.f32.mrb[0].mxu0
      %v565 = vpop.f32.mrb[0].mxu0
      %v566 = vadd.f32 0.0, %v565
      %v567 = vpop.f32.mrb[0].mxu0
      %568 = vmatprep.mubr.bf16.mxu0 0
      %569 = vmatmul.mubr.bf16.gmra.mrb[0].mxu0 %v476
      %v570 = vpop.f32.mrb[0].mxu0
      %v571 = vadd.f32 0.0, %v570
      %v572 = vpop.f32.mrb[0].mxu0
      %v573 = vpop.f32.mrb[0].mxu0
      %v574 = vadd.f32 0.0, %v573
      %v575 = vpop.f32.mrb[0].mxu0
      %576 = vmatprep.mubr.bf16.mxu0 0
      %577 = vmatmul.mubr.bf16.gmra.mrb[0].mxu0 %v477
      %v578 = vpop.f32.mrb[0].mxu0
      %v579 = vadd.f32 0.0, %v578
      %v580 = vpop.f32.mrb[0].mxu0
      %v581 = vpop.f32.mrb[0].mxu0
      %v582 = vadd.f32 0.0, %v581
      %v583 = vpop.f32.mrb[0].mxu0
      %584 = vmatprep.mubr.bf16.mxu0 0
      %585 = vmatmul.mubr.bf16.gmra.mrb[0].mxu0 %v478
      %v586 = vpop.f32.mrb[0].mxu0
      %v587 = vadd.f32 0.0, %v586
      %v588 = vpop.f32.mrb[0].mxu0
      %v589 = vpop.f32.mrb[0].mxu0
      %v590 = vadd.f32 0.0, %v589
      %v591 = vpop.f32.mrb[0].mxu0
      %592 = vmatprep.mubr.bf16.mxu0 0
      %593 = vmatmul.mubr.bf16.gmra.mrb[0].mxu0 %v479
      %v594 = vpop.f32.mrb[0].mxu0
      %v595 = vadd.f32 0.0, %v594
      %v596 = vpop.f32.mrb[0].mxu0
      %v597 = vpop.f32.mrb[0].mxu0
      %v598 = vadd.f32 0.0, %v597
      %v599 = vpop.f32.mrb[0].mxu0
      %600 = vdwg.mxu0
      %601 = vrot.lane.b32.xlu0 %v134, 120
      %v602 = vpop.permute.xlu0 %601
      %603 = vrot.lane.b32.xlu0 %v135, 120
      %v604 = vpop.permute.xlu0 %603
      %605 = vrot.lane.b32.xlu0 %v136, 120
      %v606 = vpop.permute.xlu0 %605
      %607 = vrot.lane.b32.xlu0 %v137, 120
      %v608 = vpop.permute.xlu0 %607
      %609 = vrot.lane.b32.xlu0 %v138, 120
      %v610 = vpop.permute.xlu0 %609
      %611 = vrot.lane.b32.xlu0 %v139, 120
      %v612 = vpop.permute.xlu0 %611
      %613 = vrot.lane.b32.xlu0 %v140, 120
      %v614 = vpop.permute.xlu0 %613
      %615 = vrot.lane.b32.xlu0 %v141, 120
      %v616 = vpop.permute.xlu0 %615
      %617 = vrot.lane.b32.xlu0 %v134, 88
      %v618 = vpop.permute.xlu0 %617
      %619 = vrot.lane.b32.xlu0 %v135, 88
      %v620 = vpop.permute.xlu0 %619
      %621 = vrot.lane.b32.xlu0 %v136, 88
      %v622 = vpop.permute.xlu0 %621
      %623 = vrot.lane.b32.xlu0 %v137, 88
      %v624 = vpop.permute.xlu0 %623
      %625 = vrot.lane.b32.xlu0 %v138, 88
      %v626 = vpop.permute.xlu0 %625
      %627 = vrot.lane.b32.xlu0 %v139, 88
      %v628 = vpop.permute.xlu0 %627
      %629 = vrot.lane.b32.xlu0 %v140, 88
      %v630 = vpop.permute.xlu0 %629
      %631 = vrot.lane.b32.xlu0 %v141, 88
      %v632 = vpop.permute.xlu0 %631
      %v634 = vsel %vm166, %v602, 0
      %v637 = vsel %vm166, %v604, 0
      %v640 = vsel %vm166, %v606, 0
      %v643 = vsel %vm166, %v608, 0
      %v646 = vsel %vm166, %v610, 0
      %v649 = vsel %vm166, %v612, 0
      %v652 = vsel %vm166, %v614, 0
      %v655 = vsel %vm166, %v616, 0
      %v658 = vsel %vm166, %v618, 0
      %v661 = vsel %vm166, %v620, 0
      %v664 = vsel %vm166, %v622, 0
      %v667 = vsel %vm166, %v624, 0
      %v670 = vsel %vm166, %v626, 0
      %v673 = vsel %vm166, %v628, 0
      %v676 = vsel %vm166, %v630, 0
      %v679 = vsel %vm166, %v632, 0
      %681 = vmatprep.subr.bf16.mxu0 0
      %682 = vmatpush1.bf16.xpose.msra.mxu0 %v658
      %683 = vmatprep.subr.bf16.mxu0 0
      %684 = vmatpush1.bf16.xpose.msra.mxu0 %v661
      %685 = vmatprep.subr.bf16.mxu0 0
      %686 = vmatpush1.bf16.xpose.msra.mxu0 %v664
      %687 = vmatprep.subr.bf16.mxu0 0
      %688 = vmatpush1.bf16.xpose.msra.mxu0 %v667
      %689 = vmatprep.subr.bf16.mxu0 0
      %690 = vmatpush1.bf16.xpose.msra.mxu0 %v670
      %691 = vmatprep.subr.bf16.mxu0 0
      %692 = vmatpush1.bf16.xpose.msra.mxu0 %v673
      %693 = vmatprep.subr.bf16.mxu0 0
      %694 = vmatpush1.bf16.xpose.msra.mxu0 %v676
      %695 = vmatprep.subr.bf16.mxu0 0
      %696 = vmatpush1.bf16.xpose.msra.mxu0 %v679
      %697 = vmatprep.subr.bf16.mxu0 0
      %698 = vmatpush1.bf16.xpose.msra.mxu0 0
      %699 = vmatprep.subr.bf16.mxu0 0
      %700 = vmatpush1.bf16.xpose.msra.mxu0 0
      %701 = vmatprep.subr.bf16.mxu0 0
      %702 = vmatpush1.bf16.xpose.msra.mxu0 0
      %703 = vmatprep.subr.bf16.mxu0 0
      %704 = vmatpush1.bf16.xpose.msra.mxu0 0
      %705 = vmatprep.subr.bf16.mxu0 0
      %706 = vmatpush1.bf16.xpose.msra.mxu0 0
      %707 = vmatprep.subr.bf16.mxu0 0
      %708 = vmatpush1.bf16.xpose.msra.mxu0 0
      %709 = vmatprep.subr.bf16.mxu0 0
      %710 = vmatpush1.bf16.xpose.msra.mxu0 0
      %711 = vmatprep.subr.bf16.mxu0 0
      %712 = vmatpush1.bf16.xpose.msra.mxu0 0
      %713 = vmatprep.mubr.bf16.mxu0 0
      %714 = vmatmul.mubr.bf16.gmra.mrb[0].mxu0 %v634
      %v715 = vpop.f32.mrb[0].mxu0
      %v716 = vadd.f32 0.0, %v715
      %v717 = vpop.f32.mrb[0].mxu0
      %v718 = vpop.f32.mrb[0].mxu0
      %v719 = vadd.f32 0.0, %v718
      %v720 = vpop.f32.mrb[0].mxu0
      %721 = vmatprep.mubr.bf16.mxu0 0
      %722 = vmatmul.mubr.bf16.gmra.mrb[0].mxu0 %v637
      %v723 = vpop.f32.mrb[0].mxu0
      %v724 = vadd.f32 0.0, %v723
      %v725 = vpop.f32.mrb[0].mxu0
      %v726 = vpop.f32.mrb[0].mxu0
      %v727 = vadd.f32 0.0, %v726
      %v728 = vpop.f32.mrb[0].mxu0
      %729 = vmatprep.mubr.bf16.mxu0 0
      %730 = vmatmul.mubr.bf16.gmra.mrb[0].mxu0 %v640
      %v731 = vpop.f32.mrb[0].mxu0
      %v732 = vadd.f32 0.0, %v731
      %v733 = vpop.f32.mrb[0].mxu0
      %v734 = vpop.f32.mrb[0].mxu0
      %v735 = vadd.f32 0.0, %v734
      %v736 = vpop.f32.mrb[0].mxu0
      %737 = vmatprep.mubr.bf16.mxu0 0
      %738 = vmatmul.mubr.bf16.gmra.mrb[0].mxu0 %v643
      %v739 = vpop.f32.mrb[0].mxu0
      %v740 = vadd.f32 0.0, %v739
      %v741 = vpop.f32.mrb[0].mxu0
      %v742 = vpop.f32.mrb[0].mxu0
      %v743 = vadd.f32 0.0, %v742
      %v744 = vpop.f32.mrb[0].mxu0
      %745 = vmatprep.mubr.bf16.mxu0 0
      %746 = vmatmul.mubr.bf16.gmra.mrb[0].mxu0 %v646
      %v747 = vpop.f32.mrb[0].mxu0
      %v748 = vadd.f32 0.0, %v747
      %v749 = vpop.f32.mrb[0].mxu0
      %v750 = vpop.f32.mrb[0].mxu0
      %v751 = vadd.f32 0.0, %v750
      %v752 = vpop.f32.mrb[0].mxu0
      %753 = vmatprep.mubr.bf16.mxu0 0
      %754 = vmatmul.mubr.bf16.gmra.mrb[0].mxu0 %v649
      %v755 = vpop.f32.mrb[0].mxu0
      %v756 = vadd.f32 0.0, %v755
      %v757 = vpop.f32.mrb[0].mxu0
      %v758 = vpop.f32.mrb[0].mxu0
      %v759 = vadd.f32 0.0, %v758
      %v760 = vpop.f32.mrb[0].mxu0
      %761 = vmatprep.mubr.bf16.mxu0 0
      %762 = vmatmul.mubr.bf16.gmra.mrb[0].mxu0 %v652
      %v763 = vpop.f32.mrb[0].mxu0
      %v764 = vadd.f32 0.0, %v763
      %v765 = vpop.f32.mrb[0].mxu0
      %v766 = vpop.f32.mrb[0].mxu0
      %v767 = vadd.f32 0.0, %v766
      %v768 = vpop.f32.mrb[0].mxu0
      %769 = vmatprep.mubr.bf16.mxu0 0
      %770 = vmatmul.mubr.bf16.gmra.mrb[0].mxu0 %v655
      %v771 = vpop.f32.mrb[0].mxu0
      %v772 = vadd.f32 0.0, %v771
      %v773 = vpop.f32.mrb[0].mxu0
      %v774 = vpop.f32.mrb[0].mxu0
      %v775 = vadd.f32 0.0, %v774
      %v776 = vpop.f32.mrb[0].mxu0
      %777 = vdwg.mxu0
      %v778 = vmul.f32 %v716, 0.35355338
      %v779 = vmul.f32 %v719, 0.35355338
      %v780 = vmul.f32 %v724, 0.35355338
      %v781 = vmul.f32 %v727, 0.35355338
      %v782 = vmul.f32 %v732, 0.35355338
      %v783 = vmul.f32 %v735, 0.35355338
      %v784 = vmul.f32 %v740, 0.35355338
      %v785 = vmul.f32 %v743, 0.35355338
      %v786 = vmul.f32 %v748, 0.35355338
      %v787 = vmul.f32 %v751, 0.35355338
      %v788 = vmul.f32 %v756, 0.35355338
      %v789 = vmul.f32 %v759, 0.35355338
      %v790 = vmul.f32 %v764, 0.35355338
      %v791 = vmul.f32 %v767, 0.35355338
      %v792 = vmul.f32 %v772, 0.35355338
      %v793 = vmul.f32 %v775, 0.35355338
      %794 = vmax.xlane.f32.xlu0 %v778
      %v795 = vpop.xlane.xlu0 %794
      %796 = vmax.xlane.f32.xlu0 %v779
      %v797 = vpop.xlane.xlu0 %796
      %798 = vmax.xlane.f32.xlu0 %v780
      %v799 = vpop.xlane.xlu0 %798
      %800 = vmax.xlane.f32.xlu0 %v781
      %v801 = vpop.xlane.xlu0 %800
      %802 = vmax.xlane.f32.xlu0 %v782
      %v803 = vpop.xlane.xlu0 %802
      %804 = vmax.xlane.f32.xlu0 %v783
      %v805 = vpop.xlane.xlu0 %804
      %806 = vmax.xlane.f32.xlu0 %v784
      %v807 = vpop.xlane.xlu0 %806
      %808 = vmax.xlane.f32.xlu0 %v785
      %v809 = vpop.xlane.xlu0 %808
      %810 = vmax.xlane.f32.xlu0 %v786
      %v811 = vpop.xlane.xlu0 %810
      %812 = vmax.xlane.f32.xlu0 %v787
      %v813 = vpop.xlane.xlu0 %812
      %814 = vmax.xlane.f32.xlu0 %v788
      %v815 = vpop.xlane.xlu0 %814
      %816 = vmax.xlane.f32.xlu0 %v789
      %v817 = vpop.xlane.xlu0 %816
      %818 = vmax.xlane.f32.xlu0 %v790
      %v819 = vpop.xlane.xlu0 %818
      %820 = vmax.xlane.f32.xlu0 %v791
      %v821 = vpop.xlane.xlu0 %820
      %822 = vmax.xlane.f32.xlu0 %v792
      %v823 = vpop.xlane.xlu0 %822
      %824 = vmax.xlane.f32.xlu0 %v793
      %v825 = vpop.xlane.xlu0 %824
      %v826 = vsub.f32 %v778, %v795
      %v827 = vsub.f32 %v779, %v797
      %v828 = vsub.f32 %v780, %v799
      %v829 = vsub.f32 %v781, %v801
      %v830 = vsub.f32 %v782, %v803
      %v831 = vsub.f32 %v783, %v805
      %v832 = vsub.f32 %v784, %v807
      %v833 = vsub.f32 %v785, %v809
      %v834 = vsub.f32 %v786, %v811
      %v835 = vsub.f32 %v787, %v813
      %v836 = vsub.f32 %v788, %v815
      %v837 = vsub.f32 %v789, %v817
      %v838 = vsub.f32 %v790, %v819
      %v839 = vsub.f32 %v791, %v821
      %v840 = vsub.f32 %v792, %v823
      %v841 = vsub.f32 %v793, %v825
      %v842 = vmul.f32 %v826, 1.442695
      %v843 = vpow.pop %v842
      %v844 = vmul.f32 %v827, 1.442695
      %v845 = vpow.pop %v844
      %v846 = vmul.f32 %v828, 1.442695
      %v847 = vpow.pop %v846
      %v848 = vmul.f32 %v829, 1.442695
      %v849 = vpow.pop %v848
      %v850 = vmul.f32 %v830, 1.442695
      %v851 = vpow.pop %v850
      %v852 = vmul.f32 %v831, 1.442695
      %v853 = vpow.pop %v852
      %v854 = vmul.f32 %v832, 1.442695
      %v855 = vpow.pop %v854
      %v856 = vmul.f32 %v833, 1.442695
      %v857 = vpow.pop %v856
      %v858 = vmul.f32 %v834, 1.442695
      %v859 = vpow.pop %v858
      %v860 = vmul.f32 %v835, 1.442695
      %v861 = vpow.pop %v860
      %v862 = vmul.f32 %v836, 1.442695
      %v863 = vpow.pop %v862
      %v864 = vmul.f32 %v837, 1.442695
      %v865 = vpow.pop %v864
      %v866 = vmul.f32 %v838, 1.442695
      %v867 = vpow.pop %v866
      %v868 = vmul.f32 %v839, 1.442695
      %v869 = vpow.pop %v868
      %v870 = vmul.f32 %v840, 1.442695
      %v871 = vpow.pop %v870
      %v872 = vmul.f32 %v841, 1.442695
      %v873 = vpow.pop %v872
      %874 = vadd.xlane.f32.xlu0 %v843
      %v875 = vpop.xlane.xlu0 %874
      %876 = vadd.xlane.f32.xlu0 %v845
      %v877 = vpop.xlane.xlu0 %876
      %878 = vadd.xlane.f32.xlu0 %v847
      %v879 = vpop.xlane.xlu0 %878
      %880 = vadd.xlane.f32.xlu0 %v849
      %v881 = vpop.xlane.xlu0 %880
      %882 = vadd.xlane.f32.xlu0 %v851
      %v883 = vpop.xlane.xlu0 %882
      %884 = vadd.xlane.f32.xlu0 %v853
      %v885 = vpop.xlane.xlu0 %884
      %886 = vadd.xlane.f32.xlu0 %v855
      %v887 = vpop.xlane.xlu0 %886
      %888 = vadd.xlane.f32.xlu0 %v857
      %v889 = vpop.xlane.xlu0 %888
      %890 = vadd.xlane.f32.xlu0 %v859
      %v891 = vpop.xlane.xlu0 %890
      %892 = vadd.xlane.f32.xlu0 %v861
      %v893 = vpop.xlane.xlu0 %892
      %894 = vadd.xlane.f32.xlu0 %v863
      %v895 = vpop.xlane.xlu0 %894
      %896 = vadd.xlane.f32.xlu0 %v865
      %v897 = vpop.xlane.xlu0 %896
      %898 = vadd.xlane.f32.xlu0 %v867
      %v899 = vpop.xlane.xlu0 %898
      %900 = vadd.xlane.f32.xlu0 %v869
      %v901 = vpop.xlane.xlu0 %900
      %902 = vadd.xlane.f32.xlu0 %v871
      %v903 = vpop.xlane.xlu0 %902
      %904 = vadd.xlane.f32.xlu0 %v873
      %v905 = vpop.xlane.xlu0 %904
      %v906 = vrcp.pop %v875
      %v907 = vrcp.pop %v877
      %v908 = vrcp.pop %v879
      %v909 = vrcp.pop %v881
      %v910 = vrcp.pop %v883
      %v911 = vrcp.pop %v885
      %v912 = vrcp.pop %v887
      %v913 = vrcp.pop %v889
      %v914 = vrcp.pop %v891
      %v915 = vrcp.pop %v893
      %v916 = vrcp.pop %v895
      %v917 = vrcp.pop %v897
      %v918 = vrcp.pop %v899
      %v919 = vrcp.pop %v901
      %v920 = vrcp.pop %v903
      %v921 = vrcp.pop %v905
      %v922 = vmul.f32 %v843, %v906
      %v923 = vmul.f32 %v845, %v907
      %v924 = vmul.f32 %v847, %v908
      %v925 = vmul.f32 %v849, %v909
      %v926 = vmul.f32 %v851, %v910
      %v927 = vmul.f32 %v853, %v911
      %v928 = vmul.f32 %v855, %v912
      %v929 = vmul.f32 %v857, %v913
      %v930 = vmul.f32 %v859, %v914
      %v931 = vmul.f32 %v861, %v915
      %v932 = vmul.f32 %v863, %v916
      %v933 = vmul.f32 %v865, %v917
      %v934 = vmul.f32 %v867, %v918
      %v935 = vmul.f32 %v869, %v919
      %v936 = vmul.f32 %v871, %v920
      %v937 = vmul.f32 %v873, %v921
      %v938 = vpack.c.bf16 %v923, %v922
      %v939 = vpack.c.bf16 %v925, %v924
      %v940 = vpack.c.bf16 %v927, %v926
      %v941 = vpack.c.bf16 %v929, %v928
      %v942 = vpack.c.bf16 %v931, %v930
      %v943 = vpack.c.bf16 %v933, %v932
      %v944 = vpack.c.bf16 %v935, %v934
      %v945 = vpack.c.bf16 %v937, %v936
      %946 = vrot.lane.b32.xlu0 %v134, 56
      %v947 = vpop.permute.xlu0 %946
      %948 = vrot.lane.b32.xlu0 %v135, 56
      %v949 = vpop.permute.xlu0 %948
      %950 = vrot.lane.b32.xlu0 %v136, 56
      %v951 = vpop.permute.xlu0 %950
      %952 = vrot.lane.b32.xlu0 %v137, 56
      %v953 = vpop.permute.xlu0 %952
      %954 = vrot.lane.b32.xlu0 %v138, 56
      %v955 = vpop.permute.xlu0 %954
      %956 = vrot.lane.b32.xlu0 %v139, 56
      %v957 = vpop.permute.xlu0 %956
      %958 = vrot.lane.b32.xlu0 %v140, 56
      %v959 = vpop.permute.xlu0 %958
      %960 = vrot.lane.b32.xlu0 %v141, 56
      %v961 = vpop.permute.xlu0 %960
      %970 = vmatprep.subr.bf16.mxu0 0
      %971 = vmatpush1.bf16.msra.mxu0 %v947
      %972 = vmatprep.subr.bf16.mxu0 0
      %973 = vmatpush1.bf16.msra.mxu0 %v949
      %974 = vmatprep.subr.bf16.mxu0 0
      %975 = vmatpush1.bf16.msra.mxu0 %v951
      %976 = vmatprep.subr.bf16.mxu0 0
      %977 = vmatpush1.bf16.msra.mxu0 %v953
      %978 = vmatprep.subr.bf16.mxu0 0
      %979 = vmatpush1.bf16.msra.mxu0 %v955
      %980 = vmatprep.subr.bf16.mxu0 0
      %981 = vmatpush1.bf16.msra.mxu0 %v957
      %982 = vmatprep.subr.bf16.mxu0 0
      %983 = vmatpush1.bf16.msra.mxu0 %v959
      %984 = vmatprep.subr.bf16.mxu0 0
      %985 = vmatpush1.bf16.msra.mxu0 %v961
      %986 = vmatprep.subr.bf16.mxu0 0
      %987 = vmatpush1.bf16.msra.mxu0 0
      %988 = vmatprep.subr.bf16.mxu0 0
      %989 = vmatpush1.bf16.msra.mxu0 0
      %990 = vmatprep.subr.bf16.mxu0 0
      %991 = vmatpush1.bf16.msra.mxu0 0
      %992 = vmatprep.subr.bf16.mxu0 0
      %993 = vmatpush1.bf16.msra.mxu0 0
      %994 = vmatprep.subr.bf16.mxu0 0
      %995 = vmatpush1.bf16.msra.mxu0 0
      %996 = vmatprep.subr.bf16.mxu0 0
      %997 = vmatpush1.bf16.msra.mxu0 0
      %998 = vmatprep.subr.bf16.mxu0 0
      %999 = vmatpush1.bf16.msra.mxu0 0
      %1000 = vmatprep.subr.bf16.mxu0 0
      %1001 = vmatpush1.bf16.msra.mxu0 0
      %1002 = vmatprep.mubr.bf16.mxu0 0
      %1003 = vmatmul.mubr.bf16.gmra.mrb[0].mxu0 %v938
      %v1004 = vpop.f32.mrb[0].mxu0
      %v1005 = vadd.f32 0.0, %v1004
      %v1006 = vpop.f32.mrb[0].mxu0
      %v1007 = vpop.f32.mrb[0].mxu0
      %v1008 = vadd.f32 0.0, %v1007
      %v1009 = vpop.f32.mrb[0].mxu0
      %1010 = vmatprep.mubr.bf16.mxu0 0
      %1011 = vmatmul.mubr.bf16.gmra.mrb[0].mxu0 %v939
      %v1012 = vpop.f32.mrb[0].mxu0
      %v1013 = vadd.f32 0.0, %v1012
      %v1014 = vpop.f32.mrb[0].mxu0
      %v1015 = vpop.f32.mrb[0].mxu0
      %v1016 = vadd.f32 0.0, %v1015
      %v1017 = vpop.f32.mrb[0].mxu0
      %1018 = vmatprep.mubr.bf16.mxu0 0
      %1019 = vmatmul.mubr.bf16.gmra.mrb[0].mxu0 %v940
      %v1020 = vpop.f32.mrb[0].mxu0
      %v1021 = vadd.f32 0.0, %v1020
      %v1022 = vpop.f32.mrb[0].mxu0
      %v1023 = vpop.f32.mrb[0].mxu0
      %v1024 = vadd.f32 0.0, %v1023
      %v1025 = vpop.f32.mrb[0].mxu0
      %1026 = vmatprep.mubr.bf16.mxu0 0
      %1027 = vmatmul.mubr.bf16.gmra.mrb[0].mxu0 %v941
      %v1028 = vpop.f32.mrb[0].mxu0
      %v1029 = vadd.f32 0.0, %v1028
      %v1030 = vpop.f32.mrb[0].mxu0
      %v1031 = vpop.f32.mrb[0].mxu0
      %v1032 = vadd.f32 0.0, %v1031
      %v1033 = vpop.f32.mrb[0].mxu0
      %1034 = vmatprep.mubr.bf16.mxu0 0
      %1035 = vmatmul.mubr.bf16.gmra.mrb[0].mxu0 %v942
      %v1036 = vpop.f32.mrb[0].mxu0
      %v1037 = vadd.f32 0.0, %v1036
      %v1038 = vpop.f32.mrb[0].mxu0
      %v1039 = vpop.f32.mrb[0].mxu0
      %v1040 = vadd.f32 0.0, %v1039
      %v1041 = vpop.f32.mrb[0].mxu0
      %1042 = vmatprep.mubr.bf16.mxu0 0
      %1043 = vmatmul.mubr.bf16.gmra.mrb[0].mxu0 %v943
      %v1044 = vpop.f32.mrb[0].mxu0
      %v1045 = vadd.f32 0.0, %v1044
      %v1046 = vpop.f32.mrb[0].mxu0
      %v1047 = vpop.f32.mrb[0].mxu0
      %v1048 = vadd.f32 0.0, %v1047
      %v1049 = vpop.f32.mrb[0].mxu0
      %1050 = vmatprep.mubr.bf16.mxu0 0
      %1051 = vmatmul.mubr.bf16.gmra.mrb[0].mxu0 %v944
      %v1052 = vpop.f32.mrb[0].mxu0
      %v1053 = vadd.f32 0.0, %v1052
      %v1054 = vpop.f32.mrb[0].mxu0
      %v1055 = vpop.f32.mrb[0].mxu0
      %v1056 = vadd.f32 0.0, %v1055
      %v1057 = vpop.f32.mrb[0].mxu0
      %1058 = vmatprep.mubr.bf16.mxu0 0
      %1059 = vmatmul.mubr.bf16.gmra.mrb[0].mxu0 %v945
      %v1060 = vpop.f32.mrb[0].mxu0
      %v1061 = vadd.f32 0.0, %v1060
      %v1062 = vpop.f32.mrb[0].mxu0
      %v1063 = vpop.f32.mrb[0].mxu0
      %v1064 = vadd.f32 0.0, %v1063
      %v1065 = vpop.f32.mrb[0].mxu0
      %1066 = vdwg.mxu0
      %1067 = vrot.lane.b32.xlu0 %v134, 112
      %v1068 = vpop.permute.xlu0 %1067
      %1069 = vrot.lane.b32.xlu0 %v135, 112
      %v1070 = vpop.permute.xlu0 %1069
      %1071 = vrot.lane.b32.xlu0 %v136, 112
      %v1072 = vpop.permute.xlu0 %1071
      %1073 = vrot.lane.b32.xlu0 %v137, 112
      %v1074 = vpop.permute.xlu0 %1073
      %1075 = vrot.lane.b32.xlu0 %v138, 112
      %v1076 = vpop.permute.xlu0 %1075
      %1077 = vrot.lane.b32.xlu0 %v139, 112
      %v1078 = vpop.permute.xlu0 %1077
      %1079 = vrot.lane.b32.xlu0 %v140, 112
      %v1080 = vpop.permute.xlu0 %1079
      %1081 = vrot.lane.b32.xlu0 %v141, 112
      %v1082 = vpop.permute.xlu0 %1081
      %1083 = vrot.lane.b32.xlu0 %v134, 80
      %v1084 = vpop.permute.xlu0 %1083
      %1085 = vrot.lane.b32.xlu0 %v135, 80
      %v1086 = vpop.permute.xlu0 %1085
      %1087 = vrot.lane.b32.xlu0 %v136, 80
      %v1088 = vpop.permute.xlu0 %1087
      %1089 = vrot.lane.b32.xlu0 %v137, 80
      %v1090 = vpop.permute.xlu0 %1089
      %1091 = vrot.lane.b32.xlu0 %v138, 80
      %v1092 = vpop.permute.xlu0 %1091
      %1093 = vrot.lane.b32.xlu0 %v139, 80
      %v1094 = vpop.permute.xlu0 %1093
      %1095 = vrot.lane.b32.xlu0 %v140, 80
      %v1096 = vpop.permute.xlu0 %1095
      %1097 = vrot.lane.b32.xlu0 %v141, 80
      %v1098 = vpop.permute.xlu0 %1097
      %v1100 = vsel %vm166, %v1068, 0
      %v1103 = vsel %vm166, %v1070, 0
      %v1106 = vsel %vm166, %v1072, 0
      %v1109 = vsel %vm166, %v1074, 0
      %v1112 = vsel %vm166, %v1076, 0
      %v1115 = vsel %vm166, %v1078, 0
      %v1118 = vsel %vm166, %v1080, 0
      %v1121 = vsel %vm166, %v1082, 0
      %v1124 = vsel %vm166, %v1084, 0
      %v1127 = vsel %vm166, %v1086, 0
      %v1130 = vsel %vm166, %v1088, 0
      %v1133 = vsel %vm166, %v1090, 0
      %v1136 = vsel %vm166, %v1092, 0
      %v1139 = vsel %vm166, %v1094, 0
      %v1142 = vsel %vm166, %v1096, 0
      %v1145 = vsel %vm166, %v1098, 0
      %1147 = vmatprep.subr.bf16.mxu0 0
      %1148 = vmatpush1.bf16.xpose.msra.mxu0 %v1124
      %1149 = vmatprep.subr.bf16.mxu0 0
      %1150 = vmatpush1.bf16.xpose.msra.mxu0 %v1127
      %1151 = vmatprep.subr.bf16.mxu0 0
      %1152 = vmatpush1.bf16.xpose.msra.mxu0 %v1130
      %1153 = vmatprep.subr.bf16.mxu0 0
      %1154 = vmatpush1.bf16.xpose.msra.mxu0 %v1133
      %1155 = vmatprep.subr.bf16.mxu0 0
      %1156 = vmatpush1.bf16.xpose.msra.mxu0 %v1136
      %1157 = vmatprep.subr.bf16.mxu0 0
      %1158 = vmatpush1.bf16.xpose.msra.mxu0 %v1139
      %1159 = vmatprep.subr.bf16.mxu0 0
      %1160 = vmatpush1.bf16.xpose.msra.mxu0 %v1142
      %1161 = vmatprep.subr.bf16.mxu0 0
      %1162 = vmatpush1.bf16.xpose.msra.mxu0 %v1145
      %1163 = vmatprep.subr.bf16.mxu0 0
      %1164 = vmatpush1.bf16.xpose.msra.mxu0 0
      %1165 = vmatprep.subr.bf16.mxu0 0
      %1166 = vmatpush1.bf16.xpose.msra.mxu0 0
      %1167 = vmatprep.subr.bf16.mxu0 0
      %1168 = vmatpush1.bf16.xpose.msra.mxu0 0
      %1169 = vmatprep.subr.bf16.mxu0 0
      %1170 = vmatpush1.bf16.xpose.msra.mxu0 0
      %1171 = vmatprep.subr.bf16.mxu0 0
      %1172 = vmatpush1.bf16.xpose.msra.mxu0 0
      %1173 = vmatprep.subr.bf16.mxu0 0
      %1174 = vmatpush1.bf16.xpose.msra.mxu0 0
      %1175 = vmatprep.subr.bf16.mxu0 0
      %1176 = vmatpush1.bf16.xpose.msra.mxu0 0
      %1177 = vmatprep.subr.bf16.mxu0 0
      %1178 = vmatpush1.bf16.xpose.msra.mxu0 0
      %1179 = vmatprep.mubr.bf16.mxu0 0
      %1180 = vmatmul.mubr.bf16.gmra.mrb[0].mxu0 %v1100
      %v1181 = vpop.f32.mrb[0].mxu0
      %v1182 = vadd.f32 0.0, %v1181
      %v1183 = vpop.f32.mrb[0].mxu0
      %v1184 = vpop.f32.mrb[0].mxu0
      %v1185 = vadd.f32 0.0, %v1184
      %v1186 = vpop.f32.mrb[0].mxu0
      %1187 = vmatprep.mubr.bf16.mxu0 0
      %1188 = vmatmul.mubr.bf16.gmra.mrb[0].mxu0 %v1103
      %v1189 = vpop.f32.mrb[0].mxu0
      %v1190 = vadd.f32 0.0, %v1189
      %v1191 = vpop.f32.mrb[0].mxu0
      %v1192 = vpop.f32.mrb[0].mxu0
      %v1193 = vadd.f32 0.0, %v1192
      %v1194 = vpop.f32.mrb[0].mxu0
      %1195 = vmatprep.mubr.bf16.mxu0 0
      %1196 = vmatmul.mubr.bf16.gmra.mrb[0].mxu0 %v1106
      %v1197 = vpop.f32.mrb[0].mxu0
      %v1198 = vadd.f32 0.0, %v1197
      %v1199 = vpop.f32.mrb[0].mxu0
      %v1200 = vpop.f32.mrb[0].mxu0
      %v1201 = vadd.f32 0.0, %v1200
      %v1202 = vpop.f32.mrb[0].mxu0
      %1203 = vmatprep.mubr.bf16.mxu0 0
      %1204 = vmatmul.mubr.bf16.gmra.mrb[0].mxu0 %v1109
      %v1205 = vpop.f32.mrb[0].mxu0
      %v1206 = vadd.f32 0.0, %v1205
      %v1207 = vpop.f32.mrb[0].mxu0
      %v1208 = vpop.f32.mrb[0].mxu0
      %v1209 = vadd.f32 0.0, %v1208
      %v1210 = vpop.f32.mrb[0].mxu0
      %1211 = vmatprep.mubr.bf16.mxu0 0
      %1212 = vmatmul.mubr.bf16.gmra.mrb[0].mxu0 %v1112
      %v1213 = vpop.f32.mrb[0].mxu0
      %v1214 = vadd.f32 0.0, %v1213
      %v1215 = vpop.f32.mrb[0].mxu0
      %v1216 = vpop.f32.mrb[0].mxu0
      %v1217 = vadd.f32 0.0, %v1216
      %v1218 = vpop.f32.mrb[0].mxu0
      %1219 = vmatprep.mubr.bf16.mxu0 0
      %1220 = vmatmul.mubr.bf16.gmra.mrb[0].mxu0 %v1115
      %v1221 = vpop.f32.mrb[0].mxu0
      %v1222 = vadd.f32 0.0, %v1221
      %v1223 = vpop.f32.mrb[0].mxu0
      %v1224 = vpop.f32.mrb[0].mxu0
      %v1225 = vadd.f32 0.0, %v1224
      %v1226 = vpop.f32.mrb[0].mxu0
      %1227 = vmatprep.mubr.bf16.mxu0 0
      %1228 = vmatmul.mubr.bf16.gmra.mrb[0].mxu0 %v1118
      %v1229 = vpop.f32.mrb[0].mxu0
      %v1230 = vadd.f32 0.0, %v1229
      %v1231 = vpop.f32.mrb[0].mxu0
      %v1232 = vpop.f32.mrb[0].mxu0
      %v1233 = vadd.f32 0.0, %v1232
      %v1234 = vpop.f32.mrb[0].mxu0
      %1235 = vmatprep.mubr.bf16.mxu0 0
      %1236 = vmatmul.mubr.bf16.gmra.mrb[0].mxu0 %v1121
      %v1237 = vpop.f32.mrb[0].mxu0
      %v1238 = vadd.f32 0.0, %v1237
      %v1239 = vpop.f32.mrb[0].mxu0
      %v1240 = vpop.f32.mrb[0].mxu0
      %v1241 = vadd.f32 0.0, %v1240
      %v1242 = vpop.f32.mrb[0].mxu0
      %1243 = vdwg.mxu0
      %v1244 = vmul.f32 %v1182, 0.35355338
      %v1245 = vmul.f32 %v1185, 0.35355338
      %v1246 = vmul.f32 %v1190, 0.35355338
      %v1247 = vmul.f32 %v1193, 0.35355338
      %v1248 = vmul.f32 %v1198, 0.35355338
      %v1249 = vmul.f32 %v1201, 0.35355338
      %v1250 = vmul.f32 %v1206, 0.35355338
      %v1251 = vmul.f32 %v1209, 0.35355338
      %v1252 = vmul.f32 %v1214, 0.35355338
      %v1253 = vmul.f32 %v1217, 0.35355338
      %v1254 = vmul.f32 %v1222, 0.35355338
      %v1255 = vmul.f32 %v1225, 0.35355338
      %v1256 = vmul.f32 %v1230, 0.35355338
      %v1257 = vmul.f32 %v1233, 0.35355338
      %v1258 = vmul.f32 %v1238, 0.35355338
      %v1259 = vmul.f32 %v1241, 0.35355338
      %1260 = vmax.xlane.f32.xlu0 %v1244
      %v1261 = vpop.xlane.xlu0 %1260
      %1262 = vmax.xlane.f32.xlu0 %v1245
      %v1263 = vpop.xlane.xlu0 %1262
      %1264 = vmax.xlane.f32.xlu0 %v1246
      %v1265 = vpop.xlane.xlu0 %1264
      %1266 = vmax.xlane.f32.xlu0 %v1247
      %v1267 = vpop.xlane.xlu0 %1266
      %1268 = vmax.xlane.f32.xlu0 %v1248
      %v1269 = vpop.xlane.xlu0 %1268
      %1270 = vmax.xlane.f32.xlu0 %v1249
      %v1271 = vpop.xlane.xlu0 %1270
      %1272 = vmax.xlane.f32.xlu0 %v1250
      %v1273 = vpop.xlane.xlu0 %1272
      %1274 = vmax.xlane.f32.xlu0 %v1251
      %v1275 = vpop.xlane.xlu0 %1274
      %1276 = vmax.xlane.f32.xlu0 %v1252
      %v1277 = vpop.xlane.xlu0 %1276
      %1278 = vmax.xlane.f32.xlu0 %v1253
      %v1279 = vpop.xlane.xlu0 %1278
      %1280 = vmax.xlane.f32.xlu0 %v1254
      %v1281 = vpop.xlane.xlu0 %1280
      %1282 = vmax.xlane.f32.xlu0 %v1255
      %v1283 = vpop.xlane.xlu0 %1282
      %1284 = vmax.xlane.f32.xlu0 %v1256
      %v1285 = vpop.xlane.xlu0 %1284
      %1286 = vmax.xlane.f32.xlu0 %v1257
      %v1287 = vpop.xlane.xlu0 %1286
      %1288 = vmax.xlane.f32.xlu0 %v1258
      %v1289 = vpop.xlane.xlu0 %1288
      %1290 = vmax.xlane.f32.xlu0 %v1259
      %v1291 = vpop.xlane.xlu0 %1290
      %v1292 = vsub.f32 %v1244, %v1261
      %v1293 = vsub.f32 %v1245, %v1263
      %v1294 = vsub.f32 %v1246, %v1265
      %v1295 = vsub.f32 %v1247, %v1267
      %v1296 = vsub.f32 %v1248, %v1269
      %v1297 = vsub.f32 %v1249, %v1271
      %v1298 = vsub.f32 %v1250, %v1273
      %v1299 = vsub.f32 %v1251, %v1275
      %v1300 = vsub.f32 %v1252, %v1277
      %v1301 = vsub.f32 %v1253, %v1279
      %v1302 = vsub.f32 %v1254, %v1281
      %v1303 = vsub.f32 %v1255, %v1283
      %v1304 = vsub.f32 %v1256, %v1285
      %v1305 = vsub.f32 %v1257, %v1287
      %v1306 = vsub.f32 %v1258, %v1289
      %v1307 = vsub.f32 %v1259, %v1291
      %v1308 = vmul.f32 %v1292, 1.442695
      %v1309 = vpow.pop %v1308
      %v1310 = vmul.f32 %v1293, 1.442695
      %v1311 = vpow.pop %v1310
      %v1312 = vmul.f32 %v1294, 1.442695
      %v1313 = vpow.pop %v1312
      %v1314 = vmul.f32 %v1295, 1.442695
      %v1315 = vpow.pop %v1314
      %v1316 = vmul.f32 %v1296, 1.442695
      %v1317 = vpow.pop %v1316
      %v1318 = vmul.f32 %v1297, 1.442695
      %v1319 = vpow.pop %v1318
      %v1320 = vmul.f32 %v1298, 1.442695
      %v1321 = vpow.pop %v1320
      %v1322 = vmul.f32 %v1299, 1.442695
      %v1323 = vpow.pop %v1322
      %v1324 = vmul.f32 %v1300, 1.442695
      %v1325 = vpow.pop %v1324
      %v1326 = vmul.f32 %v1301, 1.442695
      %v1327 = vpow.pop %v1326
      %v1328 = vmul.f32 %v1302, 1.442695
      %v1329 = vpow.pop %v1328
      %v1330 = vmul.f32 %v1303, 1.442695
      %v1331 = vpow.pop %v1330
      %v1332 = vmul.f32 %v1304, 1.442695
      %v1333 = vpow.pop %v1332
      %v1334 = vmul.f32 %v1305, 1.442695
      %v1335 = vpow.pop %v1334
      %v1336 = vmul.f32 %v1306, 1.442695
      %v1337 = vpow.pop %v1336
      %v1338 = vmul.f32 %v1307, 1.442695
      %v1339 = vpow.pop %v1338
      %1340 = vadd.xlane.f32.xlu0 %v1309
      %v1341 = vpop.xlane.xlu0 %1340
      %1342 = vadd.xlane.f32.xlu0 %v1311
      %v1343 = vpop.xlane.xlu0 %1342
      %1344 = vadd.xlane.f32.xlu0 %v1313
      %v1345 = vpop.xlane.xlu0 %1344
      %1346 = vadd.xlane.f32.xlu0 %v1315
      %v1347 = vpop.xlane.xlu0 %1346
      %1348 = vadd.xlane.f32.xlu0 %v1317
      %v1349 = vpop.xlane.xlu0 %1348
      %1350 = vadd.xlane.f32.xlu0 %v1319
      %v1351 = vpop.xlane.xlu0 %1350
      %1352 = vadd.xlane.f32.xlu0 %v1321
      %v1353 = vpop.xlane.xlu0 %1352
      %1354 = vadd.xlane.f32.xlu0 %v1323
      %v1355 = vpop.xlane.xlu0 %1354
      %1356 = vadd.xlane.f32.xlu0 %v1325
      %v1357 = vpop.xlane.xlu0 %1356
      %1358 = vadd.xlane.f32.xlu0 %v1327
      %v1359 = vpop.xlane.xlu0 %1358
      %1360 = vadd.xlane.f32.xlu0 %v1329
      %v1361 = vpop.xlane.xlu0 %1360
      %1362 = vadd.xlane.f32.xlu0 %v1331
      %v1363 = vpop.xlane.xlu0 %1362
      %1364 = vadd.xlane.f32.xlu0 %v1333
      %v1365 = vpop.xlane.xlu0 %1364
      %1366 = vadd.xlane.f32.xlu0 %v1335
      %v1367 = vpop.xlane.xlu0 %1366
      %1368 = vadd.xlane.f32.xlu0 %v1337
      %v1369 = vpop.xlane.xlu0 %1368
      %1370 = vadd.xlane.f32.xlu0 %v1339
      %v1371 = vpop.xlane.xlu0 %1370
      %v1372 = vrcp.pop %v1341
      %v1373 = vrcp.pop %v1343
      %v1374 = vrcp.pop %v1345
      %v1375 = vrcp.pop %v1347
      %v1376 = vrcp.pop %v1349
      %v1377 = vrcp.pop %v1351
      %v1378 = vrcp.pop %v1353
      %v1379 = vrcp.pop %v1355
      %v1380 = vrcp.pop %v1357
      %v1381 = vrcp.pop %v1359
      %v1382 = vrcp.pop %v1361
      %v1383 = vrcp.pop %v1363
      %v1384 = vrcp.pop %v1365
      %v1385 = vrcp.pop %v1367
      %v1386 = vrcp.pop %v1369
      %v1387 = vrcp.pop %v1371
      %v1388 = vmul.f32 %v1309, %v1372
      %v1389 = vmul.f32 %v1311, %v1373
      %v1390 = vmul.f32 %v1313, %v1374
      %v1391 = vmul.f32 %v1315, %v1375
      %v1392 = vmul.f32 %v1317, %v1376
      %v1393 = vmul.f32 %v1319, %v1377
      %v1394 = vmul.f32 %v1321, %v1378
      %v1395 = vmul.f32 %v1323, %v1379
      %v1396 = vmul.f32 %v1325, %v1380
      %v1397 = vmul.f32 %v1327, %v1381
      %v1398 = vmul.f32 %v1329, %v1382
      %v1399 = vmul.f32 %v1331, %v1383
      %v1400 = vmul.f32 %v1333, %v1384
      %v1401 = vmul.f32 %v1335, %v1385
      %v1402 = vmul.f32 %v1337, %v1386
      %v1403 = vmul.f32 %v1339, %v1387
      %v1404 = vpack.c.bf16 %v1389, %v1388
      %v1405 = vpack.c.bf16 %v1391, %v1390
      %v1406 = vpack.c.bf16 %v1393, %v1392
      %v1407 = vpack.c.bf16 %v1395, %v1394
      %v1408 = vpack.c.bf16 %v1397, %v1396
      %v1409 = vpack.c.bf16 %v1399, %v1398
      %v1410 = vpack.c.bf16 %v1401, %v1400
      %v1411 = vpack.c.bf16 %v1403, %v1402
      %1412 = vrot.lane.b32.xlu0 %v134, 48
      %v1413 = vpop.permute.xlu0 %1412
      %1414 = vrot.lane.b32.xlu0 %v135, 48
      %v1415 = vpop.permute.xlu0 %1414
      %1416 = vrot.lane.b32.xlu0 %v136, 48
      %v1417 = vpop.permute.xlu0 %1416
      %1418 = vrot.lane.b32.xlu0 %v137, 48
      %v1419 = vpop.permute.xlu0 %1418
      %1420 = vrot.lane.b32.xlu0 %v138, 48
      %v1421 = vpop.permute.xlu0 %1420
      %1422 = vrot.lane.b32.xlu0 %v139, 48
      %v1423 = vpop.permute.xlu0 %1422
      %1424 = vrot.lane.b32.xlu0 %v140, 48
      %v1425 = vpop.permute.xlu0 %1424
      %1426 = vrot.lane.b32.xlu0 %v141, 48
      %v1427 = vpop.permute.xlu0 %1426
      %1436 = vmatprep.subr.bf16.mxu0 0
      %1437 = vmatpush1.bf16.msra.mxu0 %v1413
      %1438 = vmatprep.subr.bf16.mxu0 0
      %1439 = vmatpush1.bf16.msra.mxu0 %v1415
      %1440 = vmatprep.subr.bf16.mxu0 0
      %1441 = vmatpush1.bf16.msra.mxu0 %v1417
      %1442 = vmatprep.subr.bf16.mxu0 0
      %1443 = vmatpush1.bf16.msra.mxu0 %v1419
      %1444 = vmatprep.subr.bf16.mxu0 0
      %1445 = vmatpush1.bf16.msra.mxu0 %v1421
      %1446 = vmatprep.subr.bf16.mxu0 0
      %1447 = vmatpush1.bf16.msra.mxu0 %v1423
      %1448 = vmatprep.subr.bf16.mxu0 0
      %1449 = vmatpush1.bf16.msra.mxu0 %v1425
      %1450 = vmatprep.subr.bf16.mxu0 0
      %1451 = vmatpush1.bf16.msra.mxu0 %v1427
      %1452 = vmatprep.subr.bf16.mxu0 0
      %1453 = vmatpush1.bf16.msra.mxu0 0
      %1454 = vmatprep.subr.bf16.mxu0 0
      %1455 = vmatpush1.bf16.msra.mxu0 0
      %1456 = vmatprep.subr.bf16.mxu0 0
      %1457 = vmatpush1.bf16.msra.mxu0 0
      %1458 = vmatprep.subr.bf16.mxu0 0
      %1459 = vmatpush1.bf16.msra.mxu0 0
      %1460 = vmatprep.subr.bf16.mxu0 0
      %1461 = vmatpush1.bf16.msra.mxu0 0
      %1462 = vmatprep.subr.bf16.mxu0 0
      %1463 = vmatpush1.bf16.msra.mxu0 0
      %1464 = vmatprep.subr.bf16.mxu0 0
      %1465 = vmatpush1.bf16.msra.mxu0 0
      %1466 = vmatprep.subr.bf16.mxu0 0
      %1467 = vmatpush1.bf16.msra.mxu0 0
      %1468 = vmatprep.mubr.bf16.mxu0 0
      %1469 = vmatmul.mubr.bf16.gmra.mrb[0].mxu0 %v1404
      %v1470 = vpop.f32.mrb[0].mxu0
      %v1471 = vadd.f32 0.0, %v1470
      %v1472 = vpop.f32.mrb[0].mxu0
      %v1473 = vpop.f32.mrb[0].mxu0
      %v1474 = vadd.f32 0.0, %v1473
      %v1475 = vpop.f32.mrb[0].mxu0
      %1476 = vmatprep.mubr.bf16.mxu0 0
      %1477 = vmatmul.mubr.bf16.gmra.mrb[0].mxu0 %v1405
      %v1478 = vpop.f32.mrb[0].mxu0
      %v1479 = vadd.f32 0.0, %v1478
      %v1480 = vpop.f32.mrb[0].mxu0
      %v1481 = vpop.f32.mrb[0].mxu0
      %v1482 = vadd.f32 0.0, %v1481
      %v1483 = vpop.f32.mrb[0].mxu0
      %1484 = vmatprep.mubr.bf16.mxu0 0
      %1485 = vmatmul.mubr.bf16.gmra.mrb[0].mxu0 %v1406
      %v1486 = vpop.f32.mrb[0].mxu0
      %v1487 = vadd.f32 0.0, %v1486
      %v1488 = vpop.f32.mrb[0].mxu0
      %v1489 = vpop.f32.mrb[0].mxu0
      %v1490 = vadd.f32 0.0, %v1489
      %v1491 = vpop.f32.mrb[0].mxu0
      %1492 = vmatprep.mubr.bf16.mxu0 0
      %1493 = vmatmul.mubr.bf16.gmra.mrb[0].mxu0 %v1407
      %v1494 = vpop.f32.mrb[0].mxu0
      %v1495 = vadd.f32 0.0, %v1494
      %v1496 = vpop.f32.mrb[0].mxu0
      %v1497 = vpop.f32.mrb[0].mxu0
      %v1498 = vadd.f32 0.0, %v1497
      %v1499 = vpop.f32.mrb[0].mxu0
      %1500 = vmatprep.mubr.bf16.mxu0 0
      %1501 = vmatmul.mubr.bf16.gmra.mrb[0].mxu0 %v1408
      %v1502 = vpop.f32.mrb[0].mxu0
      %v1503 = vadd.f32 0.0, %v1502
      %v1504 = vpop.f32.mrb[0].mxu0
      %v1505 = vpop.f32.mrb[0].mxu0
      %v1506 = vadd.f32 0.0, %v1505
      %v1507 = vpop.f32.mrb[0].mxu0
      %1508 = vmatprep.mubr.bf16.mxu0 0
      %1509 = vmatmul.mubr.bf16.gmra.mrb[0].mxu0 %v1409
      %v1510 = vpop.f32.mrb[0].mxu0
      %v1511 = vadd.f32 0.0, %v1510
      %v1512 = vpop.f32.mrb[0].mxu0
      %v1513 = vpop.f32.mrb[0].mxu0
      %v1514 = vadd.f32 0.0, %v1513
      %v1515 = vpop.f32.mrb[0].mxu0
      %1516 = vmatprep.mubr.bf16.mxu0 0
      %1517 = vmatmul.mubr.bf16.gmra.mrb[0].mxu0 %v1410
      %v1518 = vpop.f32.mrb[0].mxu0
      %v1519 = vadd.f32 0.0, %v1518
      %v1520 = vpop.f32.mrb[0].mxu0
      %v1521 = vpop.f32.mrb[0].mxu0
      %v1522 = vadd.f32 0.0, %v1521
      %v1523 = vpop.f32.mrb[0].mxu0
      %1524 = vmatprep.mubr.bf16.mxu0 0
      %1525 = vmatmul.mubr.bf16.gmra.mrb[0].mxu0 %v1411
      %v1526 = vpop.f32.mrb[0].mxu0
      %v1527 = vadd.f32 0.0, %v1526
      %v1528 = vpop.f32.mrb[0].mxu0
      %v1529 = vpop.f32.mrb[0].mxu0
      %v1530 = vadd.f32 0.0, %v1529
      %v1531 = vpop.f32.mrb[0].mxu0
      %1532 = vdwg.mxu0
      %1533 = vrot.lane.b32.xlu0 %v134, 104
      %v1534 = vpop.permute.xlu0 %1533
      %1535 = vrot.lane.b32.xlu0 %v135, 104
      %v1536 = vpop.permute.xlu0 %1535
      %1537 = vrot.lane.b32.xlu0 %v136, 104
      %v1538 = vpop.permute.xlu0 %1537
      %1539 = vrot.lane.b32.xlu0 %v137, 104
      %v1540 = vpop.permute.xlu0 %1539
      %1541 = vrot.lane.b32.xlu0 %v138, 104
      %v1542 = vpop.permute.xlu0 %1541
      %1543 = vrot.lane.b32.xlu0 %v139, 104
      %v1544 = vpop.permute.xlu0 %1543
      %1545 = vrot.lane.b32.xlu0 %v140, 104
      %v1546 = vpop.permute.xlu0 %1545
      %1547 = vrot.lane.b32.xlu0 %v141, 104
      %v1548 = vpop.permute.xlu0 %1547
      %1549 = vrot.lane.b32.xlu0 %v134, 72
      %v1550 = vpop.permute.xlu0 %1549
      %1551 = vrot.lane.b32.xlu0 %v135, 72
      %v1552 = vpop.permute.xlu0 %1551
      %1553 = vrot.lane.b32.xlu0 %v136, 72
      %v1554 = vpop.permute.xlu0 %1553
      %1555 = vrot.lane.b32.xlu0 %v137, 72
      %v1556 = vpop.permute.xlu0 %1555
      %1557 = vrot.lane.b32.xlu0 %v138, 72
      %v1558 = vpop.permute.xlu0 %1557
      %1559 = vrot.lane.b32.xlu0 %v139, 72
      %v1560 = vpop.permute.xlu0 %1559
      %1561 = vrot.lane.b32.xlu0 %v140, 72
      %v1562 = vpop.permute.xlu0 %1561
      %1563 = vrot.lane.b32.xlu0 %v141, 72
      %v1564 = vpop.permute.xlu0 %1563
      %v1566 = vsel %vm166, %v1534, 0
      %v1569 = vsel %vm166, %v1536, 0
      %v1572 = vsel %vm166, %v1538, 0
      %v1575 = vsel %vm166, %v1540, 0
      %v1578 = vsel %vm166, %v1542, 0
      %v1581 = vsel %vm166, %v1544, 0
      %v1584 = vsel %vm166, %v1546, 0
      %v1587 = vsel %vm166, %v1548, 0
      %v1590 = vsel %vm166, %v1550, 0
      %v1593 = vsel %vm166, %v1552, 0
      %v1596 = vsel %vm166, %v1554, 0
      %v1599 = vsel %vm166, %v1556, 0
      %v1602 = vsel %vm166, %v1558, 0
      %v1605 = vsel %vm166, %v1560, 0
      %v1608 = vsel %vm166, %v1562, 0
      %v1611 = vsel %vm166, %v1564, 0
      %1613 = vmatprep.subr.bf16.mxu0 0
      %1614 = vmatpush1.bf16.xpose.msra.mxu0 %v1590
      %1615 = vmatprep.subr.bf16.mxu0 0
      %1616 = vmatpush1.bf16.xpose.msra.mxu0 %v1593
      %1617 = vmatprep.subr.bf16.mxu0 0
      %1618 = vmatpush1.bf16.xpose.msra.mxu0 %v1596
      %1619 = vmatprep.subr.bf16.mxu0 0
      %1620 = vmatpush1.bf16.xpose.msra.mxu0 %v1599
      %1621 = vmatprep.subr.bf16.mxu0 0
      %1622 = vmatpush1.bf16.xpose.msra.mxu0 %v1602
      %1623 = vmatprep.subr.bf16.mxu0 0
      %1624 = vmatpush1.bf16.xpose.msra.mxu0 %v1605
      %1625 = vmatprep.subr.bf16.mxu0 0
      %1626 = vmatpush1.bf16.xpose.msra.mxu0 %v1608
      %1627 = vmatprep.subr.bf16.mxu0 0
      %1628 = vmatpush1.bf16.xpose.msra.mxu0 %v1611
      %1629 = vmatprep.subr.bf16.mxu0 0
      %1630 = vmatpush1.bf16.xpose.msra.mxu0 0
      %1631 = vmatprep.subr.bf16.mxu0 0
      %1632 = vmatpush1.bf16.xpose.msra.mxu0 0
      %1633 = vmatprep.subr.bf16.mxu0 0
      %1634 = vmatpush1.bf16.xpose.msra.mxu0 0
      %1635 = vmatprep.subr.bf16.mxu0 0
      %1636 = vmatpush1.bf16.xpose.msra.mxu0 0
      %1637 = vmatprep.subr.bf16.mxu0 0
      %1638 = vmatpush1.bf16.xpose.msra.mxu0 0
      %1639 = vmatprep.subr.bf16.mxu0 0
      %1640 = vmatpush1.bf16.xpose.msra.mxu0 0
      %1641 = vmatprep.subr.bf16.mxu0 0
      %1642 = vmatpush1.bf16.xpose.msra.mxu0 0
      %1643 = vmatprep.subr.bf16.mxu0 0
      %1644 = vmatpush1.bf16.xpose.msra.mxu0 0
      %1645 = vmatprep.mubr.bf16.mxu0 0
      %1646 = vmatmul.mubr.bf16.gmra.mrb[0].mxu0 %v1566
      %v1647 = vpop.f32.mrb[0].mxu0
      %v1648 = vadd.f32 0.0, %v1647
      %v1649 = vpop.f32.mrb[0].mxu0
      %v1650 = vpop.f32.mrb[0].mxu0
      %v1651 = vadd.f32 0.0, %v1650
      %v1652 = vpop.f32.mrb[0].mxu0
      %1653 = vmatprep.mubr.bf16.mxu0 0
      %1654 = vmatmul.mubr.bf16.gmra.mrb[0].mxu0 %v1569
      %v1655 = vpop.f32.mrb[0].mxu0
      %v1656 = vadd.f32 0.0, %v1655
      %v1657 = vpop.f32.mrb[0].mxu0
      %v1658 = vpop.f32.mrb[0].mxu0
      %v1659 = vadd.f32 0.0, %v1658
      %v1660 = vpop.f32.mrb[0].mxu0
      %1661 = vmatprep.mubr.bf16.mxu0 0
      %1662 = vmatmul.mubr.bf16.gmra.mrb[0].mxu0 %v1572
      %v1663 = vpop.f32.mrb[0].mxu0
      %v1664 = vadd.f32 0.0, %v1663
      %v1665 = vpop.f32.mrb[0].mxu0
      %v1666 = vpop.f32.mrb[0].mxu0
      %v1667 = vadd.f32 0.0, %v1666
      %v1668 = vpop.f32.mrb[0].mxu0
      %1669 = vmatprep.mubr.bf16.mxu0 0
      %1670 = vmatmul.mubr.bf16.gmra.mrb[0].mxu0 %v1575
      %v1671 = vpop.f32.mrb[0].mxu0
      %v1672 = vadd.f32 0.0, %v1671
      %v1673 = vpop.f32.mrb[0].mxu0
      %v1674 = vpop.f32.mrb[0].mxu0
      %v1675 = vadd.f32 0.0, %v1674
      %v1676 = vpop.f32.mrb[0].mxu0
      %1677 = vmatprep.mubr.bf16.mxu0 0
      %1678 = vmatmul.mubr.bf16.gmra.mrb[0].mxu0 %v1578
      %v1679 = vpop.f32.mrb[0].mxu0
      %v1680 = vadd.f32 0.0, %v1679
      %v1681 = vpop.f32.mrb[0].mxu0
      %v1682 = vpop.f32.mrb[0].mxu0
      %v1683 = vadd.f32 0.0, %v1682
      %v1684 = vpop.f32.mrb[0].mxu0
      %1685 = vmatprep.mubr.bf16.mxu0 0
      %1686 = vmatmul.mubr.bf16.gmra.mrb[0].mxu0 %v1581
      %v1687 = vpop.f32.mrb[0].mxu0
      %v1688 = vadd.f32 0.0, %v1687
      %v1689 = vpop.f32.mrb[0].mxu0
      %v1690 = vpop.f32.mrb[0].mxu0
      %v1691 = vadd.f32 0.0, %v1690
      %v1692 = vpop.f32.mrb[0].mxu0
      %1693 = vmatprep.mubr.bf16.mxu0 0
      %1694 = vmatmul.mubr.bf16.gmra.mrb[0].mxu0 %v1584
      %v1695 = vpop.f32.mrb[0].mxu0
      %v1696 = vadd.f32 0.0, %v1695
      %v1697 = vpop.f32.mrb[0].mxu0
      %v1698 = vpop.f32.mrb[0].mxu0
      %v1699 = vadd.f32 0.0, %v1698
      %v1700 = vpop.f32.mrb[0].mxu0
      %1701 = vmatprep.mubr.bf16.mxu0 0
      %1702 = vmatmul.mubr.bf16.gmra.mrb[0].mxu0 %v1587
      %v1703 = vpop.f32.mrb[0].mxu0
      %v1704 = vadd.f32 0.0, %v1703
      %v1705 = vpop.f32.mrb[0].mxu0
      %v1706 = vpop.f32.mrb[0].mxu0
      %v1707 = vadd.f32 0.0, %v1706
      %v1708 = vpop.f32.mrb[0].mxu0
      %1709 = vdwg.mxu0
      %v1710 = vmul.f32 %v1648, 0.35355338
      %v1711 = vmul.f32 %v1651, 0.35355338
      %v1712 = vmul.f32 %v1656, 0.35355338
      %v1713 = vmul.f32 %v1659, 0.35355338
      %v1714 = vmul.f32 %v1664, 0.35355338
      %v1715 = vmul.f32 %v1667, 0.35355338
      %v1716 = vmul.f32 %v1672, 0.35355338
      %v1717 = vmul.f32 %v1675, 0.35355338
      %v1718 = vmul.f32 %v1680, 0.35355338
      %v1719 = vmul.f32 %v1683, 0.35355338
      %v1720 = vmul.f32 %v1688, 0.35355338
      %v1721 = vmul.f32 %v1691, 0.35355338
      %v1722 = vmul.f32 %v1696, 0.35355338
      %v1723 = vmul.f32 %v1699, 0.35355338
      %v1724 = vmul.f32 %v1704, 0.35355338
      %v1725 = vmul.f32 %v1707, 0.35355338
      %1726 = vmax.xlane.f32.xlu0 %v1710
      %v1727 = vpop.xlane.xlu0 %1726
      %1728 = vmax.xlane.f32.xlu0 %v1711
      %v1729 = vpop.xlane.xlu0 %1728
      %1730 = vmax.xlane.f32.xlu0 %v1712
      %v1731 = vpop.xlane.xlu0 %1730
      %1732 = vmax.xlane.f32.xlu0 %v1713
      %v1733 = vpop.xlane.xlu0 %1732
      %1734 = vmax.xlane.f32.xlu0 %v1714
      %v1735 = vpop.xlane.xlu0 %1734
      %1736 = vmax.xlane.f32.xlu0 %v1715
      %v1737 = vpop.xlane.xlu0 %1736
      %1738 = vmax.xlane.f32.xlu0 %v1716
      %v1739 = vpop.xlane.xlu0 %1738
      %1740 = vmax.xlane.f32.xlu0 %v1717
      %v1741 = vpop.xlane.xlu0 %1740
      %1742 = vmax.xlane.f32.xlu0 %v1718
      %v1743 = vpop.xlane.xlu0 %1742
      %1744 = vmax.xlane.f32.xlu0 %v1719
      %v1745 = vpop.xlane.xlu0 %1744
      %1746 = vmax.xlane.f32.xlu0 %v1720
      %v1747 = vpop.xlane.xlu0 %1746
      %1748 = vmax.xlane.f32.xlu0 %v1721
      %v1749 = vpop.xlane.xlu0 %1748
      %1750 = vmax.xlane.f32.xlu0 %v1722
      %v1751 = vpop.xlane.xlu0 %1750
      %1752 = vmax.xlane.f32.xlu0 %v1723
      %v1753 = vpop.xlane.xlu0 %1752
      %1754 = vmax.xlane.f32.xlu0 %v1724
      %v1755 = vpop.xlane.xlu0 %1754
      %1756 = vmax.xlane.f32.xlu0 %v1725
      %v1757 = vpop.xlane.xlu0 %1756
      %v1758 = vsub.f32 %v1710, %v1727
      %v1759 = vsub.f32 %v1711, %v1729
      %v1760 = vsub.f32 %v1712, %v1731
      %v1761 = vsub.f32 %v1713, %v1733
      %v1762 = vsub.f32 %v1714, %v1735
      %v1763 = vsub.f32 %v1715, %v1737
      %v1764 = vsub.f32 %v1716, %v1739
      %v1765 = vsub.f32 %v1717, %v1741
      %v1766 = vsub.f32 %v1718, %v1743
      %v1767 = vsub.f32 %v1719, %v1745
      %v1768 = vsub.f32 %v1720, %v1747
      %v1769 = vsub.f32 %v1721, %v1749
      %v1770 = vsub.f32 %v1722, %v1751
      %v1771 = vsub.f32 %v1723, %v1753
      %v1772 = vsub.f32 %v1724, %v1755
      %v1773 = vsub.f32 %v1725, %v1757
      %v1774 = vmul.f32 %v1758, 1.442695
      %v1775 = vpow.pop %v1774
      %v1776 = vmul.f32 %v1759, 1.442695
      %v1777 = vpow.pop %v1776
      %v1778 = vmul.f32 %v1760, 1.442695
      %v1779 = vpow.pop %v1778
      %v1780 = vmul.f32 %v1761, 1.442695
      %v1781 = vpow.pop %v1780
      %v1782 = vmul.f32 %v1762, 1.442695
      %v1783 = vpow.pop %v1782
      %v1784 = vmul.f32 %v1763, 1.442695
      %v1785 = vpow.pop %v1784
      %v1786 = vmul.f32 %v1764, 1.442695
      %v1787 = vpow.pop %v1786
      %v1788 = vmul.f32 %v1765, 1.442695
      %v1789 = vpow.pop %v1788
      %v1790 = vmul.f32 %v1766, 1.442695
      %v1791 = vpow.pop %v1790
      %v1792 = vmul.f32 %v1767, 1.442695
      %v1793 = vpow.pop %v1792
      %v1794 = vmul.f32 %v1768, 1.442695
      %v1795 = vpow.pop %v1794
      %v1796 = vmul.f32 %v1769, 1.442695
      %v1797 = vpow.pop %v1796
      %v1798 = vmul.f32 %v1770, 1.442695
      %v1799 = vpow.pop %v1798
      %v1800 = vmul.f32 %v1771, 1.442695
      %v1801 = vpow.pop %v1800
      %v1802 = vmul.f32 %v1772, 1.442695
      %v1803 = vpow.pop %v1802
      %v1804 = vmul.f32 %v1773, 1.442695
      %v1805 = vpow.pop %v1804
      %1806 = vadd.xlane.f32.xlu0 %v1775
      %v1807 = vpop.xlane.xlu0 %1806
      %1808 = vadd.xlane.f32.xlu0 %v1777
      %v1809 = vpop.xlane.xlu0 %1808
      %1810 = vadd.xlane.f32.xlu0 %v1779
      %v1811 = vpop.xlane.xlu0 %1810
      %1812 = vadd.xlane.f32.xlu0 %v1781
      %v1813 = vpop.xlane.xlu0 %1812
      %1814 = vadd.xlane.f32.xlu0 %v1783
      %v1815 = vpop.xlane.xlu0 %1814
      %1816 = vadd.xlane.f32.xlu0 %v1785
      %v1817 = vpop.xlane.xlu0 %1816
      %1818 = vadd.xlane.f32.xlu0 %v1787
      %v1819 = vpop.xlane.xlu0 %1818
      %1820 = vadd.xlane.f32.xlu0 %v1789
      %v1821 = vpop.xlane.xlu0 %1820
      %1822 = vadd.xlane.f32.xlu0 %v1791
      %v1823 = vpop.xlane.xlu0 %1822
      %1824 = vadd.xlane.f32.xlu0 %v1793
      %v1825 = vpop.xlane.xlu0 %1824
      %1826 = vadd.xlane.f32.xlu0 %v1795
      %v1827 = vpop.xlane.xlu0 %1826
      %1828 = vadd.xlane.f32.xlu0 %v1797
      %v1829 = vpop.xlane.xlu0 %1828
      %1830 = vadd.xlane.f32.xlu0 %v1799
      %v1831 = vpop.xlane.xlu0 %1830
      %1832 = vadd.xlane.f32.xlu0 %v1801
      %v1833 = vpop.xlane.xlu0 %1832
      %1834 = vadd.xlane.f32.xlu0 %v1803
      %v1835 = vpop.xlane.xlu0 %1834
      %1836 = vadd.xlane.f32.xlu0 %v1805
      %v1837 = vpop.xlane.xlu0 %1836
      %v1838 = vrcp.pop %v1807
      %v1839 = vrcp.pop %v1809
      %v1840 = vrcp.pop %v1811
      %v1841 = vrcp.pop %v1813
      %v1842 = vrcp.pop %v1815
      %v1843 = vrcp.pop %v1817
      %v1844 = vrcp.pop %v1819
      %v1845 = vrcp.pop %v1821
      %v1846 = vrcp.pop %v1823
      %v1847 = vrcp.pop %v1825
      %v1848 = vrcp.pop %v1827
      %v1849 = vrcp.pop %v1829
      %v1850 = vrcp.pop %v1831
      %v1851 = vrcp.pop %v1833
      %v1852 = vrcp.pop %v1835
      %v1853 = vrcp.pop %v1837
      %v1854 = vmul.f32 %v1775, %v1838
      %v1855 = vmul.f32 %v1777, %v1839
      %v1856 = vmul.f32 %v1779, %v1840
      %v1857 = vmul.f32 %v1781, %v1841
      %v1858 = vmul.f32 %v1783, %v1842
      %v1859 = vmul.f32 %v1785, %v1843
      %v1860 = vmul.f32 %v1787, %v1844
      %v1861 = vmul.f32 %v1789, %v1845
      %v1862 = vmul.f32 %v1791, %v1846
      %v1863 = vmul.f32 %v1793, %v1847
      %v1864 = vmul.f32 %v1795, %v1848
      %v1865 = vmul.f32 %v1797, %v1849
      %v1866 = vmul.f32 %v1799, %v1850
      %v1867 = vmul.f32 %v1801, %v1851
      %v1868 = vmul.f32 %v1803, %v1852
      %v1869 = vmul.f32 %v1805, %v1853
      %v1870 = vpack.c.bf16 %v1855, %v1854
      %v1871 = vpack.c.bf16 %v1857, %v1856
      %v1872 = vpack.c.bf16 %v1859, %v1858
      %v1873 = vpack.c.bf16 %v1861, %v1860
      %v1874 = vpack.c.bf16 %v1863, %v1862
      %v1875 = vpack.c.bf16 %v1865, %v1864
      %v1876 = vpack.c.bf16 %v1867, %v1866
      %v1877 = vpack.c.bf16 %v1869, %v1868
      %1878 = vrot.lane.b32.xlu0 %v134, 40
      %v1879 = vpop.permute.xlu0 %1878
      %1880 = vrot.lane.b32.xlu0 %v135, 40
      %v1881 = vpop.permute.xlu0 %1880
      %1882 = vrot.lane.b32.xlu0 %v136, 40
      %v1883 = vpop.permute.xlu0 %1882
      %1884 = vrot.lane.b32.xlu0 %v137, 40
      %v1885 = vpop.permute.xlu0 %1884
      %1886 = vrot.lane.b32.xlu0 %v138, 40
      %v1887 = vpop.permute.xlu0 %1886
      %1888 = vrot.lane.b32.xlu0 %v139, 40
      %v1889 = vpop.permute.xlu0 %1888
      %1890 = vrot.lane.b32.xlu0 %v140, 40
      %v1891 = vpop.permute.xlu0 %1890
      %1892 = vrot.lane.b32.xlu0 %v141, 40
      %v1893 = vpop.permute.xlu0 %1892
      %1902 = vmatprep.subr.bf16.mxu0 0
      %1903 = vmatpush1.bf16.msra.mxu0 %v1879
      %1904 = vmatprep.subr.bf16.mxu0 0
      %1905 = vmatpush1.bf16.msra.mxu0 %v1881
      %1906 = vmatprep.subr.bf16.mxu0 0
      %1907 = vmatpush1.bf16.msra.mxu0 %v1883
      %1908 = vmatprep.subr.bf16.mxu0 0
      %1909 = vmatpush1.bf16.msra.mxu0 %v1885
      %1910 = vmatprep.subr.bf16.mxu0 0
      %1911 = vmatpush1.bf16.msra.mxu0 %v1887
      %1912 = vmatprep.subr.bf16.mxu0 0
      %1913 = vmatpush1.bf16.msra.mxu0 %v1889
      %1914 = vmatprep.subr.bf16.mxu0 0
      %1915 = vmatpush1.bf16.msra.mxu0 %v1891
      %1916 = vmatprep.subr.bf16.mxu0 0
      %1917 = vmatpush1.bf16.msra.mxu0 %v1893
      %1918 = vmatprep.subr.bf16.mxu0 0
      %1919 = vmatpush1.bf16.msra.mxu0 0
      %1920 = vmatprep.subr.bf16.mxu0 0
      %1921 = vmatpush1.bf16.msra.mxu0 0
      %1922 = vmatprep.subr.bf16.mxu0 0
      %1923 = vmatpush1.bf16.msra.mxu0 0
      %1924 = vmatprep.subr.bf16.mxu0 0
      %1925 = vmatpush1.bf16.msra.mxu0 0
      %1926 = vmatprep.subr.bf16.mxu0 0
      %1927 = vmatpush1.bf16.msra.mxu0 0
      %1928 = vmatprep.subr.bf16.mxu0 0
      %1929 = vmatpush1.bf16.msra.mxu0 0
      %1930 = vmatprep.subr.bf16.mxu0 0
      %1931 = vmatpush1.bf16.msra.mxu0 0
      %1932 = vmatprep.subr.bf16.mxu0 0
      %1933 = vmatpush1.bf16.msra.mxu0 0
      %1934 = vmatprep.mubr.bf16.mxu0 0
      %1935 = vmatmul.mubr.bf16.gmra.mrb[0].mxu0 %v1870
      %v1936 = vpop.f32.mrb[0].mxu0
      %v1937 = vadd.f32 0.0, %v1936
      %v1938 = vpop.f32.mrb[0].mxu0
      %v1939 = vpop.f32.mrb[0].mxu0
      %v1940 = vadd.f32 0.0, %v1939
      %v1941 = vpop.f32.mrb[0].mxu0
      %1942 = vmatprep.mubr.bf16.mxu0 0
      %1943 = vmatmul.mubr.bf16.gmra.mrb[0].mxu0 %v1871
      %v1944 = vpop.f32.mrb[0].mxu0
      %v1945 = vadd.f32 0.0, %v1944
      %v1946 = vpop.f32.mrb[0].mxu0
      %v1947 = vpop.f32.mrb[0].mxu0
      %v1948 = vadd.f32 0.0, %v1947
      %v1949 = vpop.f32.mrb[0].mxu0
      %1950 = vmatprep.mubr.bf16.mxu0 0
      %1951 = vmatmul.mubr.bf16.gmra.mrb[0].mxu0 %v1872
      %v1952 = vpop.f32.mrb[0].mxu0
      %v1953 = vadd.f32 0.0, %v1952
      %v1954 = vpop.f32.mrb[0].mxu0
      %v1955 = vpop.f32.mrb[0].mxu0
      %v1956 = vadd.f32 0.0, %v1955
      %v1957 = vpop.f32.mrb[0].mxu0
      %1958 = vmatprep.mubr.bf16.mxu0 0
      %1959 = vmatmul.mubr.bf16.gmra.mrb[0].mxu0 %v1873
      %v1960 = vpop.f32.mrb[0].mxu0
      %v1961 = vadd.f32 0.0, %v1960
      %v1962 = vpop.f32.mrb[0].mxu0
      %v1963 = vpop.f32.mrb[0].mxu0
      %v1964 = vadd.f32 0.0, %v1963
      %v1965 = vpop.f32.mrb[0].mxu0
      %1966 = vmatprep.mubr.bf16.mxu0 0
      %1967 = vmatmul.mubr.bf16.gmra.mrb[0].mxu0 %v1874
      %v1968 = vpop.f32.mrb[0].mxu0
      %v1969 = vadd.f32 0.0, %v1968
      %v1970 = vpop.f32.mrb[0].mxu0
      %v1971 = vpop.f32.mrb[0].mxu0
      %v1972 = vadd.f32 0.0, %v1971
      %v1973 = vpop.f32.mrb[0].mxu0
      %1974 = vmatprep.mubr.bf16.mxu0 0
      %1975 = vmatmul.mubr.bf16.gmra.mrb[0].mxu0 %v1875
      %v1976 = vpop.f32.mrb[0].mxu0
      %v1977 = vadd.f32 0.0, %v1976
      %v1978 = vpop.f32.mrb[0].mxu0
      %v1979 = vpop.f32.mrb[0].mxu0
      %v1980 = vadd.f32 0.0, %v1979
      %v1981 = vpop.f32.mrb[0].mxu0
      %1982 = vmatprep.mubr.bf16.mxu0 0
      %1983 = vmatmul.mubr.bf16.gmra.mrb[0].mxu0 %v1876
      %v1984 = vpop.f32.mrb[0].mxu0
      %v1985 = vadd.f32 0.0, %v1984
      %v1986 = vpop.f32.mrb[0].mxu0
      %v1987 = vpop.f32.mrb[0].mxu0
      %v1988 = vadd.f32 0.0, %v1987
      %v1989 = vpop.f32.mrb[0].mxu0
      %1990 = vmatprep.mubr.bf16.mxu0 0
      %1991 = vmatmul.mubr.bf16.gmra.mrb[0].mxu0 %v1877
      %v1992 = vpop.f32.mrb[0].mxu0
      %v1993 = vadd.f32 0.0, %v1992
      %v1994 = vpop.f32.mrb[0].mxu0
      %v1995 = vpop.f32.mrb[0].mxu0
      %v1996 = vadd.f32 0.0, %v1995
      %v1997 = vpop.f32.mrb[0].mxu0
      %1998 = vdwg.mxu0
      %2015 = vrot.lane.b32.xlu0 %v1005, 8
      %v2016 = vpop.permute.xlu0 %2015
      %2017 = vrot.lane.b32.xlu0 %v1008, 8
      %v2018 = vpop.permute.xlu0 %2017
      %2019 = vrot.lane.b32.xlu0 %v1013, 8
      %v2020 = vpop.permute.xlu0 %2019
      %2021 = vrot.lane.b32.xlu0 %v1016, 8
      %v2022 = vpop.permute.xlu0 %2021
      %2023 = vrot.lane.b32.xlu0 %v1021, 8
      %v2024 = vpop.permute.xlu0 %2023
      %2025 = vrot.lane.b32.xlu0 %v1024, 8
      %v2026 = vpop.permute.xlu0 %2025
      %2027 = vrot.lane.b32.xlu0 %v1029, 8
      %v2028 = vpop.permute.xlu0 %2027
      %2029 = vrot.lane.b32.xlu0 %v1032, 8
      %v2030 = vpop.permute.xlu0 %2029
      %2031 = vrot.lane.b32.xlu0 %v1037, 8
      %v2032 = vpop.permute.xlu0 %2031
      %2033 = vrot.lane.b32.xlu0 %v1040, 8
      %v2034 = vpop.permute.xlu0 %2033
      %2035 = vrot.lane.b32.xlu0 %v1045, 8
      %v2036 = vpop.permute.xlu0 %2035
      %2037 = vrot.lane.b32.xlu0 %v1048, 8
      %v2038 = vpop.permute.xlu0 %2037
      %2039 = vrot.lane.b32.xlu0 %v1053, 8
      %v2040 = vpop.permute.xlu0 %2039
      %2041 = vrot.lane.b32.xlu0 %v1056, 8
      %v2042 = vpop.permute.xlu0 %2041
      %2043 = vrot.lane.b32.xlu0 %v1061, 8
      %v2044 = vpop.permute.xlu0 %2043
      %2045 = vrot.lane.b32.xlu0 %v1064, 8
      %v2046 = vpop.permute.xlu0 %2045
      %2079 = vrot.lane.b32.xlu0 %v1471, 16
      %v2080 = vpop.permute.xlu0 %2079
      %2081 = vrot.lane.b32.xlu0 %v1474, 16
      %v2082 = vpop.permute.xlu0 %2081
      %2083 = vrot.lane.b32.xlu0 %v1479, 16
      %v2084 = vpop.permute.xlu0 %2083
      %2085 = vrot.lane.b32.xlu0 %v1482, 16
      %v2086 = vpop.permute.xlu0 %2085
      %2087 = vrot.lane.b32.xlu0 %v1487, 16
      %v2088 = vpop.permute.xlu0 %2087
      %2089 = vrot.lane.b32.xlu0 %v1490, 16
      %v2090 = vpop.permute.xlu0 %2089
      %2091 = vrot.lane.b32.xlu0 %v1495, 16
      %v2092 = vpop.permute.xlu0 %2091
      %2093 = vrot.lane.b32.xlu0 %v1498, 16
      %v2094 = vpop.permute.xlu0 %2093
      %2095 = vrot.lane.b32.xlu0 %v1503, 16
      %v2096 = vpop.permute.xlu0 %2095
      %2097 = vrot.lane.b32.xlu0 %v1506, 16
      %v2098 = vpop.permute.xlu0 %2097
      %2099 = vrot.lane.b32.xlu0 %v1511, 16
      %v2100 = vpop.permute.xlu0 %2099
      %2101 = vrot.lane.b32.xlu0 %v1514, 16
      %v2102 = vpop.permute.xlu0 %2101
      %2103 = vrot.lane.b32.xlu0 %v1519, 16
      %v2104 = vpop.permute.xlu0 %2103
      %2105 = vrot.lane.b32.xlu0 %v1522, 16
      %v2106 = vpop.permute.xlu0 %2105
      %2107 = vrot.lane.b32.xlu0 %v1527, 16
      %v2108 = vpop.permute.xlu0 %2107
      %2109 = vrot.lane.b32.xlu0 %v1530, 16
      %v2110 = vpop.permute.xlu0 %2109
      %2143 = vrot.lane.b32.xlu0 %v1937, 24
      %v2144 = vpop.permute.xlu0 %2143
      %2145 = vrot.lane.b32.xlu0 %v1940, 24
      %v2146 = vpop.permute.xlu0 %2145
      %2147 = vrot.lane.b32.xlu0 %v1945, 24
      %v2148 = vpop.permute.xlu0 %2147
      %2149 = vrot.lane.b32.xlu0 %v1948, 24
      %v2150 = vpop.permute.xlu0 %2149
      %2151 = vrot.lane.b32.xlu0 %v1953, 24
      %v2152 = vpop.permute.xlu0 %2151
      %2153 = vrot.lane.b32.xlu0 %v1956, 24
      %v2154 = vpop.permute.xlu0 %2153
      %2155 = vrot.lane.b32.xlu0 %v1961, 24
      %v2156 = vpop.permute.xlu0 %2155
      %2157 = vrot.lane.b32.xlu0 %v1964, 24
      %v2158 = vpop.permute.xlu0 %2157
      %2159 = vrot.lane.b32.xlu0 %v1969, 24
      %v2160 = vpop.permute.xlu0 %2159
      %2161 = vrot.lane.b32.xlu0 %v1972, 24
      %v2162 = vpop.permute.xlu0 %2161
      %2163 = vrot.lane.b32.xlu0 %v1977, 24
      %v2164 = vpop.permute.xlu0 %2163
      %2165 = vrot.lane.b32.xlu0 %v1980, 24
      %v2166 = vpop.permute.xlu0 %2165
      %2167 = vrot.lane.b32.xlu0 %v1985, 24
      %v2168 = vpop.permute.xlu0 %2167
      %2169 = vrot.lane.b32.xlu0 %v1988, 24
      %v2170 = vpop.permute.xlu0 %2169
      %2171 = vrot.lane.b32.xlu0 %v1993, 24
      %v2172 = vpop.permute.xlu0 %2171
      %2173 = vrot.lane.b32.xlu0 %v1996, 24
      %v2174 = vpop.permute.xlu0 %2173
      %v2191 = vsel %vm166, %v539, %v2016
      %v2192 = vsel %vm166, %v542, %v2018
      %v2193 = vsel %vm166, %v547, %v2020
      %v2194 = vsel %vm166, %v550, %v2022
      %v2195 = vsel %vm166, %v555, %v2024
      %v2196 = vsel %vm166, %v558, %v2026
      %v2197 = vsel %vm166, %v563, %v2028
      %v2198 = vsel %vm166, %v566, %v2030
      %v2199 = vsel %vm166, %v571, %v2032
      %v2200 = vsel %vm166, %v574, %v2034
      %v2201 = vsel %vm166, %v579, %v2036
      %v2202 = vsel %vm166, %v582, %v2038
      %v2203 = vsel %vm166, %v587, %v2040
      %v2204 = vsel %vm166, %v590, %v2042
      %v2205 = vsel %vm166, %v595, %v2044
      %v2206 = vsel %vm166, %v598, %v2046
      %vm2207 = vcmask 130048
      %v2208 = vsel %vm2207, %v2191, %v2080
      %v2209 = vsel %vm2207, %v2192, %v2082
      %v2210 = vsel %vm2207, %v2193, %v2084
      %v2211 = vsel %vm2207, %v2194, %v2086
      %v2212 = vsel %vm2207, %v2195, %v2088
      %v2213 = vsel %vm2207, %v2196, %v2090
      %v2214 = vsel %vm2207, %v2197, %v2092
      %v2215 = vsel %vm2207, %v2198, %v2094
      %v2216 = vsel %vm2207, %v2199, %v2096
      %v2217 = vsel %vm2207, %v2200, %v2098
      %v2218 = vsel %vm2207, %v2201, %v2100
      %v2219 = vsel %vm2207, %v2202, %v2102
      %v2220 = vsel %vm2207, %v2203, %v2104
      %v2221 = vsel %vm2207, %v2204, %v2106
      %v2222 = vsel %vm2207, %v2205, %v2108
      %v2223 = vsel %vm2207, %v2206, %v2110
      %vm2224 = vcmask 195584
      %v2225 = vsel %vm2224, %v2208, %v2144
      %v2226 = vsel %vm2224, %v2209, %v2146
      %v2227 = vsel %vm2224, %v2210, %v2148
      %v2228 = vsel %vm2224, %v2211, %v2150
      %v2229 = vsel %vm2224, %v2212, %v2152
      %v2230 = vsel %vm2224, %v2213, %v2154
      %v2231 = vsel %vm2224, %v2214, %v2156
      %v2232 = vsel %vm2224, %v2215, %v2158
      %v2233 = vsel %vm2224, %v2216, %v2160
      %v2234 = vsel %vm2224, %v2217, %v2162
      %v2235 = vsel %vm2224, %v2218, %v2164
      %v2236 = vsel %vm2224, %v2219, %v2166
      %v2237 = vsel %vm2224, %v2220, %v2168
      %v2238 = vsel %vm2224, %v2221, %v2170
      %v2239 = vsel %vm2224, %v2222, %v2172
      %v2240 = vsel %vm2224, %v2223, %v2174
      %vm2241 = vcmask 261120
      %2242 = vst.msk [vmem:[%s116] sm:$0xff] %vm2241, %v2225
      %2243 = vst.msk [vmem:[%s116 + $0x8] sm:$0xff] %vm2241, %v2226
      %2244 = vst.msk [vmem:[%s116 + $0x10] sm:$0xff] %vm2241, %v2227
      %2245 = vst.msk [vmem:[%s116 + $0x18] sm:$0xff] %vm2241, %v2228
      %2246 = vst.msk [vmem:[%s116 + $0x20] sm:$0xff] %vm2241, %v2229
      %2247 = vst.msk [vmem:[%s116 + $0x28] sm:$0xff] %vm2241, %v2230
      %2248 = vst.msk [vmem:[%s116 + $0x30] sm:$0xff] %vm2241, %v2231
      %2249 = vst.msk [vmem:[%s116 + $0x38] sm:$0xff] %vm2241, %v2232
      %2250 = vst.msk [vmem:[%s116 + $0x40] sm:$0xff] %vm2241, %v2233
      %2251 = vst.msk [vmem:[%s116 + $0x48] sm:$0xff] %vm2241, %v2234
      %2252 = vst.msk [vmem:[%s116 + $0x50] sm:$0xff] %vm2241, %v2235
      %2253 = vst.msk [vmem:[%s116 + $0x58] sm:$0xff] %vm2241, %v2236
      %2254 = vst.msk [vmem:[%s116 + $0x60] sm:$0xff] %vm2241, %v2237
      %2255 = vst.msk [vmem:[%s116 + $0x68] sm:$0xff] %vm2241, %v2238
      %2256 = vst.msk [vmem:[%s116 + $0x70] sm:$0xff] %vm2241, %v2239
      %2257 = vst.msk [vmem:[%s116 + $0x78] sm:$0xff] %vm2241, %v2240
      %p2258 = scmp.lt.s32.totalorder %s12, 1
      %s2259 = scalar_select %p2258, %s12, 1
      %s2260 = smul.addr %s2259, 16
      %s2261 = smul.addr %s2260, 8
      %s2262 = scalar_lea.vmem %s1, %s2261
      // Predicated region
      $region25: #{conv3d_transformer2_forward.16} parent=23 // pred_check
        %p2263 = pneg %p56
      $region26: #{conv3d_transformer2_forward.16} parent=23 // pred_check_branch
        %2265 = sbr.rel (%p2263) target = $region28
      $region27: #{conv3d_transformer2_forward.16} parent=23 // pred_region
        _
      $region28: #{conv3d_transformer2_forward.16} parent=23 // pred_fallthru
        _
    $region24: #{conv3d_transformer2_forward.16} parent=5 // pred_fallthru
      _
    %p2266 = scmp.le.s32.totalorder 2, %s7
    // Predicated region
    $region29: #{conv3d_transformer2_forward.16} parent=5 // pred_check
      %p2267 = pneg %p2266
    $region30: #{conv3d_transformer2_forward.16} parent=5 // pred_check_branch
      %2269 = sbr.rel (%p2267) target = $region32
    $region31: #{conv3d_transformer2_forward.16} parent=5 // pred_region
      %s2270 = ssub.s32 %s7, 2
      // Predicated region
      $region33: #{conv3d_transformer2_forward.16} parent=31 // pred_check
        %p2271 = pneg %p62
      $region34: #{conv3d_transformer2_forward.16} parent=31 // pred_check_branch
        %2273 = sbr.rel (%p2271) target = $region36
      $region35: #{conv3d_transformer2_forward.16} parent=31 // pred_region
        %p2274 = scmp.lt.s32.totalorder %s13, 1
        %s2275 = scalar_select %p2274, %s13, 1
        %s2276 = smul.addr %s2275, 16
        %s2277 = smul.addr %s2276, 8
        %s2278 = scalar_lea.vmem %s1, %s2277
      $region36: #{conv3d_transformer2_forward.16} parent=31 // pred_fallthru
        _
    $region32: #{conv3d_transformer2_forward.16} parent=5 // pred_fallthru
      _
  $region6: #{conv3d_transformer2_forward.16} parent=0 // loop_footer
    %s11 = sadd.s32 1, %s7
  $region7: #{conv3d_transformer2_forward.16} parent=0 // loop_footer_branch
    %6 = sbr.rel target = $region3
  $region8: #{conv3d_transformer2_forward.16} parent=0 // loop_exit
    _

// kernel: conv3d_transformer2_forward.18
$region0: #{conv3d_transformer2_forward.18}
  #allocation0 [shape = 'u32[]', space=smem, size = 0x4, offset = 0x4, fixed_abs, tag = 'smem constant byte address 0x4 - core index']
  #allocation1 [shape = 'u32[144,128]{1,0:T(1,128)}', space=vmem, size = 0x12000, scoped, tag = 'internal scratch']
  #allocation2 [shape = 'f32[128,64]{1,0:T(8,128)}', space=vmem, size = 0x10000, scoped, tag = 'scratch operand']
  %s0 = inlined_call_operand.vmem [shape: f32[256,32], index: 0, kind: input, shape index: {}]
  %s1 = inlined_call_operand.vmem [shape: f32[32,64], index: 1, kind: input, shape index: {}]
  %s2 = inlined_call_operand.vmem [shape: f32[1,64], index: 2, kind: input, shape index: {}]
  %s3 = inlined_call_operand.vmem [shape: f32[256,64], index: 3, kind: output, shape index: {}]
  %s4 = sld [smem:[#allocation0]]
  $region53: #{conv3d_transformer2_forward.18} parent=0
    _
  %s6 = ssub.s32 1, %s4
  %s7 = scalar_select 0, %s6, %s4
  loop: start=0, step=1, limit=4
  $region2: #{conv3d_transformer2_forward.18} parent=0 // loop_pre_header
    _
  $region3: #{conv3d_transformer2_forward.18} parent=0 // loop_header
    %s9 = sphi 0, %s13
    %p10 = scmp.ge.s32.totalorder %s9, 4
    %s16 = sphi 0, %s35
    %s17 = sphi 0, %s31
    %s18 = sphi 0, %s27
    %s19 = sphi 0, %s16
    %s20 = sphi 0, %s17
    %s21 = sphi 0, %s18
    %s22 = sphi 0, %s19
    %s23 = sphi 0, %s20
    %s24 = sphi 0, %s21
    %s40 = sphi 0, %s42
    %s43 = sphi 0, %s40
    %s44 = sphi 0, %s43
    %s60 = sphi 0, %s44
    %s68 = sphi 0, %s70
    %s71 = sphi 0, %s68
    %s72 = sphi 0, %s71
    %s88 = sphi 0, %s72
    %s94 = sphi 0, %s96
    %s97 = sphi 0, %s94
    %s98 = sphi 0, %s97
    %s114 = sphi 0, %s98
    %s122 = sphi 0, %s124
    %s125 = sphi 0, %s122
    %s126 = sphi 0, %s125
    %s142 = sphi 0, %s126
  $region4: #{conv3d_transformer2_forward.18} parent=0 // loop_header_branch
    %12 = sbr.rel (%p10) target = $region8
  $region5: #{conv3d_transformer2_forward.18} parent=0 // loop_body
    %s14 = ssub.s32 %s9, 1
    %s15 = ssub.s32 %s9, 2
    %s25 = sadd.s32 1, %s18
    %p26 = scmp.ge.s32.totalorder %s25, 1
    %s27 = scalar_select %p26, 0, %s25
    %s28 = sadd.s32 1, %s17
    %s29 = scalar_select %p26, %s28, %s17
    %p30 = scmp.ge.s32.totalorder %s29, 1
    %s31 = scalar_select %p30, 0, %s29
    %s32 = sadd.s32 1, %s16
    %s33 = scalar_select %p30, %s32, %s16
    %p34 = scmp.ge.s32.totalorder %s33, 2
    %s35 = scalar_select %p34, 0, %s33
    %s36 = ssub.s32 %s16, %s35
    %s37 = ssub.s32 %s18, %s27
    %s38 = sor.u32 %s36, %s37
    %p39 = scmp.eq.s32.totalorder %s38, 0
    %s41 = sadd.s32 %s40, 1
    %s42 = scalar_select %p39, %s40, %s41
    %p45 = pneg %p39
    %p46 = scmp.eq.s32.totalorder %s9, 1
    %p47 = por %p45, %p46
    %p48 = scmp.ne.s32.totalorder %s40, %s43
    %p49 = scmp.eq.s32.totalorder %s9, 0
    %p50 = por %p48, %p49
    %p51 = scmp.ne.s32.totalorder %s40, %s43
    %p52 = scmp.eq.s32.totalorder %s14, 1
    %p53 = por %p51, %p52
    %p54 = scmp.ne.s32.totalorder %s43, %s44
    %p55 = scmp.eq.s32.totalorder %s14, 0
    %p56 = por %p54, %p55
    %p57 = scmp.ne.s32.totalorder %s43, %s44
    %p58 = scmp.eq.s32.totalorder %s15, 1
    %p59 = por %p57, %p58
    %p61 = scmp.ne.s32.totalorder %s44, %s60
    %p62 = scmp.eq.s32.totalorder %s15, 0
    %p63 = por %p61, %p62
    %s64 = ssub.s32 %s18, %s27
    %s65 = ssub.s32 %s17, %s31
    %s66 = sor.u32 %s64, %s65
    %p67 = scmp.eq.s32.totalorder %s66, 0
    %s69 = sadd.s32 %s68, 1
    %s70 = scalar_select %p67, %s68, %s69
    %p73 = pneg %p67
    %p74 = scmp.eq.s32.totalorder %s9, 1
    %p75 = por %p73, %p74
    %p76 = scmp.ne.s32.totalorder %s68, %s71
    %p77 = scmp.eq.s32.totalorder %s9, 0
    %p78 = por %p76, %p77
    %p79 = scmp.ne.s32.totalorder %s68, %s71
    %p80 = scmp.eq.s32.totalorder %s14, 1
    %p81 = por %p79, %p80
    %p82 = scmp.ne.s32.totalorder %s71, %s72
    %p83 = scmp.eq.s32.totalorder %s14, 0
    %p84 = por %p82, %p83
    %p85 = scmp.ne.s32.totalorder %s71, %s72
    %p86 = scmp.eq.s32.totalorder %s15, 1
    %p87 = por %p85, %p86
    %p89 = scmp.ne.s32.totalorder %s72, %s88
    %p90 = scmp.eq.s32.totalorder %s15, 0
    %p91 = por %p89, %p90
    %s92 = ssub.s32 %s17, %s31
    %p93 = scmp.eq.s32.totalorder %s92, 0
    %s95 = sadd.s32 %s94, 1
    %s96 = scalar_select %p93, %s94, %s95
    %p99 = pneg %p93
    %p100 = scmp.eq.s32.totalorder %s9, 1
    %p101 = por %p99, %p100
    %p102 = scmp.ne.s32.totalorder %s94, %s97
    %p103 = scmp.eq.s32.totalorder %s9, 0
    %p104 = por %p102, %p103
    %p105 = scmp.ne.s32.totalorder %s94, %s97
    %p106 = scmp.eq.s32.totalorder %s14, 1
    %p107 = por %p105, %p106
    %p108 = scmp.ne.s32.totalorder %s97, %s98
    %p109 = scmp.eq.s32.totalorder %s14, 0
    %p110 = por %p108, %p109
    %p111 = scmp.ne.s32.totalorder %s97, %s98
    %p112 = scmp.eq.s32.totalorder %s15, 1
    %p113 = por %p111, %p112
    %p115 = scmp.ne.s32.totalorder %s98, %s114
    %p116 = scmp.eq.s32.totalorder %s15, 0
    %p117 = por %p115, %p116
    %s118 = ssub.s32 %s16, %s35
    %s119 = ssub.s32 %s17, %s31
    %s120 = sor.u32 %s118, %s119
    %p121 = scmp.eq.s32.totalorder %s120, 0
    %s123 = sadd.s32 %s122, 1
    %s124 = scalar_select %p121, %s122, %s123
    %p127 = pneg %p121
    %p128 = scmp.eq.s32.totalorder %s9, 1
    %p129 = por %p127, %p128
    %p130 = scmp.ne.s32.totalorder %s122, %s125
    %p131 = scmp.eq.s32.totalorder %s9, 0
    %p132 = por %p130, %p131
    %p133 = scmp.ne.s32.totalorder %s122, %s125
    %p134 = scmp.eq.s32.totalorder %s14, 1
    %p135 = por %p133, %p134
    %p136 = scmp.ne.s32.totalorder %s125, %s126
    %p137 = scmp.eq.s32.totalorder %s14, 0
    %p138 = por %p136, %p137
    %p139 = scmp.ne.s32.totalorder %s125, %s126
    %p140 = scmp.eq.s32.totalorder %s15, 1
    %p141 = por %p139, %p140
    %p143 = scmp.ne.s32.totalorder %s126, %s142
    %p144 = scmp.eq.s32.totalorder %s15, 0
    %p145 = por %p143, %p144
    %p146 = scmp.le.s32.totalorder 1, %s9
    %p147 = scmp.lt.s32.totalorder %s9, 3
    %p148 = pnand %p146, %p147
    %p149 = pneg %p148
    // Predicated region
    $region9: #{conv3d_transformer2_forward.18} parent=5 // pred_check
      _
    $region10: #{conv3d_transformer2_forward.18} parent=5 // pred_check_branch
      %151 = sbr.rel (%p148) target = $region12
    $region11: #{conv3d_transformer2_forward.18} parent=5 // pred_region
      %s152 = ssub.s32 %s9, 1
      // Predicated region
      $region13: #{conv3d_transformer2_forward.18} parent=11 // pred_check
        %p153 = pneg %p84
      $region14: #{conv3d_transformer2_forward.18} parent=11 // pred_check_branch
        %155 = sbr.rel (%p153) target = $region16
      $region15: #{conv3d_transformer2_forward.18} parent=11 // pred_region
        %s156 = smul.u32 4, %s21
        %p157 = scmp.lt.s32.totalorder %s156, 3
        %s158 = scalar_select %p157, %s156, 3
        %p159 = scmp.lt.s32.totalorder %s20, 0
        %s160 = scalar_select %p159, %s20, 0
        %s161 = sadd.s32 %s160, %s158
        %s162 = smul.addr %s161, 8
        %s163 = scalar_lea.vmem %s1, %s162
        %s164 = smul.u32 4, %s21
      $region16: #{conv3d_transformer2_forward.18} parent=11 // pred_fallthru
        _
      // Predicated region
      $region17: #{conv3d_transformer2_forward.18} parent=11 // pred_check
        %p165 = pneg %p110
      $region18: #{conv3d_transformer2_forward.18} parent=11 // pred_check_branch
        %167 = sbr.rel (%p165) target = $region20
      $region19: #{conv3d_transformer2_forward.18} parent=11 // pred_region
        %p168 = scmp.lt.s32.totalorder %s20, 0
        %s169 = scalar_select %p168, %s20, 0
        %s170 = scalar_lea.vmem %s2, %s169
      $region20: #{conv3d_transformer2_forward.18} parent=11 // pred_fallthru
        _
    $region12: #{conv3d_transformer2_forward.18} parent=5 // pred_fallthru
      _
    %p171 = scmp.lt.s32.totalorder %s9, 2
    // Predicated region
    $region21: #{conv3d_transformer2_forward.18} parent=5 // pred_check
      %p172 = pneg %p171
    $region22: #{conv3d_transformer2_forward.18} parent=5 // pred_check_branch
      %174 = sbr.rel (%p172) target = $region24
    $region23: #{conv3d_transformer2_forward.18} parent=5 // pred_region
      // Predicated region
      $region25: #{conv3d_transformer2_forward.18} parent=23 // pred_check
        %p175 = pneg %p50
      $region26: #{conv3d_transformer2_forward.18} parent=23 // pred_check_branch
        %177 = sbr.rel (%p175) target = $region28
      $region27: #{conv3d_transformer2_forward.18} parent=23 // pred_region
        %s178 = smul.u32 16, %s16
        %p179 = scmp.lt.s32.totalorder %s178, 31
        %s180 = scalar_select %p179, %s178, 31
        %p181 = scmp.lt.s32.totalorder %s18, 0
        %s182 = scalar_select %p181, %s18, 0
        %s183 = sadd.s32 %s182, %s180
        %s184 = smul.addr %s183, 8
        %s185 = scalar_lea.vmem %s0, %s184
        %s186 = smul.u32 16, %s16
      $region28: #{conv3d_transformer2_forward.18} parent=23 // pred_fallthru
        _
    $region24: #{conv3d_transformer2_forward.18} parent=5 // pred_fallthru
      _
    %p187 = scmp.le.s32.totalorder 1, %s9
    %p188 = scmp.lt.s32.totalorder %s9, 3
    %p189 = pnand %p187, %p188
    %p190 = pneg %p189
    // Predicated region
    $region29: #{conv3d_transformer2_forward.18} parent=5 // pred_check
      _
    $region30: #{conv3d_transformer2_forward.18} parent=5 // pred_check_branch
      %192 = sbr.rel (%p189) target = $region32
    $region31: #{conv3d_transformer2_forward.18} parent=5 // pred_region
      %s193 = ssub.s32 %s9, 1
      %s194 = smul.u32 16, %s19
      %p195 = scmp.lt.s32.totalorder %s194, 31
      %s196 = scalar_select %p195, %s194, 31
      %p197 = scmp.lt.s32.totalorder %s21, 0
      %s198 = scalar_select %p197, %s21, 0
      %s199 = sadd.s32 %s198, %s196
      %s200 = smul.addr %s199, 8
      %s201 = scalar_lea.vmem %s0, %s200
      %p202 = pneg %p56
      %p203 = pneg %p53
      %s204 = smul.u32 4, %s21
      %p205 = scmp.lt.s32.totalorder %s204, 3
      %s206 = scalar_select %p205, %s204, 3
      %p207 = scmp.lt.s32.totalorder %s20, 0
      %s208 = scalar_select %p207, %s20, 0
      %s209 = sadd.s32 %s208, %s206
      %s210 = smul.addr %s209, 8
      %s211 = scalar_lea.vmem %s1, %s210
      %p212 = pneg %p84
      %p213 = pneg %p81
      %p214 = scmp.lt.s32.totalorder %s20, 0
      %s215 = scalar_select %p214, %s20, 0
      %s216 = scalar_lea.vmem %s2, %s215
      %p217 = pneg %p110
      %p218 = pneg %p107
      %p219 = pneg %p138
      %p220 = pneg %p135
      %s221 = smul.u32 16, %s19
      %p222 = scmp.lt.s32.totalorder %s221, 31
      %s223 = scalar_select %p222, %s221, 31
      %p224 = scmp.lt.s32.totalorder %s20, 0
      %s225 = scalar_select %p224, %s20, 0
      %s226 = sadd.s32 %s225, %s223
      %s227 = smul.addr %s226, 8
      %s228 = scalar_lea.vmem %s3, %s227
      %s229 = smul.u32 16, %s19
      %p230 = scmp.lt.s32.totalorder %s229, 31
      %s231 = scalar_select %p230, %s229, 31
      %p232 = scmp.lt.s32.totalorder %s21, 0
      %s233 = scalar_select %p232, %s21, 0
      %s234 = sadd.s32 %s233, %s231
      %s235 = smul.addr %s234, 8
      %s236 = scalar_lea.vmem %s0, %s235
      %s237 = smul.u32 16, %s19
      %s238 = smul.u32 4, %s21
      %p239 = scmp.lt.s32.totalorder %s238, 3
      %s240 = scalar_select %p239, %s238, 3
      %p241 = scmp.lt.s32.totalorder %s20, 0
      %s242 = scalar_select %p241, %s20, 0
      %s243 = sadd.s32 %s242, %s240
      %s244 = smul.addr %s243, 8
      %s245 = scalar_lea.vmem %s1, %s244
      %s246 = smul.u32 4, %s21
      %p247 = scmp.lt.s32.totalorder %s20, 0
      %s248 = scalar_select %p247, %s20, 0
      %s249 = scalar_lea.vmem %s2, %s248
      %s250 = smul.u32 16, %s19
      %p251 = scmp.lt.s32.totalorder %s250, 31
      %s252 = scalar_select %p251, %s250, 31
      %p253 = scmp.lt.s32.totalorder %s20, 0
      %s254 = scalar_select %p253, %s20, 0
      %s255 = sadd.s32 %s254, %s252
      %s256 = smul.addr %s255, 8
      %s257 = scalar_lea.vmem %s3, %s256
      %s258 = smul.u32 16, %s19
      %p260 = scmp.eq.s32.totalorder %s21, 0
      // Predicated region
      $region33: #{conv3d_transformer2_forward.18} parent=31 // pred_check
        %p261 = pneg %p260
      $region34: #{conv3d_transformer2_forward.18} parent=31 // pred_check_branch
        %263 = sbr.rel (%p261) target = $region36
      $region35: #{conv3d_transformer2_forward.18} parent=31 // pred_region
        %vm264 = vcmask 523264
        %265 = vst.msk [vmem:[#allocation2] sm:$0xff] %vm264, 0.0
        %266 = vst.msk [vmem:[#allocation2 + $0x8] sm:$0xff] %vm264, 0.0
        %267 = vst.msk [vmem:[#allocation2 + $0x10] sm:$0xff] %vm264, 0.0
        %268 = vst.msk [vmem:[#allocation2 + $0x18] sm:$0xff] %vm264, 0.0
        %269 = vst.msk [vmem:[#allocation2 + $0x20] sm:$0xff] %vm264, 0.0
        %270 = vst.msk [vmem:[#allocation2 + $0x28] sm:$0xff] %vm264, 0.0
        %271 = vst.msk [vmem:[#allocation2 + $0x30] sm:$0xff] %vm264, 0.0
        %272 = vst.msk [vmem:[#allocation2 + $0x38] sm:$0xff] %vm264, 0.0
        %273 = vst.msk [vmem:[#allocation2 + $0x40] sm:$0xff] %vm264, 0.0
        %274 = vst.msk [vmem:[#allocation2 + $0x48] sm:$0xff] %vm264, 0.0
        %275 = vst.msk [vmem:[#allocation2 + $0x50] sm:$0xff] %vm264, 0.0
        %276 = vst.msk [vmem:[#allocation2 + $0x58] sm:$0xff] %vm264, 0.0
        %277 = vst.msk [vmem:[#allocation2 + $0x60] sm:$0xff] %vm264, 0.0
        %278 = vst.msk [vmem:[#allocation2 + $0x68] sm:$0xff] %vm264, 0.0
        %279 = vst.msk [vmem:[#allocation2 + $0x70] sm:$0xff] %vm264, 0.0
        %280 = vst.msk [vmem:[#allocation2 + $0x78] sm:$0xff] %vm264, 0.0
      $region36: #{conv3d_transformer2_forward.18} parent=31 // pred_fallthru
        _
      %v281 = vld [vmem:[#allocation2] sm:$0xff]
      %v282 = vld [vmem:[#allocation2 + $0x8] sm:$0xff]
      %v283 = vld [vmem:[#allocation2 + $0x10] sm:$0xff]
      %v284 = vld [vmem:[#allocation2 + $0x18] sm:$0xff]
      %v285 = vld [vmem:[#allocation2 + $0x20] sm:$0xff]
      %v286 = vld [vmem:[#allocation2 + $0x28] sm:$0xff]
      %v287 = vld [vmem:[#allocation2 + $0x30] sm:$0xff]
      %v288 = vld [vmem:[#allocation2 + $0x38] sm:$0xff]
      %v289 = vld [vmem:[#allocation2 + $0x40] sm:$0xff]
      %v290 = vld [vmem:[#allocation2 + $0x48] sm:$0xff]
      %v291 = vld [vmem:[#allocation2 + $0x50] sm:$0xff]
      %v292 = vld [vmem:[#allocation2 + $0x58] sm:$0xff]
      %v293 = vld [vmem:[#allocation2 + $0x60] sm:$0xff]
      %v294 = vld [vmem:[#allocation2 + $0x68] sm:$0xff]
      %v295 = vld [vmem:[#allocation2 + $0x70] sm:$0xff]
      %v296 = vld [vmem:[#allocation2 + $0x78] sm:$0xff]
      %v297 = vld [vmem:[%s236] sm:$0xff]
      %v298 = vld [vmem:[%s236 + $0x8] sm:$0xff]
      %v299 = vld [vmem:[%s236 + $0x10] sm:$0xff]
      %v300 = vld [vmem:[%s236 + $0x18] sm:$0xff]
      %v301 = vld [vmem:[%s236 + $0x20] sm:$0xff]
      %v302 = vld [vmem:[%s236 + $0x28] sm:$0xff]
      %v303 = vld [vmem:[%s236 + $0x30] sm:$0xff]
      %v304 = vld [vmem:[%s236 + $0x38] sm:$0xff]
      %v305 = vld [vmem:[%s236 + $0x40] sm:$0xff]
      %v306 = vld [vmem:[%s236 + $0x48] sm:$0xff]
      %v307 = vld [vmem:[%s236 + $0x50] sm:$0xff]
      %v308 = vld [vmem:[%s236 + $0x58] sm:$0xff]
      %v309 = vld [vmem:[%s236 + $0x60] sm:$0xff]
      %v310 = vld [vmem:[%s236 + $0x68] sm:$0xff]
      %v311 = vld [vmem:[%s236 + $0x70] sm:$0xff]
      %v312 = vld [vmem:[%s236 + $0x78] sm:$0xff]
      %v313 = vpack.c.bf16 %v298, %v297
      %v314 = vpack.c.bf16 %v300, %v299
      %v315 = vpack.c.bf16 %v302, %v301
      %v316 = vpack.c.bf16 %v304, %v303
      %v317 = vpack.c.bf16 %v306, %v305
      %v318 = vpack.c.bf16 %v308, %v307
      %v319 = vpack.c.bf16 %v310, %v309
      %v320 = vpack.c.bf16 %v312, %v311
      %v321 = vld [vmem:[%s245] sm:$0xff]
      %v322 = vld [vmem:[%s245 + $0x8] sm:$0xff]
      %v323 = vld [vmem:[%s245 + $0x10] sm:$0xff]
      %v324 = vld [vmem:[%s245 + $0x18] sm:$0xff]
      %v325 = vpack.c.bf16 %v322, %v321
      %v326 = vpack.c.bf16 %v324, %v323
      %vm327 = vcmask 261120
      %v329 = vsel %vm327, %v313, 0
      %v332 = vsel %vm327, %v314, 0
      %v335 = vsel %vm327, %v315, 0
      %v338 = vsel %vm327, %v316, 0
      %v341 = vsel %vm327, %v317, 0
      %v344 = vsel %vm327, %v318, 0
      %v347 = vsel %vm327, %v319, 0
      %v350 = vsel %vm327, %v320, 0
      %352 = vmatprep.subr.bf16.mxu0 0
      %353 = vmatpush1.bf16.msra.mxu0 %v325
      %354 = vmatprep.subr.bf16.mxu0 0
      %355 = vmatpush1.bf16.msra.mxu0 %v326
      %356 = vmatprep.subr.bf16.mxu0 0
      %357 = vmatpush1.bf16.msra.mxu0 0
      %358 = vmatprep.subr.bf16.mxu0 0
      %359 = vmatpush1.bf16.msra.mxu0 0
      %360 = vmatprep.subr.bf16.mxu0 0
      %361 = vmatpush1.bf16.msra.mxu0 0
      %362 = vmatprep.subr.bf16.mxu0 0
      %363 = vmatpush1.bf16.msra.mxu0 0
      %364 = vmatprep.subr.bf16.mxu0 0
      %365 = vmatpush1.bf16.msra.mxu0 0
      %366 = vmatprep.subr.bf16.mxu0 0
      %367 = vmatpush1.bf16.msra.mxu0 0
      %368 = vmatprep.subr.bf16.mxu0 0
      %369 = vmatpush1.bf16.msra.mxu0 0
      %370 = vmatprep.subr.bf16.mxu0 0
      %371 = vmatpush1.bf16.msra.mxu0 0
      %372 = vmatprep.subr.bf16.mxu0 0
      %373 = vmatpush1.bf16.msra.mxu0 0
      %374 = vmatprep.subr.bf16.mxu0 0
      %375 = vmatpush1.bf16.msra.mxu0 0
      %376 = vmatprep.subr.bf16.mxu0 0
      %377 = vmatpush1.bf16.msra.mxu0 0
      %378 = vmatprep.subr.bf16.mxu0 0
      %379 = vmatpush1.bf16.msra.mxu0 0
      %380 = vmatprep.subr.bf16.mxu0 0
      %381 = vmatpush1.bf16.msra.mxu0 0
      %382 = vmatprep.subr.bf16.mxu0 0
      %383 = vmatpush1.bf16.msra.mxu0 0
      %384 = vmatprep.mubr.bf16.mxu0 0
      %385 = vmatmul.mubr.bf16.gmra.mrb[0].mxu0 %v329
      %v386 = vpop.f32.mrb[0].mxu0
      %v387 = vadd.f32 0.0, %v386
      %v388 = vpop.f32.mrb[0].mxu0
      %v389 = vpop.f32.mrb[0].mxu0
      %v390 = vadd.f32 0.0, %v389
      %v391 = vpop.f32.mrb[0].mxu0
      %392 = vmatprep.mubr.bf16.mxu0 0
      %393 = vmatmul.mubr.bf16.gmra.mrb[0].mxu0 %v332
      %v394 = vpop.f32.mrb[0].mxu0
      %v395 = vadd.f32 0.0, %v394
      %v396 = vpop.f32.mrb[0].mxu0
      %v397 = vpop.f32.mrb[0].mxu0
      %v398 = vadd.f32 0.0, %v397
      %v399 = vpop.f32.mrb[0].mxu0
      %400 = vmatprep.mubr.bf16.mxu0 0
      %401 = vmatmul.mubr.bf16.gmra.mrb[0].mxu0 %v335
      %v402 = vpop.f32.mrb[0].mxu0
      %v403 = vadd.f32 0.0, %v402
      %v404 = vpop.f32.mrb[0].mxu0
      %v405 = vpop.f32.mrb[0].mxu0
      %v406 = vadd.f32 0.0, %v405
      %v407 = vpop.f32.mrb[0].mxu0
      %408 = vmatprep.mubr.bf16.mxu0 0
      %409 = vmatmul.mubr.bf16.gmra.mrb[0].mxu0 %v338
      %v410 = vpop.f32.mrb[0].mxu0
      %v411 = vadd.f32 0.0, %v410
      %v412 = vpop.f32.mrb[0].mxu0
      %v413 = vpop.f32.mrb[0].mxu0
      %v414 = vadd.f32 0.0, %v413
      %v415 = vpop.f32.mrb[0].mxu0
      %416 = vmatprep.mubr.bf16.mxu0 0
      %417 = vmatmul.mubr.bf16.gmra.mrb[0].mxu0 %v341
      %v418 = vpop.f32.mrb[0].mxu0
      %v419 = vadd.f32 0.0, %v418
      %v420 = vpop.f32.mrb[0].mxu0
      %v421 = vpop.f32.mrb[0].mxu0
      %v422 = vadd.f32 0.0, %v421
      %v423 = vpop.f32.mrb[0].mxu0
      %424 = vmatprep.mubr.bf16.mxu0 0
      %425 = vmatmul.mubr.bf16.gmra.mrb[0].mxu0 %v344
      %v426 = vpop.f32.mrb[0].mxu0
      %v427 = vadd.f32 0.0, %v426
      %v428 = vpop.f32.mrb[0].mxu0
      %v429 = vpop.f32.mrb[0].mxu0
      %v430 = vadd.f32 0.0, %v429
      %v431 = vpop.f32.mrb[0].mxu0
      %432 = vmatprep.mubr.bf16.mxu0 0
      %433 = vmatmul.mubr.bf16.gmra.mrb[0].mxu0 %v347
      %v434 = vpop.f32.mrb[0].mxu0
      %v435 = vadd.f32 0.0, %v434
      %v436 = vpop.f32.mrb[0].mxu0
      %v437 = vpop.f32.mrb[0].mxu0
      %v438 = vadd.f32 0.0, %v437
      %v439 = vpop.f32.mrb[0].mxu0
      %440 = vmatprep.mubr.bf16.mxu0 0
      %441 = vmatmul.mubr.bf16.gmra.mrb[0].mxu0 %v350
      %v442 = vpop.f32.mrb[0].mxu0
      %v443 = vadd.f32 0.0, %v442
      %v444 = vpop.f32.mrb[0].mxu0
      %v445 = vpop.f32.mrb[0].mxu0
      %v446 = vadd.f32 0.0, %v445
      %v447 = vpop.f32.mrb[0].mxu0
      %448 = vdwg.mxu0
      %v449 = vadd.f32 %v281, %v387
      %v450 = vadd.f32 %v282, %v390
      %v451 = vadd.f32 %v283, %v395
      %v452 = vadd.f32 %v284, %v398
      %v453 = vadd.f32 %v285, %v403
      %v454 = vadd.f32 %v286, %v406
      %v455 = vadd.f32 %v287, %v411
      %v456 = vadd.f32 %v288, %v414
      %v457 = vadd.f32 %v289, %v419
      %v458 = vadd.f32 %v290, %v422
      %v459 = vadd.f32 %v291, %v427
      %v460 = vadd.f32 %v292, %v430
      %v461 = vadd.f32 %v293, %v435
      %v462 = vadd.f32 %v294, %v438
      %v463 = vadd.f32 %v295, %v443
      %v464 = vadd.f32 %v296, %v446
      %vm465 = vcmask 523264
      %466 = vst.msk [vmem:[#allocation2] sm:$0xff] %vm465, %v449
      %467 = vst.msk [vmem:[#allocation2 + $0x8] sm:$0xff] %vm465, %v450
      %468 = vst.msk [vmem:[#allocation2 + $0x10] sm:$0xff] %vm465, %v451
      %469 = vst.msk [vmem:[#allocation2 + $0x18] sm:$0xff] %vm465, %v452
      %470 = vst.msk [vmem:[#allocation2 + $0x20] sm:$0xff] %vm465, %v453
      %471 = vst.msk [vmem:[#allocation2 + $0x28] sm:$0xff] %vm465, %v454
      %472 = vst.msk [vmem:[#allocation2 + $0x30] sm:$0xff] %vm465, %v455
      %473 = vst.msk [vmem:[#allocation2 + $0x38] sm:$0xff] %vm465, %v456
      %474 = vst.msk [vmem:[#allocation2 + $0x40] sm:$0xff] %vm465, %v457
      %475 = vst.msk [vmem:[#allocation2 + $0x48] sm:$0xff] %vm465, %v458
      %476 = vst.msk [vmem:[#allocation2 + $0x50] sm:$0xff] %vm465, %v459
      %477 = vst.msk [vmem:[#allocation2 + $0x58] sm:$0xff] %vm465, %v460
      %478 = vst.msk [vmem:[#allocation2 + $0x60] sm:$0xff] %vm465, %v461
      %479 = vst.msk [vmem:[#allocation2 + $0x68] sm:$0xff] %vm465, %v462
      %480 = vst.msk [vmem:[#allocation2 + $0x70] sm:$0xff] %vm465, %v463
      %481 = vst.msk [vmem:[#allocation2 + $0x78] sm:$0xff] %vm465, %v464
      // Predicated region
      $region37: #{conv3d_transformer2_forward.18} parent=31 // pred_check
        %p482 = pneg %p260
      $region38: #{conv3d_transformer2_forward.18} parent=31 // pred_check_branch
        %484 = sbr.rel (%p482) target = $region40
      $region39: #{conv3d_transformer2_forward.18} parent=31 // pred_region
        %v485 = vld [vmem:[#allocation2] sm:$0xff]
        %v486 = vld [vmem:[#allocation2 + $0x8] sm:$0xff]
        %v487 = vld [vmem:[#allocation2 + $0x10] sm:$0xff]
        %v488 = vld [vmem:[#allocation2 + $0x18] sm:$0xff]
        %v489 = vld [vmem:[#allocation2 + $0x20] sm:$0xff]
        %v490 = vld [vmem:[#allocation2 + $0x28] sm:$0xff]
        %v491 = vld [vmem:[#allocation2 + $0x30] sm:$0xff]
        %v492 = vld [vmem:[#allocation2 + $0x38] sm:$0xff]
        %v493 = vld [vmem:[#allocation2 + $0x40] sm:$0xff]
        %v494 = vld [vmem:[#allocation2 + $0x48] sm:$0xff]
        %v495 = vld [vmem:[#allocation2 + $0x50] sm:$0xff]
        %v496 = vld [vmem:[#allocation2 + $0x58] sm:$0xff]
        %v497 = vld [vmem:[#allocation2 + $0x60] sm:$0xff]
        %v498 = vld [vmem:[#allocation2 + $0x68] sm:$0xff]
        %v499 = vld [vmem:[#allocation2 + $0x70] sm:$0xff]
        %v500 = vld [vmem:[#allocation2 + $0x78] sm:$0xff]
        %v501 = vld [vmem:[%s249] sm:$0x1]
        %v503 = vlaneseq
        %v504 = vshrl.u32 %v503, 7
        %v505 = vsub.s32 0, %v504
        %v506 = vrot.slane %v501, %v505
        %v508 = vadd.f32 %v485, %v506
        %v509 = vadd.f32 %v486, %v506
        %v510 = vadd.f32 %v487, %v506
        %v511 = vadd.f32 %v488, %v506
        %v512 = vadd.f32 %v489, %v506
        %v513 = vadd.f32 %v490, %v506
        %v514 = vadd.f32 %v491, %v506
        %v515 = vadd.f32 %v492, %v506
        %v516 = vadd.f32 %v493, %v506
        %v517 = vadd.f32 %v494, %v506
        %v518 = vadd.f32 %v495, %v506
        %v519 = vadd.f32 %v496, %v506
        %v520 = vadd.f32 %v497, %v506
        %v521 = vadd.f32 %v498, %v506
        %v522 = vadd.f32 %v499, %v506
        %v523 = vadd.f32 %v500, %v506
        %v524 = vmax.f32 %v508, 0.0
        %v525 = vmax.f32 %v509, 0.0
        %v526 = vmax.f32 %v510, 0.0
        %v527 = vmax.f32 %v511, 0.0
        %v528 = vmax.f32 %v512, 0.0
        %v529 = vmax.f32 %v513, 0.0
        %v530 = vmax.f32 %v514, 0.0
        %v531 = vmax.f32 %v515, 0.0
        %v532 = vmax.f32 %v516, 0.0
        %v533 = vmax.f32 %v517, 0.0
        %v534 = vmax.f32 %v518, 0.0
        %v535 = vmax.f32 %v519, 0.0
        %v536 = vmax.f32 %v520, 0.0
        %v537 = vmax.f32 %v521, 0.0
        %v538 = vmax.f32 %v522, 0.0
        %v539 = vmax.f32 %v523, 0.0
        %540 = vst.msk [vmem:[%s257] sm:$0xff] %vm465, %v524
        %541 = vst.msk [vmem:[%s257 + $0x8] sm:$0xff] %vm465, %v525
        %542 = vst.msk [vmem:[%s257 + $0x10] sm:$0xff] %vm465, %v526
        %543 = vst.msk [vmem:[%s257 + $0x18] sm:$0xff] %vm465, %v527
        %544 = vst.msk [vmem:[%s257 + $0x20] sm:$0xff] %vm465, %v528
        %545 = vst.msk [vmem:[%s257 + $0x28] sm:$0xff] %vm465, %v529
        %546 = vst.msk [vmem:[%s257 + $0x30] sm:$0xff] %vm465, %v530
        %547 = vst.msk [vmem:[%s257 + $0x38] sm:$0xff] %vm465, %v531
        %548 = vst.msk [vmem:[%s257 + $0x40] sm:$0xff] %vm465, %v532
        %549 = vst.msk [vmem:[%s257 + $0x48] sm:$0xff] %vm465, %v533
        %550 = vst.msk [vmem:[%s257 + $0x50] sm:$0xff] %vm465, %v534
        %551 = vst.msk [vmem:[%s257 + $0x58] sm:$0xff] %vm465, %v535
        %552 = vst.msk [vmem:[%s257 + $0x60] sm:$0xff] %vm465, %v536
        %553 = vst.msk [vmem:[%s257 + $0x68] sm:$0xff] %vm465, %v537
        %554 = vst.msk [vmem:[%s257 + $0x70] sm:$0xff] %vm465, %v538
        %555 = vst.msk [vmem:[%s257 + $0x78] sm:$0xff] %vm465, %v539
      $region40: #{conv3d_transformer2_forward.18} parent=31 // pred_fallthru
        _
      %s556 = smul.u32 16, %s19
      %p557 = scmp.lt.s32.totalorder %s556, 31
      %s558 = scalar_select %p557, %s556, 31
      %p559 = scmp.lt.s32.totalorder %s20, 0
      %s560 = scalar_select %p559, %s20, 0
      %s561 = sadd.s32 %s560, %s558
      %s562 = smul.addr %s561, 8
      %s563 = scalar_lea.vmem %s3, %s562
      // Predicated region
      $region41: #{conv3d_transformer2_forward.18} parent=31 // pred_check
        %p564 = pneg %p135
      $region42: #{conv3d_transformer2_forward.18} parent=31 // pred_check_branch
        %566 = sbr.rel (%p564) target = $region44
      $region43: #{conv3d_transformer2_forward.18} parent=31 // pred_region
        %s567 = smul.u32 16, %s19
      $region44: #{conv3d_transformer2_forward.18} parent=31 // pred_fallthru
        _
    $region32: #{conv3d_transformer2_forward.18} parent=5 // pred_fallthru
      _
    %p568 = scmp.le.s32.totalorder 2, %s9
    // Predicated region
    $region45: #{conv3d_transformer2_forward.18} parent=5 // pred_check
      %p569 = pneg %p568
    $region46: #{conv3d_transformer2_forward.18} parent=5 // pred_check_branch
      %571 = sbr.rel (%p569) target = $region48
    $region47: #{conv3d_transformer2_forward.18} parent=5 // pred_region
      %s572 = ssub.s32 %s9, 2
      // Predicated region
      $region49: #{conv3d_transformer2_forward.18} parent=47 // pred_check
        %p573 = pneg %p141
      $region50: #{conv3d_transformer2_forward.18} parent=47 // pred_check_branch
        %575 = sbr.rel (%p573) target = $region52
      $region51: #{conv3d_transformer2_forward.18} parent=47 // pred_region
        %s576 = smul.u32 16, %s22
        %p577 = scmp.lt.s32.totalorder %s576, 31
        %s578 = scalar_select %p577, %s576, 31
        %p579 = scmp.lt.s32.totalorder %s23, 0
        %s580 = scalar_select %p579, %s23, 0
        %s581 = sadd.s32 %s580, %s578
        %s582 = smul.addr %s581, 8
        %s583 = scalar_lea.vmem %s3, %s582
      $region52: #{conv3d_transformer2_forward.18} parent=47 // pred_fallthru
        _
    $region48: #{conv3d_transformer2_forward.18} parent=5 // pred_fallthru
      _
  $region6: #{conv3d_transformer2_forward.18} parent=0 // loop_footer
    %s13 = sadd.s32 1, %s9
  $region7: #{conv3d_transformer2_forward.18} parent=0 // loop_footer_branch
    %8 = sbr.rel target = $region3
  $region8: #{conv3d_transformer2_forward.18} parent=0 // loop_exit
    _

// kernel: conv3d_transformer2_forward.17
$region0: #{conv3d_transformer2_forward.17}
  #allocation0 [shape = 'u32[]', space=smem, size = 0x4, offset = 0x4, fixed_abs, tag = 'smem constant byte address 0x4 - core index']
  #allocation1 [shape = 'u32[144,128]{1,0:T(1,128)}', space=vmem, size = 0x12000, scoped, tag = 'internal scratch']
  #allocation2 [shape = 'f32[128,32]{1,0:T(8,128)}', space=vmem, size = 0x10000, scoped, tag = 'scratch operand']
  %s0 = inlined_call_operand.vmem [shape: f32[256,32], index: 0, kind: input, shape index: {}]
  %s1 = inlined_call_operand.vmem [shape: f32[32,32], index: 1, kind: input, shape index: {}]
  %s2 = inlined_call_operand.vmem [shape: f32[1,32], index: 2, kind: input, shape index: {}]
  %s3 = inlined_call_operand.vmem [shape: f32[256,32], index: 3, kind: input, shape index: {}]
  %s4 = inlined_call_operand.vmem [shape: f32[1,32], index: 4, kind: input, shape index: {}]
  %s5 = inlined_call_operand.vmem [shape: f32[1,32], index: 5, kind: input, shape index: {}]
  %s6 = inlined_call_operand.vmem [shape: f32[256,32], index: 6, kind: output, shape index: {}]
  %s7 = sld [smem:[#allocation0]]
  $region65: #{conv3d_transformer2_forward.17} parent=0
    _
  %s9 = ssub.s32 1, %s7
  %s10 = scalar_select 0, %s9, %s7
  loop: start=0, step=1, limit=4
  $region2: #{conv3d_transformer2_forward.17} parent=0 // loop_pre_header
    _
  $region3: #{conv3d_transformer2_forward.17} parent=0 // loop_header
    %s12 = sphi 0, %s16
    %p13 = scmp.ge.s32.totalorder %s12, 4
    %s19 = sphi 0, %s31
    %s20 = sphi 0, %s27
    %s21 = sphi 0, %s19
    %s22 = sphi 0, %s20
    %s23 = sphi 0, %s21
    %s24 = sphi 0, %s22
    %s36 = sphi 0, %s38
    %s39 = sphi 0, %s36
    %s40 = sphi 0, %s39
    %s56 = sphi 0, %s40
    %s62 = sphi 0, %s64
    %s65 = sphi 0, %s62
    %s66 = sphi 0, %s65
    %s82 = sphi 0, %s66
    %s86 = sphi 0, %s86
    %s88 = sphi 0, %s86
    %s89 = sphi 0, %s88
    %s103 = sphi 0, %s89
    %s109 = sphi 0, %s111
    %s112 = sphi 0, %s109
    %s113 = sphi 0, %s112
    %s129 = sphi 0, %s113
    %s133 = sphi 0, %s133
    %s135 = sphi 0, %s133
    %s136 = sphi 0, %s135
    %s150 = sphi 0, %s136
    %s154 = sphi 0, %s154
    %s156 = sphi 0, %s154
    %s157 = sphi 0, %s156
    %s171 = sphi 0, %s157
    %s177 = sphi 0, %s179
    %s180 = sphi 0, %s177
    %s181 = sphi 0, %s180
    %s197 = sphi 0, %s181
  $region4: #{conv3d_transformer2_forward.17} parent=0 // loop_header_branch
    %15 = sbr.rel (%p13) target = $region8
  $region5: #{conv3d_transformer2_forward.17} parent=0 // loop_body
    %s17 = ssub.s32 %s12, 1
    %s18 = ssub.s32 %s12, 2
    %s25 = sadd.s32 1, %s20
    %p26 = scmp.ge.s32.totalorder %s25, 1
    %s27 = scalar_select %p26, 0, %s25
    %s28 = sadd.s32 1, %s19
    %s29 = scalar_select %p26, %s28, %s19
    %p30 = scmp.ge.s32.totalorder %s29, 2
    %s31 = scalar_select %p30, 0, %s29
    %s32 = ssub.s32 %s19, %s31
    %s33 = ssub.s32 %s20, %s27
    %s34 = sor.u32 %s32, %s33
    %p35 = scmp.eq.s32.totalorder %s34, 0
    %s37 = sadd.s32 %s36, 1
    %s38 = scalar_select %p35, %s36, %s37
    %p41 = pneg %p35
    %p42 = scmp.eq.s32.totalorder %s12, 1
    %p43 = por %p41, %p42
    %p44 = scmp.ne.s32.totalorder %s36, %s39
    %p45 = scmp.eq.s32.totalorder %s12, 0
    %p46 = por %p44, %p45
    %p47 = scmp.ne.s32.totalorder %s36, %s39
    %p48 = scmp.eq.s32.totalorder %s17, 1
    %p49 = por %p47, %p48
    %p50 = scmp.ne.s32.totalorder %s39, %s40
    %p51 = scmp.eq.s32.totalorder %s17, 0
    %p52 = por %p50, %p51
    %p53 = scmp.ne.s32.totalorder %s39, %s40
    %p54 = scmp.eq.s32.totalorder %s18, 1
    %p55 = por %p53, %p54
    %p57 = scmp.ne.s32.totalorder %s40, %s56
    %p58 = scmp.eq.s32.totalorder %s18, 0
    %p59 = por %p57, %p58
    %s60 = ssub.s32 %s20, %s27
    %p61 = scmp.eq.s32.totalorder %s60, 0
    %s63 = sadd.s32 %s62, 1
    %s64 = scalar_select %p61, %s62, %s63
    %p67 = pneg %p61
    %p68 = scmp.eq.s32.totalorder %s12, 1
    %p69 = por %p67, %p68
    %p70 = scmp.ne.s32.totalorder %s62, %s65
    %p71 = scmp.eq.s32.totalorder %s12, 0
    %p72 = por %p70, %p71
    %p73 = scmp.ne.s32.totalorder %s62, %s65
    %p74 = scmp.eq.s32.totalorder %s17, 1
    %p75 = por %p73, %p74
    %p76 = scmp.ne.s32.totalorder %s65, %s66
    %p77 = scmp.eq.s32.totalorder %s17, 0
    %p78 = por %p76, %p77
    %p79 = scmp.ne.s32.totalorder %s65, %s66
    %p80 = scmp.eq.s32.totalorder %s18, 1
    %p81 = por %p79, %p80
    %p83 = scmp.ne.s32.totalorder %s66, %s82
    %p84 = scmp.eq.s32.totalorder %s18, 0
    %p85 = por %p83, %p84
    %s87 = sadd.s32 %s86, 1
    %p90 = scmp.eq.s32.totalorder %s12, 1
    %p91 = scmp.ne.s32.totalorder %s86, %s88
    %p92 = scmp.eq.s32.totalorder %s12, 0
    %p93 = por %p91, %p92
    %p94 = scmp.ne.s32.totalorder %s86, %s88
    %p95 = scmp.eq.s32.totalorder %s17, 1
    %p96 = por %p94, %p95
    %p97 = scmp.ne.s32.totalorder %s88, %s89
    %p98 = scmp.eq.s32.totalorder %s17, 0
    %p99 = por %p97, %p98
    %p100 = scmp.ne.s32.totalorder %s88, %s89
    %p101 = scmp.eq.s32.totalorder %s18, 1
    %p102 = por %p100, %p101
    %p104 = scmp.ne.s32.totalorder %s89, %s103
    %p105 = scmp.eq.s32.totalorder %s18, 0
    %p106 = por %p104, %p105
    %s107 = ssub.s32 %s19, %s31
    %p108 = scmp.eq.s32.totalorder %s107, 0
    %s110 = sadd.s32 %s109, 1
    %s111 = scalar_select %p108, %s109, %s110
    %p114 = pneg %p108
    %p115 = scmp.eq.s32.totalorder %s12, 1
    %p116 = por %p114, %p115
    %p117 = scmp.ne.s32.totalorder %s109, %s112
    %p118 = scmp.eq.s32.totalorder %s12, 0
    %p119 = por %p117, %p118
    %p120 = scmp.ne.s32.totalorder %s109, %s112
    %p121 = scmp.eq.s32.totalorder %s17, 1
    %p122 = por %p120, %p121
    %p123 = scmp.ne.s32.totalorder %s112, %s113
    %p124 = scmp.eq.s32.totalorder %s17, 0
    %p125 = por %p123, %p124
    %p126 = scmp.ne.s32.totalorder %s112, %s113
    %p127 = scmp.eq.s32.totalorder %s18, 1
    %p128 = por %p126, %p127
    %p130 = scmp.ne.s32.totalorder %s113, %s129
    %p131 = scmp.eq.s32.totalorder %s18, 0
    %p132 = por %p130, %p131
    %s134 = sadd.s32 %s133, 1
    %p137 = scmp.eq.s32.totalorder %s12, 1
    %p138 = scmp.ne.s32.totalorder %s133, %s135
    %p139 = scmp.eq.s32.totalorder %s12, 0
    %p140 = por %p138, %p139
    %p141 = scmp.ne.s32.totalorder %s133, %s135
    %p142 = scmp.eq.s32.totalorder %s17, 1
    %p143 = por %p141, %p142
    %p144 = scmp.ne.s32.totalorder %s135, %s136
    %p145 = scmp.eq.s32.totalorder %s17, 0
    %p146 = por %p144, %p145
    %p147 = scmp.ne.s32.totalorder %s135, %s136
    %p148 = scmp.eq.s32.totalorder %s18, 1
    %p149 = por %p147, %p148
    %p151 = scmp.ne.s32.totalorder %s136, %s150
    %p152 = scmp.eq.s32.totalorder %s18, 0
    %p153 = por %p151, %p152
    %s155 = sadd.s32 %s154, 1
    %p158 = scmp.eq.s32.totalorder %s12, 1
    %p159 = scmp.ne.s32.totalorder %s154, %s156
    %p160 = scmp.eq.s32.totalorder %s12, 0
    %p161 = por %p159, %p160
    %p162 = scmp.ne.s32.totalorder %s154, %s156
    %p163 = scmp.eq.s32.totalorder %s17, 1
    %p164 = por %p162, %p163
    %p165 = scmp.ne.s32.totalorder %s156, %s157
    %p166 = scmp.eq.s32.totalorder %s17, 0
    %p167 = por %p165, %p166
    %p168 = scmp.ne.s32.totalorder %s156, %s157
    %p169 = scmp.eq.s32.totalorder %s18, 1
    %p170 = por %p168, %p169
    %p172 = scmp.ne.s32.totalorder %s157, %s171
    %p173 = scmp.eq.s32.totalorder %s18, 0
    %p174 = por %p172, %p173
    %s175 = ssub.s32 %s19, %s31
    %p176 = scmp.eq.s32.totalorder %s175, 0
    %s178 = sadd.s32 %s177, 1
    %s179 = scalar_select %p176, %s177, %s178
    %p182 = pneg %p176
    %p183 = scmp.eq.s32.totalorder %s12, 1
    %p184 = por %p182, %p183
    %p185 = scmp.ne.s32.totalorder %s177, %s180
    %p186 = scmp.eq.s32.totalorder %s12, 0
    %p187 = por %p185, %p186
    %p188 = scmp.ne.s32.totalorder %s177, %s180
    %p189 = scmp.eq.s32.totalorder %s17, 1
    %p190 = por %p188, %p189
    %p191 = scmp.ne.s32.totalorder %s180, %s181
    %p192 = scmp.eq.s32.totalorder %s17, 0
    %p193 = por %p191, %p192
    %p194 = scmp.ne.s32.totalorder %s180, %s181
    %p195 = scmp.eq.s32.totalorder %s18, 1
    %p196 = por %p194, %p195
    %p198 = scmp.ne.s32.totalorder %s181, %s197
    %p199 = scmp.eq.s32.totalorder %s18, 0
    %p200 = por %p198, %p199
    %p201 = scmp.le.s32.totalorder 1, %s12
    %p202 = scmp.lt.s32.totalorder %s12, 3
    %p203 = pnand %p201, %p202
    %p204 = pneg %p203
    // Predicated region
    $region9: #{conv3d_transformer2_forward.17} parent=5 // pred_check
      _
    $region10: #{conv3d_transformer2_forward.17} parent=5 // pred_check_branch
      %206 = sbr.rel (%p203) target = $region12
    $region11: #{conv3d_transformer2_forward.17} parent=5 // pred_region
      %s207 = ssub.s32 %s12, 1
      // Predicated region
      $region13: #{conv3d_transformer2_forward.17} parent=11 // pred_check
        %p208 = pneg %p78
      $region14: #{conv3d_transformer2_forward.17} parent=11 // pred_check_branch
        %210 = sbr.rel (%p208) target = $region16
      $region15: #{conv3d_transformer2_forward.17} parent=11 // pred_region
        %s211 = smul.u32 4, %s22
        %p212 = scmp.lt.s32.totalorder %s211, 3
        %s213 = scalar_select %p212, %s211, 3
        %s214 = smul.addr %s213, 8
        %s215 = scalar_lea.vmem %s1, %s214
        %s216 = smul.u32 4, %s22
      $region16: #{conv3d_transformer2_forward.17} parent=11 // pred_fallthru
        _
      // Predicated region
      $region17: #{conv3d_transformer2_forward.17} parent=11 // pred_check
        %p217 = pneg %p99
      $region18: #{conv3d_transformer2_forward.17} parent=11 // pred_check_branch
        %219 = sbr.rel (%p217) target = $region20
      $region19: #{conv3d_transformer2_forward.17} parent=11 // pred_region
        _
      $region20: #{conv3d_transformer2_forward.17} parent=11 // pred_fallthru
        _
      // Predicated region
      $region21: #{conv3d_transformer2_forward.17} parent=11 // pred_check
        %p220 = pneg %p146
      $region22: #{conv3d_transformer2_forward.17} parent=11 // pred_check_branch
        %222 = sbr.rel (%p220) target = $region24
      $region23: #{conv3d_transformer2_forward.17} parent=11 // pred_region
        _
      $region24: #{conv3d_transformer2_forward.17} parent=11 // pred_fallthru
        _
      // Predicated region
      $region25: #{conv3d_transformer2_forward.17} parent=11 // pred_check
        %p223 = pneg %p167
      $region26: #{conv3d_transformer2_forward.17} parent=11 // pred_check_branch
        %225 = sbr.rel (%p223) target = $region28
      $region27: #{conv3d_transformer2_forward.17} parent=11 // pred_region
        _
      $region28: #{conv3d_transformer2_forward.17} parent=11 // pred_fallthru
        _
    $region12: #{conv3d_transformer2_forward.17} parent=5 // pred_fallthru
      _
    %p226 = scmp.lt.s32.totalorder %s12, 2
    // Predicated region
    $region29: #{conv3d_transformer2_forward.17} parent=5 // pred_check
      %p227 = pneg %p226
    $region30: #{conv3d_transformer2_forward.17} parent=5 // pred_check_branch
      %229 = sbr.rel (%p227) target = $region32
    $region31: #{conv3d_transformer2_forward.17} parent=5 // pred_region
      // Predicated region
      $region33: #{conv3d_transformer2_forward.17} parent=31 // pred_check
        %p230 = pneg %p46
      $region34: #{conv3d_transformer2_forward.17} parent=31 // pred_check_branch
        %232 = sbr.rel (%p230) target = $region36
      $region35: #{conv3d_transformer2_forward.17} parent=31 // pred_region
        %s233 = smul.u32 16, %s19
        %p234 = scmp.lt.s32.totalorder %s233, 31
        %s235 = scalar_select %p234, %s233, 31
        %p236 = scmp.lt.s32.totalorder %s20, 0
        %s237 = scalar_select %p236, %s20, 0
        %s238 = sadd.s32 %s237, %s235
        %s239 = smul.addr %s238, 8
        %s240 = scalar_lea.vmem %s0, %s239
        %s241 = smul.u32 16, %s19
      $region36: #{conv3d_transformer2_forward.17} parent=31 // pred_fallthru
        _
      // Predicated region
      $region37: #{conv3d_transformer2_forward.17} parent=31 // pred_check
        %p242 = pneg %p119
      $region38: #{conv3d_transformer2_forward.17} parent=31 // pred_check_branch
        %244 = sbr.rel (%p242) target = $region40
      $region39: #{conv3d_transformer2_forward.17} parent=31 // pred_region
        %s245 = smul.u32 16, %s19
        %p246 = scmp.lt.s32.totalorder %s245, 31
        %s247 = scalar_select %p246, %s245, 31
        %s248 = smul.addr %s247, 8
        %s249 = scalar_lea.vmem %s3, %s248
        %s250 = smul.u32 16, %s19
      $region40: #{conv3d_transformer2_forward.17} parent=31 // pred_fallthru
        _
    $region32: #{conv3d_transformer2_forward.17} parent=5 // pred_fallthru
      _
    %p251 = scmp.le.s32.totalorder 1, %s12
    %p252 = scmp.lt.s32.totalorder %s12, 3
    %p253 = pnand %p251, %p252
    %p254 = pneg %p253
    // Predicated region
    $region41: #{conv3d_transformer2_forward.17} parent=5 // pred_check
      _
    $region42: #{conv3d_transformer2_forward.17} parent=5 // pred_check_branch
      %256 = sbr.rel (%p253) target = $region44
    $region43: #{conv3d_transformer2_forward.17} parent=5 // pred_region
      %s257 = ssub.s32 %s12, 1
      %s258 = smul.u32 16, %s21
      %p259 = scmp.lt.s32.totalorder %s258, 31
      %s260 = scalar_select %p259, %s258, 31
      %p261 = scmp.lt.s32.totalorder %s22, 0
      %s262 = scalar_select %p261, %s22, 0
      %s263 = sadd.s32 %s262, %s260
      %s264 = smul.addr %s263, 8
      %s265 = scalar_lea.vmem %s0, %s264
      %p266 = pneg %p52
      %p267 = pneg %p49
      %s268 = smul.u32 4, %s22
      %p269 = scmp.lt.s32.totalorder %s268, 3
      %s270 = scalar_select %p269, %s268, 3
      %s271 = smul.addr %s270, 8
      %s272 = scalar_lea.vmem %s1, %s271
      %p273 = pneg %p78
      %p274 = pneg %p75
      %p275 = pneg %p99
      %p276 = pneg %p96
      %s277 = smul.u32 16, %s21
      %p278 = scmp.lt.s32.totalorder %s277, 31
      %s279 = scalar_select %p278, %s277, 31
      %s280 = smul.addr %s279, 8
      %s281 = scalar_lea.vmem %s3, %s280
      %p282 = pneg %p125
      %p283 = pneg %p122
      %p284 = pneg %p146
      %p285 = pneg %p143
      %p286 = pneg %p167
      %p287 = pneg %p164
      %p288 = pneg %p193
      %p289 = pneg %p190
      %s290 = smul.u32 16, %s21
      %p291 = scmp.lt.s32.totalorder %s290, 31
      %s292 = scalar_select %p291, %s290, 31
      %s293 = smul.addr %s292, 8
      %s294 = scalar_lea.vmem %s6, %s293
      %s295 = smul.u32 16, %s21
      %p296 = scmp.lt.s32.totalorder %s295, 31
      %s297 = scalar_select %p296, %s295, 31
      %p298 = scmp.lt.s32.totalorder %s22, 0
      %s299 = scalar_select %p298, %s22, 0
      %s300 = sadd.s32 %s299, %s297
      %s301 = smul.addr %s300, 8
      %s302 = scalar_lea.vmem %s0, %s301
      %s303 = smul.u32 16, %s21
      %s304 = smul.u32 4, %s22
      %p305 = scmp.lt.s32.totalorder %s304, 3
      %s306 = scalar_select %p305, %s304, 3
      %s307 = smul.addr %s306, 8
      %s308 = scalar_lea.vmem %s1, %s307
      %s309 = smul.u32 4, %s22
      %s310 = smul.u32 16, %s21
      %p311 = scmp.lt.s32.totalorder %s310, 31
      %s312 = scalar_select %p311, %s310, 31
      %s313 = smul.addr %s312, 8
      %s314 = scalar_lea.vmem %s3, %s313
      %s315 = smul.u32 16, %s21
      %s316 = smul.u32 16, %s21
      %p317 = scmp.lt.s32.totalorder %s316, 31
      %s318 = scalar_select %p317, %s316, 31
      %s319 = smul.addr %s318, 8
      %s320 = scalar_lea.vmem %s6, %s319
      %s321 = smul.u32 16, %s21
      %p323 = scmp.eq.s32.totalorder %s22, 0
      // Predicated region
      $region45: #{conv3d_transformer2_forward.17} parent=43 // pred_check
        %p324 = pneg %p323
      $region46: #{conv3d_transformer2_forward.17} parent=43 // pred_check_branch
        %326 = sbr.rel (%p324) target = $region48
      $region47: #{conv3d_transformer2_forward.17} parent=43 // pred_region
        %vm327 = vcmask 261120
        %328 = vst.msk [vmem:[#allocation2] sm:$0xff] %vm327, 0.0
        %329 = vst.msk [vmem:[#allocation2 + $0x8] sm:$0xff] %vm327, 0.0
        %330 = vst.msk [vmem:[#allocation2 + $0x10] sm:$0xff] %vm327, 0.0
        %331 = vst.msk [vmem:[#allocation2 + $0x18] sm:$0xff] %vm327, 0.0
        %332 = vst.msk [vmem:[#allocation2 + $0x20] sm:$0xff] %vm327, 0.0
        %333 = vst.msk [vmem:[#allocation2 + $0x28] sm:$0xff] %vm327, 0.0
        %334 = vst.msk [vmem:[#allocation2 + $0x30] sm:$0xff] %vm327, 0.0
        %335 = vst.msk [vmem:[#allocation2 + $0x38] sm:$0xff] %vm327, 0.0
        %336 = vst.msk [vmem:[#allocation2 + $0x40] sm:$0xff] %vm327, 0.0
        %337 = vst.msk [vmem:[#allocation2 + $0x48] sm:$0xff] %vm327, 0.0
        %338 = vst.msk [vmem:[#allocation2 + $0x50] sm:$0xff] %vm327, 0.0
        %339 = vst.msk [vmem:[#allocation2 + $0x58] sm:$0xff] %vm327, 0.0
        %340 = vst.msk [vmem:[#allocation2 + $0x60] sm:$0xff] %vm327, 0.0
        %341 = vst.msk [vmem:[#allocation2 + $0x68] sm:$0xff] %vm327, 0.0
        %342 = vst.msk [vmem:[#allocation2 + $0x70] sm:$0xff] %vm327, 0.0
        %343 = vst.msk [vmem:[#allocation2 + $0x78] sm:$0xff] %vm327, 0.0
      $region48: #{conv3d_transformer2_forward.17} parent=43 // pred_fallthru
        _
      %v344 = vld [vmem:[#allocation2] sm:$0xff]
      %v345 = vld [vmem:[#allocation2 + $0x8] sm:$0xff]
      %v346 = vld [vmem:[#allocation2 + $0x10] sm:$0xff]
      %v347 = vld [vmem:[#allocation2 + $0x18] sm:$0xff]
      %v348 = vld [vmem:[#allocation2 + $0x20] sm:$0xff]
      %v349 = vld [vmem:[#allocation2 + $0x28] sm:$0xff]
      %v350 = vld [vmem:[#allocation2 + $0x30] sm:$0xff]
      %v351 = vld [vmem:[#allocation2 + $0x38] sm:$0xff]
      %v352 = vld [vmem:[#allocation2 + $0x40] sm:$0xff]
      %v353 = vld [vmem:[#allocation2 + $0x48] sm:$0xff]
      %v354 = vld [vmem:[#allocation2 + $0x50] sm:$0xff]
      %v355 = vld [vmem:[#allocation2 + $0x58] sm:$0xff]
      %v356 = vld [vmem:[#allocation2 + $0x60] sm:$0xff]
      %v357 = vld [vmem:[#allocation2 + $0x68] sm:$0xff]
      %v358 = vld [vmem:[#allocation2 + $0x70] sm:$0xff]
      %v359 = vld [vmem:[#allocation2 + $0x78] sm:$0xff]
      %v360 = vld [vmem:[%s302] sm:$0xff]
      %v361 = vld [vmem:[%s302 + $0x8] sm:$0xff]
      %v362 = vld [vmem:[%s302 + $0x10] sm:$0xff]
      %v363 = vld [vmem:[%s302 + $0x18] sm:$0xff]
      %v364 = vld [vmem:[%s302 + $0x20] sm:$0xff]
      %v365 = vld [vmem:[%s302 + $0x28] sm:$0xff]
      %v366 = vld [vmem:[%s302 + $0x30] sm:$0xff]
      %v367 = vld [vmem:[%s302 + $0x38] sm:$0xff]
      %v368 = vld [vmem:[%s302 + $0x40] sm:$0xff]
      %v369 = vld [vmem:[%s302 + $0x48] sm:$0xff]
      %v370 = vld [vmem:[%s302 + $0x50] sm:$0xff]
      %v371 = vld [vmem:[%s302 + $0x58] sm:$0xff]
      %v372 = vld [vmem:[%s302 + $0x60] sm:$0xff]
      %v373 = vld [vmem:[%s302 + $0x68] sm:$0xff]
      %v374 = vld [vmem:[%s302 + $0x70] sm:$0xff]
      %v375 = vld [vmem:[%s302 + $0x78] sm:$0xff]
      %v376 = vpack.c.bf16 %v361, %v360
      %v377 = vpack.c.bf16 %v363, %v362
      %v378 = vpack.c.bf16 %v365, %v364
      %v379 = vpack.c.bf16 %v367, %v366
      %v380 = vpack.c.bf16 %v369, %v368
      %v381 = vpack.c.bf16 %v371, %v370
      %v382 = vpack.c.bf16 %v373, %v372
      %v383 = vpack.c.bf16 %v375, %v374
      %v384 = vld [vmem:[%s308] sm:$0xff]
      %v385 = vld [vmem:[%s308 + $0x8] sm:$0xff]
      %v386 = vld [vmem:[%s308 + $0x10] sm:$0xff]
      %v387 = vld [vmem:[%s308 + $0x18] sm:$0xff]
      %v388 = vpack.c.bf16 %v385, %v384
      %v389 = vpack.c.bf16 %v387, %v386
      %vm390 = vcmask 261120
      %v392 = vsel %vm390, %v376, 0
      %v395 = vsel %vm390, %v377, 0
      %v398 = vsel %vm390, %v378, 0
      %v401 = vsel %vm390, %v379, 0
      %v404 = vsel %vm390, %v380, 0
      %v407 = vsel %vm390, %v381, 0
      %v410 = vsel %vm390, %v382, 0
      %v413 = vsel %vm390, %v383, 0
      %415 = vmatprep.subr.bf16.mxu0 0
      %416 = vmatpush1.bf16.msra.mxu0 %v388
      %417 = vmatprep.subr.bf16.mxu0 0
      %418 = vmatpush1.bf16.msra.mxu0 %v389
      %419 = vmatprep.subr.bf16.mxu0 0
      %420 = vmatpush1.bf16.msra.mxu0 0
      %421 = vmatprep.subr.bf16.mxu0 0
      %422 = vmatpush1.bf16.msra.mxu0 0
      %423 = vmatprep.subr.bf16.mxu0 0
      %424 = vmatpush1.bf16.msra.mxu0 0
      %425 = vmatprep.subr.bf16.mxu0 0
      %426 = vmatpush1.bf16.msra.mxu0 0
      %427 = vmatprep.subr.bf16.mxu0 0
      %428 = vmatpush1.bf16.msra.mxu0 0
      %429 = vmatprep.subr.bf16.mxu0 0
      %430 = vmatpush1.bf16.msra.mxu0 0
      %431 = vmatprep.subr.bf16.mxu0 0
      %432 = vmatpush1.bf16.msra.mxu0 0
      %433 = vmatprep.subr.bf16.mxu0 0
      %434 = vmatpush1.bf16.msra.mxu0 0
      %435 = vmatprep.subr.bf16.mxu0 0
      %436 = vmatpush1.bf16.msra.mxu0 0
      %437 = vmatprep.subr.bf16.mxu0 0
      %438 = vmatpush1.bf16.msra.mxu0 0
      %439 = vmatprep.subr.bf16.mxu0 0
      %440 = vmatpush1.bf16.msra.mxu0 0
      %441 = vmatprep.subr.bf16.mxu0 0
      %442 = vmatpush1.bf16.msra.mxu0 0
      %443 = vmatprep.subr.bf16.mxu0 0
      %444 = vmatpush1.bf16.msra.mxu0 0
      %445 = vmatprep.subr.bf16.mxu0 0
      %446 = vmatpush1.bf16.msra.mxu0 0
      %447 = vmatprep.mubr.bf16.mxu0 0
      %448 = vmatmul.mubr.bf16.gmra.mrb[0].mxu0 %v392
      %v449 = vpop.f32.mrb[0].mxu0
      %v450 = vadd.f32 0.0, %v449
      %v451 = vpop.f32.mrb[0].mxu0
      %v452 = vpop.f32.mrb[0].mxu0
      %v453 = vadd.f32 0.0, %v452
      %v454 = vpop.f32.mrb[0].mxu0
      %455 = vmatprep.mubr.bf16.mxu0 0
      %456 = vmatmul.mubr.bf16.gmra.mrb[0].mxu0 %v395
      %v457 = vpop.f32.mrb[0].mxu0
      %v458 = vadd.f32 0.0, %v457
      %v459 = vpop.f32.mrb[0].mxu0
      %v460 = vpop.f32.mrb[0].mxu0
      %v461 = vadd.f32 0.0, %v460
      %v462 = vpop.f32.mrb[0].mxu0
      %463 = vmatprep.mubr.bf16.mxu0 0
      %464 = vmatmul.mubr.bf16.gmra.mrb[0].mxu0 %v398
      %v465 = vpop.f32.mrb[0].mxu0
      %v466 = vadd.f32 0.0, %v465
      %v467 = vpop.f32.mrb[0].mxu0
      %v468 = vpop.f32.mrb[0].mxu0
      %v469 = vadd.f32 0.0, %v468
      %v470 = vpop.f32.mrb[0].mxu0
      %471 = vmatprep.mubr.bf16.mxu0 0
      %472 = vmatmul.mubr.bf16.gmra.mrb[0].mxu0 %v401
      %v473 = vpop.f32.mrb[0].mxu0
      %v474 = vadd.f32 0.0, %v473
      %v475 = vpop.f32.mrb[0].mxu0
      %v476 = vpop.f32.mrb[0].mxu0
      %v477 = vadd.f32 0.0, %v476
      %v478 = vpop.f32.mrb[0].mxu0
      %479 = vmatprep.mubr.bf16.mxu0 0
      %480 = vmatmul.mubr.bf16.gmra.mrb[0].mxu0 %v404
      %v481 = vpop.f32.mrb[0].mxu0
      %v482 = vadd.f32 0.0, %v481
      %v483 = vpop.f32.mrb[0].mxu0
      %v484 = vpop.f32.mrb[0].mxu0
      %v485 = vadd.f32 0.0, %v484
      %v486 = vpop.f32.mrb[0].mxu0
      %487 = vmatprep.mubr.bf16.mxu0 0
      %488 = vmatmul.mubr.bf16.gmra.mrb[0].mxu0 %v407
      %v489 = vpop.f32.mrb[0].mxu0
      %v490 = vadd.f32 0.0, %v489
      %v491 = vpop.f32.mrb[0].mxu0
      %v492 = vpop.f32.mrb[0].mxu0
      %v493 = vadd.f32 0.0, %v492
      %v494 = vpop.f32.mrb[0].mxu0
      %495 = vmatprep.mubr.bf16.mxu0 0
      %496 = vmatmul.mubr.bf16.gmra.mrb[0].mxu0 %v410
      %v497 = vpop.f32.mrb[0].mxu0
      %v498 = vadd.f32 0.0, %v497
      %v499 = vpop.f32.mrb[0].mxu0
      %v500 = vpop.f32.mrb[0].mxu0
      %v501 = vadd.f32 0.0, %v500
      %v502 = vpop.f32.mrb[0].mxu0
      %503 = vmatprep.mubr.bf16.mxu0 0
      %504 = vmatmul.mubr.bf16.gmra.mrb[0].mxu0 %v413
      %v505 = vpop.f32.mrb[0].mxu0
      %v506 = vadd.f32 0.0, %v505
      %v507 = vpop.f32.mrb[0].mxu0
      %v508 = vpop.f32.mrb[0].mxu0
      %v509 = vadd.f32 0.0, %v508
      %v510 = vpop.f32.mrb[0].mxu0
      %511 = vdwg.mxu0
      %v512 = vadd.f32 %v344, %v450
      %v513 = vadd.f32 %v345, %v453
      %v514 = vadd.f32 %v346, %v458
      %v515 = vadd.f32 %v347, %v461
      %v516 = vadd.f32 %v348, %v466
      %v517 = vadd.f32 %v349, %v469
      %v518 = vadd.f32 %v350, %v474
      %v519 = vadd.f32 %v351, %v477
      %v520 = vadd.f32 %v352, %v482
      %v521 = vadd.f32 %v353, %v485
      %v522 = vadd.f32 %v354, %v490
      %v523 = vadd.f32 %v355, %v493
      %v524 = vadd.f32 %v356, %v498
      %v525 = vadd.f32 %v357, %v501
      %v526 = vadd.f32 %v358, %v506
      %v527 = vadd.f32 %v359, %v509
      %528 = vst.msk [vmem:[#allocation2] sm:$0xff] %vm390, %v512
      %529 = vst.msk [vmem:[#allocation2 + $0x8] sm:$0xff] %vm390, %v513
      %530 = vst.msk [vmem:[#allocation2 + $0x10] sm:$0xff] %vm390, %v514
      %531 = vst.msk [vmem:[#allocation2 + $0x18] sm:$0xff] %vm390, %v515
      %532 = vst.msk [vmem:[#allocation2 + $0x20] sm:$0xff] %vm390, %v516
      %533 = vst.msk [vmem:[#allocation2 + $0x28] sm:$0xff] %vm390, %v517
      %534 = vst.msk [vmem:[#allocation2 + $0x30] sm:$0xff] %vm390, %v518
      %535 = vst.msk [vmem:[#allocation2 + $0x38] sm:$0xff] %vm390, %v519
      %536 = vst.msk [vmem:[#allocation2 + $0x40] sm:$0xff] %vm390, %v520
      %537 = vst.msk [vmem:[#allocation2 + $0x48] sm:$0xff] %vm390, %v521
      %538 = vst.msk [vmem:[#allocation2 + $0x50] sm:$0xff] %vm390, %v522
      %539 = vst.msk [vmem:[#allocation2 + $0x58] sm:$0xff] %vm390, %v523
      %540 = vst.msk [vmem:[#allocation2 + $0x60] sm:$0xff] %vm390, %v524
      %541 = vst.msk [vmem:[#allocation2 + $0x68] sm:$0xff] %vm390, %v525
      %542 = vst.msk [vmem:[#allocation2 + $0x70] sm:$0xff] %vm390, %v526
      %543 = vst.msk [vmem:[#allocation2 + $0x78] sm:$0xff] %vm390, %v527
      // Predicated region
      $region49: #{conv3d_transformer2_forward.17} parent=43 // pred_check
        %p544 = pneg %p323
      $region50: #{conv3d_transformer2_forward.17} parent=43 // pred_check_branch
        %546 = sbr.rel (%p544) target = $region52
      $region51: #{conv3d_transformer2_forward.17} parent=43 // pred_region
        %v547 = vld [vmem:[#allocation2] sm:$0xff]
        %v548 = vld [vmem:[#allocation2 + $0x8] sm:$0xff]
        %v549 = vld [vmem:[#allocation2 + $0x10] sm:$0xff]
        %v550 = vld [vmem:[#allocation2 + $0x18] sm:$0xff]
        %v551 = vld [vmem:[#allocation2 + $0x20] sm:$0xff]
        %v552 = vld [vmem:[#allocation2 + $0x28] sm:$0xff]
        %v553 = vld [vmem:[#allocation2 + $0x30] sm:$0xff]
        %v554 = vld [vmem:[#allocation2 + $0x38] sm:$0xff]
        %v555 = vld [vmem:[#allocation2 + $0x40] sm:$0xff]
        %v556 = vld [vmem:[#allocation2 + $0x48] sm:$0xff]
        %v557 = vld [vmem:[#allocation2 + $0x50] sm:$0xff]
        %v558 = vld [vmem:[#allocation2 + $0x58] sm:$0xff]
        %v559 = vld [vmem:[#allocation2 + $0x60] sm:$0xff]
        %v560 = vld [vmem:[#allocation2 + $0x68] sm:$0xff]
        %v561 = vld [vmem:[#allocation2 + $0x70] sm:$0xff]
        %v562 = vld [vmem:[#allocation2 + $0x78] sm:$0xff]
        %v563 = vld [vmem:[%s2] sm:$0x1]
        %v565 = vlaneseq
        %v566 = vshrl.u32 %v565, 7
        %v567 = vsub.s32 0, %v566
        %v568 = vrot.slane %v563, %v567
        %v570 = vadd.f32 %v547, %v568
        %v571 = vadd.f32 %v548, %v568
        %v572 = vadd.f32 %v549, %v568
        %v573 = vadd.f32 %v550, %v568
        %v574 = vadd.f32 %v551, %v568
        %v575 = vadd.f32 %v552, %v568
        %v576 = vadd.f32 %v553, %v568
        %v577 = vadd.f32 %v554, %v568
        %v578 = vadd.f32 %v555, %v568
        %v579 = vadd.f32 %v556, %v568
        %v580 = vadd.f32 %v557, %v568
        %v581 = vadd.f32 %v558, %v568
        %v582 = vadd.f32 %v559, %v568
        %v583 = vadd.f32 %v560, %v568
        %v584 = vadd.f32 %v561, %v568
        %v585 = vadd.f32 %v562, %v568
        %v586 = vld [vmem:[%s314] sm:$0xff]
        %v587 = vld [vmem:[%s314 + $0x8] sm:$0xff]
        %v588 = vld [vmem:[%s314 + $0x10] sm:$0xff]
        %v589 = vld [vmem:[%s314 + $0x18] sm:$0xff]
        %v590 = vld [vmem:[%s314 + $0x20] sm:$0xff]
        %v591 = vld [vmem:[%s314 + $0x28] sm:$0xff]
        %v592 = vld [vmem:[%s314 + $0x30] sm:$0xff]
        %v593 = vld [vmem:[%s314 + $0x38] sm:$0xff]
        %v594 = vld [vmem:[%s314 + $0x40] sm:$0xff]
        %v595 = vld [vmem:[%s314 + $0x48] sm:$0xff]
        %v596 = vld [vmem:[%s314 + $0x50] sm:$0xff]
        %v597 = vld [vmem:[%s314 + $0x58] sm:$0xff]
        %v598 = vld [vmem:[%s314 + $0x60] sm:$0xff]
        %v599 = vld [vmem:[%s314 + $0x68] sm:$0xff]
        %v600 = vld [vmem:[%s314 + $0x70] sm:$0xff]
        %v601 = vld [vmem:[%s314 + $0x78] sm:$0xff]
        %v602 = vadd.f32 %v570, %v586
        %v603 = vadd.f32 %v571, %v587
        %v604 = vadd.f32 %v572, %v588
        %v605 = vadd.f32 %v573, %v589
        %v606 = vadd.f32 %v574, %v590
        %v607 = vadd.f32 %v575, %v591
        %v608 = vadd.f32 %v576, %v592
        %v609 = vadd.f32 %v577, %v593
        %v610 = vadd.f32 %v578, %v594
        %v611 = vadd.f32 %v579, %v595
        %v612 = vadd.f32 %v580, %v596
        %v613 = vadd.f32 %v581, %v597
        %v614 = vadd.f32 %v582, %v598
        %v615 = vadd.f32 %v583, %v599
        %v616 = vadd.f32 %v584, %v600
        %v617 = vadd.f32 %v585, %v601
        %v618 = vsel %vm390, %v602, 0.0
        %619 = vadd.xlane.f32.xlu0 %v618
        %v620 = vpop.xlane.xlu0 %619
        %v621 = vsel %vm390, %v603, 0.0
        %622 = vadd.xlane.f32.xlu0 %v621
        %v623 = vpop.xlane.xlu0 %622
        %v624 = vsel %vm390, %v604, 0.0
        %625 = vadd.xlane.f32.xlu0 %v624
        %v626 = vpop.xlane.xlu0 %625
        %v627 = vsel %vm390, %v605, 0.0
        %628 = vadd.xlane.f32.xlu0 %v627
        %v629 = vpop.xlane.xlu0 %628
        %v630 = vsel %vm390, %v606, 0.0
        %631 = vadd.xlane.f32.xlu0 %v630
        %v632 = vpop.xlane.xlu0 %631
        %v633 = vsel %vm390, %v607, 0.0
        %634 = vadd.xlane.f32.xlu0 %v633
        %v635 = vpop.xlane.xlu0 %634
        %v636 = vsel %vm390, %v608, 0.0
        %637 = vadd.xlane.f32.xlu0 %v636
        %v638 = vpop.xlane.xlu0 %637
        %v639 = vsel %vm390, %v609, 0.0
        %640 = vadd.xlane.f32.xlu0 %v639
        %v641 = vpop.xlane.xlu0 %640
        %v642 = vsel %vm390, %v610, 0.0
        %643 = vadd.xlane.f32.xlu0 %v642
        %v644 = vpop.xlane.xlu0 %643
        %v645 = vsel %vm390, %v611, 0.0
        %646 = vadd.xlane.f32.xlu0 %v645
        %v647 = vpop.xlane.xlu0 %646
        %v648 = vsel %vm390, %v612, 0.0
        %649 = vadd.xlane.f32.xlu0 %v648
        %v650 = vpop.xlane.xlu0 %649
        %v651 = vsel %vm390, %v613, 0.0
        %652 = vadd.xlane.f32.xlu0 %v651
        %v653 = vpop.xlane.xlu0 %652
        %v654 = vsel %vm390, %v614, 0.0
        %655 = vadd.xlane.f32.xlu0 %v654
        %v656 = vpop.xlane.xlu0 %655
        %v657 = vsel %vm390, %v615, 0.0
        %658 = vadd.xlane.f32.xlu0 %v657
        %v659 = vpop.xlane.xlu0 %658
        %v660 = vsel %vm390, %v616, 0.0
        %661 = vadd.xlane.f32.xlu0 %v660
        %v662 = vpop.xlane.xlu0 %661
        %v663 = vsel %vm390, %v617, 0.0
        %664 = vadd.xlane.f32.xlu0 %v663
        %v665 = vpop.xlane.xlu0 %664
        %v666 = vrcp.pop 32.0
        %v667 = vmul.f32 %v620, %v666
        %v668 = vmul.f32 %v623, %v666
        %v669 = vmul.f32 %v626, %v666
        %v670 = vmul.f32 %v629, %v666
        %v671 = vmul.f32 %v632, %v666
        %v672 = vmul.f32 %v635, %v666
        %v673 = vmul.f32 %v638, %v666
        %v674 = vmul.f32 %v641, %v666
        %v675 = vmul.f32 %v644, %v666
        %v676 = vmul.f32 %v647, %v666
        %v677 = vmul.f32 %v650, %v666
        %v678 = vmul.f32 %v653, %v666
        %v679 = vmul.f32 %v656, %v666
        %v680 = vmul.f32 %v659, %v666
        %v681 = vmul.f32 %v662, %v666
        %v682 = vmul.f32 %v665, %v666
        %v683 = vsub.f32 %v602, %v667
        %v684 = vsub.f32 %v603, %v668
        %v685 = vsub.f32 %v604, %v669
        %v686 = vsub.f32 %v605, %v670
        %v687 = vsub.f32 %v606, %v671
        %v688 = vsub.f32 %v607, %v672
        %v689 = vsub.f32 %v608, %v673
        %v690 = vsub.f32 %v609, %v674
        %v691 = vsub.f32 %v610, %v675
        %v692 = vsub.f32 %v611, %v676
        %v693 = vsub.f32 %v612, %v677
        %v694 = vsub.f32 %v613, %v678
        %v695 = vsub.f32 %v614, %v679
        %v696 = vsub.f32 %v615, %v680
        %v697 = vsub.f32 %v616, %v681
        %v698 = vsub.f32 %v617, %v682
        %v699 = vmul.f32 %v683, %v683
        %v700 = vmul.f32 %v684, %v684
        %v701 = vmul.f32 %v685, %v685
        %v702 = vmul.f32 %v686, %v686
        %v703 = vmul.f32 %v687, %v687
        %v704 = vmul.f32 %v688, %v688
        %v705 = vmul.f32 %v689, %v689
        %v706 = vmul.f32 %v690, %v690
        %v707 = vmul.f32 %v691, %v691
        %v708 = vmul.f32 %v692, %v692
        %v709 = vmul.f32 %v693, %v693
        %v710 = vmul.f32 %v694, %v694
        %v711 = vmul.f32 %v695, %v695
        %v712 = vmul.f32 %v696, %v696
        %v713 = vmul.f32 %v697, %v697
        %v714 = vmul.f32 %v698, %v698
        %v715 = vsel %vm390, %v699, 0.0
        %716 = vadd.xlane.f32.xlu0 %v715
        %v717 = vpop.xlane.xlu0 %716
        %v718 = vsel %vm390, %v700, 0.0
        %719 = vadd.xlane.f32.xlu0 %v718
        %v720 = vpop.xlane.xlu0 %719
        %v721 = vsel %vm390, %v701, 0.0
        %722 = vadd.xlane.f32.xlu0 %v721
        %v723 = vpop.xlane.xlu0 %722
        %v724 = vsel %vm390, %v702, 0.0
        %725 = vadd.xlane.f32.xlu0 %v724
        %v726 = vpop.xlane.xlu0 %725
        %v727 = vsel %vm390, %v703, 0.0
        %728 = vadd.xlane.f32.xlu0 %v727
        %v729 = vpop.xlane.xlu0 %728
        %v730 = vsel %vm390, %v704, 0.0
        %731 = vadd.xlane.f32.xlu0 %v730
        %v732 = vpop.xlane.xlu0 %731
        %v733 = vsel %vm390, %v705, 0.0
        %734 = vadd.xlane.f32.xlu0 %v733
        %v735 = vpop.xlane.xlu0 %734
        %v736 = vsel %vm390, %v706, 0.0
        %737 = vadd.xlane.f32.xlu0 %v736
        %v738 = vpop.xlane.xlu0 %737
        %v739 = vsel %vm390, %v707, 0.0
        %740 = vadd.xlane.f32.xlu0 %v739
        %v741 = vpop.xlane.xlu0 %740
        %v742 = vsel %vm390, %v708, 0.0
        %743 = vadd.xlane.f32.xlu0 %v742
        %v744 = vpop.xlane.xlu0 %743
        %v745 = vsel %vm390, %v709, 0.0
        %746 = vadd.xlane.f32.xlu0 %v745
        %v747 = vpop.xlane.xlu0 %746
        %v748 = vsel %vm390, %v710, 0.0
        %749 = vadd.xlane.f32.xlu0 %v748
        %v750 = vpop.xlane.xlu0 %749
        %v751 = vsel %vm390, %v711, 0.0
        %752 = vadd.xlane.f32.xlu0 %v751
        %v753 = vpop.xlane.xlu0 %752
        %v754 = vsel %vm390, %v712, 0.0
        %755 = vadd.xlane.f32.xlu0 %v754
        %v756 = vpop.xlane.xlu0 %755
        %v757 = vsel %vm390, %v713, 0.0
        %758 = vadd.xlane.f32.xlu0 %v757
        %v759 = vpop.xlane.xlu0 %758
        %v760 = vsel %vm390, %v714, 0.0
        %761 = vadd.xlane.f32.xlu0 %v760
        %v762 = vpop.xlane.xlu0 %761
        %v763 = vmul.f32 %v717, %v666
        %v764 = vmul.f32 %v720, %v666
        %v765 = vmul.f32 %v723, %v666
        %v766 = vmul.f32 %v726, %v666
        %v767 = vmul.f32 %v729, %v666
        %v768 = vmul.f32 %v732, %v666
        %v769 = vmul.f32 %v735, %v666
        %v770 = vmul.f32 %v738, %v666
        %v771 = vmul.f32 %v741, %v666
        %v772 = vmul.f32 %v744, %v666
        %v773 = vmul.f32 %v747, %v666
        %v774 = vmul.f32 %v750, %v666
        %v775 = vmul.f32 %v753, %v666
        %v776 = vmul.f32 %v756, %v666
        %v777 = vmul.f32 %v759, %v666
        %v778 = vmul.f32 %v762, %v666
        %v779 = vadd.f32 %v763, 1e-05
        %v780 = vadd.f32 %v764, 1e-05
        %v781 = vadd.f32 %v765, 1e-05
        %v782 = vadd.f32 %v766, 1e-05
        %v783 = vadd.f32 %v767, 1e-05
        %v784 = vadd.f32 %v768, 1e-05
        %v785 = vadd.f32 %v769, 1e-05
        %v786 = vadd.f32 %v770, 1e-05
        %v787 = vadd.f32 %v771, 1e-05
        %v788 = vadd.f32 %v772, 1e-05
        %v789 = vadd.f32 %v773, 1e-05
        %v790 = vadd.f32 %v774, 1e-05
        %v791 = vadd.f32 %v775, 1e-05
        %v792 = vadd.f32 %v776, 1e-05
        %v793 = vadd.f32 %v777, 1e-05
        %v794 = vadd.f32 %v778, 1e-05
        %v795 = vrsqrt.pop %v779
        %v796 = vrsqrt.pop %v780
        %v797 = vrsqrt.pop %v781
        %v798 = vrsqrt.pop %v782
        %v799 = vrsqrt.pop %v783
        %v800 = vrsqrt.pop %v784
        %v801 = vrsqrt.pop %v785
        %v802 = vrsqrt.pop %v786
        %v803 = vrsqrt.pop %v787
        %v804 = vrsqrt.pop %v788
        %v805 = vrsqrt.pop %v789
        %v806 = vrsqrt.pop %v790
        %v807 = vrsqrt.pop %v791
        %v808 = vrsqrt.pop %v792
        %v809 = vrsqrt.pop %v793
        %v810 = vrsqrt.pop %v794
        %v811 = vmul.f32 %v683, %v795
        %v812 = vmul.f32 %v684, %v796
        %v813 = vmul.f32 %v685, %v797
        %v814 = vmul.f32 %v686, %v798
        %v815 = vmul.f32 %v687, %v799
        %v816 = vmul.f32 %v688, %v800
        %v817 = vmul.f32 %v689, %v801
        %v818 = vmul.f32 %v690, %v802
        %v819 = vmul.f32 %v691, %v803
        %v820 = vmul.f32 %v692, %v804
        %v821 = vmul.f32 %v693, %v805
        %v822 = vmul.f32 %v694, %v806
        %v823 = vmul.f32 %v695, %v807
        %v824 = vmul.f32 %v696, %v808
        %v825 = vmul.f32 %v697, %v809
        %v826 = vmul.f32 %v698, %v810
        %v827 = vld [vmem:[%s4] sm:$0x1]
        %v829 = vlaneseq
        %v830 = vshrl.u32 %v829, 7
        %v831 = vsub.s32 0, %v830
        %v832 = vrot.slane %v827, %v831
        %v834 = vmul.f32 %v811, %v832
        %v835 = vmul.f32 %v812, %v832
        %v836 = vmul.f32 %v813, %v832
        %v837 = vmul.f32 %v814, %v832
        %v838 = vmul.f32 %v815, %v832
        %v839 = vmul.f32 %v816, %v832
        %v840 = vmul.f32 %v817, %v832
        %v841 = vmul.f32 %v818, %v832
        %v842 = vmul.f32 %v819, %v832
        %v843 = vmul.f32 %v820, %v832
        %v844 = vmul.f32 %v821, %v832
        %v845 = vmul.f32 %v822, %v832
        %v846 = vmul.f32 %v823, %v832
        %v847 = vmul.f32 %v824, %v832
        %v848 = vmul.f32 %v825, %v832
        %v849 = vmul.f32 %v826, %v832
        %v850 = vld [vmem:[%s5] sm:$0x1]
        %v852 = vlaneseq
        %v853 = vshrl.u32 %v852, 7
        %v854 = vsub.s32 0, %v853
        %v855 = vrot.slane %v850, %v854
        %v857 = vadd.f32 %v834, %v855
        %v858 = vadd.f32 %v835, %v855
        %v859 = vadd.f32 %v836, %v855
        %v860 = vadd.f32 %v837, %v855
        %v861 = vadd.f32 %v838, %v855
        %v862 = vadd.f32 %v839, %v855
        %v863 = vadd.f32 %v840, %v855
        %v864 = vadd.f32 %v841, %v855
        %v865 = vadd.f32 %v842, %v855
        %v866 = vadd.f32 %v843, %v855
        %v867 = vadd.f32 %v844, %v855
        %v868 = vadd.f32 %v845, %v855
        %v869 = vadd.f32 %v846, %v855
        %v870 = vadd.f32 %v847, %v855
        %v871 = vadd.f32 %v848, %v855
        %v872 = vadd.f32 %v849, %v855
        %873 = vst.msk [vmem:[%s320] sm:$0xff] %vm390, %v857
        %874 = vst.msk [vmem:[%s320 + $0x8] sm:$0xff] %vm390, %v858
        %875 = vst.msk [vmem:[%s320 + $0x10] sm:$0xff] %vm390, %v859
        %876 = vst.msk [vmem:[%s320 + $0x18] sm:$0xff] %vm390, %v860
        %877 = vst.msk [vmem:[%s320 + $0x20] sm:$0xff] %vm390, %v861
        %878 = vst.msk [vmem:[%s320 + $0x28] sm:$0xff] %vm390, %v862
        %879 = vst.msk [vmem:[%s320 + $0x30] sm:$0xff] %vm390, %v863
        %880 = vst.msk [vmem:[%s320 + $0x38] sm:$0xff] %vm390, %v864
        %881 = vst.msk [vmem:[%s320 + $0x40] sm:$0xff] %vm390, %v865
        %882 = vst.msk [vmem:[%s320 + $0x48] sm:$0xff] %vm390, %v866
        %883 = vst.msk [vmem:[%s320 + $0x50] sm:$0xff] %vm390, %v867
        %884 = vst.msk [vmem:[%s320 + $0x58] sm:$0xff] %vm390, %v868
        %885 = vst.msk [vmem:[%s320 + $0x60] sm:$0xff] %vm390, %v869
        %886 = vst.msk [vmem:[%s320 + $0x68] sm:$0xff] %vm390, %v870
        %887 = vst.msk [vmem:[%s320 + $0x70] sm:$0xff] %vm390, %v871
        %888 = vst.msk [vmem:[%s320 + $0x78] sm:$0xff] %vm390, %v872
      $region52: #{conv3d_transformer2_forward.17} parent=43 // pred_fallthru
        _
      %s889 = smul.u32 16, %s21
      %p890 = scmp.lt.s32.totalorder %s889, 31
      %s891 = scalar_select %p890, %s889, 31
      %s892 = smul.addr %s891, 8
      %s893 = scalar_lea.vmem %s6, %s892
      // Predicated region
      $region53: #{conv3d_transformer2_forward.17} parent=43 // pred_check
        %p894 = pneg %p190
      $region54: #{conv3d_transformer2_forward.17} parent=43 // pred_check_branch
        %896 = sbr.rel (%p894) target = $region56
      $region55: #{conv3d_transformer2_forward.17} parent=43 // pred_region
        %s897 = smul.u32 16, %s21
      $region56: #{conv3d_transformer2_forward.17} parent=43 // pred_fallthru
        _
    $region44: #{conv3d_transformer2_forward.17} parent=5 // pred_fallthru
      _
    %p898 = scmp.le.s32.totalorder 2, %s12
    // Predicated region
    $region57: #{conv3d_transformer2_forward.17} parent=5 // pred_check
      %p899 = pneg %p898
    $region58: #{conv3d_transformer2_forward.17} parent=5 // pred_check_branch
      %901 = sbr.rel (%p899) target = $region60
    $region59: #{conv3d_transformer2_forward.17} parent=5 // pred_region
      %s902 = ssub.s32 %s12, 2
      // Predicated region
      $region61: #{conv3d_transformer2_forward.17} parent=59 // pred_check
        %p903 = pneg %p196
      $region62: #{conv3d_transformer2_forward.17} parent=59 // pred_check_branch
        %905 = sbr.rel (%p903) target = $region64
      $region63: #{conv3d_transformer2_forward.17} parent=59 // pred_region
        %s906 = smul.u32 16, %s23
        %p907 = scmp.lt.s32.totalorder %s906, 31
        %s908 = scalar_select %p907, %s906, 31
        %s909 = smul.addr %s908, 8
        %s910 = scalar_lea.vmem %s6, %s909
      $region64: #{conv3d_transformer2_forward.17} parent=59 // pred_fallthru
        _
    $region60: #{conv3d_transformer2_forward.17} parent=5 // pred_fallthru
      _
  $region6: #{conv3d_transformer2_forward.17} parent=0 // loop_footer
    %s16 = sadd.s32 1, %s12
  $region7: #{conv3d_transformer2_forward.17} parent=0 // loop_footer_branch
    %11 = sbr.rel target = $region3
  $region8: #{conv3d_transformer2_forward.17} parent=0 // loop_exit
    _

// kernel: conv3d_transformer2_forward.19
$region0: #{conv3d_transformer2_forward.19}
  #allocation0 [shape = 'u32[]', space=smem, size = 0x4, offset = 0x4, fixed_abs, tag = 'smem constant byte address 0x4 - core index']
  #allocation1 [shape = 'u32[144,128]{1,0:T(1,128)}', space=vmem, size = 0x12000, scoped, tag = 'internal scratch']
  #allocation2 [shape = 'f32[128,32]{1,0:T(8,128)}', space=vmem, size = 0x10000, scoped, tag = 'scratch operand']
  %s0 = inlined_call_operand.vmem [shape: f32[256,64], index: 0, kind: input, shape index: {}]
  %s1 = inlined_call_operand.vmem [shape: f32[64,32], index: 1, kind: input, shape index: {}]
  %s2 = inlined_call_operand.vmem [shape: f32[1,32], index: 2, kind: input, shape index: {}]
  %s3 = inlined_call_operand.vmem [shape: f32[256,32], index: 3, kind: input, shape index: {}]
  %s4 = inlined_call_operand.vmem [shape: f32[1,32], index: 4, kind: input, shape index: {}]
  %s5 = inlined_call_operand.vmem [shape: f32[1,32], index: 5, kind: input, shape index: {}]
  %s6 = inlined_call_operand.vmem [shape: f32[256,32], index: 6, kind: output, shape index: {}]
  %s7 = sld [smem:[#allocation0]]
  $region65: #{conv3d_transformer2_forward.19} parent=0
    _
  %s9 = ssub.s32 1, %s7
  %s10 = scalar_select 0, %s9, %s7
  loop: start=0, step=1, limit=4
  $region2: #{conv3d_transformer2_forward.19} parent=0 // loop_pre_header
    _
  $region3: #{conv3d_transformer2_forward.19} parent=0 // loop_header
    %s12 = sphi 0, %s16
    %p13 = scmp.ge.s32.totalorder %s12, 4
    %s19 = sphi 0, %s31
    %s20 = sphi 0, %s27
    %s21 = sphi 0, %s19
    %s22 = sphi 0, %s20
    %s23 = sphi 0, %s21
    %s24 = sphi 0, %s22
    %s36 = sphi 0, %s38
    %s39 = sphi 0, %s36
    %s40 = sphi 0, %s39
    %s56 = sphi 0, %s40
    %s62 = sphi 0, %s64
    %s65 = sphi 0, %s62
    %s66 = sphi 0, %s65
    %s82 = sphi 0, %s66
    %s86 = sphi 0, %s86
    %s88 = sphi 0, %s86
    %s89 = sphi 0, %s88
    %s103 = sphi 0, %s89
    %s109 = sphi 0, %s111
    %s112 = sphi 0, %s109
    %s113 = sphi 0, %s112
    %s129 = sphi 0, %s113
    %s133 = sphi 0, %s133
    %s135 = sphi 0, %s133
    %s136 = sphi 0, %s135
    %s150 = sphi 0, %s136
    %s154 = sphi 0, %s154
    %s156 = sphi 0, %s154
    %s157 = sphi 0, %s156
    %s171 = sphi 0, %s157
    %s177 = sphi 0, %s179
    %s180 = sphi 0, %s177
    %s181 = sphi 0, %s180
    %s197 = sphi 0, %s181
  $region4: #{conv3d_transformer2_forward.19} parent=0 // loop_header_branch
    %15 = sbr.rel (%p13) target = $region8
  $region5: #{conv3d_transformer2_forward.19} parent=0 // loop_body
    %s17 = ssub.s32 %s12, 1
    %s18 = ssub.s32 %s12, 2
    %s25 = sadd.s32 1, %s20
    %p26 = scmp.ge.s32.totalorder %s25, 1
    %s27 = scalar_select %p26, 0, %s25
    %s28 = sadd.s32 1, %s19
    %s29 = scalar_select %p26, %s28, %s19
    %p30 = scmp.ge.s32.totalorder %s29, 2
    %s31 = scalar_select %p30, 0, %s29
    %s32 = ssub.s32 %s19, %s31
    %s33 = ssub.s32 %s20, %s27
    %s34 = sor.u32 %s32, %s33
    %p35 = scmp.eq.s32.totalorder %s34, 0
    %s37 = sadd.s32 %s36, 1
    %s38 = scalar_select %p35, %s36, %s37
    %p41 = pneg %p35
    %p42 = scmp.eq.s32.totalorder %s12, 1
    %p43 = por %p41, %p42
    %p44 = scmp.ne.s32.totalorder %s36, %s39
    %p45 = scmp.eq.s32.totalorder %s12, 0
    %p46 = por %p44, %p45
    %p47 = scmp.ne.s32.totalorder %s36, %s39
    %p48 = scmp.eq.s32.totalorder %s17, 1
    %p49 = por %p47, %p48
    %p50 = scmp.ne.s32.totalorder %s39, %s40
    %p51 = scmp.eq.s32.totalorder %s17, 0
    %p52 = por %p50, %p51
    %p53 = scmp.ne.s32.totalorder %s39, %s40
    %p54 = scmp.eq.s32.totalorder %s18, 1
    %p55 = por %p53, %p54
    %p57 = scmp.ne.s32.totalorder %s40, %s56
    %p58 = scmp.eq.s32.totalorder %s18, 0
    %p59 = por %p57, %p58
    %s60 = ssub.s32 %s20, %s27
    %p61 = scmp.eq.s32.totalorder %s60, 0
    %s63 = sadd.s32 %s62, 1
    %s64 = scalar_select %p61, %s62, %s63
    %p67 = pneg %p61
    %p68 = scmp.eq.s32.totalorder %s12, 1
    %p69 = por %p67, %p68
    %p70 = scmp.ne.s32.totalorder %s62, %s65
    %p71 = scmp.eq.s32.totalorder %s12, 0
    %p72 = por %p70, %p71
    %p73 = scmp.ne.s32.totalorder %s62, %s65
    %p74 = scmp.eq.s32.totalorder %s17, 1
    %p75 = por %p73, %p74
    %p76 = scmp.ne.s32.totalorder %s65, %s66
    %p77 = scmp.eq.s32.totalorder %s17, 0
    %p78 = por %p76, %p77
    %p79 = scmp.ne.s32.totalorder %s65, %s66
    %p80 = scmp.eq.s32.totalorder %s18, 1
    %p81 = por %p79, %p80
    %p83 = scmp.ne.s32.totalorder %s66, %s82
    %p84 = scmp.eq.s32.totalorder %s18, 0
    %p85 = por %p83, %p84
    %s87 = sadd.s32 %s86, 1
    %p90 = scmp.eq.s32.totalorder %s12, 1
    %p91 = scmp.ne.s32.totalorder %s86, %s88
    %p92 = scmp.eq.s32.totalorder %s12, 0
    %p93 = por %p91, %p92
    %p94 = scmp.ne.s32.totalorder %s86, %s88
    %p95 = scmp.eq.s32.totalorder %s17, 1
    %p96 = por %p94, %p95
    %p97 = scmp.ne.s32.totalorder %s88, %s89
    %p98 = scmp.eq.s32.totalorder %s17, 0
    %p99 = por %p97, %p98
    %p100 = scmp.ne.s32.totalorder %s88, %s89
    %p101 = scmp.eq.s32.totalorder %s18, 1
    %p102 = por %p100, %p101
    %p104 = scmp.ne.s32.totalorder %s89, %s103
    %p105 = scmp.eq.s32.totalorder %s18, 0
    %p106 = por %p104, %p105
    %s107 = ssub.s32 %s19, %s31
    %p108 = scmp.eq.s32.totalorder %s107, 0
    %s110 = sadd.s32 %s109, 1
    %s111 = scalar_select %p108, %s109, %s110
    %p114 = pneg %p108
    %p115 = scmp.eq.s32.totalorder %s12, 1
    %p116 = por %p114, %p115
    %p117 = scmp.ne.s32.totalorder %s109, %s112
    %p118 = scmp.eq.s32.totalorder %s12, 0
    %p119 = por %p117, %p118
    %p120 = scmp.ne.s32.totalorder %s109, %s112
    %p121 = scmp.eq.s32.totalorder %s17, 1
    %p122 = por %p120, %p121
    %p123 = scmp.ne.s32.totalorder %s112, %s113
    %p124 = scmp.eq.s32.totalorder %s17, 0
    %p125 = por %p123, %p124
    %p126 = scmp.ne.s32.totalorder %s112, %s113
    %p127 = scmp.eq.s32.totalorder %s18, 1
    %p128 = por %p126, %p127
    %p130 = scmp.ne.s32.totalorder %s113, %s129
    %p131 = scmp.eq.s32.totalorder %s18, 0
    %p132 = por %p130, %p131
    %s134 = sadd.s32 %s133, 1
    %p137 = scmp.eq.s32.totalorder %s12, 1
    %p138 = scmp.ne.s32.totalorder %s133, %s135
    %p139 = scmp.eq.s32.totalorder %s12, 0
    %p140 = por %p138, %p139
    %p141 = scmp.ne.s32.totalorder %s133, %s135
    %p142 = scmp.eq.s32.totalorder %s17, 1
    %p143 = por %p141, %p142
    %p144 = scmp.ne.s32.totalorder %s135, %s136
    %p145 = scmp.eq.s32.totalorder %s17, 0
    %p146 = por %p144, %p145
    %p147 = scmp.ne.s32.totalorder %s135, %s136
    %p148 = scmp.eq.s32.totalorder %s18, 1
    %p149 = por %p147, %p148
    %p151 = scmp.ne.s32.totalorder %s136, %s150
    %p152 = scmp.eq.s32.totalorder %s18, 0
    %p153 = por %p151, %p152
    %s155 = sadd.s32 %s154, 1
    %p158 = scmp.eq.s32.totalorder %s12, 1
    %p159 = scmp.ne.s32.totalorder %s154, %s156
    %p160 = scmp.eq.s32.totalorder %s12, 0
    %p161 = por %p159, %p160
    %p162 = scmp.ne.s32.totalorder %s154, %s156
    %p163 = scmp.eq.s32.totalorder %s17, 1
    %p164 = por %p162, %p163
    %p165 = scmp.ne.s32.totalorder %s156, %s157
    %p166 = scmp.eq.s32.totalorder %s17, 0
    %p167 = por %p165, %p166
    %p168 = scmp.ne.s32.totalorder %s156, %s157
    %p169 = scmp.eq.s32.totalorder %s18, 1
    %p170 = por %p168, %p169
    %p172 = scmp.ne.s32.totalorder %s157, %s171
    %p173 = scmp.eq.s32.totalorder %s18, 0
    %p174 = por %p172, %p173
    %s175 = ssub.s32 %s19, %s31
    %p176 = scmp.eq.s32.totalorder %s175, 0
    %s178 = sadd.s32 %s177, 1
    %s179 = scalar_select %p176, %s177, %s178
    %p182 = pneg %p176
    %p183 = scmp.eq.s32.totalorder %s12, 1
    %p184 = por %p182, %p183
    %p185 = scmp.ne.s32.totalorder %s177, %s180
    %p186 = scmp.eq.s32.totalorder %s12, 0
    %p187 = por %p185, %p186
    %p188 = scmp.ne.s32.totalorder %s177, %s180
    %p189 = scmp.eq.s32.totalorder %s17, 1
    %p190 = por %p188, %p189
    %p191 = scmp.ne.s32.totalorder %s180, %s181
    %p192 = scmp.eq.s32.totalorder %s17, 0
    %p193 = por %p191, %p192
    %p194 = scmp.ne.s32.totalorder %s180, %s181
    %p195 = scmp.eq.s32.totalorder %s18, 1
    %p196 = por %p194, %p195
    %p198 = scmp.ne.s32.totalorder %s181, %s197
    %p199 = scmp.eq.s32.totalorder %s18, 0
    %p200 = por %p198, %p199
    %p201 = scmp.le.s32.totalorder 1, %s12
    %p202 = scmp.lt.s32.totalorder %s12, 3
    %p203 = pnand %p201, %p202
    %p204 = pneg %p203
    // Predicated region
    $region9: #{conv3d_transformer2_forward.19} parent=5 // pred_check
      _
    $region10: #{conv3d_transformer2_forward.19} parent=5 // pred_check_branch
      %206 = sbr.rel (%p203) target = $region12
    $region11: #{conv3d_transformer2_forward.19} parent=5 // pred_region
      %s207 = ssub.s32 %s12, 1
      // Predicated region
      $region13: #{conv3d_transformer2_forward.19} parent=11 // pred_check
        %p208 = pneg %p78
      $region14: #{conv3d_transformer2_forward.19} parent=11 // pred_check_branch
        %210 = sbr.rel (%p208) target = $region16
      $region15: #{conv3d_transformer2_forward.19} parent=11 // pred_region
        %s211 = smul.u32 8, %s22
        %p212 = scmp.lt.s32.totalorder %s211, 7
        %s213 = scalar_select %p212, %s211, 7
        %s214 = smul.addr %s213, 8
        %s215 = scalar_lea.vmem %s1, %s214
        %s216 = smul.u32 8, %s22
      $region16: #{conv3d_transformer2_forward.19} parent=11 // pred_fallthru
        _
      // Predicated region
      $region17: #{conv3d_transformer2_forward.19} parent=11 // pred_check
        %p217 = pneg %p99
      $region18: #{conv3d_transformer2_forward.19} parent=11 // pred_check_branch
        %219 = sbr.rel (%p217) target = $region20
      $region19: #{conv3d_transformer2_forward.19} parent=11 // pred_region
        _
      $region20: #{conv3d_transformer2_forward.19} parent=11 // pred_fallthru
        _
      // Predicated region
      $region21: #{conv3d_transformer2_forward.19} parent=11 // pred_check
        %p220 = pneg %p146
      $region22: #{conv3d_transformer2_forward.19} parent=11 // pred_check_branch
        %222 = sbr.rel (%p220) target = $region24
      $region23: #{conv3d_transformer2_forward.19} parent=11 // pred_region
        _
      $region24: #{conv3d_transformer2_forward.19} parent=11 // pred_fallthru
        _
      // Predicated region
      $region25: #{conv3d_transformer2_forward.19} parent=11 // pred_check
        %p223 = pneg %p167
      $region26: #{conv3d_transformer2_forward.19} parent=11 // pred_check_branch
        %225 = sbr.rel (%p223) target = $region28
      $region27: #{conv3d_transformer2_forward.19} parent=11 // pred_region
        _
      $region28: #{conv3d_transformer2_forward.19} parent=11 // pred_fallthru
        _
    $region12: #{conv3d_transformer2_forward.19} parent=5 // pred_fallthru
      _
    %p226 = scmp.lt.s32.totalorder %s12, 2
    // Predicated region
    $region29: #{conv3d_transformer2_forward.19} parent=5 // pred_check
      %p227 = pneg %p226
    $region30: #{conv3d_transformer2_forward.19} parent=5 // pred_check_branch
      %229 = sbr.rel (%p227) target = $region32
    $region31: #{conv3d_transformer2_forward.19} parent=5 // pred_region
      // Predicated region
      $region33: #{conv3d_transformer2_forward.19} parent=31 // pred_check
        %p230 = pneg %p46
      $region34: #{conv3d_transformer2_forward.19} parent=31 // pred_check_branch
        %232 = sbr.rel (%p230) target = $region36
      $region35: #{conv3d_transformer2_forward.19} parent=31 // pred_region
        %s233 = smul.u32 16, %s19
        %p234 = scmp.lt.s32.totalorder %s233, 31
        %s235 = scalar_select %p234, %s233, 31
        %p236 = scmp.lt.s32.totalorder %s20, 0
        %s237 = scalar_select %p236, %s20, 0
        %s238 = sadd.s32 %s237, %s235
        %s239 = smul.addr %s238, 8
        %s240 = scalar_lea.vmem %s0, %s239
        %s241 = smul.u32 16, %s19
      $region36: #{conv3d_transformer2_forward.19} parent=31 // pred_fallthru
        _
      // Predicated region
      $region37: #{conv3d_transformer2_forward.19} parent=31 // pred_check
        %p242 = pneg %p119
      $region38: #{conv3d_transformer2_forward.19} parent=31 // pred_check_branch
        %244 = sbr.rel (%p242) target = $region40
      $region39: #{conv3d_transformer2_forward.19} parent=31 // pred_region
        %s245 = smul.u32 16, %s19
        %p246 = scmp.lt.s32.totalorder %s245, 31
        %s247 = scalar_select %p246, %s245, 31
        %s248 = smul.addr %s247, 8
        %s249 = scalar_lea.vmem %s3, %s248
        %s250 = smul.u32 16, %s19
      $region40: #{conv3d_transformer2_forward.19} parent=31 // pred_fallthru
        _
    $region32: #{conv3d_transformer2_forward.19} parent=5 // pred_fallthru
      _
    %p251 = scmp.le.s32.totalorder 1, %s12
    %p252 = scmp.lt.s32.totalorder %s12, 3
    %p253 = pnand %p251, %p252
    %p254 = pneg %p253
    // Predicated region
    $region41: #{conv3d_transformer2_forward.19} parent=5 // pred_check
      _
    $region42: #{conv3d_transformer2_forward.19} parent=5 // pred_check_branch
      %256 = sbr.rel (%p253) target = $region44
    $region43: #{conv3d_transformer2_forward.19} parent=5 // pred_region
      %s257 = ssub.s32 %s12, 1
      %s258 = smul.u32 16, %s21
      %p259 = scmp.lt.s32.totalorder %s258, 31
      %s260 = scalar_select %p259, %s258, 31
      %p261 = scmp.lt.s32.totalorder %s22, 0
      %s262 = scalar_select %p261, %s22, 0
      %s263 = sadd.s32 %s262, %s260
      %s264 = smul.addr %s263, 8
      %s265 = scalar_lea.vmem %s0, %s264
      %p266 = pneg %p52
      %p267 = pneg %p49
      %s268 = smul.u32 8, %s22
      %p269 = scmp.lt.s32.totalorder %s268, 7
      %s270 = scalar_select %p269, %s268, 7
      %s271 = smul.addr %s270, 8
      %s272 = scalar_lea.vmem %s1, %s271
      %p273 = pneg %p78
      %p274 = pneg %p75
      %p275 = pneg %p99
      %p276 = pneg %p96
      %s277 = smul.u32 16, %s21
      %p278 = scmp.lt.s32.totalorder %s277, 31
      %s279 = scalar_select %p278, %s277, 31
      %s280 = smul.addr %s279, 8
      %s281 = scalar_lea.vmem %s3, %s280
      %p282 = pneg %p125
      %p283 = pneg %p122
      %p284 = pneg %p146
      %p285 = pneg %p143
      %p286 = pneg %p167
      %p287 = pneg %p164
      %p288 = pneg %p193
      %p289 = pneg %p190
      %s290 = smul.u32 16, %s21
      %p291 = scmp.lt.s32.totalorder %s290, 31
      %s292 = scalar_select %p291, %s290, 31
      %s293 = smul.addr %s292, 8
      %s294 = scalar_lea.vmem %s6, %s293
      %s295 = smul.u32 16, %s21
      %p296 = scmp.lt.s32.totalorder %s295, 31
      %s297 = scalar_select %p296, %s295, 31
      %p298 = scmp.lt.s32.totalorder %s22, 0
      %s299 = scalar_select %p298, %s22, 0
      %s300 = sadd.s32 %s299, %s297
      %s301 = smul.addr %s300, 8
      %s302 = scalar_lea.vmem %s0, %s301
      %s303 = smul.u32 16, %s21
      %s304 = smul.u32 8, %s22
      %p305 = scmp.lt.s32.totalorder %s304, 7
      %s306 = scalar_select %p305, %s304, 7
      %s307 = smul.addr %s306, 8
      %s308 = scalar_lea.vmem %s1, %s307
      %s309 = smul.u32 8, %s22
      %s310 = smul.u32 16, %s21
      %p311 = scmp.lt.s32.totalorder %s310, 31
      %s312 = scalar_select %p311, %s310, 31
      %s313 = smul.addr %s312, 8
      %s314 = scalar_lea.vmem %s3, %s313
      %s315 = smul.u32 16, %s21
      %s316 = smul.u32 16, %s21
      %p317 = scmp.lt.s32.totalorder %s316, 31
      %s318 = scalar_select %p317, %s316, 31
      %s319 = smul.addr %s318, 8
      %s320 = scalar_lea.vmem %s6, %s319
      %s321 = smul.u32 16, %s21
      %p323 = scmp.eq.s32.totalorder %s22, 0
      // Predicated region
      $region45: #{conv3d_transformer2_forward.19} parent=43 // pred_check
        %p324 = pneg %p323
      $region46: #{conv3d_transformer2_forward.19} parent=43 // pred_check_branch
        %326 = sbr.rel (%p324) target = $region48
      $region47: #{conv3d_transformer2_forward.19} parent=43 // pred_region
        %vm327 = vcmask 261120
        %328 = vst.msk [vmem:[#allocation2] sm:$0xff] %vm327, 0.0
        %329 = vst.msk [vmem:[#allocation2 + $0x8] sm:$0xff] %vm327, 0.0
        %330 = vst.msk [vmem:[#allocation2 + $0x10] sm:$0xff] %vm327, 0.0
        %331 = vst.msk [vmem:[#allocation2 + $0x18] sm:$0xff] %vm327, 0.0
        %332 = vst.msk [vmem:[#allocation2 + $0x20] sm:$0xff] %vm327, 0.0
        %333 = vst.msk [vmem:[#allocation2 + $0x28] sm:$0xff] %vm327, 0.0
        %334 = vst.msk [vmem:[#allocation2 + $0x30] sm:$0xff] %vm327, 0.0
        %335 = vst.msk [vmem:[#allocation2 + $0x38] sm:$0xff] %vm327, 0.0
        %336 = vst.msk [vmem:[#allocation2 + $0x40] sm:$0xff] %vm327, 0.0
        %337 = vst.msk [vmem:[#allocation2 + $0x48] sm:$0xff] %vm327, 0.0
        %338 = vst.msk [vmem:[#allocation2 + $0x50] sm:$0xff] %vm327, 0.0
        %339 = vst.msk [vmem:[#allocation2 + $0x58] sm:$0xff] %vm327, 0.0
        %340 = vst.msk [vmem:[#allocation2 + $0x60] sm:$0xff] %vm327, 0.0
        %341 = vst.msk [vmem:[#allocation2 + $0x68] sm:$0xff] %vm327, 0.0
        %342 = vst.msk [vmem:[#allocation2 + $0x70] sm:$0xff] %vm327, 0.0
        %343 = vst.msk [vmem:[#allocation2 + $0x78] sm:$0xff] %vm327, 0.0
      $region48: #{conv3d_transformer2_forward.19} parent=43 // pred_fallthru
        _
      %v344 = vld [vmem:[#allocation2] sm:$0xff]
      %v345 = vld [vmem:[#allocation2 + $0x8] sm:$0xff]
      %v346 = vld [vmem:[#allocation2 + $0x10] sm:$0xff]
      %v347 = vld [vmem:[#allocation2 + $0x18] sm:$0xff]
      %v348 = vld [vmem:[#allocation2 + $0x20] sm:$0xff]
      %v349 = vld [vmem:[#allocation2 + $0x28] sm:$0xff]
      %v350 = vld [vmem:[#allocation2 + $0x30] sm:$0xff]
      %v351 = vld [vmem:[#allocation2 + $0x38] sm:$0xff]
      %v352 = vld [vmem:[#allocation2 + $0x40] sm:$0xff]
      %v353 = vld [vmem:[#allocation2 + $0x48] sm:$0xff]
      %v354 = vld [vmem:[#allocation2 + $0x50] sm:$0xff]
      %v355 = vld [vmem:[#allocation2 + $0x58] sm:$0xff]
      %v356 = vld [vmem:[#allocation2 + $0x60] sm:$0xff]
      %v357 = vld [vmem:[#allocation2 + $0x68] sm:$0xff]
      %v358 = vld [vmem:[#allocation2 + $0x70] sm:$0xff]
      %v359 = vld [vmem:[#allocation2 + $0x78] sm:$0xff]
      %v360 = vld [vmem:[%s302] sm:$0xff]
      %v361 = vld [vmem:[%s302 + $0x8] sm:$0xff]
      %v362 = vld [vmem:[%s302 + $0x10] sm:$0xff]
      %v363 = vld [vmem:[%s302 + $0x18] sm:$0xff]
      %v364 = vld [vmem:[%s302 + $0x20] sm:$0xff]
      %v365 = vld [vmem:[%s302 + $0x28] sm:$0xff]
      %v366 = vld [vmem:[%s302 + $0x30] sm:$0xff]
      %v367 = vld [vmem:[%s302 + $0x38] sm:$0xff]
      %v368 = vld [vmem:[%s302 + $0x40] sm:$0xff]
      %v369 = vld [vmem:[%s302 + $0x48] sm:$0xff]
      %v370 = vld [vmem:[%s302 + $0x50] sm:$0xff]
      %v371 = vld [vmem:[%s302 + $0x58] sm:$0xff]
      %v372 = vld [vmem:[%s302 + $0x60] sm:$0xff]
      %v373 = vld [vmem:[%s302 + $0x68] sm:$0xff]
      %v374 = vld [vmem:[%s302 + $0x70] sm:$0xff]
      %v375 = vld [vmem:[%s302 + $0x78] sm:$0xff]
      %v376 = vpack.c.bf16 %v361, %v360
      %v377 = vpack.c.bf16 %v363, %v362
      %v378 = vpack.c.bf16 %v365, %v364
      %v379 = vpack.c.bf16 %v367, %v366
      %v380 = vpack.c.bf16 %v369, %v368
      %v381 = vpack.c.bf16 %v371, %v370
      %v382 = vpack.c.bf16 %v373, %v372
      %v383 = vpack.c.bf16 %v375, %v374
      %v384 = vld [vmem:[%s308] sm:$0xff]
      %v385 = vld [vmem:[%s308 + $0x8] sm:$0xff]
      %v386 = vld [vmem:[%s308 + $0x10] sm:$0xff]
      %v387 = vld [vmem:[%s308 + $0x18] sm:$0xff]
      %v388 = vld [vmem:[%s308 + $0x20] sm:$0xff]
      %v389 = vld [vmem:[%s308 + $0x28] sm:$0xff]
      %v390 = vld [vmem:[%s308 + $0x30] sm:$0xff]
      %v391 = vld [vmem:[%s308 + $0x38] sm:$0xff]
      %v392 = vpack.c.bf16 %v385, %v384
      %v393 = vpack.c.bf16 %v387, %v386
      %v394 = vpack.c.bf16 %v389, %v388
      %v395 = vpack.c.bf16 %v391, %v390
      %vm396 = vcmask 523264
      %v398 = vsel %vm396, %v376, 0
      %v401 = vsel %vm396, %v377, 0
      %v404 = vsel %vm396, %v378, 0
      %v407 = vsel %vm396, %v379, 0
      %v410 = vsel %vm396, %v380, 0
      %v413 = vsel %vm396, %v381, 0
      %v416 = vsel %vm396, %v382, 0
      %v419 = vsel %vm396, %v383, 0
      %421 = vmatprep.subr.bf16.mxu0 0
      %422 = vmatpush1.bf16.msra.mxu0 %v392
      %423 = vmatprep.subr.bf16.mxu0 0
      %424 = vmatpush1.bf16.msra.mxu0 %v393
      %425 = vmatprep.subr.bf16.mxu0 0
      %426 = vmatpush1.bf16.msra.mxu0 %v394
      %427 = vmatprep.subr.bf16.mxu0 0
      %428 = vmatpush1.bf16.msra.mxu0 %v395
      %429 = vmatprep.subr.bf16.mxu0 0
      %430 = vmatpush1.bf16.msra.mxu0 0
      %431 = vmatprep.subr.bf16.mxu0 0
      %432 = vmatpush1.bf16.msra.mxu0 0
      %433 = vmatprep.subr.bf16.mxu0 0
      %434 = vmatpush1.bf16.msra.mxu0 0
      %435 = vmatprep.subr.bf16.mxu0 0
      %436 = vmatpush1.bf16.msra.mxu0 0
      %437 = vmatprep.subr.bf16.mxu0 0
      %438 = vmatpush1.bf16.msra.mxu0 0
      %439 = vmatprep.subr.bf16.mxu0 0
      %440 = vmatpush1.bf16.msra.mxu0 0
      %441 = vmatprep.subr.bf16.mxu0 0
      %442 = vmatpush1.bf16.msra.mxu0 0
      %443 = vmatprep.subr.bf16.mxu0 0
      %444 = vmatpush1.bf16.msra.mxu0 0
      %445 = vmatprep.subr.bf16.mxu0 0
      %446 = vmatpush1.bf16.msra.mxu0 0
      %447 = vmatprep.subr.bf16.mxu0 0
      %448 = vmatpush1.bf16.msra.mxu0 0
      %449 = vmatprep.subr.bf16.mxu0 0
      %450 = vmatpush1.bf16.msra.mxu0 0
      %451 = vmatprep.subr.bf16.mxu0 0
      %452 = vmatpush1.bf16.msra.mxu0 0
      %453 = vmatprep.mubr.bf16.mxu0 0
      %454 = vmatmul.mubr.bf16.gmra.mrb[0].mxu0 %v398
      %v455 = vpop.f32.mrb[0].mxu0
      %v456 = vadd.f32 0.0, %v455
      %v457 = vpop.f32.mrb[0].mxu0
      %v458 = vpop.f32.mrb[0].mxu0
      %v459 = vadd.f32 0.0, %v458
      %v460 = vpop.f32.mrb[0].mxu0
      %461 = vmatprep.mubr.bf16.mxu0 0
      %462 = vmatmul.mubr.bf16.gmra.mrb[0].mxu0 %v401
      %v463 = vpop.f32.mrb[0].mxu0
      %v464 = vadd.f32 0.0, %v463
      %v465 = vpop.f32.mrb[0].mxu0
      %v466 = vpop.f32.mrb[0].mxu0
      %v467 = vadd.f32 0.0, %v466
      %v468 = vpop.f32.mrb[0].mxu0
      %469 = vmatprep.mubr.bf16.mxu0 0
      %470 = vmatmul.mubr.bf16.gmra.mrb[0].mxu0 %v404
      %v471 = vpop.f32.mrb[0].mxu0
      %v472 = vadd.f32 0.0, %v471
      %v473 = vpop.f32.mrb[0].mxu0
      %v474 = vpop.f32.mrb[0].mxu0
      %v475 = vadd.f32 0.0, %v474
      %v476 = vpop.f32.mrb[0].mxu0
      %477 = vmatprep.mubr.bf16.mxu0 0
      %478 = vmatmul.mubr.bf16.gmra.mrb[0].mxu0 %v407
      %v479 = vpop.f32.mrb[0].mxu0
      %v480 = vadd.f32 0.0, %v479
      %v481 = vpop.f32.mrb[0].mxu0
      %v482 = vpop.f32.mrb[0].mxu0
      %v483 = vadd.f32 0.0, %v482
      %v484 = vpop.f32.mrb[0].mxu0
      %485 = vmatprep.mubr.bf16.mxu0 0
      %486 = vmatmul.mubr.bf16.gmra.mrb[0].mxu0 %v410
      %v487 = vpop.f32.mrb[0].mxu0
      %v488 = vadd.f32 0.0, %v487
      %v489 = vpop.f32.mrb[0].mxu0
      %v490 = vpop.f32.mrb[0].mxu0
      %v491 = vadd.f32 0.0, %v490
      %v492 = vpop.f32.mrb[0].mxu0
      %493 = vmatprep.mubr.bf16.mxu0 0
      %494 = vmatmul.mubr.bf16.gmra.mrb[0].mxu0 %v413
      %v495 = vpop.f32.mrb[0].mxu0
      %v496 = vadd.f32 0.0, %v495
      %v497 = vpop.f32.mrb[0].mxu0
      %v498 = vpop.f32.mrb[0].mxu0
      %v499 = vadd.f32 0.0, %v498
      %v500 = vpop.f32.mrb[0].mxu0
      %501 = vmatprep.mubr.bf16.mxu0 0
      %502 = vmatmul.mubr.bf16.gmra.mrb[0].mxu0 %v416
      %v503 = vpop.f32.mrb[0].mxu0
      %v504 = vadd.f32 0.0, %v503
      %v505 = vpop.f32.mrb[0].mxu0
      %v506 = vpop.f32.mrb[0].mxu0
      %v507 = vadd.f32 0.0, %v506
      %v508 = vpop.f32.mrb[0].mxu0
      %509 = vmatprep.mubr.bf16.mxu0 0
      %510 = vmatmul.mubr.bf16.gmra.mrb[0].mxu0 %v419
      %v511 = vpop.f32.mrb[0].mxu0
      %v512 = vadd.f32 0.0, %v511
      %v513 = vpop.f32.mrb[0].mxu0
      %v514 = vpop.f32.mrb[0].mxu0
      %v515 = vadd.f32 0.0, %v514
      %v516 = vpop.f32.mrb[0].mxu0
      %517 = vdwg.mxu0
      %v518 = vadd.f32 %v344, %v456
      %v519 = vadd.f32 %v345, %v459
      %v520 = vadd.f32 %v346, %v464
      %v521 = vadd.f32 %v347, %v467
      %v522 = vadd.f32 %v348, %v472
      %v523 = vadd.f32 %v349, %v475
      %v524 = vadd.f32 %v350, %v480
      %v525 = vadd.f32 %v351, %v483
      %v526 = vadd.f32 %v352, %v488
      %v527 = vadd.f32 %v353, %v491
      %v528 = vadd.f32 %v354, %v496
      %v529 = vadd.f32 %v355, %v499
      %v530 = vadd.f32 %v356, %v504
      %v531 = vadd.f32 %v357, %v507
      %v532 = vadd.f32 %v358, %v512
      %v533 = vadd.f32 %v359, %v515
      %vm534 = vcmask 261120
      %535 = vst.msk [vmem:[#allocation2] sm:$0xff] %vm534, %v518
      %536 = vst.msk [vmem:[#allocation2 + $0x8] sm:$0xff] %vm534, %v519
      %537 = vst.msk [vmem:[#allocation2 + $0x10] sm:$0xff] %vm534, %v520
      %538 = vst.msk [vmem:[#allocation2 + $0x18] sm:$0xff] %vm534, %v521
      %539 = vst.msk [vmem:[#allocation2 + $0x20] sm:$0xff] %vm534, %v522
      %540 = vst.msk [vmem:[#allocation2 + $0x28] sm:$0xff] %vm534, %v523
      %541 = vst.msk [vmem:[#allocation2 + $0x30] sm:$0xff] %vm534, %v524
      %542 = vst.msk [vmem:[#allocation2 + $0x38] sm:$0xff] %vm534, %v525
      %543 = vst.msk [vmem:[#allocation2 + $0x40] sm:$0xff] %vm534, %v526
      %544 = vst.msk [vmem:[#allocation2 + $0x48] sm:$0xff] %vm534, %v527
      %545 = vst.msk [vmem:[#allocation2 + $0x50] sm:$0xff] %vm534, %v528
      %546 = vst.msk [vmem:[#allocation2 + $0x58] sm:$0xff] %vm534, %v529
      %547 = vst.msk [vmem:[#allocation2 + $0x60] sm:$0xff] %vm534, %v530
      %548 = vst.msk [vmem:[#allocation2 + $0x68] sm:$0xff] %vm534, %v531
      %549 = vst.msk [vmem:[#allocation2 + $0x70] sm:$0xff] %vm534, %v532
      %550 = vst.msk [vmem:[#allocation2 + $0x78] sm:$0xff] %vm534, %v533
      // Predicated region
      $region49: #{conv3d_transformer2_forward.19} parent=43 // pred_check
        %p551 = pneg %p323
      $region50: #{conv3d_transformer2_forward.19} parent=43 // pred_check_branch
        %553 = sbr.rel (%p551) target = $region52
      $region51: #{conv3d_transformer2_forward.19} parent=43 // pred_region
        %v554 = vld [vmem:[#allocation2] sm:$0xff]
        %v555 = vld [vmem:[#allocation2 + $0x8] sm:$0xff]
        %v556 = vld [vmem:[#allocation2 + $0x10] sm:$0xff]
        %v557 = vld [vmem:[#allocation2 + $0x18] sm:$0xff]
        %v558 = vld [vmem:[#allocation2 + $0x20] sm:$0xff]
        %v559 = vld [vmem:[#allocation2 + $0x28] sm:$0xff]
        %v560 = vld [vmem:[#allocation2 + $0x30] sm:$0xff]
        %v561 = vld [vmem:[#allocation2 + $0x38] sm:$0xff]
        %v562 = vld [vmem:[#allocation2 + $0x40] sm:$0xff]
        %v563 = vld [vmem:[#allocation2 + $0x48] sm:$0xff]
        %v564 = vld [vmem:[#allocation2 + $0x50] sm:$0xff]
        %v565 = vld [vmem:[#allocation2 + $0x58] sm:$0xff]
        %v566 = vld [vmem:[#allocation2 + $0x60] sm:$0xff]
        %v567 = vld [vmem:[#allocation2 + $0x68] sm:$0xff]
        %v568 = vld [vmem:[#allocation2 + $0x70] sm:$0xff]
        %v569 = vld [vmem:[#allocation2 + $0x78] sm:$0xff]
        %v570 = vld [vmem:[%s2] sm:$0x1]
        %v572 = vlaneseq
        %v573 = vshrl.u32 %v572, 7
        %v574 = vsub.s32 0, %v573
        %v575 = vrot.slane %v570, %v574
        %v577 = vadd.f32 %v554, %v575
        %v578 = vadd.f32 %v555, %v575
        %v579 = vadd.f32 %v556, %v575
        %v580 = vadd.f32 %v557, %v575
        %v581 = vadd.f32 %v558, %v575
        %v582 = vadd.f32 %v559, %v575
        %v583 = vadd.f32 %v560, %v575
        %v584 = vadd.f32 %v561, %v575
        %v585 = vadd.f32 %v562, %v575
        %v586 = vadd.f32 %v563, %v575
        %v587 = vadd.f32 %v564, %v575
        %v588 = vadd.f32 %v565, %v575
        %v589 = vadd.f32 %v566, %v575
        %v590 = vadd.f32 %v567, %v575
        %v591 = vadd.f32 %v568, %v575
        %v592 = vadd.f32 %v569, %v575
        %v593 = vld [vmem:[%s314] sm:$0xff]
        %v594 = vld [vmem:[%s314 + $0x8] sm:$0xff]
        %v595 = vld [vmem:[%s314 + $0x10] sm:$0xff]
        %v596 = vld [vmem:[%s314 + $0x18] sm:$0xff]
        %v597 = vld [vmem:[%s314 + $0x20] sm:$0xff]
        %v598 = vld [vmem:[%s314 + $0x28] sm:$0xff]
        %v599 = vld [vmem:[%s314 + $0x30] sm:$0xff]
        %v600 = vld [vmem:[%s314 + $0x38] sm:$0xff]
        %v601 = vld [vmem:[%s314 + $0x40] sm:$0xff]
        %v602 = vld [vmem:[%s314 + $0x48] sm:$0xff]
        %v603 = vld [vmem:[%s314 + $0x50] sm:$0xff]
        %v604 = vld [vmem:[%s314 + $0x58] sm:$0xff]
        %v605 = vld [vmem:[%s314 + $0x60] sm:$0xff]
        %v606 = vld [vmem:[%s314 + $0x68] sm:$0xff]
        %v607 = vld [vmem:[%s314 + $0x70] sm:$0xff]
        %v608 = vld [vmem:[%s314 + $0x78] sm:$0xff]
        %v609 = vadd.f32 %v577, %v593
        %v610 = vadd.f32 %v578, %v594
        %v611 = vadd.f32 %v579, %v595
        %v612 = vadd.f32 %v580, %v596
        %v613 = vadd.f32 %v581, %v597
        %v614 = vadd.f32 %v582, %v598
        %v615 = vadd.f32 %v583, %v599
        %v616 = vadd.f32 %v584, %v600
        %v617 = vadd.f32 %v585, %v601
        %v618 = vadd.f32 %v586, %v602
        %v619 = vadd.f32 %v587, %v603
        %v620 = vadd.f32 %v588, %v604
        %v621 = vadd.f32 %v589, %v605
        %v622 = vadd.f32 %v590, %v606
        %v623 = vadd.f32 %v591, %v607
        %v624 = vadd.f32 %v592, %v608
        %v625 = vsel %vm534, %v609, 0.0
        %626 = vadd.xlane.f32.xlu0 %v625
        %v627 = vpop.xlane.xlu0 %626
        %v628 = vsel %vm534, %v610, 0.0
        %629 = vadd.xlane.f32.xlu0 %v628
        %v630 = vpop.xlane.xlu0 %629
        %v631 = vsel %vm534, %v611, 0.0
        %632 = vadd.xlane.f32.xlu0 %v631
        %v633 = vpop.xlane.xlu0 %632
        %v634 = vsel %vm534, %v612, 0.0
        %635 = vadd.xlane.f32.xlu0 %v634
        %v636 = vpop.xlane.xlu0 %635
        %v637 = vsel %vm534, %v613, 0.0
        %638 = vadd.xlane.f32.xlu0 %v637
        %v639 = vpop.xlane.xlu0 %638
        %v640 = vsel %vm534, %v614, 0.0
        %641 = vadd.xlane.f32.xlu0 %v640
        %v642 = vpop.xlane.xlu0 %641
        %v643 = vsel %vm534, %v615, 0.0
        %644 = vadd.xlane.f32.xlu0 %v643
        %v645 = vpop.xlane.xlu0 %644
        %v646 = vsel %vm534, %v616, 0.0
        %647 = vadd.xlane.f32.xlu0 %v646
        %v648 = vpop.xlane.xlu0 %647
        %v649 = vsel %vm534, %v617, 0.0
        %650 = vadd.xlane.f32.xlu0 %v649
        %v651 = vpop.xlane.xlu0 %650
        %v652 = vsel %vm534, %v618, 0.0
        %653 = vadd.xlane.f32.xlu0 %v652
        %v654 = vpop.xlane.xlu0 %653
        %v655 = vsel %vm534, %v619, 0.0
        %656 = vadd.xlane.f32.xlu0 %v655
        %v657 = vpop.xlane.xlu0 %656
        %v658 = vsel %vm534, %v620, 0.0
        %659 = vadd.xlane.f32.xlu0 %v658
        %v660 = vpop.xlane.xlu0 %659
        %v661 = vsel %vm534, %v621, 0.0
        %662 = vadd.xlane.f32.xlu0 %v661
        %v663 = vpop.xlane.xlu0 %662
        %v664 = vsel %vm534, %v622, 0.0
        %665 = vadd.xlane.f32.xlu0 %v664
        %v666 = vpop.xlane.xlu0 %665
        %v667 = vsel %vm534, %v623, 0.0
        %668 = vadd.xlane.f32.xlu0 %v667
        %v669 = vpop.xlane.xlu0 %668
        %v670 = vsel %vm534, %v624, 0.0
        %671 = vadd.xlane.f32.xlu0 %v670
        %v672 = vpop.xlane.xlu0 %671
        %v673 = vrcp.pop 32.0
        %v674 = vmul.f32 %v627, %v673
        %v675 = vmul.f32 %v630, %v673
        %v676 = vmul.f32 %v633, %v673
        %v677 = vmul.f32 %v636, %v673
        %v678 = vmul.f32 %v639, %v673
        %v679 = vmul.f32 %v642, %v673
        %v680 = vmul.f32 %v645, %v673
        %v681 = vmul.f32 %v648, %v673
        %v682 = vmul.f32 %v651, %v673
        %v683 = vmul.f32 %v654, %v673
        %v684 = vmul.f32 %v657, %v673
        %v685 = vmul.f32 %v660, %v673
        %v686 = vmul.f32 %v663, %v673
        %v687 = vmul.f32 %v666, %v673
        %v688 = vmul.f32 %v669, %v673
        %v689 = vmul.f32 %v672, %v673
        %v690 = vsub.f32 %v609, %v674
        %v691 = vsub.f32 %v610, %v675
        %v692 = vsub.f32 %v611, %v676
        %v693 = vsub.f32 %v612, %v677
        %v694 = vsub.f32 %v613, %v678
        %v695 = vsub.f32 %v614, %v679
        %v696 = vsub.f32 %v615, %v680
        %v697 = vsub.f32 %v616, %v681
        %v698 = vsub.f32 %v617, %v682
        %v699 = vsub.f32 %v618, %v683
        %v700 = vsub.f32 %v619, %v684
        %v701 = vsub.f32 %v620, %v685
        %v702 = vsub.f32 %v621, %v686
        %v703 = vsub.f32 %v622, %v687
        %v704 = vsub.f32 %v623, %v688
        %v705 = vsub.f32 %v624, %v689
        %v706 = vmul.f32 %v690, %v690
        %v707 = vmul.f32 %v691, %v691
        %v708 = vmul.f32 %v692, %v692
        %v709 = vmul.f32 %v693, %v693
        %v710 = vmul.f32 %v694, %v694
        %v711 = vmul.f32 %v695, %v695
        %v712 = vmul.f32 %v696, %v696
        %v713 = vmul.f32 %v697, %v697
        %v714 = vmul.f32 %v698, %v698
        %v715 = vmul.f32 %v699, %v699
        %v716 = vmul.f32 %v700, %v700
        %v717 = vmul.f32 %v701, %v701
        %v718 = vmul.f32 %v702, %v702
        %v719 = vmul.f32 %v703, %v703
        %v720 = vmul.f32 %v704, %v704
        %v721 = vmul.f32 %v705, %v705
        %v722 = vsel %vm534, %v706, 0.0
        %723 = vadd.xlane.f32.xlu0 %v722
        %v724 = vpop.xlane.xlu0 %723
        %v725 = vsel %vm534, %v707, 0.0
        %726 = vadd.xlane.f32.xlu0 %v725
        %v727 = vpop.xlane.xlu0 %726
        %v728 = vsel %vm534, %v708, 0.0
        %729 = vadd.xlane.f32.xlu0 %v728
        %v730 = vpop.xlane.xlu0 %729
        %v731 = vsel %vm534, %v709, 0.0
        %732 = vadd.xlane.f32.xlu0 %v731
        %v733 = vpop.xlane.xlu0 %732
        %v734 = vsel %vm534, %v710, 0.0
        %735 = vadd.xlane.f32.xlu0 %v734
        %v736 = vpop.xlane.xlu0 %735
        %v737 = vsel %vm534, %v711, 0.0
        %738 = vadd.xlane.f32.xlu0 %v737
        %v739 = vpop.xlane.xlu0 %738
        %v740 = vsel %vm534, %v712, 0.0
        %741 = vadd.xlane.f32.xlu0 %v740
        %v742 = vpop.xlane.xlu0 %741
        %v743 = vsel %vm534, %v713, 0.0
        %744 = vadd.xlane.f32.xlu0 %v743
        %v745 = vpop.xlane.xlu0 %744
        %v746 = vsel %vm534, %v714, 0.0
        %747 = vadd.xlane.f32.xlu0 %v746
        %v748 = vpop.xlane.xlu0 %747
        %v749 = vsel %vm534, %v715, 0.0
        %750 = vadd.xlane.f32.xlu0 %v749
        %v751 = vpop.xlane.xlu0 %750
        %v752 = vsel %vm534, %v716, 0.0
        %753 = vadd.xlane.f32.xlu0 %v752
        %v754 = vpop.xlane.xlu0 %753
        %v755 = vsel %vm534, %v717, 0.0
        %756 = vadd.xlane.f32.xlu0 %v755
        %v757 = vpop.xlane.xlu0 %756
        %v758 = vsel %vm534, %v718, 0.0
        %759 = vadd.xlane.f32.xlu0 %v758
        %v760 = vpop.xlane.xlu0 %759
        %v761 = vsel %vm534, %v719, 0.0
        %762 = vadd.xlane.f32.xlu0 %v761
        %v763 = vpop.xlane.xlu0 %762
        %v764 = vsel %vm534, %v720, 0.0
        %765 = vadd.xlane.f32.xlu0 %v764
        %v766 = vpop.xlane.xlu0 %765
        %v767 = vsel %vm534, %v721, 0.0
        %768 = vadd.xlane.f32.xlu0 %v767
        %v769 = vpop.xlane.xlu0 %768
        %v770 = vmul.f32 %v724, %v673
        %v771 = vmul.f32 %v727, %v673
        %v772 = vmul.f32 %v730, %v673
        %v773 = vmul.f32 %v733, %v673
        %v774 = vmul.f32 %v736, %v673
        %v775 = vmul.f32 %v739, %v673
        %v776 = vmul.f32 %v742, %v673
        %v777 = vmul.f32 %v745, %v673
        %v778 = vmul.f32 %v748, %v673
        %v779 = vmul.f32 %v751, %v673
        %v780 = vmul.f32 %v754, %v673
        %v781 = vmul.f32 %v757, %v673
        %v782 = vmul.f32 %v760, %v673
        %v783 = vmul.f32 %v763, %v673
        %v784 = vmul.f32 %v766, %v673
        %v785 = vmul.f32 %v769, %v673
        %v786 = vadd.f32 %v770, 1e-05
        %v787 = vadd.f32 %v771, 1e-05
        %v788 = vadd.f32 %v772, 1e-05
        %v789 = vadd.f32 %v773, 1e-05
        %v790 = vadd.f32 %v774, 1e-05
        %v791 = vadd.f32 %v775, 1e-05
        %v792 = vadd.f32 %v776, 1e-05
        %v793 = vadd.f32 %v777, 1e-05
        %v794 = vadd.f32 %v778, 1e-05
        %v795 = vadd.f32 %v779, 1e-05
        %v796 = vadd.f32 %v780, 1e-05
        %v797 = vadd.f32 %v781, 1e-05
        %v798 = vadd.f32 %v782, 1e-05
        %v799 = vadd.f32 %v783, 1e-05
        %v800 = vadd.f32 %v784, 1e-05
        %v801 = vadd.f32 %v785, 1e-05
        %v802 = vrsqrt.pop %v786
        %v803 = vrsqrt.pop %v787
        %v804 = vrsqrt.pop %v788
        %v805 = vrsqrt.pop %v789
        %v806 = vrsqrt.pop %v790
        %v807 = vrsqrt.pop %v791
        %v808 = vrsqrt.pop %v792
        %v809 = vrsqrt.pop %v793
        %v810 = vrsqrt.pop %v794
        %v811 = vrsqrt.pop %v795
        %v812 = vrsqrt.pop %v796
        %v813 = vrsqrt.pop %v797
        %v814 = vrsqrt.pop %v798
        %v815 = vrsqrt.pop %v799
        %v816 = vrsqrt.pop %v800
        %v817 = vrsqrt.pop %v801
        %v818 = vmul.f32 %v690, %v802
        %v819 = vmul.f32 %v691, %v803
        %v820 = vmul.f32 %v692, %v804
        %v821 = vmul.f32 %v693, %v805
        %v822 = vmul.f32 %v694, %v806
        %v823 = vmul.f32 %v695, %v807
        %v824 = vmul.f32 %v696, %v808
        %v825 = vmul.f32 %v697, %v809
        %v826 = vmul.f32 %v698, %v810
        %v827 = vmul.f32 %v699, %v811
        %v828 = vmul.f32 %v700, %v812
        %v829 = vmul.f32 %v701, %v813
        %v830 = vmul.f32 %v702, %v814
        %v831 = vmul.f32 %v703, %v815
        %v832 = vmul.f32 %v704, %v816
        %v833 = vmul.f32 %v705, %v817
        %v834 = vld [vmem:[%s4] sm:$0x1]
        %v836 = vlaneseq
        %v837 = vshrl.u32 %v836, 7
        %v838 = vsub.s32 0, %v837
        %v839 = vrot.slane %v834, %v838
        %v841 = vmul.f32 %v818, %v839
        %v842 = vmul.f32 %v819, %v839
        %v843 = vmul.f32 %v820, %v839
        %v844 = vmul.f32 %v821, %v839
        %v845 = vmul.f32 %v822, %v839
        %v846 = vmul.f32 %v823, %v839
        %v847 = vmul.f32 %v824, %v839
        %v848 = vmul.f32 %v825, %v839
        %v849 = vmul.f32 %v826, %v839
        %v850 = vmul.f32 %v827, %v839
        %v851 = vmul.f32 %v828, %v839
        %v852 = vmul.f32 %v829, %v839
        %v853 = vmul.f32 %v830, %v839
        %v854 = vmul.f32 %v831, %v839
        %v855 = vmul.f32 %v832, %v839
        %v856 = vmul.f32 %v833, %v839
        %v857 = vld [vmem:[%s5] sm:$0x1]
        %v859 = vlaneseq
        %v860 = vshrl.u32 %v859, 7
        %v861 = vsub.s32 0, %v860
        %v862 = vrot.slane %v857, %v861
        %v864 = vadd.f32 %v841, %v862
        %v865 = vadd.f32 %v842, %v862
        %v866 = vadd.f32 %v843, %v862
        %v867 = vadd.f32 %v844, %v862
        %v868 = vadd.f32 %v845, %v862
        %v869 = vadd.f32 %v846, %v862
        %v870 = vadd.f32 %v847, %v862
        %v871 = vadd.f32 %v848, %v862
        %v872 = vadd.f32 %v849, %v862
        %v873 = vadd.f32 %v850, %v862
        %v874 = vadd.f32 %v851, %v862
        %v875 = vadd.f32 %v852, %v862
        %v876 = vadd.f32 %v853, %v862
        %v877 = vadd.f32 %v854, %v862
        %v878 = vadd.f32 %v855, %v862
        %v879 = vadd.f32 %v856, %v862
        %880 = vst.msk [vmem:[%s320] sm:$0xff] %vm534, %v864
        %881 = vst.msk [vmem:[%s320 + $0x8] sm:$0xff] %vm534, %v865
        %882 = vst.msk [vmem:[%s320 + $0x10] sm:$0xff] %vm534, %v866
        %883 = vst.msk [vmem:[%s320 + $0x18] sm:$0xff] %vm534, %v867
        %884 = vst.msk [vmem:[%s320 + $0x20] sm:$0xff] %vm534, %v868
        %885 = vst.msk [vmem:[%s320 + $0x28] sm:$0xff] %vm534, %v869
        %886 = vst.msk [vmem:[%s320 + $0x30] sm:$0xff] %vm534, %v870
        %887 = vst.msk [vmem:[%s320 + $0x38] sm:$0xff] %vm534, %v871
        %888 = vst.msk [vmem:[%s320 + $0x40] sm:$0xff] %vm534, %v872
        %889 = vst.msk [vmem:[%s320 + $0x48] sm:$0xff] %vm534, %v873
        %890 = vst.msk [vmem:[%s320 + $0x50] sm:$0xff] %vm534, %v874
        %891 = vst.msk [vmem:[%s320 + $0x58] sm:$0xff] %vm534, %v875
        %892 = vst.msk [vmem:[%s320 + $0x60] sm:$0xff] %vm534, %v876
        %893 = vst.msk [vmem:[%s320 + $0x68] sm:$0xff] %vm534, %v877
        %894 = vst.msk [vmem:[%s320 + $0x70] sm:$0xff] %vm534, %v878
        %895 = vst.msk [vmem:[%s320 + $0x78] sm:$0xff] %vm534, %v879
      $region52: #{conv3d_transformer2_forward.19} parent=43 // pred_fallthru
        _
      %s896 = smul.u32 16, %s21
      %p897 = scmp.lt.s32.totalorder %s896, 31
      %s898 = scalar_select %p897, %s896, 31
      %s899 = smul.addr %s898, 8
      %s900 = scalar_lea.vmem %s6, %s899
      // Predicated region
      $region53: #{conv3d_transformer2_forward.19} parent=43 // pred_check
        %p901 = pneg %p190
      $region54: #{conv3d_transformer2_forward.19} parent=43 // pred_check_branch
        %903 = sbr.rel (%p901) target = $region56
      $region55: #{conv3d_transformer2_forward.19} parent=43 // pred_region
        %s904 = smul.u32 16, %s21
      $region56: #{conv3d_transformer2_forward.19} parent=43 // pred_fallthru
        _
    $region44: #{conv3d_transformer2_forward.19} parent=5 // pred_fallthru
      _
    %p905 = scmp.le.s32.totalorder 2, %s12
    // Predicated region
    $region57: #{conv3d_transformer2_forward.19} parent=5 // pred_check
      %p906 = pneg %p905
    $region58: #{conv3d_transformer2_forward.19} parent=5 // pred_check_branch
      %908 = sbr.rel (%p906) target = $region60
    $region59: #{conv3d_transformer2_forward.19} parent=5 // pred_region
      %s909 = ssub.s32 %s12, 2
      // Predicated region
      $region61: #{conv3d_transformer2_forward.19} parent=59 // pred_check
        %p910 = pneg %p196
      $region62: #{conv3d_transformer2_forward.19} parent=59 // pred_check_branch
        %912 = sbr.rel (%p910) target = $region64
      $region63: #{conv3d_transformer2_forward.19} parent=59 // pred_region
        %s913 = smul.u32 16, %s23
        %p914 = scmp.lt.s32.totalorder %s913, 31
        %s915 = scalar_select %p914, %s913, 31
        %s916 = smul.addr %s915, 8
        %s917 = scalar_lea.vmem %s6, %s916
      $region64: #{conv3d_transformer2_forward.19} parent=59 // pred_fallthru
        _
    $region60: #{conv3d_transformer2_forward.19} parent=5 // pred_fallthru
      _
  $region6: #{conv3d_transformer2_forward.19} parent=0 // loop_footer
    %s16 = sadd.s32 1, %s12
  $region7: #{conv3d_transformer2_forward.19} parent=0 // loop_footer_branch
    %11 = sbr.rel target = $region3
  $region8: #{conv3d_transformer2_forward.19} parent=0 // loop_exit
    _

// kernel: conv3d_transformer2_forward.25
$region0: #{conv3d_transformer2_forward.25}
  #allocation0 [shape = 'u32[]', space=smem, size = 0x4, offset = 0x4, fixed_abs, tag = 'smem constant byte address 0x4 - core index']
  #allocation1 [shape = 'u32[144,128]{1,0:T(1,128)}', space=vmem, size = 0x12000, scoped, tag = 'internal scratch']
  #allocation2 [shape = 'f32[128,3]{1,0:T(8,128)}', space=vmem, size = 0x10000, scoped, tag = 'scratch operand']
  %s0 = inlined_call_operand.vmem [shape: f32[128,32], index: 0, kind: input, shape index: {}]
  %s1 = inlined_call_operand.vmem [shape: f32[32,3], index: 1, kind: input, shape index: {}]
  %s2 = inlined_call_operand.vmem [shape: f32[1,3], index: 2, kind: input, shape index: {}]
  %s3 = inlined_call_operand.vmem [shape: f32[128,3], index: 3, kind: output, shape index: {}]
  %s4 = sld [smem:[#allocation0]]
  $region30: #{conv3d_transformer2_forward.25} parent=0
    _
  %s6 = ssub.s32 1, %s4
  %s7 = scalar_select 0, %s6, %s4
  // Predicated region
  $region2: #{conv3d_transformer2_forward.25} parent=0 // pred_check
    _
  $region3: #{conv3d_transformer2_forward.25} parent=0 // pred_check_branch
    %9 = sbr.rel (0) target = $region5
  $region4: #{conv3d_transformer2_forward.25} parent=0 // pred_region
    _
  $region5: #{conv3d_transformer2_forward.25} parent=0 // pred_fallthru
    _
  // Predicated region
  $region6: #{conv3d_transformer2_forward.25} parent=0 // pred_check
    _
  $region7: #{conv3d_transformer2_forward.25} parent=0 // pred_check_branch
    %11 = sbr.rel (0) target = $region9
  $region8: #{conv3d_transformer2_forward.25} parent=0 // pred_region
    _
  $region9: #{conv3d_transformer2_forward.25} parent=0 // pred_fallthru
    _
  // Predicated region
  $region10: #{conv3d_transformer2_forward.25} parent=0 // pred_check
    _
  $region11: #{conv3d_transformer2_forward.25} parent=0 // pred_check_branch
    %13 = sbr.rel (0) target = $region13
  $region12: #{conv3d_transformer2_forward.25} parent=0 // pred_region
    _
  $region13: #{conv3d_transformer2_forward.25} parent=0 // pred_fallthru
    _
  %p15 = scmp.eq.s32.totalorder 0, 0
  // Predicated region
  $region14: #{conv3d_transformer2_forward.25} parent=0 // pred_check
    %p16 = pneg %p15
  $region15: #{conv3d_transformer2_forward.25} parent=0 // pred_check_branch
    %18 = sbr.rel (%p16) target = $region17
  $region16: #{conv3d_transformer2_forward.25} parent=0 // pred_region
    %vm19 = vcmask 23552
    %20 = vst.msk [vmem:[#allocation2] sm:$0xff] %vm19, 0.0
    %21 = vst.msk [vmem:[#allocation2 + $0x8] sm:$0xff] %vm19, 0.0
    %22 = vst.msk [vmem:[#allocation2 + $0x10] sm:$0xff] %vm19, 0.0
    %23 = vst.msk [vmem:[#allocation2 + $0x18] sm:$0xff] %vm19, 0.0
    %24 = vst.msk [vmem:[#allocation2 + $0x20] sm:$0xff] %vm19, 0.0
    %25 = vst.msk [vmem:[#allocation2 + $0x28] sm:$0xff] %vm19, 0.0
    %26 = vst.msk [vmem:[#allocation2 + $0x30] sm:$0xff] %vm19, 0.0
    %27 = vst.msk [vmem:[#allocation2 + $0x38] sm:$0xff] %vm19, 0.0
    %28 = vst.msk [vmem:[#allocation2 + $0x40] sm:$0xff] %vm19, 0.0
    %29 = vst.msk [vmem:[#allocation2 + $0x48] sm:$0xff] %vm19, 0.0
    %30 = vst.msk [vmem:[#allocation2 + $0x50] sm:$0xff] %vm19, 0.0
    %31 = vst.msk [vmem:[#allocation2 + $0x58] sm:$0xff] %vm19, 0.0
    %32 = vst.msk [vmem:[#allocation2 + $0x60] sm:$0xff] %vm19, 0.0
    %33 = vst.msk [vmem:[#allocation2 + $0x68] sm:$0xff] %vm19, 0.0
    %34 = vst.msk [vmem:[#allocation2 + $0x70] sm:$0xff] %vm19, 0.0
    %35 = vst.msk [vmem:[#allocation2 + $0x78] sm:$0xff] %vm19, 0.0
  $region17: #{conv3d_transformer2_forward.25} parent=0 // pred_fallthru
    _
  %v36 = vld [vmem:[#allocation2] sm:$0xff]
  %v37 = vld [vmem:[#allocation2 + $0x8] sm:$0xff]
  %v38 = vld [vmem:[#allocation2 + $0x10] sm:$0xff]
  %v39 = vld [vmem:[#allocation2 + $0x18] sm:$0xff]
  %v40 = vld [vmem:[#allocation2 + $0x20] sm:$0xff]
  %v41 = vld [vmem:[#allocation2 + $0x28] sm:$0xff]
  %v42 = vld [vmem:[#allocation2 + $0x30] sm:$0xff]
  %v43 = vld [vmem:[#allocation2 + $0x38] sm:$0xff]
  %v44 = vld [vmem:[#allocation2 + $0x40] sm:$0xff]
  %v45 = vld [vmem:[#allocation2 + $0x48] sm:$0xff]
  %v46 = vld [vmem:[#allocation2 + $0x50] sm:$0xff]
  %v47 = vld [vmem:[#allocation2 + $0x58] sm:$0xff]
  %v48 = vld [vmem:[#allocation2 + $0x60] sm:$0xff]
  %v49 = vld [vmem:[#allocation2 + $0x68] sm:$0xff]
  %v50 = vld [vmem:[#allocation2 + $0x70] sm:$0xff]
  %v51 = vld [vmem:[#allocation2 + $0x78] sm:$0xff]
  %v52 = vld [vmem:[%s0] sm:$0xff]
  %v53 = vld [vmem:[%s0 + $0x8] sm:$0xff]
  %v54 = vld [vmem:[%s0 + $0x10] sm:$0xff]
  %v55 = vld [vmem:[%s0 + $0x18] sm:$0xff]
  %v56 = vld [vmem:[%s0 + $0x20] sm:$0xff]
  %v57 = vld [vmem:[%s0 + $0x28] sm:$0xff]
  %v58 = vld [vmem:[%s0 + $0x30] sm:$0xff]
  %v59 = vld [vmem:[%s0 + $0x38] sm:$0xff]
  %v60 = vld [vmem:[%s0 + $0x40] sm:$0xff]
  %v61 = vld [vmem:[%s0 + $0x48] sm:$0xff]
  %v62 = vld [vmem:[%s0 + $0x50] sm:$0xff]
  %v63 = vld [vmem:[%s0 + $0x58] sm:$0xff]
  %v64 = vld [vmem:[%s0 + $0x60] sm:$0xff]
  %v65 = vld [vmem:[%s0 + $0x68] sm:$0xff]
  %v66 = vld [vmem:[%s0 + $0x70] sm:$0xff]
  %v67 = vld [vmem:[%s0 + $0x78] sm:$0xff]
  %v68 = vpack.c.bf16 %v53, %v52
  %v69 = vpack.c.bf16 %v55, %v54
  %v70 = vpack.c.bf16 %v57, %v56
  %v71 = vpack.c.bf16 %v59, %v58
  %v72 = vpack.c.bf16 %v61, %v60
  %v73 = vpack.c.bf16 %v63, %v62
  %v74 = vpack.c.bf16 %v65, %v64
  %v75 = vpack.c.bf16 %v67, %v66
  %v76 = vld [vmem:[%s1] sm:$0xff]
  %v77 = vld [vmem:[%s1 + $0x8] sm:$0xff]
  %v78 = vld [vmem:[%s1 + $0x10] sm:$0xff]
  %v79 = vld [vmem:[%s1 + $0x18] sm:$0xff]
  %v80 = vpack.c.bf16 %v77, %v76
  %v81 = vpack.c.bf16 %v79, %v78
  %vm82 = vcmask 261120
  %v84 = vsel %vm82, %v68, 0
  %v87 = vsel %vm82, %v69, 0
  %v90 = vsel %vm82, %v70, 0
  %v93 = vsel %vm82, %v71, 0
  %v96 = vsel %vm82, %v72, 0
  %v99 = vsel %vm82, %v73, 0
  %v102 = vsel %vm82, %v74, 0
  %v105 = vsel %vm82, %v75, 0
  %107 = vmatprep.subr.bf16.mxu0 0
  %108 = vmatpush1.bf16.msra.mxu0 %v80
  %109 = vmatprep.subr.bf16.mxu0 0
  %110 = vmatpush1.bf16.msra.mxu0 %v81
  %111 = vmatprep.subr.bf16.mxu0 0
  %112 = vmatpush1.bf16.msra.mxu0 0
  %113 = vmatprep.subr.bf16.mxu0 0
  %114 = vmatpush1.bf16.msra.mxu0 0
  %115 = vmatprep.subr.bf16.mxu0 0
  %116 = vmatpush1.bf16.msra.mxu0 0
  %117 = vmatprep.subr.bf16.mxu0 0
  %118 = vmatpush1.bf16.msra.mxu0 0
  %119 = vmatprep.subr.bf16.mxu0 0
  %120 = vmatpush1.bf16.msra.mxu0 0
  %121 = vmatprep.subr.bf16.mxu0 0
  %122 = vmatpush1.bf16.msra.mxu0 0
  %123 = vmatprep.subr.bf16.mxu0 0
  %124 = vmatpush1.bf16.msra.mxu0 0
  %125 = vmatprep.subr.bf16.mxu0 0
  %126 = vmatpush1.bf16.msra.mxu0 0
  %127 = vmatprep.subr.bf16.mxu0 0
  %128 = vmatpush1.bf16.msra.mxu0 0
  %129 = vmatprep.subr.bf16.mxu0 0
  %130 = vmatpush1.bf16.msra.mxu0 0
  %131 = vmatprep.subr.bf16.mxu0 0
  %132 = vmatpush1.bf16.msra.mxu0 0
  %133 = vmatprep.subr.bf16.mxu0 0
  %134 = vmatpush1.bf16.msra.mxu0 0
  %135 = vmatprep.subr.bf16.mxu0 0
  %136 = vmatpush1.bf16.msra.mxu0 0
  %137 = vmatprep.subr.bf16.mxu0 0
  %138 = vmatpush1.bf16.msra.mxu0 0
  %139 = vmatprep.mubr.bf16.mxu0 0
  %140 = vmatmul.mubr.bf16.gmra.mrb[0].mxu0 %v84
  %v141 = vpop.f32.mrb[0].mxu0
  %v142 = vadd.f32 0.0, %v141
  %v143 = vpop.f32.mrb[0].mxu0
  %v144 = vpop.f32.mrb[0].mxu0
  %v145 = vadd.f32 0.0, %v144
  %v146 = vpop.f32.mrb[0].mxu0
  %147 = vmatprep.mubr.bf16.mxu0 0
  %148 = vmatmul.mubr.bf16.gmra.mrb[0].mxu0 %v87
  %v149 = vpop.f32.mrb[0].mxu0
  %v150 = vadd.f32 0.0, %v149
  %v151 = vpop.f32.mrb[0].mxu0
  %v152 = vpop.f32.mrb[0].mxu0
  %v153 = vadd.f32 0.0, %v152
  %v154 = vpop.f32.mrb[0].mxu0
  %155 = vmatprep.mubr.bf16.mxu0 0
  %156 = vmatmul.mubr.bf16.gmra.mrb[0].mxu0 %v90
  %v157 = vpop.f32.mrb[0].mxu0
  %v158 = vadd.f32 0.0, %v157
  %v159 = vpop.f32.mrb[0].mxu0
  %v160 = vpop.f32.mrb[0].mxu0
  %v161 = vadd.f32 0.0, %v160
  %v162 = vpop.f32.mrb[0].mxu0
  %163 = vmatprep.mubr.bf16.mxu0 0
  %164 = vmatmul.mubr.bf16.gmra.mrb[0].mxu0 %v93
  %v165 = vpop.f32.mrb[0].mxu0
  %v166 = vadd.f32 0.0, %v165
  %v167 = vpop.f32.mrb[0].mxu0
  %v168 = vpop.f32.mrb[0].mxu0
  %v169 = vadd.f32 0.0, %v168
  %v170 = vpop.f32.mrb[0].mxu0
  %171 = vmatprep.mubr.bf16.mxu0 0
  %172 = vmatmul.mubr.bf16.gmra.mrb[0].mxu0 %v96
  %v173 = vpop.f32.mrb[0].mxu0
  %v174 = vadd.f32 0.0, %v173
  %v175 = vpop.f32.mrb[0].mxu0
  %v176 = vpop.f32.mrb[0].mxu0
  %v177 = vadd.f32 0.0, %v176
  %v178 = vpop.f32.mrb[0].mxu0
  %179 = vmatprep.mubr.bf16.mxu0 0
  %180 = vmatmul.mubr.bf16.gmra.mrb[0].mxu0 %v99
  %v181 = vpop.f32.mrb[0].mxu0
  %v182 = vadd.f32 0.0, %v181
  %v183 = vpop.f32.mrb[0].mxu0
  %v184 = vpop.f32.mrb[0].mxu0
  %v185 = vadd.f32 0.0, %v184
  %v186 = vpop.f32.mrb[0].mxu0
  %187 = vmatprep.mubr.bf16.mxu0 0
  %188 = vmatmul.mubr.bf16.gmra.mrb[0].mxu0 %v102
  %v189 = vpop.f32.mrb[0].mxu0
  %v190 = vadd.f32 0.0, %v189
  %v191 = vpop.f32.mrb[0].mxu0
  %v192 = vpop.f32.mrb[0].mxu0
  %v193 = vadd.f32 0.0, %v192
  %v194 = vpop.f32.mrb[0].mxu0
  %195 = vmatprep.mubr.bf16.mxu0 0
  %196 = vmatmul.mubr.bf16.gmra.mrb[0].mxu0 %v105
  %v197 = vpop.f32.mrb[0].mxu0
  %v198 = vadd.f32 0.0, %v197
  %v199 = vpop.f32.mrb[0].mxu0
  %v200 = vpop.f32.mrb[0].mxu0
  %v201 = vadd.f32 0.0, %v200
  %v202 = vpop.f32.mrb[0].mxu0
  %203 = vdwg.mxu0
  %v204 = vadd.f32 %v36, %v142
  %v205 = vadd.f32 %v37, %v145
  %v206 = vadd.f32 %v38, %v150
  %v207 = vadd.f32 %v39, %v153
  %v208 = vadd.f32 %v40, %v158
  %v209 = vadd.f32 %v41, %v161
  %v210 = vadd.f32 %v42, %v166
  %v211 = vadd.f32 %v43, %v169
  %v212 = vadd.f32 %v44, %v174
  %v213 = vadd.f32 %v45, %v177
  %v214 = vadd.f32 %v46, %v182
  %v215 = vadd.f32 %v47, %v185
  %v216 = vadd.f32 %v48, %v190
  %v217 = vadd.f32 %v49, %v193
  %v218 = vadd.f32 %v50, %v198
  %v219 = vadd.f32 %v51, %v201
  %vm220 = vcmask 23552
  %221 = vst.msk [vmem:[#allocation2] sm:$0xff] %vm220, %v204
  %222 = vst.msk [vmem:[#allocation2 + $0x8] sm:$0xff] %vm220, %v205
  %223 = vst.msk [vmem:[#allocation2 + $0x10] sm:$0xff] %vm220, %v206
  %224 = vst.msk [vmem:[#allocation2 + $0x18] sm:$0xff] %vm220, %v207
  %225 = vst.msk [vmem:[#allocation2 + $0x20] sm:$0xff] %vm220, %v208
  %226 = vst.msk [vmem:[#allocation2 + $0x28] sm:$0xff] %vm220, %v209
  %227 = vst.msk [vmem:[#allocation2 + $0x30] sm:$0xff] %vm220, %v210
  %228 = vst.msk [vmem:[#allocation2 + $0x38] sm:$0xff] %vm220, %v211
  %229 = vst.msk [vmem:[#allocation2 + $0x40] sm:$0xff] %vm220, %v212
  %230 = vst.msk [vmem:[#allocation2 + $0x48] sm:$0xff] %vm220, %v213
  %231 = vst.msk [vmem:[#allocation2 + $0x50] sm:$0xff] %vm220, %v214
  %232 = vst.msk [vmem:[#allocation2 + $0x58] sm:$0xff] %vm220, %v215
  %233 = vst.msk [vmem:[#allocation2 + $0x60] sm:$0xff] %vm220, %v216
  %234 = vst.msk [vmem:[#allocation2 + $0x68] sm:$0xff] %vm220, %v217
  %235 = vst.msk [vmem:[#allocation2 + $0x70] sm:$0xff] %vm220, %v218
  %236 = vst.msk [vmem:[#allocation2 + $0x78] sm:$0xff] %vm220, %v219
  // Predicated region
  $region18: #{conv3d_transformer2_forward.25} parent=0 // pred_check
    %p237 = pneg %p15
  $region19: #{conv3d_transformer2_forward.25} parent=0 // pred_check_branch
    %239 = sbr.rel (%p237) target = $region21
  $region20: #{conv3d_transformer2_forward.25} parent=0 // pred_region
    %v240 = vld [vmem:[#allocation2] sm:$0xff]
    %v241 = vld [vmem:[#allocation2 + $0x8] sm:$0xff]
    %v242 = vld [vmem:[#allocation2 + $0x10] sm:$0xff]
    %v243 = vld [vmem:[#allocation2 + $0x18] sm:$0xff]
    %v244 = vld [vmem:[#allocation2 + $0x20] sm:$0xff]
    %v245 = vld [vmem:[#allocation2 + $0x28] sm:$0xff]
    %v246 = vld [vmem:[#allocation2 + $0x30] sm:$0xff]
    %v247 = vld [vmem:[#allocation2 + $0x38] sm:$0xff]
    %v248 = vld [vmem:[#allocation2 + $0x40] sm:$0xff]
    %v249 = vld [vmem:[#allocation2 + $0x48] sm:$0xff]
    %v250 = vld [vmem:[#allocation2 + $0x50] sm:$0xff]
    %v251 = vld [vmem:[#allocation2 + $0x58] sm:$0xff]
    %v252 = vld [vmem:[#allocation2 + $0x60] sm:$0xff]
    %v253 = vld [vmem:[#allocation2 + $0x68] sm:$0xff]
    %v254 = vld [vmem:[#allocation2 + $0x70] sm:$0xff]
    %v255 = vld [vmem:[#allocation2 + $0x78] sm:$0xff]
    %v256 = vld [vmem:[%s2] sm:$0x1]
    %v258 = vlaneseq
    %v259 = vshrl.u32 %v258, 7
    %v260 = vsub.s32 0, %v259
    %v261 = vrot.slane %v256, %v260
    %v263 = vadd.f32 %v240, %v261
    %v264 = vadd.f32 %v241, %v261
    %v265 = vadd.f32 %v242, %v261
    %v266 = vadd.f32 %v243, %v261
    %v267 = vadd.f32 %v244, %v261
    %v268 = vadd.f32 %v245, %v261
    %v269 = vadd.f32 %v246, %v261
    %v270 = vadd.f32 %v247, %v261
    %v271 = vadd.f32 %v248, %v261
    %v272 = vadd.f32 %v249, %v261
    %v273 = vadd.f32 %v250, %v261
    %v274 = vadd.f32 %v251, %v261
    %v275 = vadd.f32 %v252, %v261
    %v276 = vadd.f32 %v253, %v261
    %v277 = vadd.f32 %v254, %v261
    %v278 = vadd.f32 %v255, %v261
    %279 = vst.msk [vmem:[%s3] sm:$0xff] %vm220, %v263
    %280 = vst.msk [vmem:[%s3 + $0x8] sm:$0xff] %vm220, %v264
    %281 = vst.msk [vmem:[%s3 + $0x10] sm:$0xff] %vm220, %v265
    %282 = vst.msk [vmem:[%s3 + $0x18] sm:$0xff] %vm220, %v266
    %283 = vst.msk [vmem:[%s3 + $0x20] sm:$0xff] %vm220, %v267
    %284 = vst.msk [vmem:[%s3 + $0x28] sm:$0xff] %vm220, %v268
    %285 = vst.msk [vmem:[%s3 + $0x30] sm:$0xff] %vm220, %v269
    %286 = vst.msk [vmem:[%s3 + $0x38] sm:$0xff] %vm220, %v270
    %287 = vst.msk [vmem:[%s3 + $0x40] sm:$0xff] %vm220, %v271
    %288 = vst.msk [vmem:[%s3 + $0x48] sm:$0xff] %vm220, %v272
    %289 = vst.msk [vmem:[%s3 + $0x50] sm:$0xff] %vm220, %v273
    %290 = vst.msk [vmem:[%s3 + $0x58] sm:$0xff] %vm220, %v274
    %291 = vst.msk [vmem:[%s3 + $0x60] sm:$0xff] %vm220, %v275
    %292 = vst.msk [vmem:[%s3 + $0x68] sm:$0xff] %vm220, %v276
    %293 = vst.msk [vmem:[%s3 + $0x70] sm:$0xff] %vm220, %v277
    %294 = vst.msk [vmem:[%s3 + $0x78] sm:$0xff] %vm220, %v278
  $region21: #{conv3d_transformer2_forward.25} parent=0 // pred_fallthru
    _
  // Predicated region
  $region22: #{conv3d_transformer2_forward.25} parent=0 // pred_check
    _
  $region23: #{conv3d_transformer2_forward.25} parent=0 // pred_check_branch
    %296 = sbr.rel (0) target = $region25
  $region24: #{conv3d_transformer2_forward.25} parent=0 // pred_region
    _
  $region25: #{conv3d_transformer2_forward.25} parent=0 // pred_fallthru
    _
  // Predicated region
  $region26: #{conv3d_transformer2_forward.25} parent=0 // pred_check
    _
  $region27: #{conv3d_transformer2_forward.25} parent=0 // pred_check_branch
    %298 = sbr.rel (0) target = $region29
  $region28: #{conv3d_transformer2_forward.25} parent=0 // pred_region
    _
  $region29: #{conv3d_transformer2_forward.25} parent=0 // pred_fallthru
    _

</llo_original>
